<compile_context>
chip_gen: v6e
topology: v6e:2x2x1
jax: 0.10.0
libtpu: 0.0.40
codegen_flags: <defaults>
</compile_context>

<pallas_src>
import jax
import jax.numpy as jnp
from jax.experimental import pallas as pl
from jax.experimental.pallas import tpu as pltpu

_MIB = 1024 * 1024


def _recip(x):
    """Reciprocal: EUP approximate op (separate VLIW slot) + one Newton step
    to restore ~f32 accuracy.  Operands are tiny (Bb, L, 1) / (Bb, 1, T)."""
    r = pl.reciprocal(x, approx=True)
    return r * (2.0 - x * r)


def _coattention_kernel(x_ref, y_ref, w_ref, mx_ref, my_ref, cx_ref, cy_ref):
    xb = x_ref[...]            # (Bb, L, Dx)  MXU-operand dtype (bf16 or f32)
    yb = y_ref[...]            # (Bb, T, Dy)
    w = w_ref[...]             # (Dx, Dy)
    mx = mx_ref[...]           # (Bb, L, 1)  float32, 1.0 == masked
    my = my_ref[...]           # (Bb, 1, T)  float32, 1.0 == masked

    bb, L, dx = xb.shape
    dy = yb.shape[2]

    # Bilinear scores.  x @ W as a single flat MXU matmul over the whole batch
    # block (M = Bb*L, sized to the MXU width by the block picker); (xW) @ y^T
    # as a batched NT matmul (einsum -> dot_general, no transpose materialised).
    # Accumulation is always f32.
    xw = jnp.dot(xb.reshape(bb * L, dx), w,
                 preferred_element_type=jnp.float32).reshape(bb, L, dy)
    scores = jnp.einsum("ble,bte->blt", xw.astype(yb.dtype), yb,
                        preferred_element_type=jnp.float32)       # (Bb, L, T)

    # ReLU + masked_fill(-10000) fused into one select.  Score/softmax math is
    # kept in f32 on every chip generation (v5e has no bf16 VPU/EUP path).
    masked = (mx + my) > 0.0                                      # (Bb, L, T)
    scores = jnp.where(masked, jnp.float32(-10000.0),
                       jnp.maximum(scores, 0.0))

    # Row (over T) and column (over L) softmax numerators.  Both exps are
    # issued back to back so `scores` dies immediately afterwards (short live
    # range).  The column exp is taken directly from the scores rather than via
    # e_row * exp(m_row - m_col): overflow-safe for arbitrarily large unmasked
    # scores, and fully-masked columns (all -10000) give exp(0) == 1, i.e.
    # torch's uniform softmax, with no special-case select.
    m_row = jnp.max(scores, axis=2, keepdims=True)                # (Bb, L, 1)
    m_col = jnp.max(scores, axis=1, keepdims=True)                # (Bb, 1, T)
    e_row = jnp.exp(scores - m_row)                               # (Bb, L, T)
    e_col = jnp.exp(scores - m_col)                               # (Bb, L, T)

    # ---- softmax over T (rows): normalisation deferred onto the (L, Dy)
    # context and applied with an EUP reciprocal-multiply.
    l_row = jnp.sum(e_row, axis=2, keepdims=True)                 # (Bb, L, 1)
    cx = jnp.einsum("blt,btd->bld", e_row.astype(yb.dtype), yb,
                    preferred_element_type=jnp.float32)           # (Bb, L, Dy)
    cx_ref[...] = (cx * _recip(l_row)).astype(cx_ref.dtype)

    # ---- softmax over L (columns): normalise with a lane-aligned
    # reciprocal-multiply, transpose the small (L, T) probability block
    # (T << Dx) and contract with the well-supported batched NN matmul form.
    l_col = jnp.sum(e_col, axis=1, keepdims=True)                 # (Bb, 1, T)
    b_mat = jnp.swapaxes(e_col * _recip(l_col), 1, 2)             # (Bb, T, L)
    cy = jnp.einsum("btl,bld->btd", b_mat.astype(xb.dtype), xb,
                    preferred_element_type=jnp.float32)           # (Bb, T, Dx)
    cy_ref[...] = cy.astype(cy_ref.dtype)


def _tpu_generation_info():
    """(vmem_capacity_bytes, mxu_width, tensorcores_per_device) with safe
    fallbacks.  Defaults are sized for the most constrained current part
    (v7x: 64 MiB VMEM/TC, 256-wide MXU, 2 TCs per chip)."""
    kind = ""
    try:
        kind = jax.devices()[0].device_kind.lower()
    except Exception:
        pass
    vmem_bytes = 64 * _MIB
    mxu_width = 256
    num_cores = 1
    if any(s in kind for s in ("v2", "v3", "v5 lite", "v5e", "v5lite")):
        mxu_width = 128                      # 128-wide MXUs
    if any(s in kind for s in ("v3", "v4", "v5", "v6")):
        vmem_bytes = 128 * _MIB              # 128 MiB VMEM parts
    if any(s in kind for s in ("v4", "v5p", "7")):
        num_cores = 2                        # dual-TC / megacore parts
    try:
        info = pltpu.get_tpu_info()
        vmem_bytes = int(getattr(info, "vmem_capacity_bytes", vmem_bytes))
    except Exception:
        pass
    return vmem_bytes, mxu_width, num_cores


def _pick_block_b(B, L, T, Dx, Dy, *, in_itemsize, out_itemsize, budget_bytes,
                  num_cores, mxu_width):
    """Batch elements per grid step.

    Picks the largest divisor of B whose double-buffered pipeline blocks PLUS
    the kernel-internal f32 temporaries (xw, scores/e_row/e_col, b_mat,
    pre-cast cx/cy -- previously omitted) fit the VMEM budget, preferring
      * an even, >= num_cores step count on dual-TC parts (both cores busy),
      * Bb*L a multiple of the MXU width (no partial-tile passes on the
        flattened xW matmul),
      * then the largest Bb (fewest ~0.35 us grid steps).
    Single-TC parts never force a grid split."""
    f32 = 4
    per_b = (
        2 * in_itemsize * (L * Dx + T * Dy)       # x / y input blocks (x2 buffers)
        + 2 * out_itemsize * (L * Dy + T * Dx)    # C_x / C_y output blocks (x2)
        + f32 * (2 * L * Dy + T * Dx)             # xw + pre-cast cx / cy (f32)
        + f32 * 4 * L * T                         # scores, e_row, e_col, b_mat
        + f32 * 8 * (L + T))                      # masks, maxima, sums, recips
    fixed = 2 * in_itemsize * Dx * Dy             # shared BiLinearM block(s)
    budget = max(budget_bytes - fixed, per_b)

    divisors = [d for d in range(1, B + 1) if B % d == 0]
    fitting = [d for d in divisors if d * per_b <= budget] or [1]

    def score(bb):
        steps = B // bb
        if num_cores > 1:
            balanced = int(steps >= num_cores and steps % num_cores == 0)
        else:
            balanced = 1                          # single TC: no forced split
        aligned = int((bb * L) % mxu_width == 0)
        return (balanced, aligned, bb)

    return max(fitting, key=score)


def coattention(x, y, bilinear_m, mask_x, mask_y, *, block_b=None,
                use_bf16_matmul=None, vmem_limit_bytes=None,
                budget_bytes=None, input_buffer_count=None):
    """CoAttention forward.

    x: (B, L, dim_x), y: (B, T, dim_y), bilinear_m: (dim_x, dim_y),
    mask_x: (B, L) bool/int (True == masked), mask_y: (B, T) bool/int.
    Returns (C_x, C_y) of shapes (B, L, dim_y) and (B, T, dim_x).

    use_bf16_matmul: None (default) -> True: bf16 MXU operands, f32 accumulation
      and f32 softmax math (documented accuracy budget ~1e-1 abs on O(1)
      contexts).  False -> pure f32, matches the PyTorch reference to ~1e-4.
    """
    B, L, Dx = x.shape
    _, T, Dy = y.shape
    out_dtype = x.dtype

    vmem_cap, mxu_width, num_cores = _tpu_generation_info()
    if vmem_limit_bytes is None:
        # ~108 MiB on 128 MiB parts (v5e/v6e), ~54 MiB on 64 MiB parts (v7x).
        vmem_limit_bytes = min(int(0.85 * vmem_cap), 112 * _MIB)
    if budget_bytes is None:
        budget_bytes = int(0.6 * vmem_limit_bytes)

    if use_bf16_matmul is None:
        use_bf16_matmul = True        # native MXU operand dtype on v5e/v6e/v7x

    if use_bf16_matmul:
        x_in = x.astype(jnp.bfloat16)
        y_in = y.astype(jnp.bfloat16)
        w_in = bilinear_m.astype(jnp.bfloat16)
    else:                             # exact path: matches the f32 reference
        x_in, y_in, w_in = x, y, bilinear_m
    in_itemsize = jnp.dtype(x_in.dtype).itemsize
    out_itemsize = jnp.dtype(out_dtype).itemsize

    # Masks are passed in the layout they are consumed in inside the (L, T)
    # score tile: (B, 1, T) is lane-dense; (B, L, 1) matches the sublane axis.
    mx = mask_x.astype(jnp.float32).reshape(B, L, 1)
    my = mask_y.astype(jnp.float32).reshape(B, 1, T)

    bb = block_b if block_b is not None else _pick_block_b(
        B, L, T, Dx, Dy, in_itemsize=in_itemsize, out_itemsize=out_itemsize,
        budget_bytes=budget_bytes, num_cores=num_cores, mxu_width=mxu_width)
    assert B % bb == 0, f"block_b={bb} must divide batch size {B}"

    cost = pl.CostEstimate(
        flops=int(2 * B * (L * Dx * Dy + L * T * (2 * Dy + Dx))),
        transcendentals=int(2 * B * L * T + 4 * B * (L + T)),
        bytes_accessed=int(in_itemsize * (B * L * Dx + B * T * Dy + Dx * Dy)
                           + out_itemsize * (B * L * Dy + B * T * Dx)
                           + 4 * B * (L + T)),
    )

    def _run(w_buffer_count):
        def _buf(n):
            return {} if n is None else {"pipeline_mode": pl.Buffered(n)}

        grid_spec = pltpu.PrefetchScalarGridSpec(
            num_scalar_prefetch=0,
            grid=(B // bb,),
            in_specs=[
                pl.BlockSpec((bb, L, Dx), lambda b: (b, 0, 0),
                             **_buf(input_buffer_count)),
                pl.BlockSpec((bb, T, Dy), lambda b: (b, 0, 0),
                             **_buf(input_buffer_count)),
                # Constant across the grid -> single buffer reclaims VMEM.
                pl.BlockSpec((Dx, Dy), lambda b: (0, 0),
                             **_buf(w_buffer_count)),
                pl.BlockSpec((bb, L, 1), lambda b: (b, 0, 0)),
                pl.BlockSpec((bb, 1, T), lambda b: (b, 0, 0)),
            ],
            out_specs=[
                pl.BlockSpec((bb, L, Dy), lambda b: (b, 0, 0)),
                pl.BlockSpec((bb, T, Dx), lambda b: (b, 0, 0)),
            ],
        )
        return pl.pallas_call(
            _coattention_kernel,
            out_shape=(
                jax.ShapeDtypeStruct((B, L, Dy), out_dtype),
                jax.ShapeDtypeStruct((B, T, Dx), out_dtype),
            ),
            grid_spec=grid_spec,
            compiler_params=pltpu.CompilerParams(
                dimension_semantics=("parallel",),
                vmem_limit_bytes=vmem_limit_bytes,
            ),
            cost_estimate=cost,
        )(x_in, y_in, w_in, mx, my)

    try:
        return _run(1)                # single-buffered BiLinearM block
    except Exception:                 # jax without Buffered(1) pipeline_mode
        return _run(None)             # default double-buffering


def _reference(x, y, w, mask_x, mask_y):
    scores = jnp.einsum("bld,de,bte->blt", x, w, y)
    scores = jnp.maximum(scores, 0.0)
    mask = mask_x.astype(bool)[:, :, None] | mask_y.astype(bool)[:, None, :]
    scores = jnp.where(mask, -10000.0, scores)
    A = jax.nn.softmax(scores, axis=2)
    Bm = jax.nn.softmax(scores, axis=1)
    C_x = jnp.einsum("blt,bte->ble", A, y)
    C_y = jnp.einsum("blt,bld->btd", Bm, x)
    return C_x, C_y


if __name__ == "__main__":
    # Small shapes consistent with MSSPM's forward: feature dim = 2*hidden_dim
    # (hidden_dim = 64 here so the feature axis is a lane-dense 128),
    # L / T = sentence / stock sequence lengths, B = batch.
    B, L, T, DIM_X, DIM_Y = 16, 16, 24, 128, 128

    key = jax.random.PRNGKey(0)
    kx, ky, kw = jax.random.split(key, 3)

    x = jax.random.normal(kx, (B, L, DIM_X), dtype=jnp.float32)
    y = jax.random.normal(ky, (B, T, DIM_Y), dtype=jnp.float32)

    # Xavier-uniform BiLinearM (as nn.init.xavier_uniform_ does).
    bound = (6.0 / (DIM_X + DIM_Y)) ** 0.5
    bilinear_m = jax.random.uniform(
        kw, (DIM_X, DIM_Y), dtype=jnp.float32, minval=-bound, maxval=bound)

    # Deterministic padding-style masks (True == masked).  Includes batches
    # with heavy padding so fully-masked rows / columns (degenerate softmaxes)
    # are exercised.
    len_x = 1 + (jnp.arange(B) * 5) % L
    len_y = 1 + (jnp.arange(B) * 7) % T
    mask_x = jnp.arange(L)[None, :] >= len_x[:, None]     # (B, L) bool
    mask_y = jnp.arange(T)[None, :] >= len_y[:, None]     # (B, T) bool

    ref_cx, ref_cy = _reference(x, y, bilinear_m, mask_x, mask_y)

    # 1) Exact-semantics path (f32 MXU operands): tight check vs. reference.
    cx32, cy32 = coattention(x, y, bilinear_m, mask_x, mask_y,
                             use_bf16_matmul=False)
    jax.block_until_ready((cx32, cy32))
    assert jnp.allclose(cx32, ref_cx, atol=1e-4, rtol=1e-4), \
        float(jnp.max(jnp.abs(cx32 - ref_cx)))
    assert jnp.allclose(cy32, ref_cy, atol=1e-4, rtol=1e-4), \
        float(jnp.max(jnp.abs(cy32 - ref_cy)))

    # 2) Default fast path (bf16 MXU operands, f32 accumulation + f32 softmax):
    #    documented accuracy budget (bf16 score rounding can shift near-tied
    #    softmax weights), so the tolerance is intentionally loose.
    cxf, cyf = coattention(x, y, bilinear_m, mask_x, mask_y)
    jax.block_until_ready((cxf, cyf))
    for out, ref in ((cxf, ref_cx), (cyf, ref_cy)):
        assert bool(jnp.all(jnp.isfinite(out)))
        max_err = float(jnp.max(jnp.abs(out - ref)))
        mean_err = float(jnp.mean(jnp.abs(out - ref)))
        assert max_err < 0.5 and mean_err < 0.05, (max_err, mean_err)

    print("KERNEL_OK")
</pallas_src>

<mosaic_0001>
module attributes {stable_mosaic.version = 11 : i64} {
  func.func @_coattention_kernel(%arg0: i32, %arg1: memref<16x16x128xf32, #tpu.memory_space<vmem>>, %arg2: memref<16x24x128xf32, #tpu.memory_space<vmem>>, %arg3: memref<128x128xf32, #tpu.memory_space<vmem>>, %arg4: memref<16x16x1xf32, #tpu.memory_space<vmem>>, %arg5: memref<16x1x24xf32, #tpu.memory_space<vmem>>, %arg6: memref<16x16x128xf32, #tpu.memory_space<vmem>>, %arg7: memref<16x24x128xf32, #tpu.memory_space<vmem>>) attributes {dimension_semantics = [#tpu.dimension_semantics<parallel>], iteration_bounds = array<i64: 1>, scalar_prefetch = 0 : i64, scratch_operands = 0 : i64, tpu.core_type = #tpu.core_type<tc>, window_params = [{transform_indices = @transform_0, window_bounds = array<i64: 16, 16, 128>}, {transform_indices = @transform_1, window_bounds = array<i64: 16, 24, 128>}, {pipeline_mode = #tpu.pipeline_mode<synchronous>, transform_indices = @transform_2, window_bounds = array<i64: 128, 128>}, {transform_indices = @transform_3, window_bounds = array<i64: 16, 16, 1>}, {transform_indices = @transform_4, window_bounds = array<i64: 16, 1, 24>}, {transform_indices = @transform_5, window_bounds = array<i64: 16, 16, 128>}, {transform_indices = @transform_6, window_bounds = array<i64: 16, 24, 128>}]} {
    %c0 = arith.constant 0 : index
    %c0_0 = arith.constant 0 : index
    %c0_1 = arith.constant 0 : index
    %0 = vector.load %arg1[%c0, %c0_0, %c0_1] : memref<16x16x128xf32, #tpu.memory_space<vmem>>, vector<16x16x128xf32>
    %c0_2 = arith.constant 0 : index
    %c0_3 = arith.constant 0 : index
    %c0_4 = arith.constant 0 : index
    %1 = vector.load %arg2[%c0_2, %c0_3, %c0_4] : memref<16x24x128xf32, #tpu.memory_space<vmem>>, vector<16x24x128xf32>
    %c0_5 = arith.constant 0 : index
    %c0_6 = arith.constant 0 : index
    %2 = vector.load %arg3[%c0_5, %c0_6] : memref<128x128xf32, #tpu.memory_space<vmem>>, vector<128x128xf32>
    %c0_7 = arith.constant 0 : index
    %c0_8 = arith.constant 0 : index
    %c0_9 = arith.constant 0 : index
    %3 = vector.load %arg4[%c0_7, %c0_8, %c0_9] : memref<16x16x1xf32, #tpu.memory_space<vmem>>, vector<16x16x1xf32>
    %c0_10 = arith.constant 0 : index
    %c0_11 = arith.constant 0 : index
    %c0_12 = arith.constant 0 : index
    %4 = vector.load %arg5[%c0_10, %c0_11, %c0_12] : memref<16x1x24xf32, #tpu.memory_space<vmem>>, vector<16x1x24xf32>
    %5 = vector.shape_cast %0 : vector<16x16x128xf32> to vector<256x128xf32>
    %cst = arith.constant dense<0.000000e+00> : vector<256x128xf32>
    %6 = tpu.matmul %5, %2, %cst {dimension_numbers = #tpu.dot_dimension_numbers<[1], [0], [0], [1], [0, 0, 1, 1], [], []>} : vector<256x128xf32>, vector<128x128xf32>, vector<256x128xf32> -> vector<256x128xf32>
    %7 = vector.shape_cast %6 : vector<256x128xf32> to vector<16x16x128xf32>
    "tpu.trace_start"() <{level = 10 : i32, message = "ble,bte->blt"}> : () -> ()
    %cst_13 = arith.constant dense<0.000000e+00> : vector<16x16x24xf32>
    %8 = tpu.matmul %7, %1, %cst_13 {dimension_numbers = #tpu.dot_dimension_numbers<[2], [2], [1], [1], [0, 0, 0, 1, 1, 1], [0], [0]>} : vector<16x16x128xf32>, vector<16x24x128xf32>, vector<16x16x24xf32> -> vector<16x16x24xf32>
    "tpu.trace_stop"() : () -> ()
    %9 = vector.broadcast %3 : vector<16x16x1xf32> to vector<16x16x24xf32>
    %10 = vector.broadcast %4 : vector<16x1x24xf32> to vector<16x16x24xf32>
    %11 = arith.addf %9, %10 : vector<16x16x24xf32>
    %cst_14 = arith.constant 0.000000e+00 : f32
    %12 = vector.broadcast %cst_14 : f32 to vector<16x16x24xf32>
    %13 = arith.cmpf ogt, %11, %12 : vector<16x16x24xf32>
    %cst_15 = arith.constant 0.000000e+00 : f32
    %14 = vector.broadcast %cst_15 : f32 to vector<16x16x24xf32>
    %15 = arith.maximumf %8, %14 : vector<16x16x24xf32>
    %cst_16 = arith.constant -1.000000e+04 : f32
    %16 = vector.broadcast %cst_16 : f32 to vector<16x16x24xf32>
    %17 = arith.select %13, %16, %15 : vector<16x16x24xi1>, vector<16x16x24xf32>
    %cst_17 = arith.constant dense<0xFF800000> : vector<16x16xf32>
    %18 = vector.multi_reduction <maximumf>, %17, %cst_17 [2] : vector<16x16x24xf32> to vector<16x16xf32>
    %19 = vector.shape_cast %18 : vector<16x16xf32> to vector<16x16x1xf32>
    %cst_18 = arith.constant dense<0xFF800000> : vector<16x24xf32>
    %20 = vector.multi_reduction <maximumf>, %17, %cst_18 [1] : vector<16x16x24xf32> to vector<16x24xf32>
    %21 = vector.shape_cast %20 : vector<16x24xf32> to vector<16x1x24xf32>
    %22 = vector.broadcast %19 : vector<16x16x1xf32> to vector<16x16x24xf32>
    %23 = arith.subf %17, %22 : vector<16x16x24xf32>
    %24 = math.exp %23 : vector<16x16x24xf32>
    %25 = vector.broadcast %21 : vector<16x1x24xf32> to vector<16x16x24xf32>
    %26 = arith.subf %17, %25 : vector<16x16x24xf32>
    %27 = math.exp %26 : vector<16x16x24xf32>
    %cst_19 = arith.constant dense<0.000000e+00> : vector<16x16xf32>
    %28 = vector.multi_reduction <add>, %24, %cst_19 [2] : vector<16x16x24xf32> to vector<16x16xf32>
    %29 = vector.shape_cast %28 : vector<16x16xf32> to vector<16x16x1xf32>
    "tpu.trace_start"() <{level = 10 : i32, message = "blt,btd->bld"}> : () -> ()
    %cst_20 = arith.constant dense<0.000000e+00> : vector<16x16x128xf32>
    %30 = tpu.matmul %24, %1, %cst_20 {dimension_numbers = #tpu.dot_dimension_numbers<[2], [1], [1], [2], [0, 0, 0, 1, 1, 2], [0], [0]>} : vector<16x16x24xf32>, vector<16x24x128xf32>, vector<16x16x128xf32> -> vector<16x16x128xf32>
    "tpu.trace_stop"() : () -> ()
    %31 = tpu.reciprocal %29 {approx = true} : vector<16x16x1xf32> -> vector<16x16x1xf32>
    %32 = arith.mulf %29, %31 : vector<16x16x1xf32>
    %cst_21 = arith.constant 2.000000e+00 : f32
    %33 = vector.broadcast %cst_21 : f32 to vector<16x16x1xf32>
    %34 = arith.subf %33, %32 : vector<16x16x1xf32>
    %35 = arith.mulf %31, %34 : vector<16x16x1xf32>
    %36 = vector.broadcast %35 : vector<16x16x1xf32> to vector<16x16x128xf32>
    %37 = arith.mulf %30, %36 : vector<16x16x128xf32>
    %c0_22 = arith.constant 0 : index
    %c0_23 = arith.constant 0 : index
    %c0_24 = arith.constant 0 : index
    %38 = vector.load %arg6[%c0_22, %c0_23, %c0_24] : memref<16x16x128xf32, #tpu.memory_space<vmem>>, vector<16x16x128xf32>
    tpu.vector_store %arg6[%c0_22, %c0_23, %c0_24], %37 {strides = array<i32>} : memref<16x16x128xf32, #tpu.memory_space<vmem>>, vector<16x16x128xf32>,
    %cst_25 = arith.constant dense<0.000000e+00> : vector<16x24xf32>
    %39 = vector.multi_reduction <add>, %27, %cst_25 [1] : vector<16x16x24xf32> to vector<16x24xf32>
    %40 = vector.shape_cast %39 : vector<16x24xf32> to vector<16x1x24xf32>
    %41 = tpu.reciprocal %40 {approx = true} : vector<16x1x24xf32> -> vector<16x1x24xf32>
    %42 = arith.mulf %40, %41 : vector<16x1x24xf32>
    %cst_26 = arith.constant 2.000000e+00 : f32
    %43 = vector.broadcast %cst_26 : f32 to vector<16x1x24xf32>
    %44 = arith.subf %43, %42 : vector<16x1x24xf32>
    %45 = arith.mulf %41, %44 : vector<16x1x24xf32>
    %46 = vector.broadcast %45 : vector<16x1x24xf32> to vector<16x16x24xf32>
    %47 = arith.mulf %27, %46 : vector<16x16x24xf32>
    %48 = tpu.transpose %47, [0, 2, 1] : vector<16x16x24xf32> -> vector<16x24x16xf32>
    "tpu.trace_start"() <{level = 10 : i32, message = "btl,bld->btd"}> : () -> ()
    %cst_27 = arith.constant dense<0.000000e+00> : vector<16x24x128xf32>
    %49 = tpu.matmul %48, %0, %cst_27 {dimension_numbers = #tpu.dot_dimension_numbers<[2], [1], [1], [2], [0, 0, 0, 1, 1, 2], [0], [0]>} : vector<16x24x16xf32>, vector<16x16x128xf32>, vector<16x24x128xf32> -> vector<16x24x128xf32>
    "tpu.trace_stop"() : () -> ()
    %c0_28 = arith.constant 0 : index
    %c0_29 = arith.constant 0 : index
    %c0_30 = arith.constant 0 : index
    %50 = vector.load %arg7[%c0_28, %c0_29, %c0_30] : memref<16x24x128xf32, #tpu.memory_space<vmem>>, vector<16x24x128xf32>
    tpu.vector_store %arg7[%c0_28, %c0_29, %c0_30], %49 {strides = array<i32>} : memref<16x24x128xf32, #tpu.memory_space<vmem>>, vector<16x24x128xf32>,
    return
  }
  func.func @transform_0(%arg0: i32) -> (i32, i32, i32) {
    %c0_i32 = arith.constant 0 : i32
    %c0_i32_0 = arith.constant 0 : i32
    %c0_i32_1 = arith.constant 0 : i32
    return %arg0, %c0_i32, %c0_i32_0 : i32, i32, i32
  }
  func.func @transform_1(%arg0: i32) -> (i32, i32, i32) {
    %c0_i32 = arith.constant 0 : i32
    %c0_i32_0 = arith.constant 0 : i32
    %c0_i32_1 = arith.constant 0 : i32
    return %arg0, %c0_i32, %c0_i32_0 : i32, i32, i32
  }
  func.func @transform_2(%arg0: i32) -> (i32, i32) {
    %c0_i32 = arith.constant 0 : i32
    %c0_i32_0 = arith.constant 0 : i32
    %c0_i32_1 = arith.constant 0 : i32
    return %c0_i32, %c0_i32_0 : i32, i32
  }
  func.func @transform_3(%arg0: i32) -> (i32, i32, i32) {
    %c0_i32 = arith.constant 0 : i32
    %c0_i32_0 = arith.constant 0 : i32
    %c0_i32_1 = arith.constant 0 : i32
    return %arg0, %c0_i32, %c0_i32_0 : i32, i32, i32
  }
  func.func @transform_4(%arg0: i32) -> (i32, i32, i32) {
    %c0_i32 = arith.constant 0 : i32
    %c0_i32_0 = arith.constant 0 : i32
    %c0_i32_1 = arith.constant 0 : i32
    return %arg0, %c0_i32, %c0_i32_0 : i32, i32, i32
  }
  func.func @transform_5(%arg0: i32) -> (i32, i32, i32) {
    %c0_i32 = arith.constant 0 : i32
    %c0_i32_0 = arith.constant 0 : i32
    %c0_i32_1 = arith.constant 0 : i32
    return %arg0, %c0_i32, %c0_i32_0 : i32, i32, i32
  }
  func.func @transform_6(%arg0: i32) -> (i32, i32, i32) {
    %c0_i32 = arith.constant 0 : i32
    %c0_i32_0 = arith.constant 0 : i32
    %c0_i32_1 = arith.constant 0 : i32
    return %arg0, %c0_i32, %c0_i32_0 : i32, i32, i32
  }
}

module attributes {stable_mosaic.version = 11 : i64} {
  func.func @_coattention_kernel(%arg0: i32, %arg1: memref<16x16x128xf32, #tpu.memory_space<vmem>>, %arg2: memref<16x24x128xf32, #tpu.memory_space<vmem>>, %arg3: memref<128x128xf32, #tpu.memory_space<vmem>>, %arg4: memref<16x16x1xf32, #tpu.memory_space<vmem>>, %arg5: memref<16x1x24xf32, #tpu.memory_space<vmem>>, %arg6: memref<16x16x128xf32, #tpu.memory_space<vmem>>, %arg7: memref<16x24x128xf32, #tpu.memory_space<vmem>>) attributes {dimension_semantics = [#tpu.dimension_semantics<parallel>], iteration_bounds = array<i64: 1>, scalar_prefetch = 0 : i64, scratch_operands = 0 : i64, tpu.core_type = #tpu.core_type<tc>, window_params = [{transform_indices = @transform_0, window_bounds = array<i64: 16, 16, 128>}, {transform_indices = @transform_1, window_bounds = array<i64: 16, 24, 128>}, {pipeline_mode = #tpu.pipeline_mode<synchronous>, transform_indices = @transform_2, window_bounds = array<i64: 128, 128>}, {transform_indices = @transform_3, window_bounds = array<i64: 16, 16, 1>}, {transform_indices = @transform_4, window_bounds = array<i64: 16, 1, 24>}, {transform_indices = @transform_5, window_bounds = array<i64: 16, 16, 128>}, {transform_indices = @transform_6, window_bounds = array<i64: 16, 24, 128>}]} {
    %c0 = arith.constant 0 : index
    %c0_0 = arith.constant 0 : index
    %c0_1 = arith.constant 0 : index
    %0 = vector.load %arg1[%c0, %c0_0, %c0_1] : memref<16x16x128xf32, #tpu.memory_space<vmem>>, vector<16x16x128xf32>
    %c0_2 = arith.constant 0 : index
    %c0_3 = arith.constant 0 : index
    %c0_4 = arith.constant 0 : index
    %1 = vector.load %arg2[%c0_2, %c0_3, %c0_4] : memref<16x24x128xf32, #tpu.memory_space<vmem>>, vector<16x24x128xf32>
    %c0_5 = arith.constant 0 : index
    %c0_6 = arith.constant 0 : index
    %2 = vector.load %arg3[%c0_5, %c0_6] : memref<128x128xf32, #tpu.memory_space<vmem>>, vector<128x128xf32>
    %c0_7 = arith.constant 0 : index
    %c0_8 = arith.constant 0 : index
    %c0_9 = arith.constant 0 : index
    %3 = vector.load %arg4[%c0_7, %c0_8, %c0_9] : memref<16x16x1xf32, #tpu.memory_space<vmem>>, vector<16x16x1xf32>
    %c0_10 = arith.constant 0 : index
    %c0_11 = arith.constant 0 : index
    %c0_12 = arith.constant 0 : index
    %4 = vector.load %arg5[%c0_10, %c0_11, %c0_12] : memref<16x1x24xf32, #tpu.memory_space<vmem>>, vector<16x1x24xf32>
    %5 = vector.shape_cast %0 : vector<16x16x128xf32> to vector<256x128xf32>
    %cst = arith.constant dense<0.000000e+00> : vector<256x128xf32>
    %6 = tpu.matmul %5, %2, %cst {dimension_numbers = #tpu.dot_dimension_numbers<[1], [0], [0], [1], [0, 0, 1, 1], [], []>} : vector<256x128xf32>, vector<128x128xf32>, vector<256x128xf32> -> vector<256x128xf32>
    %7 = vector.shape_cast %6 : vector<256x128xf32> to vector<16x16x128xf32>
    "tpu.trace_start"() <{level = 10 : i32, message = "ble,bte->blt"}> : () -> ()
    %cst_13 = arith.constant dense<0.000000e+00> : vector<16x16x24xf32>
    %8 = tpu.matmul %7, %1, %cst_13 {dimension_numbers = #tpu.dot_dimension_numbers<[2], [2], [1], [1], [0, 0, 0, 1, 1, 1], [0], [0]>} : vector<16x16x128xf32>, vector<16x24x128xf32>, vector<16x16x24xf32> -> vector<16x16x24xf32>
    "tpu.trace_stop"() : () -> ()
    %9 = vector.broadcast %3 : vector<16x16x1xf32> to vector<16x16x24xf32>
    %10 = vector.broadcast %4 : vector<16x1x24xf32> to vector<16x16x24xf32>
    %11 = arith.addf %9, %10 : vector<16x16x24xf32>
    %cst_14 = arith.constant 0.000000e+00 : f32
    %12 = vector.broadcast %cst_14 : f32 to vector<16x16x24xf32>
    %13 = arith.cmpf ogt, %11, %12 : vector<16x16x24xf32>
    %cst_15 = arith.constant 0.000000e+00 : f32
    %14 = vector.broadcast %cst_15 : f32 to vector<16x16x24xf32>
    %15 = arith.maximumf %8, %14 : vector<16x16x24xf32>
    %cst_16 = arith.constant -1.000000e+04 : f32
    %16 = vector.broadcast %cst_16 : f32 to vector<16x16x24xf32>
    %17 = arith.select %13, %16, %15 : vector<16x16x24xi1>, vector<16x16x24xf32>
    %cst_17 = arith.constant dense<0xFF800000> : vector<16x16xf32>
    %18 = vector.multi_reduction <maximumf>, %17, %cst_17 [2] : vector<16x16x24xf32> to vector<16x16xf32>
    %19 = vector.shape_cast %18 : vector<16x16xf32> to vector<16x16x1xf32>
    %cst_18 = arith.constant dense<0xFF800000> : vector<16x24xf32>
    %20 = vector.multi_reduction <maximumf>, %17, %cst_18 [1] : vector<16x16x24xf32> to vector<16x24xf32>
    %21 = vector.shape_cast %20 : vector<16x24xf32> to vector<16x1x24xf32>
    %22 = vector.broadcast %19 : vector<16x16x1xf32> to vector<16x16x24xf32>
    %23 = arith.subf %17, %22 : vector<16x16x24xf32>
    %24 = math.exp %23 : vector<16x16x24xf32>
    %25 = vector.broadcast %21 : vector<16x1x24xf32> to vector<16x16x24xf32>
    %26 = arith.subf %17, %25 : vector<16x16x24xf32>
    %27 = math.exp %26 : vector<16x16x24xf32>
    %cst_19 = arith.constant dense<0.000000e+00> : vector<16x16xf32>
    %28 = vector.multi_reduction <add>, %24, %cst_19 [2] : vector<16x16x24xf32> to vector<16x16xf32>
    %29 = vector.shape_cast %28 : vector<16x16xf32> to vector<16x16x1xf32>
    "tpu.trace_start"() <{level = 10 : i32, message = "blt,btd->bld"}> : () -> ()
    %cst_20 = arith.constant dense<0.000000e+00> : vector<16x16x128xf32>
    %30 = tpu.matmul %24, %1, %cst_20 {dimension_numbers = #tpu.dot_dimension_numbers<[2], [1], [1], [2], [0, 0, 0, 1, 1, 2], [0], [0]>} : vector<16x16x24xf32>, vector<16x24x128xf32>, vector<16x16x128xf32> -> vector<16x16x128xf32>
    "tpu.trace_stop"() : () -> ()
    %31 = tpu.reciprocal %29 {approx = true} : vector<16x16x1xf32> -> vector<16x16x1xf32>
    %32 = arith.mulf %29, %31 : vector<16x16x1xf32>
    %cst_21 = arith.constant 2.000000e+00 : f32
    %33 = vector.broadcast %cst_21 : f32 to vector<16x16x1xf32>
    %34 = arith.subf %33, %32 : vector<16x16x1xf32>
    %35 = arith.mulf %31, %34 : vector<16x16x1xf32>
    %36 = vector.broadcast %35 : vector<16x16x1xf32> to vector<16x16x128xf32>
    %37 = arith.mulf %30, %36 : vector<16x16x128xf32>
    %c0_22 = arith.constant 0 : index
    %c0_23 = arith.constant 0 : index
    %c0_24 = arith.constant 0 : index
    %38 = vector.load %arg6[%c0_22, %c0_23, %c0_24] : memref<16x16x128xf32, #tpu.memory_space<vmem>>, vector<16x16x128xf32>
    tpu.vector_store %arg6[%c0_22, %c0_23, %c0_24], %37 {strides = array<i32>} : memref<16x16x128xf32, #tpu.memory_space<vmem>>, vector<16x16x128xf32>,
    %cst_25 = arith.constant dense<0.000000e+00> : vector<16x24xf32>
    %39 = vector.multi_reduction <add>, %27, %cst_25 [1] : vector<16x16x24xf32> to vector<16x24xf32>
    %40 = vector.shape_cast %39 : vector<16x24xf32> to vector<16x1x24xf32>
    %41 = tpu.reciprocal %40 {approx = true} : vector<16x1x24xf32> -> vector<16x1x24xf32>
    %42 = arith.mulf %40, %41 : vector<16x1x24xf32>
    %cst_26 = arith.constant 2.000000e+00 : f32
    %43 = vector.broadcast %cst_26 : f32 to vector<16x1x24xf32>
    %44 = arith.subf %43, %42 : vector<16x1x24xf32>
    %45 = arith.mulf %41, %44 : vector<16x1x24xf32>
    %46 = vector.broadcast %45 : vector<16x1x24xf32> to vector<16x16x24xf32>
    %47 = arith.mulf %27, %46 : vector<16x16x24xf32>
    %48 = tpu.transpose %47, [0, 2, 1] : vector<16x16x24xf32> -> vector<16x24x16xf32>
    "tpu.trace_start"() <{level = 10 : i32, message = "btl,bld->btd"}> : () -> ()
    %cst_27 = arith.constant dense<0.000000e+00> : vector<16x24x128xf32>
    %49 = tpu.matmul %48, %0, %cst_27 {dimension_numbers = #tpu.dot_dimension_numbers<[2], [1], [1], [2], [0, 0, 0, 1, 1, 2], [0], [0]>} : vector<16x24x16xf32>, vector<16x16x128xf32>, vector<16x24x128xf32> -> vector<16x24x128xf32>
    "tpu.trace_stop"() : () -> ()
    %c0_28 = arith.constant 0 : index
    %c0_29 = arith.constant 0 : index
    %c0_30 = arith.constant 0 : index
    %50 = vector.load %arg7[%c0_28, %c0_29, %c0_30] : memref<16x24x128xf32, #tpu.memory_space<vmem>>, vector<16x24x128xf32>
    tpu.vector_store %arg7[%c0_28, %c0_29, %c0_30], %49 {strides = array<i32>} : memref<16x24x128xf32, #tpu.memory_space<vmem>>, vector<16x24x128xf32>,
    return
  }
  func.func @transform_0(%arg0: i32) -> (i32, i32, i32) {
    %c0_i32 = arith.constant 0 : i32
    %c0_i32_0 = arith.constant 0 : i32
    %c0_i32_1 = arith.constant 0 : i32
    return %arg0, %c0_i32, %c0_i32_0 : i32, i32, i32
  }
  func.func @transform_1(%arg0: i32) -> (i32, i32, i32) {
    %c0_i32 = arith.constant 0 : i32
    %c0_i32_0 = arith.constant 0 : i32
    %c0_i32_1 = arith.constant 0 : i32
    return %arg0, %c0_i32, %c0_i32_0 : i32, i32, i32
  }
  func.func @transform_2(%arg0: i32) -> (i32, i32) {
    %c0_i32 = arith.constant 0 : i32
    %c0_i32_0 = arith.constant 0 : i32
    %c0_i32_1 = arith.constant 0 : i32
    return %c0_i32, %c0_i32_0 : i32, i32
  }
  func.func @transform_3(%arg0: i32) -> (i32, i32, i32) {
    %c0_i32 = arith.constant 0 : i32
    %c0_i32_0 = arith.constant 0 : i32
    %c0_i32_1 = arith.constant 0 : i32
    return %arg0, %c0_i32, %c0_i32_0 : i32, i32, i32
  }
  func.func @transform_4(%arg0: i32) -> (i32, i32, i32) {
    %c0_i32 = arith.constant 0 : i32
    %c0_i32_0 = arith.constant 0 : i32
    %c0_i32_1 = arith.constant 0 : i32
    return %arg0, %c0_i32, %c0_i32_0 : i32, i32, i32
  }
  func.func @transform_5(%arg0: i32) -> (i32, i32, i32) {
    %c0_i32 = arith.constant 0 : i32
    %c0_i32_0 = arith.constant 0 : i32
    %c0_i32_1 = arith.constant 0 : i32
    return %arg0, %c0_i32, %c0_i32_0 : i32, i32, i32
  }
  func.func @transform_6(%arg0: i32) -> (i32, i32, i32) {
    %c0_i32 = arith.constant 0 : i32
    %c0_i32_0 = arith.constant 0 : i32
    %c0_i32_1 = arith.constant 0 : i32
    return %arg0, %c0_i32, %c0_i32_0 : i32, i32, i32
  }
}

</mosaic_0001>

<llo_original>
// kernel: tpu_custom_call.1
$region0: #{tpu_custom_call.1}
  #allocation0 [shape = 'u32[]', space=smem, size = 0x4, offset = 0x4, fixed_abs, tag = 'smem constant byte address 0x4 - core index']
  #allocation1 [shape = 'u32[144,128]{1,0:T(1,128)}', space=vmem, size = 0x12000, scoped, tag = 'internal scratch']
  %s0 = inlined_call_operand.vmem [shape: f32[16,16,128], index: 0, kind: input, shape index: {}]
  %s1 = inlined_call_operand.hbm [shape: f32[16,24,128], index: 1, kind: input, shape index: {}]
  %s2 = inlined_call_operand.hbm [shape: f32[128,128], index: 2, kind: input, shape index: {}]
  %s3 = inlined_call_operand.vmem [shape: f32[16,16,1], index: 3, kind: input, shape index: {}]
  %s4 = inlined_call_operand.vmem [shape: f32[16,1,24], index: 4, kind: input, shape index: {}]
  %s5 = inlined_call_operand.hbm [shape: f32[16,16,128], index: 5, kind: output, shape index: {0}]
  %s6 = inlined_call_operand.hbm [shape: f32[16,24,128], index: 6, kind: output, shape index: {1}]
  %7 = xla_tuple %s5, %s6
  %s8 = sld [smem:[#allocation0]]
  $region46: #{tpu_custom_call.1} parent=0
    _
  %s10 = ssub.s32 1, %s8
  %s11 = scalar_select 0, %s10, %s8
  $region1: #{tpu_custom_call.1} parent=0
    #allocation2 [shape = 'u8[196608]{0}', space=vmem, size = 0x30000, scoped, tag = 'input window, operand 1, single buffered']
    #allocation3 [shape = 's32[1]{0}', space=sflag, size = 0x4, scoped, tag = 'scoped memory for tpu_custom_call.1']
    #allocation4 [shape = 's32[1]{0}', space=sflag, size = 0x4, scoped, tag = 'scoped memory for tpu_custom_call.1']
    #allocation5 [shape = 'u8[65536]{0}', space=vmem, size = 0x10000, scoped, tag = 'input window, operand 2, single buffered']
    #allocation6 [shape = 's32[1]{0}', space=sflag, size = 0x4, scoped, tag = 'scoped memory for tpu_custom_call.1']
    #allocation7 [shape = 'u8[131072]{0}', space=vmem, size = 0x20000, scoped, tag = 'output window, operand 0, single buffered']
    #allocation8 [shape = 'u8[196608]{0}', space=vmem, size = 0x30000, scoped, tag = 'output window, operand 1, single buffered']
    #allocation9 [shape = 's32[1]{0}', space=sflag, size = 0x4, scoped, tag = 'scoped memory for tpu_custom_call.1']
    %12 = vsyncpa [#allocation3], 0
    %13 = vsyncpa [#allocation6], 0
    %14 = vsyncpa [#allocation4], 0
    %15 = vsyncpa [#allocation9], 0
    // Predicated region
    $region2: #{tpu_custom_call.1} parent=1 // pred_check
      _
    $region3: #{tpu_custom_call.1} parent=1 // pred_check_branch
      %17 = sbr.rel (0) target = $region5
    $region4: #{tpu_custom_call.1} parent=1 // pred_region
      _
    $region5: #{tpu_custom_call.1} parent=1 // pred_fallthru
      _
    // Predicated region
    $region6: #{tpu_custom_call.1} parent=1 // pred_check
      _
    $region7: #{tpu_custom_call.1} parent=1 // pred_check_branch
      %19 = sbr.rel (0) target = $region9
    $region8: #{tpu_custom_call.1} parent=1 // pred_region
      %s21 = ssub.s32 6144, 6144
      %22 = vsyncadd [#allocation3], %s21
      %s23 = sshll.u32 [#allocation2], 4
      %s24 = int_to_ptr.vmem [resolvable:$true] %s23
      %29 = dma.hbm_to_vmem [thread:$0]  %s1, 6144, %s24, [#allocation3], 128, 128, 8
    $region9: #{tpu_custom_call.1} parent=1 // pred_fallthru
      _
    // Predicated region
    $region10: #{tpu_custom_call.1} parent=1 // pred_check
      _
    $region11: #{tpu_custom_call.1} parent=1 // pred_check_branch
      %31 = sbr.rel (0) target = $region13
    $region12: #{tpu_custom_call.1} parent=1 // pred_region
      %s33 = ssub.s32 2048, 2048
      %34 = vsyncadd [#allocation6], %s33
      %s35 = sshll.u32 [#allocation5], 4
      %s36 = int_to_ptr.vmem [resolvable:$true] %s35
      %41 = dma.hbm_to_vmem [thread:$0]  %s2, 2048, %s36, [#allocation6], 128, 128, 8
    $region13: #{tpu_custom_call.1} parent=1 // pred_fallthru
      _
    // Predicated region
    $region14: #{tpu_custom_call.1} parent=1 // pred_check
      _
    $region15: #{tpu_custom_call.1} parent=1 // pred_check_branch
      %43 = sbr.rel (0) target = $region17
    $region16: #{tpu_custom_call.1} parent=1 // pred_region
      _
    $region17: #{tpu_custom_call.1} parent=1 // pred_fallthru
      _
    // Predicated region
    $region18: #{tpu_custom_call.1} parent=1 // pred_check
      _
    $region19: #{tpu_custom_call.1} parent=1 // pred_check_branch
      %45 = sbr.rel (0) target = $region21
    $region20: #{tpu_custom_call.1} parent=1 // pred_region
      _
    $region21: #{tpu_custom_call.1} parent=1 // pred_fallthru
      _
    // Predicated region
    $region22: #{tpu_custom_call.1} parent=1 // pred_check
      _
    $region23: #{tpu_custom_call.1} parent=1 // pred_check_branch
      %47 = sbr.rel (0) target = $region25
    $region24: #{tpu_custom_call.1} parent=1 // pred_region
      %48 = dma.done [#allocation3], 6144
    $region25: #{tpu_custom_call.1} parent=1 // pred_fallthru
      _
    // Predicated region
    $region26: #{tpu_custom_call.1} parent=1 // pred_check
      _
    $region27: #{tpu_custom_call.1} parent=1 // pred_check_branch
      %50 = sbr.rel (0) target = $region29
    $region28: #{tpu_custom_call.1} parent=1 // pred_region
      %51 = dma.done [#allocation6], 2048
    $region29: #{tpu_custom_call.1} parent=1 // pred_fallthru
      _
    %v52 = vld [vmem:[%s0] sm:$0xff]
    %v53 = vld [vmem:[%s0 + $0x8] sm:$0xff]
    %v54 = vld [vmem:[%s0 + $0x10] sm:$0xff]
    %v55 = vld [vmem:[%s0 + $0x18] sm:$0xff]
    %v56 = vld [vmem:[%s0 + $0x20] sm:$0xff]
    %v57 = vld [vmem:[%s0 + $0x28] sm:$0xff]
    %v58 = vld [vmem:[%s0 + $0x30] sm:$0xff]
    %v59 = vld [vmem:[%s0 + $0x38] sm:$0xff]
    %v60 = vld [vmem:[%s0 + $0x40] sm:$0xff]
    %v61 = vld [vmem:[%s0 + $0x48] sm:$0xff]
    %v62 = vld [vmem:[%s0 + $0x50] sm:$0xff]
    %v63 = vld [vmem:[%s0 + $0x58] sm:$0xff]
    %v64 = vld [vmem:[%s0 + $0x60] sm:$0xff]
    %v65 = vld [vmem:[%s0 + $0x68] sm:$0xff]
    %v66 = vld [vmem:[%s0 + $0x70] sm:$0xff]
    %v67 = vld [vmem:[%s0 + $0x78] sm:$0xff]
    %v68 = vld [vmem:[%s0 + $0x80] sm:$0xff]
    %v69 = vld [vmem:[%s0 + $0x88] sm:$0xff]
    %v70 = vld [vmem:[%s0 + $0x90] sm:$0xff]
    %v71 = vld [vmem:[%s0 + $0x98] sm:$0xff]
    %v72 = vld [vmem:[%s0 + $0xa0] sm:$0xff]
    %v73 = vld [vmem:[%s0 + $0xa8] sm:$0xff]
    %v74 = vld [vmem:[%s0 + $0xb0] sm:$0xff]
    %v75 = vld [vmem:[%s0 + $0xb8] sm:$0xff]
    %v76 = vld [vmem:[%s0 + $0xc0] sm:$0xff]
    %v77 = vld [vmem:[%s0 + $0xc8] sm:$0xff]
    %v78 = vld [vmem:[%s0 + $0xd0] sm:$0xff]
    %v79 = vld [vmem:[%s0 + $0xd8] sm:$0xff]
    %v80 = vld [vmem:[%s0 + $0xe0] sm:$0xff]
    %v81 = vld [vmem:[%s0 + $0xe8] sm:$0xff]
    %v82 = vld [vmem:[%s0 + $0xf0] sm:$0xff]
    %v83 = vld [vmem:[%s0 + $0xf8] sm:$0xff]
    %v84 = vld [vmem:[#allocation2] sm:$0xff]
    %v85 = vld [vmem:[#allocation2 + $0x8] sm:$0xff]
    %v86 = vld [vmem:[#allocation2 + $0x10] sm:$0xff]
    %v87 = vld [vmem:[#allocation2 + $0x18] sm:$0xff]
    %v88 = vld [vmem:[#allocation2 + $0x20] sm:$0xff]
    %v89 = vld [vmem:[#allocation2 + $0x28] sm:$0xff]
    %v90 = vld [vmem:[#allocation2 + $0x30] sm:$0xff]
    %v91 = vld [vmem:[#allocation2 + $0x38] sm:$0xff]
    %v92 = vld [vmem:[#allocation2 + $0x40] sm:$0xff]
    %v93 = vld [vmem:[#allocation2 + $0x48] sm:$0xff]
    %v94 = vld [vmem:[#allocation2 + $0x50] sm:$0xff]
    %v95 = vld [vmem:[#allocation2 + $0x58] sm:$0xff]
    %v96 = vld [vmem:[#allocation2 + $0x60] sm:$0xff]
    %v97 = vld [vmem:[#allocation2 + $0x68] sm:$0xff]
    %v98 = vld [vmem:[#allocation2 + $0x70] sm:$0xff]
    %v99 = vld [vmem:[#allocation2 + $0x78] sm:$0xff]
    %v100 = vld [vmem:[#allocation2 + $0x80] sm:$0xff]
    %v101 = vld [vmem:[#allocation2 + $0x88] sm:$0xff]
    %v102 = vld [vmem:[#allocation2 + $0x90] sm:$0xff]
    %v103 = vld [vmem:[#allocation2 + $0x98] sm:$0xff]
    %v104 = vld [vmem:[#allocation2 + $0xa0] sm:$0xff]
    %v105 = vld [vmem:[#allocation2 + $0xa8] sm:$0xff]
    %v106 = vld [vmem:[#allocation2 + $0xb0] sm:$0xff]
    %v107 = vld [vmem:[#allocation2 + $0xb8] sm:$0xff]
    %v108 = vld [vmem:[#allocation2 + $0xc0] sm:$0xff]
    %v109 = vld [vmem:[#allocation2 + $0xc8] sm:$0xff]
    %v110 = vld [vmem:[#allocation2 + $0xd0] sm:$0xff]
    %v111 = vld [vmem:[#allocation2 + $0xd8] sm:$0xff]
    %v112 = vld [vmem:[#allocation2 + $0xe0] sm:$0xff]
    %v113 = vld [vmem:[#allocation2 + $0xe8] sm:$0xff]
    %v114 = vld [vmem:[#allocation2 + $0xf0] sm:$0xff]
    %v115 = vld [vmem:[#allocation2 + $0xf8] sm:$0xff]
    %v116 = vld [vmem:[#allocation2 + $0x100] sm:$0xff]
    %v117 = vld [vmem:[#allocation2 + $0x108] sm:$0xff]
    %v118 = vld [vmem:[#allocation2 + $0x110] sm:$0xff]
    %v119 = vld [vmem:[#allocation2 + $0x118] sm:$0xff]
    %v120 = vld [vmem:[#allocation2 + $0x120] sm:$0xff]
    %v121 = vld [vmem:[#allocation2 + $0x128] sm:$0xff]
    %v122 = vld [vmem:[#allocation2 + $0x130] sm:$0xff]
    %v123 = vld [vmem:[#allocation2 + $0x138] sm:$0xff]
    %v124 = vld [vmem:[#allocation2 + $0x140] sm:$0xff]
    %v125 = vld [vmem:[#allocation2 + $0x148] sm:$0xff]
    %v126 = vld [vmem:[#allocation2 + $0x150] sm:$0xff]
    %v127 = vld [vmem:[#allocation2 + $0x158] sm:$0xff]
    %v128 = vld [vmem:[#allocation2 + $0x160] sm:$0xff]
    %v129 = vld [vmem:[#allocation2 + $0x168] sm:$0xff]
    %v130 = vld [vmem:[#allocation2 + $0x170] sm:$0xff]
    %v131 = vld [vmem:[#allocation2 + $0x178] sm:$0xff]
    %v132 = vld [vmem:[#allocation5] sm:$0xff]
    %v133 = vld [vmem:[#allocation5 + $0x8] sm:$0xff]
    %v134 = vld [vmem:[#allocation5 + $0x10] sm:$0xff]
    %v135 = vld [vmem:[#allocation5 + $0x18] sm:$0xff]
    %v136 = vld [vmem:[#allocation5 + $0x20] sm:$0xff]
    %v137 = vld [vmem:[#allocation5 + $0x28] sm:$0xff]
    %v138 = vld [vmem:[#allocation5 + $0x30] sm:$0xff]
    %v139 = vld [vmem:[#allocation5 + $0x38] sm:$0xff]
    %v140 = vld [vmem:[#allocation5 + $0x40] sm:$0xff]
    %v141 = vld [vmem:[#allocation5 + $0x48] sm:$0xff]
    %v142 = vld [vmem:[#allocation5 + $0x50] sm:$0xff]
    %v143 = vld [vmem:[#allocation5 + $0x58] sm:$0xff]
    %v144 = vld [vmem:[#allocation5 + $0x60] sm:$0xff]
    %v145 = vld [vmem:[#allocation5 + $0x68] sm:$0xff]
    %v146 = vld [vmem:[#allocation5 + $0x70] sm:$0xff]
    %v147 = vld [vmem:[#allocation5 + $0x78] sm:$0xff]
    %v148 = vld [vmem:[%s3] sm:$0xff]
    %v149 = vld [vmem:[%s3 + $0x8] sm:$0xff]
    %v150 = vld [vmem:[%s3 + $0x10] sm:$0xff]
    %v151 = vld [vmem:[%s3 + $0x18] sm:$0xff]
    %v152 = vld [vmem:[%s3 + $0x20] sm:$0xff]
    %v153 = vld [vmem:[%s3 + $0x28] sm:$0xff]
    %v154 = vld [vmem:[%s3 + $0x30] sm:$0xff]
    %v155 = vld [vmem:[%s3 + $0x38] sm:$0xff]
    %v156 = vld [vmem:[%s3 + $0x40] sm:$0xff]
    %v157 = vld [vmem:[%s3 + $0x48] sm:$0xff]
    %v158 = vld [vmem:[%s3 + $0x50] sm:$0xff]
    %v159 = vld [vmem:[%s3 + $0x58] sm:$0xff]
    %v160 = vld [vmem:[%s3 + $0x60] sm:$0xff]
    %v161 = vld [vmem:[%s3 + $0x68] sm:$0xff]
    %v162 = vld [vmem:[%s3 + $0x70] sm:$0xff]
    %v163 = vld [vmem:[%s3 + $0x78] sm:$0xff]
    %v164 = vld [vmem:[%s3 + $0x80] sm:$0xff]
    %v165 = vld [vmem:[%s3 + $0x88] sm:$0xff]
    %v166 = vld [vmem:[%s3 + $0x90] sm:$0xff]
    %v167 = vld [vmem:[%s3 + $0x98] sm:$0xff]
    %v168 = vld [vmem:[%s3 + $0xa0] sm:$0xff]
    %v169 = vld [vmem:[%s3 + $0xa8] sm:$0xff]
    %v170 = vld [vmem:[%s3 + $0xb0] sm:$0xff]
    %v171 = vld [vmem:[%s3 + $0xb8] sm:$0xff]
    %v172 = vld [vmem:[%s3 + $0xc0] sm:$0xff]
    %v173 = vld [vmem:[%s3 + $0xc8] sm:$0xff]
    %v174 = vld [vmem:[%s3 + $0xd0] sm:$0xff]
    %v175 = vld [vmem:[%s3 + $0xd8] sm:$0xff]
    %v176 = vld [vmem:[%s3 + $0xe0] sm:$0xff]
    %v177 = vld [vmem:[%s3 + $0xe8] sm:$0xff]
    %v178 = vld [vmem:[%s3 + $0xf0] sm:$0xff]
    %v179 = vld [vmem:[%s3 + $0xf8] sm:$0xff]
    %v180 = vld [vmem:[%s4] sm:$0x1]
    %v181 = vld [vmem:[%s4 + $0x1] sm:$0x1]
    %v182 = vld [vmem:[%s4 + $0x2] sm:$0x1]
    %v183 = vld [vmem:[%s4 + $0x3] sm:$0x1]
    %v184 = vld [vmem:[%s4 + $0x4] sm:$0x1]
    %v185 = vld [vmem:[%s4 + $0x5] sm:$0x1]
    %v186 = vld [vmem:[%s4 + $0x6] sm:$0x1]
    %v187 = vld [vmem:[%s4 + $0x7] sm:$0x1]
    %v188 = vld [vmem:[%s4 + $0x8] sm:$0x1]
    %v189 = vld [vmem:[%s4 + $0x9] sm:$0x1]
    %v190 = vld [vmem:[%s4 + $0xa] sm:$0x1]
    %v191 = vld [vmem:[%s4 + $0xb] sm:$0x1]
    %v192 = vld [vmem:[%s4 + $0xc] sm:$0x1]
    %v193 = vld [vmem:[%s4 + $0xd] sm:$0x1]
    %v194 = vld [vmem:[%s4 + $0xe] sm:$0x1]
    %v195 = vld [vmem:[%s4 + $0xf] sm:$0x1]
    %196 = vmatprep.subr.mxu0 0.0
    %197 = vmatpush1.msra.mxu0 %v147
    %198 = vmatprep.subr.mxu0 0.0
    %199 = vmatpush1.msra.mxu0 %v146
    %200 = vmatprep.subr.mxu0 0.0
    %201 = vmatpush1.msra.mxu0 %v145
    %202 = vmatprep.subr.mxu0 0.0
    %203 = vmatpush1.msra.mxu0 %v144
    %204 = vmatprep.subr.mxu0 0.0
    %205 = vmatpush1.msra.mxu0 %v143
    %206 = vmatprep.subr.mxu0 0.0
    %207 = vmatpush1.msra.mxu0 %v142
    %208 = vmatprep.subr.mxu0 0.0
    %209 = vmatpush1.msra.mxu0 %v141
    %210 = vmatprep.subr.mxu0 0.0
    %211 = vmatpush1.msra.mxu0 %v140
    %212 = vmatprep.subr.mxu0 0.0
    %213 = vmatpush1.msra.mxu0 %v139
    %214 = vmatprep.subr.mxu0 0.0
    %215 = vmatpush1.msra.mxu0 %v138
    %216 = vmatprep.subr.mxu0 0.0
    %217 = vmatpush1.msra.mxu0 %v137
    %218 = vmatprep.subr.mxu0 0.0
    %219 = vmatpush1.msra.mxu0 %v136
    %220 = vmatprep.subr.mxu0 0.0
    %221 = vmatpush1.msra.mxu0 %v135
    %222 = vmatprep.subr.mxu0 0.0
    %223 = vmatpush1.msra.mxu0 %v134
    %224 = vmatprep.subr.mxu0 0.0
    %225 = vmatpush1.msra.mxu0 %v133
    %226 = vmatprep.subr.mxu0 0.0
    %227 = vmatpush1.msra.mxu0 %v132
    %228 = vmatprep.subr.mxu0 0.0
    %229 = vmatpush2.msra.mxu0 0.0
    %230 = vmatprep.subr.mxu0 0.0
    %231 = vmatpush2.msra.mxu0 0.0
    %232 = vmatprep.subr.mxu0 0.0
    %233 = vmatpush2.msra.mxu0 0.0
    %234 = vmatprep.subr.mxu0 0.0
    %235 = vmatpush2.msra.mxu0 0.0
    %236 = vmatprep.subr.mxu0 0.0
    %237 = vmatpush2.msra.mxu0 0.0
    %238 = vmatprep.subr.mxu0 0.0
    %239 = vmatpush2.msra.mxu0 0.0
    %240 = vmatprep.subr.mxu0 0.0
    %241 = vmatpush2.msra.mxu0 0.0
    %242 = vmatprep.subr.mxu0 0.0
    %243 = vmatpush2.msra.mxu0 0.0
    %244 = vmatprep.subr.mxu0 0.0
    %245 = vmatpush2.msra.mxu0 0.0
    %246 = vmatprep.subr.mxu0 0.0
    %247 = vmatpush2.msra.mxu0 0.0
    %248 = vmatprep.subr.mxu0 0.0
    %249 = vmatpush2.msra.mxu0 0.0
    %250 = vmatprep.subr.mxu0 0.0
    %251 = vmatpush2.msra.mxu0 0.0
    %252 = vmatprep.subr.mxu0 0.0
    %253 = vmatpush2.msra.mxu0 0.0
    %254 = vmatprep.subr.mxu0 0.0
    %255 = vmatpush2.msra.mxu0 0.0
    %256 = vmatprep.subr.mxu0 0.0
    %257 = vmatpush2.msra.mxu0 0.0
    %258 = vmatprep.subr.mxu0 0.0
    %259 = vmatpush2.msra.mxu0 0.0
    %260 = vmatprep.mubr.f32.mxu0 0.0
    %261 = vmatmul.mubr.f32.gmra.mxu0 %v52
    %v262 = vpop.f32.mrf.mxu0
    %v263 = vadd.f32 0.0, %v262
    %v264 = vpop.f32.mrf.mxu0
    %265 = vmatprep.mubr.f32.mxu0 0.0
    %266 = vmatmul.mubr.f32.gmra.mxu0 %v53
    %v267 = vpop.f32.mrf.mxu0
    %v268 = vadd.f32 0.0, %v267
    %v269 = vpop.f32.mrf.mxu0
    %270 = vmatprep.mubr.f32.mxu0 0.0
    %271 = vmatmul.mubr.f32.gmra.mxu0 %v54
    %v272 = vpop.f32.mrf.mxu0
    %v273 = vadd.f32 0.0, %v272
    %v274 = vpop.f32.mrf.mxu0
    %275 = vmatprep.mubr.f32.mxu0 0.0
    %276 = vmatmul.mubr.f32.gmra.mxu0 %v55
    %v277 = vpop.f32.mrf.mxu0
    %v278 = vadd.f32 0.0, %v277
    %v279 = vpop.f32.mrf.mxu0
    %280 = vmatprep.mubr.f32.mxu0 0.0
    %281 = vmatmul.mubr.f32.gmra.mxu0 %v56
    %v282 = vpop.f32.mrf.mxu0
    %v283 = vadd.f32 0.0, %v282
    %v284 = vpop.f32.mrf.mxu0
    %285 = vmatprep.mubr.f32.mxu0 0.0
    %286 = vmatmul.mubr.f32.gmra.mxu0 %v57
    %v287 = vpop.f32.mrf.mxu0
    %v288 = vadd.f32 0.0, %v287
    %v289 = vpop.f32.mrf.mxu0
    %290 = vmatprep.mubr.f32.mxu0 0.0
    %291 = vmatmul.mubr.f32.gmra.mxu0 %v58
    %v292 = vpop.f32.mrf.mxu0
    %v293 = vadd.f32 0.0, %v292
    %v294 = vpop.f32.mrf.mxu0
    %295 = vmatprep.mubr.f32.mxu0 0.0
    %296 = vmatmul.mubr.f32.gmra.mxu0 %v59
    %v297 = vpop.f32.mrf.mxu0
    %v298 = vadd.f32 0.0, %v297
    %v299 = vpop.f32.mrf.mxu0
    %300 = vmatprep.mubr.f32.mxu0 0.0
    %301 = vmatmul.mubr.f32.gmra.mxu0 %v60
    %v302 = vpop.f32.mrf.mxu0
    %v303 = vadd.f32 0.0, %v302
    %v304 = vpop.f32.mrf.mxu0
    %305 = vmatprep.mubr.f32.mxu0 0.0
    %306 = vmatmul.mubr.f32.gmra.mxu0 %v61
    %v307 = vpop.f32.mrf.mxu0
    %v308 = vadd.f32 0.0, %v307
    %v309 = vpop.f32.mrf.mxu0
    %310 = vmatprep.mubr.f32.mxu0 0.0
    %311 = vmatmul.mubr.f32.gmra.mxu0 %v62
    %v312 = vpop.f32.mrf.mxu0
    %v313 = vadd.f32 0.0, %v312
    %v314 = vpop.f32.mrf.mxu0
    %315 = vmatprep.mubr.f32.mxu0 0.0
    %316 = vmatmul.mubr.f32.gmra.mxu0 %v63
    %v317 = vpop.f32.mrf.mxu0
    %v318 = vadd.f32 0.0, %v317
    %v319 = vpop.f32.mrf.mxu0
    %320 = vmatprep.mubr.f32.mxu0 0.0
    %321 = vmatmul.mubr.f32.gmra.mxu0 %v64
    %v322 = vpop.f32.mrf.mxu0
    %v323 = vadd.f32 0.0, %v322
    %v324 = vpop.f32.mrf.mxu0
    %325 = vmatprep.mubr.f32.mxu0 0.0
    %326 = vmatmul.mubr.f32.gmra.mxu0 %v65
    %v327 = vpop.f32.mrf.mxu0
    %v328 = vadd.f32 0.0, %v327
    %v329 = vpop.f32.mrf.mxu0
    %330 = vmatprep.mubr.f32.mxu0 0.0
    %331 = vmatmul.mubr.f32.gmra.mxu0 %v66
    %v332 = vpop.f32.mrf.mxu0
    %v333 = vadd.f32 0.0, %v332
    %v334 = vpop.f32.mrf.mxu0
    %335 = vmatprep.mubr.f32.mxu0 0.0
    %336 = vmatmul.mubr.f32.gmra.mxu0 %v67
    %v337 = vpop.f32.mrf.mxu0
    %v338 = vadd.f32 0.0, %v337
    %v339 = vpop.f32.mrf.mxu0
    %340 = vmatprep.mubr.f32.mxu0 0.0
    %341 = vmatmul.mubr.f32.gmra.mxu0 %v68
    %v342 = vpop.f32.mrf.mxu0
    %v343 = vadd.f32 0.0, %v342
    %v344 = vpop.f32.mrf.mxu0
    %345 = vmatprep.mubr.f32.mxu0 0.0
    %346 = vmatmul.mubr.f32.gmra.mxu0 %v69
    %v347 = vpop.f32.mrf.mxu0
    %v348 = vadd.f32 0.0, %v347
    %v349 = vpop.f32.mrf.mxu0
    %350 = vmatprep.mubr.f32.mxu0 0.0
    %351 = vmatmul.mubr.f32.gmra.mxu0 %v70
    %v352 = vpop.f32.mrf.mxu0
    %v353 = vadd.f32 0.0, %v352
    %v354 = vpop.f32.mrf.mxu0
    %355 = vmatprep.mubr.f32.mxu0 0.0
    %356 = vmatmul.mubr.f32.gmra.mxu0 %v71
    %v357 = vpop.f32.mrf.mxu0
    %v358 = vadd.f32 0.0, %v357
    %v359 = vpop.f32.mrf.mxu0
    %360 = vmatprep.mubr.f32.mxu0 0.0
    %361 = vmatmul.mubr.f32.gmra.mxu0 %v72
    %v362 = vpop.f32.mrf.mxu0
    %v363 = vadd.f32 0.0, %v362
    %v364 = vpop.f32.mrf.mxu0
    %365 = vmatprep.mubr.f32.mxu0 0.0
    %366 = vmatmul.mubr.f32.gmra.mxu0 %v73
    %v367 = vpop.f32.mrf.mxu0
    %v368 = vadd.f32 0.0, %v367
    %v369 = vpop.f32.mrf.mxu0
    %370 = vmatprep.mubr.f32.mxu0 0.0
    %371 = vmatmul.mubr.f32.gmra.mxu0 %v74
    %v372 = vpop.f32.mrf.mxu0
    %v373 = vadd.f32 0.0, %v372
    %v374 = vpop.f32.mrf.mxu0
    %375 = vmatprep.mubr.f32.mxu0 0.0
    %376 = vmatmul.mubr.f32.gmra.mxu0 %v75
    %v377 = vpop.f32.mrf.mxu0
    %v378 = vadd.f32 0.0, %v377
    %v379 = vpop.f32.mrf.mxu0
    %380 = vmatprep.mubr.f32.mxu0 0.0
    %381 = vmatmul.mubr.f32.gmra.mxu0 %v76
    %v382 = vpop.f32.mrf.mxu0
    %v383 = vadd.f32 0.0, %v382
    %v384 = vpop.f32.mrf.mxu0
    %385 = vmatprep.mubr.f32.mxu0 0.0
    %386 = vmatmul.mubr.f32.gmra.mxu0 %v77
    %v387 = vpop.f32.mrf.mxu0
    %v388 = vadd.f32 0.0, %v387
    %v389 = vpop.f32.mrf.mxu0
    %390 = vmatprep.mubr.f32.mxu0 0.0
    %391 = vmatmul.mubr.f32.gmra.mxu0 %v78
    %v392 = vpop.f32.mrf.mxu0
    %v393 = vadd.f32 0.0, %v392
    %v394 = vpop.f32.mrf.mxu0
    %395 = vmatprep.mubr.f32.mxu0 0.0
    %396 = vmatmul.mubr.f32.gmra.mxu0 %v79
    %v397 = vpop.f32.mrf.mxu0
    %v398 = vadd.f32 0.0, %v397
    %v399 = vpop.f32.mrf.mxu0
    %400 = vmatprep.mubr.f32.mxu0 0.0
    %401 = vmatmul.mubr.f32.gmra.mxu0 %v80
    %v402 = vpop.f32.mrf.mxu0
    %v403 = vadd.f32 0.0, %v402
    %v404 = vpop.f32.mrf.mxu0
    %405 = vmatprep.mubr.f32.mxu0 0.0
    %406 = vmatmul.mubr.f32.gmra.mxu0 %v81
    %v407 = vpop.f32.mrf.mxu0
    %v408 = vadd.f32 0.0, %v407
    %v409 = vpop.f32.mrf.mxu0
    %410 = vmatprep.mubr.f32.mxu0 0.0
    %411 = vmatmul.mubr.f32.gmra.mxu0 %v82
    %v412 = vpop.f32.mrf.mxu0
    %v413 = vadd.f32 0.0, %v412
    %v414 = vpop.f32.mrf.mxu0
    %415 = vmatprep.mubr.f32.mxu0 0.0
    %416 = vmatmul.mubr.f32.gmra.mxu0 %v83
    %v417 = vpop.f32.mrf.mxu0
    %v418 = vadd.f32 0.0, %v417
    %v419 = vpop.f32.mrf.mxu0
    %420 = vdwg.mxu0
    %421 = vmatprep.subr.mxu0 0.0
    %422 = vmatpush1.xpose.msra.mxu0 0.0
    %423 = vmatprep.subr.mxu0 0.0
    %424 = vmatpush1.xpose.msra.mxu0 0.0
    %425 = vmatprep.subr.mxu0 0.0
    %426 = vmatpush1.xpose.msra.mxu0 0.0
    %427 = vmatprep.subr.mxu0 0.0
    %428 = vmatpush1.xpose.msra.mxu0 0.0
    %429 = vmatprep.subr.mxu0 0.0
    %430 = vmatpush1.xpose.msra.mxu0 0.0
    %431 = vmatprep.subr.mxu0 0.0
    %432 = vmatpush1.xpose.msra.mxu0 0.0
    %433 = vmatprep.subr.mxu0 0.0
    %434 = vmatpush1.xpose.msra.mxu0 0.0
    %435 = vmatprep.subr.mxu0 0.0
    %436 = vmatpush1.xpose.msra.mxu0 0.0
    %437 = vmatprep.subr.mxu0 0.0
    %438 = vmatpush1.xpose.msra.mxu0 0.0
    %439 = vmatprep.subr.mxu0 0.0
    %440 = vmatpush1.xpose.msra.mxu0 0.0
    %441 = vmatprep.subr.mxu0 0.0
    %442 = vmatpush1.xpose.msra.mxu0 0.0
    %443 = vmatprep.subr.mxu0 0.0
    %444 = vmatpush1.xpose.msra.mxu0 0.0
    %445 = vmatprep.subr.mxu0 0.0
    %446 = vmatpush1.xpose.msra.mxu0 0.0
    %447 = vmatprep.subr.mxu0 0.0
    %448 = vmatpush1.xpose.msra.mxu0 %v86
    %449 = vmatprep.subr.mxu0 0.0
    %450 = vmatpush1.xpose.msra.mxu0 %v85
    %451 = vmatprep.subr.mxu0 0.0
    %452 = vmatpush1.xpose.msra.mxu0 %v84
    %453 = vmatprep.subr.mxu0 0.0
    %454 = vmatpush2.xpose.msra.mxu0 0.0
    %455 = vmatprep.subr.mxu0 0.0
    %456 = vmatpush2.xpose.msra.mxu0 0.0
    %457 = vmatprep.subr.mxu0 0.0
    %458 = vmatpush2.xpose.msra.mxu0 0.0
    %459 = vmatprep.subr.mxu0 0.0
    %460 = vmatpush2.xpose.msra.mxu0 0.0
    %461 = vmatprep.subr.mxu0 0.0
    %462 = vmatpush2.xpose.msra.mxu0 0.0
    %463 = vmatprep.subr.mxu0 0.0
    %464 = vmatpush2.xpose.msra.mxu0 0.0
    %465 = vmatprep.subr.mxu0 0.0
    %466 = vmatpush2.xpose.msra.mxu0 0.0
    %467 = vmatprep.subr.mxu0 0.0
    %468 = vmatpush2.xpose.msra.mxu0 0.0
    %469 = vmatprep.subr.mxu0 0.0
    %470 = vmatpush2.xpose.msra.mxu0 0.0
    %471 = vmatprep.subr.mxu0 0.0
    %472 = vmatpush2.xpose.msra.mxu0 0.0
    %473 = vmatprep.subr.mxu0 0.0
    %474 = vmatpush2.xpose.msra.mxu0 0.0
    %475 = vmatprep.subr.mxu0 0.0
    %476 = vmatpush2.xpose.msra.mxu0 0.0
    %477 = vmatprep.subr.mxu0 0.0
    %478 = vmatpush2.xpose.msra.mxu0 0.0
    %479 = vmatprep.subr.mxu0 0.0
    %480 = vmatpush2.xpose.msra.mxu0 0.0
    %481 = vmatprep.subr.mxu0 0.0
    %482 = vmatpush2.xpose.msra.mxu0 0.0
    %483 = vmatprep.subr.mxu0 0.0
    %484 = vmatpush2.xpose.msra.mxu0 0.0
    %485 = vmatprep.mubr.f32.mxu0 0.0
    %486 = vmatmul.mubr.f32.gmra.mxu0 %v263
    %v487 = vpop.f32.mrf.mxu0
    %v488 = vadd.f32 0.0, %v487
    %v489 = vpop.f32.mrf.mxu0
    %490 = vmatprep.mubr.f32.mxu0 0.0
    %491 = vmatmul.mubr.f32.gmra.mxu0 %v268
    %v492 = vpop.f32.mrf.mxu0
    %v493 = vadd.f32 0.0, %v492
    %v494 = vpop.f32.mrf.mxu0
    %495 = vdwg.mxu0
    %496 = vmatprep.subr.mxu0 0.0
    %497 = vmatpush1.xpose.msra.mxu0 0.0
    %498 = vmatprep.subr.mxu0 0.0
    %499 = vmatpush1.xpose.msra.mxu0 0.0
    %500 = vmatprep.subr.mxu0 0.0
    %501 = vmatpush1.xpose.msra.mxu0 0.0
    %502 = vmatprep.subr.mxu0 0.0
    %503 = vmatpush1.xpose.msra.mxu0 0.0
    %504 = vmatprep.subr.mxu0 0.0
    %505 = vmatpush1.xpose.msra.mxu0 0.0
    %506 = vmatprep.subr.mxu0 0.0
    %507 = vmatpush1.xpose.msra.mxu0 0.0
    %508 = vmatprep.subr.mxu0 0.0
    %509 = vmatpush1.xpose.msra.mxu0 0.0
    %510 = vmatprep.subr.mxu0 0.0
    %511 = vmatpush1.xpose.msra.mxu0 0.0
    %512 = vmatprep.subr.mxu0 0.0
    %513 = vmatpush1.xpose.msra.mxu0 0.0
    %514 = vmatprep.subr.mxu0 0.0
    %515 = vmatpush1.xpose.msra.mxu0 0.0
    %516 = vmatprep.subr.mxu0 0.0
    %517 = vmatpush1.xpose.msra.mxu0 0.0
    %518 = vmatprep.subr.mxu0 0.0
    %519 = vmatpush1.xpose.msra.mxu0 0.0
    %520 = vmatprep.subr.mxu0 0.0
    %521 = vmatpush1.xpose.msra.mxu0 0.0
    %522 = vmatprep.subr.mxu0 0.0
    %523 = vmatpush1.xpose.msra.mxu0 %v89
    %524 = vmatprep.subr.mxu0 0.0
    %525 = vmatpush1.xpose.msra.mxu0 %v88
    %526 = vmatprep.subr.mxu0 0.0
    %527 = vmatpush1.xpose.msra.mxu0 %v87
    %528 = vmatprep.subr.mxu0 0.0
    %529 = vmatpush2.xpose.msra.mxu0 0.0
    %530 = vmatprep.subr.mxu0 0.0
    %531 = vmatpush2.xpose.msra.mxu0 0.0
    %532 = vmatprep.subr.mxu0 0.0
    %533 = vmatpush2.xpose.msra.mxu0 0.0
    %534 = vmatprep.subr.mxu0 0.0
    %535 = vmatpush2.xpose.msra.mxu0 0.0
    %536 = vmatprep.subr.mxu0 0.0
    %537 = vmatpush2.xpose.msra.mxu0 0.0
    %538 = vmatprep.subr.mxu0 0.0
    %539 = vmatpush2.xpose.msra.mxu0 0.0
    %540 = vmatprep.subr.mxu0 0.0
    %541 = vmatpush2.xpose.msra.mxu0 0.0
    %542 = vmatprep.subr.mxu0 0.0
    %543 = vmatpush2.xpose.msra.mxu0 0.0
    %544 = vmatprep.subr.mxu0 0.0
    %545 = vmatpush2.xpose.msra.mxu0 0.0
    %546 = vmatprep.subr.mxu0 0.0
    %547 = vmatpush2.xpose.msra.mxu0 0.0
    %548 = vmatprep.subr.mxu0 0.0
    %549 = vmatpush2.xpose.msra.mxu0 0.0
    %550 = vmatprep.subr.mxu0 0.0
    %551 = vmatpush2.xpose.msra.mxu0 0.0
    %552 = vmatprep.subr.mxu0 0.0
    %553 = vmatpush2.xpose.msra.mxu0 0.0
    %554 = vmatprep.subr.mxu0 0.0
    %555 = vmatpush2.xpose.msra.mxu0 0.0
    %556 = vmatprep.subr.mxu0 0.0
    %557 = vmatpush2.xpose.msra.mxu0 0.0
    %558 = vmatprep.subr.mxu0 0.0
    %559 = vmatpush2.xpose.msra.mxu0 0.0
    %560 = vmatprep.mubr.f32.mxu0 0.0
    %561 = vmatmul.mubr.f32.gmra.mxu0 %v273
    %v562 = vpop.f32.mrf.mxu0
    %v563 = vadd.f32 0.0, %v562
    %v564 = vpop.f32.mrf.mxu0
    %565 = vmatprep.mubr.f32.mxu0 0.0
    %566 = vmatmul.mubr.f32.gmra.mxu0 %v278
    %v567 = vpop.f32.mrf.mxu0
    %v568 = vadd.f32 0.0, %v567
    %v569 = vpop.f32.mrf.mxu0
    %570 = vdwg.mxu0
    %571 = vmatprep.subr.mxu0 0.0
    %572 = vmatpush1.xpose.msra.mxu0 0.0
    %573 = vmatprep.subr.mxu0 0.0
    %574 = vmatpush1.xpose.msra.mxu0 0.0
    %575 = vmatprep.subr.mxu0 0.0
    %576 = vmatpush1.xpose.msra.mxu0 0.0
    %577 = vmatprep.subr.mxu0 0.0
    %578 = vmatpush1.xpose.msra.mxu0 0.0
    %579 = vmatprep.subr.mxu0 0.0
    %580 = vmatpush1.xpose.msra.mxu0 0.0
    %581 = vmatprep.subr.mxu0 0.0
    %582 = vmatpush1.xpose.msra.mxu0 0.0
    %583 = vmatprep.subr.mxu0 0.0
    %584 = vmatpush1.xpose.msra.mxu0 0.0
    %585 = vmatprep.subr.mxu0 0.0
    %586 = vmatpush1.xpose.msra.mxu0 0.0
    %587 = vmatprep.subr.mxu0 0.0
    %588 = vmatpush1.xpose.msra.mxu0 0.0
    %589 = vmatprep.subr.mxu0 0.0
    %590 = vmatpush1.xpose.msra.mxu0 0.0
    %591 = vmatprep.subr.mxu0 0.0
    %592 = vmatpush1.xpose.msra.mxu0 0.0
    %593 = vmatprep.subr.mxu0 0.0
    %594 = vmatpush1.xpose.msra.mxu0 0.0
    %595 = vmatprep.subr.mxu0 0.0
    %596 = vmatpush1.xpose.msra.mxu0 0.0
    %597 = vmatprep.subr.mxu0 0.0
    %598 = vmatpush1.xpose.msra.mxu0 %v92
    %599 = vmatprep.subr.mxu0 0.0
    %600 = vmatpush1.xpose.msra.mxu0 %v91
    %601 = vmatprep.subr.mxu0 0.0
    %602 = vmatpush1.xpose.msra.mxu0 %v90
    %603 = vmatprep.subr.mxu0 0.0
    %604 = vmatpush2.xpose.msra.mxu0 0.0
    %605 = vmatprep.subr.mxu0 0.0
    %606 = vmatpush2.xpose.msra.mxu0 0.0
    %607 = vmatprep.subr.mxu0 0.0
    %608 = vmatpush2.xpose.msra.mxu0 0.0
    %609 = vmatprep.subr.mxu0 0.0
    %610 = vmatpush2.xpose.msra.mxu0 0.0
    %611 = vmatprep.subr.mxu0 0.0
    %612 = vmatpush2.xpose.msra.mxu0 0.0
    %613 = vmatprep.subr.mxu0 0.0
    %614 = vmatpush2.xpose.msra.mxu0 0.0
    %615 = vmatprep.subr.mxu0 0.0
    %616 = vmatpush2.xpose.msra.mxu0 0.0
    %617 = vmatprep.subr.mxu0 0.0
    %618 = vmatpush2.xpose.msra.mxu0 0.0
    %619 = vmatprep.subr.mxu0 0.0
    %620 = vmatpush2.xpose.msra.mxu0 0.0
    %621 = vmatprep.subr.mxu0 0.0
    %622 = vmatpush2.xpose.msra.mxu0 0.0
    %623 = vmatprep.subr.mxu0 0.0
    %624 = vmatpush2.xpose.msra.mxu0 0.0
    %625 = vmatprep.subr.mxu0 0.0
    %626 = vmatpush2.xpose.msra.mxu0 0.0
    %627 = vmatprep.subr.mxu0 0.0
    %628 = vmatpush2.xpose.msra.mxu0 0.0
    %629 = vmatprep.subr.mxu0 0.0
    %630 = vmatpush2.xpose.msra.mxu0 0.0
    %631 = vmatprep.subr.mxu0 0.0
    %632 = vmatpush2.xpose.msra.mxu0 0.0
    %633 = vmatprep.subr.mxu0 0.0
    %634 = vmatpush2.xpose.msra.mxu0 0.0
    %635 = vmatprep.mubr.f32.mxu0 0.0
    %636 = vmatmul.mubr.f32.gmra.mxu0 %v283
    %v637 = vpop.f32.mrf.mxu0
    %v638 = vadd.f32 0.0, %v637
    %v639 = vpop.f32.mrf.mxu0
    %640 = vmatprep.mubr.f32.mxu0 0.0
    %641 = vmatmul.mubr.f32.gmra.mxu0 %v288
    %v642 = vpop.f32.mrf.mxu0
    %v643 = vadd.f32 0.0, %v642
    %v644 = vpop.f32.mrf.mxu0
    %645 = vdwg.mxu0
    %646 = vmatprep.subr.mxu0 0.0
    %647 = vmatpush1.xpose.msra.mxu0 0.0
    %648 = vmatprep.subr.mxu0 0.0
    %649 = vmatpush1.xpose.msra.mxu0 0.0
    %650 = vmatprep.subr.mxu0 0.0
    %651 = vmatpush1.xpose.msra.mxu0 0.0
    %652 = vmatprep.subr.mxu0 0.0
    %653 = vmatpush1.xpose.msra.mxu0 0.0
    %654 = vmatprep.subr.mxu0 0.0
    %655 = vmatpush1.xpose.msra.mxu0 0.0
    %656 = vmatprep.subr.mxu0 0.0
    %657 = vmatpush1.xpose.msra.mxu0 0.0
    %658 = vmatprep.subr.mxu0 0.0
    %659 = vmatpush1.xpose.msra.mxu0 0.0
    %660 = vmatprep.subr.mxu0 0.0
    %661 = vmatpush1.xpose.msra.mxu0 0.0
    %662 = vmatprep.subr.mxu0 0.0
    %663 = vmatpush1.xpose.msra.mxu0 0.0
    %664 = vmatprep.subr.mxu0 0.0
    %665 = vmatpush1.xpose.msra.mxu0 0.0
    %666 = vmatprep.subr.mxu0 0.0
    %667 = vmatpush1.xpose.msra.mxu0 0.0
    %668 = vmatprep.subr.mxu0 0.0
    %669 = vmatpush1.xpose.msra.mxu0 0.0
    %670 = vmatprep.subr.mxu0 0.0
    %671 = vmatpush1.xpose.msra.mxu0 0.0
    %672 = vmatprep.subr.mxu0 0.0
    %673 = vmatpush1.xpose.msra.mxu0 %v95
    %674 = vmatprep.subr.mxu0 0.0
    %675 = vmatpush1.xpose.msra.mxu0 %v94
    %676 = vmatprep.subr.mxu0 0.0
    %677 = vmatpush1.xpose.msra.mxu0 %v93
    %678 = vmatprep.subr.mxu0 0.0
    %679 = vmatpush2.xpose.msra.mxu0 0.0
    %680 = vmatprep.subr.mxu0 0.0
    %681 = vmatpush2.xpose.msra.mxu0 0.0
    %682 = vmatprep.subr.mxu0 0.0
    %683 = vmatpush2.xpose.msra.mxu0 0.0
    %684 = vmatprep.subr.mxu0 0.0
    %685 = vmatpush2.xpose.msra.mxu0 0.0
    %686 = vmatprep.subr.mxu0 0.0
    %687 = vmatpush2.xpose.msra.mxu0 0.0
    %688 = vmatprep.subr.mxu0 0.0
    %689 = vmatpush2.xpose.msra.mxu0 0.0
    %690 = vmatprep.subr.mxu0 0.0
    %691 = vmatpush2.xpose.msra.mxu0 0.0
    %692 = vmatprep.subr.mxu0 0.0
    %693 = vmatpush2.xpose.msra.mxu0 0.0
    %694 = vmatprep.subr.mxu0 0.0
    %695 = vmatpush2.xpose.msra.mxu0 0.0
    %696 = vmatprep.subr.mxu0 0.0
    %697 = vmatpush2.xpose.msra.mxu0 0.0
    %698 = vmatprep.subr.mxu0 0.0
    %699 = vmatpush2.xpose.msra.mxu0 0.0
    %700 = vmatprep.subr.mxu0 0.0
    %701 = vmatpush2.xpose.msra.mxu0 0.0
    %702 = vmatprep.subr.mxu0 0.0
    %703 = vmatpush2.xpose.msra.mxu0 0.0
    %704 = vmatprep.subr.mxu0 0.0
    %705 = vmatpush2.xpose.msra.mxu0 0.0
    %706 = vmatprep.subr.mxu0 0.0
    %707 = vmatpush2.xpose.msra.mxu0 0.0
    %708 = vmatprep.subr.mxu0 0.0
    %709 = vmatpush2.xpose.msra.mxu0 0.0
    %710 = vmatprep.mubr.f32.mxu0 0.0
    %711 = vmatmul.mubr.f32.gmra.mxu0 %v293
    %v712 = vpop.f32.mrf.mxu0
    %v713 = vadd.f32 0.0, %v712
    %v714 = vpop.f32.mrf.mxu0
    %715 = vmatprep.mubr.f32.mxu0 0.0
    %716 = vmatmul.mubr.f32.gmra.mxu0 %v298
    %v717 = vpop.f32.mrf.mxu0
    %v718 = vadd.f32 0.0, %v717
    %v719 = vpop.f32.mrf.mxu0
    %720 = vdwg.mxu0
    %721 = vmatprep.subr.mxu0 0.0
    %722 = vmatpush1.xpose.msra.mxu0 0.0
    %723 = vmatprep.subr.mxu0 0.0
    %724 = vmatpush1.xpose.msra.mxu0 0.0
    %725 = vmatprep.subr.mxu0 0.0
    %726 = vmatpush1.xpose.msra.mxu0 0.0
    %727 = vmatprep.subr.mxu0 0.0
    %728 = vmatpush1.xpose.msra.mxu0 0.0
    %729 = vmatprep.subr.mxu0 0.0
    %730 = vmatpush1.xpose.msra.mxu0 0.0
    %731 = vmatprep.subr.mxu0 0.0
    %732 = vmatpush1.xpose.msra.mxu0 0.0
    %733 = vmatprep.subr.mxu0 0.0
    %734 = vmatpush1.xpose.msra.mxu0 0.0
    %735 = vmatprep.subr.mxu0 0.0
    %736 = vmatpush1.xpose.msra.mxu0 0.0
    %737 = vmatprep.subr.mxu0 0.0
    %738 = vmatpush1.xpose.msra.mxu0 0.0
    %739 = vmatprep.subr.mxu0 0.0
    %740 = vmatpush1.xpose.msra.mxu0 0.0
    %741 = vmatprep.subr.mxu0 0.0
    %742 = vmatpush1.xpose.msra.mxu0 0.0
    %743 = vmatprep.subr.mxu0 0.0
    %744 = vmatpush1.xpose.msra.mxu0 0.0
    %745 = vmatprep.subr.mxu0 0.0
    %746 = vmatpush1.xpose.msra.mxu0 0.0
    %747 = vmatprep.subr.mxu0 0.0
    %748 = vmatpush1.xpose.msra.mxu0 %v98
    %749 = vmatprep.subr.mxu0 0.0
    %750 = vmatpush1.xpose.msra.mxu0 %v97
    %751 = vmatprep.subr.mxu0 0.0
    %752 = vmatpush1.xpose.msra.mxu0 %v96
    %753 = vmatprep.subr.mxu0 0.0
    %754 = vmatpush2.xpose.msra.mxu0 0.0
    %755 = vmatprep.subr.mxu0 0.0
    %756 = vmatpush2.xpose.msra.mxu0 0.0
    %757 = vmatprep.subr.mxu0 0.0
    %758 = vmatpush2.xpose.msra.mxu0 0.0
    %759 = vmatprep.subr.mxu0 0.0
    %760 = vmatpush2.xpose.msra.mxu0 0.0
    %761 = vmatprep.subr.mxu0 0.0
    %762 = vmatpush2.xpose.msra.mxu0 0.0
    %763 = vmatprep.subr.mxu0 0.0
    %764 = vmatpush2.xpose.msra.mxu0 0.0
    %765 = vmatprep.subr.mxu0 0.0
    %766 = vmatpush2.xpose.msra.mxu0 0.0
    %767 = vmatprep.subr.mxu0 0.0
    %768 = vmatpush2.xpose.msra.mxu0 0.0
    %769 = vmatprep.subr.mxu0 0.0
    %770 = vmatpush2.xpose.msra.mxu0 0.0
    %771 = vmatprep.subr.mxu0 0.0
    %772 = vmatpush2.xpose.msra.mxu0 0.0
    %773 = vmatprep.subr.mxu0 0.0
    %774 = vmatpush2.xpose.msra.mxu0 0.0
    %775 = vmatprep.subr.mxu0 0.0
    %776 = vmatpush2.xpose.msra.mxu0 0.0
    %777 = vmatprep.subr.mxu0 0.0
    %778 = vmatpush2.xpose.msra.mxu0 0.0
    %779 = vmatprep.subr.mxu0 0.0
    %780 = vmatpush2.xpose.msra.mxu0 0.0
    %781 = vmatprep.subr.mxu0 0.0
    %782 = vmatpush2.xpose.msra.mxu0 0.0
    %783 = vmatprep.subr.mxu0 0.0
    %784 = vmatpush2.xpose.msra.mxu0 0.0
    %785 = vmatprep.mubr.f32.mxu0 0.0
    %786 = vmatmul.mubr.f32.gmra.mxu0 %v303
    %v787 = vpop.f32.mrf.mxu0
    %v788 = vadd.f32 0.0, %v787
    %v789 = vpop.f32.mrf.mxu0
    %790 = vmatprep.mubr.f32.mxu0 0.0
    %791 = vmatmul.mubr.f32.gmra.mxu0 %v308
    %v792 = vpop.f32.mrf.mxu0
    %v793 = vadd.f32 0.0, %v792
    %v794 = vpop.f32.mrf.mxu0
    %795 = vdwg.mxu0
    %796 = vmatprep.subr.mxu0 0.0
    %797 = vmatpush1.xpose.msra.mxu0 0.0
    %798 = vmatprep.subr.mxu0 0.0
    %799 = vmatpush1.xpose.msra.mxu0 0.0
    %800 = vmatprep.subr.mxu0 0.0
    %801 = vmatpush1.xpose.msra.mxu0 0.0
    %802 = vmatprep.subr.mxu0 0.0
    %803 = vmatpush1.xpose.msra.mxu0 0.0
    %804 = vmatprep.subr.mxu0 0.0
    %805 = vmatpush1.xpose.msra.mxu0 0.0
    %806 = vmatprep.subr.mxu0 0.0
    %807 = vmatpush1.xpose.msra.mxu0 0.0
    %808 = vmatprep.subr.mxu0 0.0
    %809 = vmatpush1.xpose.msra.mxu0 0.0
    %810 = vmatprep.subr.mxu0 0.0
    %811 = vmatpush1.xpose.msra.mxu0 0.0
    %812 = vmatprep.subr.mxu0 0.0
    %813 = vmatpush1.xpose.msra.mxu0 0.0
    %814 = vmatprep.subr.mxu0 0.0
    %815 = vmatpush1.xpose.msra.mxu0 0.0
    %816 = vmatprep.subr.mxu0 0.0
    %817 = vmatpush1.xpose.msra.mxu0 0.0
    %818 = vmatprep.subr.mxu0 0.0
    %819 = vmatpush1.xpose.msra.mxu0 0.0
    %820 = vmatprep.subr.mxu0 0.0
    %821 = vmatpush1.xpose.msra.mxu0 0.0
    %822 = vmatprep.subr.mxu0 0.0
    %823 = vmatpush1.xpose.msra.mxu0 %v101
    %824 = vmatprep.subr.mxu0 0.0
    %825 = vmatpush1.xpose.msra.mxu0 %v100
    %826 = vmatprep.subr.mxu0 0.0
    %827 = vmatpush1.xpose.msra.mxu0 %v99
    %828 = vmatprep.subr.mxu0 0.0
    %829 = vmatpush2.xpose.msra.mxu0 0.0
    %830 = vmatprep.subr.mxu0 0.0
    %831 = vmatpush2.xpose.msra.mxu0 0.0
    %832 = vmatprep.subr.mxu0 0.0
    %833 = vmatpush2.xpose.msra.mxu0 0.0
    %834 = vmatprep.subr.mxu0 0.0
    %835 = vmatpush2.xpose.msra.mxu0 0.0
    %836 = vmatprep.subr.mxu0 0.0
    %837 = vmatpush2.xpose.msra.mxu0 0.0
    %838 = vmatprep.subr.mxu0 0.0
    %839 = vmatpush2.xpose.msra.mxu0 0.0
    %840 = vmatprep.subr.mxu0 0.0
    %841 = vmatpush2.xpose.msra.mxu0 0.0
    %842 = vmatprep.subr.mxu0 0.0
    %843 = vmatpush2.xpose.msra.mxu0 0.0
    %844 = vmatprep.subr.mxu0 0.0
    %845 = vmatpush2.xpose.msra.mxu0 0.0
    %846 = vmatprep.subr.mxu0 0.0
    %847 = vmatpush2.xpose.msra.mxu0 0.0
    %848 = vmatprep.subr.mxu0 0.0
    %849 = vmatpush2.xpose.msra.mxu0 0.0
    %850 = vmatprep.subr.mxu0 0.0
    %851 = vmatpush2.xpose.msra.mxu0 0.0
    %852 = vmatprep.subr.mxu0 0.0
    %853 = vmatpush2.xpose.msra.mxu0 0.0
    %854 = vmatprep.subr.mxu0 0.0
    %855 = vmatpush2.xpose.msra.mxu0 0.0
    %856 = vmatprep.subr.mxu0 0.0
    %857 = vmatpush2.xpose.msra.mxu0 0.0
    %858 = vmatprep.subr.mxu0 0.0
    %859 = vmatpush2.xpose.msra.mxu0 0.0
    %860 = vmatprep.mubr.f32.mxu0 0.0
    %861 = vmatmul.mubr.f32.gmra.mxu0 %v313
    %v862 = vpop.f32.mrf.mxu0
    %v863 = vadd.f32 0.0, %v862
    %v864 = vpop.f32.mrf.mxu0
    %865 = vmatprep.mubr.f32.mxu0 0.0
    %866 = vmatmul.mubr.f32.gmra.mxu0 %v318
    %v867 = vpop.f32.mrf.mxu0
    %v868 = vadd.f32 0.0, %v867
    %v869 = vpop.f32.mrf.mxu0
    %870 = vdwg.mxu0
    %871 = vmatprep.subr.mxu0 0.0
    %872 = vmatpush1.xpose.msra.mxu0 0.0
    %873 = vmatprep.subr.mxu0 0.0
    %874 = vmatpush1.xpose.msra.mxu0 0.0
    %875 = vmatprep.subr.mxu0 0.0
    %876 = vmatpush1.xpose.msra.mxu0 0.0
    %877 = vmatprep.subr.mxu0 0.0
    %878 = vmatpush1.xpose.msra.mxu0 0.0
    %879 = vmatprep.subr.mxu0 0.0
    %880 = vmatpush1.xpose.msra.mxu0 0.0
    %881 = vmatprep.subr.mxu0 0.0
    %882 = vmatpush1.xpose.msra.mxu0 0.0
    %883 = vmatprep.subr.mxu0 0.0
    %884 = vmatpush1.xpose.msra.mxu0 0.0
    %885 = vmatprep.subr.mxu0 0.0
    %886 = vmatpush1.xpose.msra.mxu0 0.0
    %887 = vmatprep.subr.mxu0 0.0
    %888 = vmatpush1.xpose.msra.mxu0 0.0
    %889 = vmatprep.subr.mxu0 0.0
    %890 = vmatpush1.xpose.msra.mxu0 0.0
    %891 = vmatprep.subr.mxu0 0.0
    %892 = vmatpush1.xpose.msra.mxu0 0.0
    %893 = vmatprep.subr.mxu0 0.0
    %894 = vmatpush1.xpose.msra.mxu0 0.0
    %895 = vmatprep.subr.mxu0 0.0
    %896 = vmatpush1.xpose.msra.mxu0 0.0
    %897 = vmatprep.subr.mxu0 0.0
    %898 = vmatpush1.xpose.msra.mxu0 %v104
    %899 = vmatprep.subr.mxu0 0.0
    %900 = vmatpush1.xpose.msra.mxu0 %v103
    %901 = vmatprep.subr.mxu0 0.0
    %902 = vmatpush1.xpose.msra.mxu0 %v102
    %903 = vmatprep.subr.mxu0 0.0
    %904 = vmatpush2.xpose.msra.mxu0 0.0
    %905 = vmatprep.subr.mxu0 0.0
    %906 = vmatpush2.xpose.msra.mxu0 0.0
    %907 = vmatprep.subr.mxu0 0.0
    %908 = vmatpush2.xpose.msra.mxu0 0.0
    %909 = vmatprep.subr.mxu0 0.0
    %910 = vmatpush2.xpose.msra.mxu0 0.0
    %911 = vmatprep.subr.mxu0 0.0
    %912 = vmatpush2.xpose.msra.mxu0 0.0
    %913 = vmatprep.subr.mxu0 0.0
    %914 = vmatpush2.xpose.msra.mxu0 0.0
    %915 = vmatprep.subr.mxu0 0.0
    %916 = vmatpush2.xpose.msra.mxu0 0.0
    %917 = vmatprep.subr.mxu0 0.0
    %918 = vmatpush2.xpose.msra.mxu0 0.0
    %919 = vmatprep.subr.mxu0 0.0
    %920 = vmatpush2.xpose.msra.mxu0 0.0
    %921 = vmatprep.subr.mxu0 0.0
    %922 = vmatpush2.xpose.msra.mxu0 0.0
    %923 = vmatprep.subr.mxu0 0.0
    %924 = vmatpush2.xpose.msra.mxu0 0.0
    %925 = vmatprep.subr.mxu0 0.0
    %926 = vmatpush2.xpose.msra.mxu0 0.0
    %927 = vmatprep.subr.mxu0 0.0
    %928 = vmatpush2.xpose.msra.mxu0 0.0
    %929 = vmatprep.subr.mxu0 0.0
    %930 = vmatpush2.xpose.msra.mxu0 0.0
    %931 = vmatprep.subr.mxu0 0.0
    %932 = vmatpush2.xpose.msra.mxu0 0.0
    %933 = vmatprep.subr.mxu0 0.0
    %934 = vmatpush2.xpose.msra.mxu0 0.0
    %935 = vmatprep.mubr.f32.mxu0 0.0
    %936 = vmatmul.mubr.f32.gmra.mxu0 %v323
    %v937 = vpop.f32.mrf.mxu0
    %v938 = vadd.f32 0.0, %v937
    %v939 = vpop.f32.mrf.mxu0
    %940 = vmatprep.mubr.f32.mxu0 0.0
    %941 = vmatmul.mubr.f32.gmra.mxu0 %v328
    %v942 = vpop.f32.mrf.mxu0
    %v943 = vadd.f32 0.0, %v942
    %v944 = vpop.f32.mrf.mxu0
    %945 = vdwg.mxu0
    %946 = vmatprep.subr.mxu0 0.0
    %947 = vmatpush1.xpose.msra.mxu0 0.0
    %948 = vmatprep.subr.mxu0 0.0
    %949 = vmatpush1.xpose.msra.mxu0 0.0
    %950 = vmatprep.subr.mxu0 0.0
    %951 = vmatpush1.xpose.msra.mxu0 0.0
    %952 = vmatprep.subr.mxu0 0.0
    %953 = vmatpush1.xpose.msra.mxu0 0.0
    %954 = vmatprep.subr.mxu0 0.0
    %955 = vmatpush1.xpose.msra.mxu0 0.0
    %956 = vmatprep.subr.mxu0 0.0
    %957 = vmatpush1.xpose.msra.mxu0 0.0
    %958 = vmatprep.subr.mxu0 0.0
    %959 = vmatpush1.xpose.msra.mxu0 0.0
    %960 = vmatprep.subr.mxu0 0.0
    %961 = vmatpush1.xpose.msra.mxu0 0.0
    %962 = vmatprep.subr.mxu0 0.0
    %963 = vmatpush1.xpose.msra.mxu0 0.0
    %964 = vmatprep.subr.mxu0 0.0
    %965 = vmatpush1.xpose.msra.mxu0 0.0
    %966 = vmatprep.subr.mxu0 0.0
    %967 = vmatpush1.xpose.msra.mxu0 0.0
    %968 = vmatprep.subr.mxu0 0.0
    %969 = vmatpush1.xpose.msra.mxu0 0.0
    %970 = vmatprep.subr.mxu0 0.0
    %971 = vmatpush1.xpose.msra.mxu0 0.0
    %972 = vmatprep.subr.mxu0 0.0
    %973 = vmatpush1.xpose.msra.mxu0 %v107
    %974 = vmatprep.subr.mxu0 0.0
    %975 = vmatpush1.xpose.msra.mxu0 %v106
    %976 = vmatprep.subr.mxu0 0.0
    %977 = vmatpush1.xpose.msra.mxu0 %v105
    %978 = vmatprep.subr.mxu0 0.0
    %979 = vmatpush2.xpose.msra.mxu0 0.0
    %980 = vmatprep.subr.mxu0 0.0
    %981 = vmatpush2.xpose.msra.mxu0 0.0
    %982 = vmatprep.subr.mxu0 0.0
    %983 = vmatpush2.xpose.msra.mxu0 0.0
    %984 = vmatprep.subr.mxu0 0.0
    %985 = vmatpush2.xpose.msra.mxu0 0.0
    %986 = vmatprep.subr.mxu0 0.0
    %987 = vmatpush2.xpose.msra.mxu0 0.0
    %988 = vmatprep.subr.mxu0 0.0
    %989 = vmatpush2.xpose.msra.mxu0 0.0
    %990 = vmatprep.subr.mxu0 0.0
    %991 = vmatpush2.xpose.msra.mxu0 0.0
    %992 = vmatprep.subr.mxu0 0.0
    %993 = vmatpush2.xpose.msra.mxu0 0.0
    %994 = vmatprep.subr.mxu0 0.0
    %995 = vmatpush2.xpose.msra.mxu0 0.0
    %996 = vmatprep.subr.mxu0 0.0
    %997 = vmatpush2.xpose.msra.mxu0 0.0
    %998 = vmatprep.subr.mxu0 0.0
    %999 = vmatpush2.xpose.msra.mxu0 0.0
    %1000 = vmatprep.subr.mxu0 0.0
    %1001 = vmatpush2.xpose.msra.mxu0 0.0
    %1002 = vmatprep.subr.mxu0 0.0
    %1003 = vmatpush2.xpose.msra.mxu0 0.0
    %1004 = vmatprep.subr.mxu0 0.0
    %1005 = vmatpush2.xpose.msra.mxu0 0.0
    %1006 = vmatprep.subr.mxu0 0.0
    %1007 = vmatpush2.xpose.msra.mxu0 0.0
    %1008 = vmatprep.subr.mxu0 0.0
    %1009 = vmatpush2.xpose.msra.mxu0 0.0
    %1010 = vmatprep.mubr.f32.mxu0 0.0
    %1011 = vmatmul.mubr.f32.gmra.mxu0 %v333
    %v1012 = vpop.f32.mrf.mxu0
    %v1013 = vadd.f32 0.0, %v1012
    %v1014 = vpop.f32.mrf.mxu0
    %1015 = vmatprep.mubr.f32.mxu0 0.0
    %1016 = vmatmul.mubr.f32.gmra.mxu0 %v338
    %v1017 = vpop.f32.mrf.mxu0
    %v1018 = vadd.f32 0.0, %v1017
    %v1019 = vpop.f32.mrf.mxu0
    %1020 = vdwg.mxu0
    %1021 = vmatprep.subr.mxu0 0.0
    %1022 = vmatpush1.xpose.msra.mxu0 0.0
    %1023 = vmatprep.subr.mxu0 0.0
    %1024 = vmatpush1.xpose.msra.mxu0 0.0
    %1025 = vmatprep.subr.mxu0 0.0
    %1026 = vmatpush1.xpose.msra.mxu0 0.0
    %1027 = vmatprep.subr.mxu0 0.0
    %1028 = vmatpush1.xpose.msra.mxu0 0.0
    %1029 = vmatprep.subr.mxu0 0.0
    %1030 = vmatpush1.xpose.msra.mxu0 0.0
    %1031 = vmatprep.subr.mxu0 0.0
    %1032 = vmatpush1.xpose.msra.mxu0 0.0
    %1033 = vmatprep.subr.mxu0 0.0
    %1034 = vmatpush1.xpose.msra.mxu0 0.0
    %1035 = vmatprep.subr.mxu0 0.0
    %1036 = vmatpush1.xpose.msra.mxu0 0.0
    %1037 = vmatprep.subr.mxu0 0.0
    %1038 = vmatpush1.xpose.msra.mxu0 0.0
    %1039 = vmatprep.subr.mxu0 0.0
    %1040 = vmatpush1.xpose.msra.mxu0 0.0
    %1041 = vmatprep.subr.mxu0 0.0
    %1042 = vmatpush1.xpose.msra.mxu0 0.0
    %1043 = vmatprep.subr.mxu0 0.0
    %1044 = vmatpush1.xpose.msra.mxu0 0.0
    %1045 = vmatprep.subr.mxu0 0.0
    %1046 = vmatpush1.xpose.msra.mxu0 0.0
    %1047 = vmatprep.subr.mxu0 0.0
    %1048 = vmatpush1.xpose.msra.mxu0 %v110
    %1049 = vmatprep.subr.mxu0 0.0
    %1050 = vmatpush1.xpose.msra.mxu0 %v109
    %1051 = vmatprep.subr.mxu0 0.0
    %1052 = vmatpush1.xpose.msra.mxu0 %v108
    %1053 = vmatprep.subr.mxu0 0.0
    %1054 = vmatpush2.xpose.msra.mxu0 0.0
    %1055 = vmatprep.subr.mxu0 0.0
    %1056 = vmatpush2.xpose.msra.mxu0 0.0
    %1057 = vmatprep.subr.mxu0 0.0
    %1058 = vmatpush2.xpose.msra.mxu0 0.0
    %1059 = vmatprep.subr.mxu0 0.0
    %1060 = vmatpush2.xpose.msra.mxu0 0.0
    %1061 = vmatprep.subr.mxu0 0.0
    %1062 = vmatpush2.xpose.msra.mxu0 0.0
    %1063 = vmatprep.subr.mxu0 0.0
    %1064 = vmatpush2.xpose.msra.mxu0 0.0
    %1065 = vmatprep.subr.mxu0 0.0
    %1066 = vmatpush2.xpose.msra.mxu0 0.0
    %1067 = vmatprep.subr.mxu0 0.0
    %1068 = vmatpush2.xpose.msra.mxu0 0.0
    %1069 = vmatprep.subr.mxu0 0.0
    %1070 = vmatpush2.xpose.msra.mxu0 0.0
    %1071 = vmatprep.subr.mxu0 0.0
    %1072 = vmatpush2.xpose.msra.mxu0 0.0
    %1073 = vmatprep.subr.mxu0 0.0
    %1074 = vmatpush2.xpose.msra.mxu0 0.0
    %1075 = vmatprep.subr.mxu0 0.0
    %1076 = vmatpush2.xpose.msra.mxu0 0.0
    %1077 = vmatprep.subr.mxu0 0.0
    %1078 = vmatpush2.xpose.msra.mxu0 0.0
    %1079 = vmatprep.subr.mxu0 0.0
    %1080 = vmatpush2.xpose.msra.mxu0 0.0
    %1081 = vmatprep.subr.mxu0 0.0
    %1082 = vmatpush2.xpose.msra.mxu0 0.0
    %1083 = vmatprep.subr.mxu0 0.0
    %1084 = vmatpush2.xpose.msra.mxu0 0.0
    %1085 = vmatprep.mubr.f32.mxu0 0.0
    %1086 = vmatmul.mubr.f32.gmra.mxu0 %v343
    %v1087 = vpop.f32.mrf.mxu0
    %v1088 = vadd.f32 0.0, %v1087
    %v1089 = vpop.f32.mrf.mxu0
    %1090 = vmatprep.mubr.f32.mxu0 0.0
    %1091 = vmatmul.mubr.f32.gmra.mxu0 %v348
    %v1092 = vpop.f32.mrf.mxu0
    %v1093 = vadd.f32 0.0, %v1092
    %v1094 = vpop.f32.mrf.mxu0
    %1095 = vdwg.mxu0
    %1096 = vmatprep.subr.mxu0 0.0
    %1097 = vmatpush1.xpose.msra.mxu0 0.0
    %1098 = vmatprep.subr.mxu0 0.0
    %1099 = vmatpush1.xpose.msra.mxu0 0.0
    %1100 = vmatprep.subr.mxu0 0.0
    %1101 = vmatpush1.xpose.msra.mxu0 0.0
    %1102 = vmatprep.subr.mxu0 0.0
    %1103 = vmatpush1.xpose.msra.mxu0 0.0
    %1104 = vmatprep.subr.mxu0 0.0
    %1105 = vmatpush1.xpose.msra.mxu0 0.0
    %1106 = vmatprep.subr.mxu0 0.0
    %1107 = vmatpush1.xpose.msra.mxu0 0.0
    %1108 = vmatprep.subr.mxu0 0.0
    %1109 = vmatpush1.xpose.msra.mxu0 0.0
    %1110 = vmatprep.subr.mxu0 0.0
    %1111 = vmatpush1.xpose.msra.mxu0 0.0
    %1112 = vmatprep.subr.mxu0 0.0
    %1113 = vmatpush1.xpose.msra.mxu0 0.0
    %1114 = vmatprep.subr.mxu0 0.0
    %1115 = vmatpush1.xpose.msra.mxu0 0.0
    %1116 = vmatprep.subr.mxu0 0.0
    %1117 = vmatpush1.xpose.msra.mxu0 0.0
    %1118 = vmatprep.subr.mxu0 0.0
    %1119 = vmatpush1.xpose.msra.mxu0 0.0
    %1120 = vmatprep.subr.mxu0 0.0
    %1121 = vmatpush1.xpose.msra.mxu0 0.0
    %1122 = vmatprep.subr.mxu0 0.0
    %1123 = vmatpush1.xpose.msra.mxu0 %v113
    %1124 = vmatprep.subr.mxu0 0.0
    %1125 = vmatpush1.xpose.msra.mxu0 %v112
    %1126 = vmatprep.subr.mxu0 0.0
    %1127 = vmatpush1.xpose.msra.mxu0 %v111
    %1128 = vmatprep.subr.mxu0 0.0
    %1129 = vmatpush2.xpose.msra.mxu0 0.0
    %1130 = vmatprep.subr.mxu0 0.0
    %1131 = vmatpush2.xpose.msra.mxu0 0.0
    %1132 = vmatprep.subr.mxu0 0.0
    %1133 = vmatpush2.xpose.msra.mxu0 0.0
    %1134 = vmatprep.subr.mxu0 0.0
    %1135 = vmatpush2.xpose.msra.mxu0 0.0
    %1136 = vmatprep.subr.mxu0 0.0
    %1137 = vmatpush2.xpose.msra.mxu0 0.0
    %1138 = vmatprep.subr.mxu0 0.0
    %1139 = vmatpush2.xpose.msra.mxu0 0.0
    %1140 = vmatprep.subr.mxu0 0.0
    %1141 = vmatpush2.xpose.msra.mxu0 0.0
    %1142 = vmatprep.subr.mxu0 0.0
    %1143 = vmatpush2.xpose.msra.mxu0 0.0
    %1144 = vmatprep.subr.mxu0 0.0
    %1145 = vmatpush2.xpose.msra.mxu0 0.0
    %1146 = vmatprep.subr.mxu0 0.0
    %1147 = vmatpush2.xpose.msra.mxu0 0.0
    %1148 = vmatprep.subr.mxu0 0.0
    %1149 = vmatpush2.xpose.msra.mxu0 0.0
    %1150 = vmatprep.subr.mxu0 0.0
    %1151 = vmatpush2.xpose.msra.mxu0 0.0
    %1152 = vmatprep.subr.mxu0 0.0
    %1153 = vmatpush2.xpose.msra.mxu0 0.0
    %1154 = vmatprep.subr.mxu0 0.0
    %1155 = vmatpush2.xpose.msra.mxu0 0.0
    %1156 = vmatprep.subr.mxu0 0.0
    %1157 = vmatpush2.xpose.msra.mxu0 0.0
    %1158 = vmatprep.subr.mxu0 0.0
    %1159 = vmatpush2.xpose.msra.mxu0 0.0
    %1160 = vmatprep.mubr.f32.mxu0 0.0
    %1161 = vmatmul.mubr.f32.gmra.mxu0 %v353
    %v1162 = vpop.f32.mrf.mxu0
    %v1163 = vadd.f32 0.0, %v1162
    %v1164 = vpop.f32.mrf.mxu0
    %1165 = vmatprep.mubr.f32.mxu0 0.0
    %1166 = vmatmul.mubr.f32.gmra.mxu0 %v358
    %v1167 = vpop.f32.mrf.mxu0
    %v1168 = vadd.f32 0.0, %v1167
    %v1169 = vpop.f32.mrf.mxu0
    %1170 = vdwg.mxu0
    %1171 = vmatprep.subr.mxu0 0.0
    %1172 = vmatpush1.xpose.msra.mxu0 0.0
    %1173 = vmatprep.subr.mxu0 0.0
    %1174 = vmatpush1.xpose.msra.mxu0 0.0
    %1175 = vmatprep.subr.mxu0 0.0
    %1176 = vmatpush1.xpose.msra.mxu0 0.0
    %1177 = vmatprep.subr.mxu0 0.0
    %1178 = vmatpush1.xpose.msra.mxu0 0.0
    %1179 = vmatprep.subr.mxu0 0.0
    %1180 = vmatpush1.xpose.msra.mxu0 0.0
    %1181 = vmatprep.subr.mxu0 0.0
    %1182 = vmatpush1.xpose.msra.mxu0 0.0
    %1183 = vmatprep.subr.mxu0 0.0
    %1184 = vmatpush1.xpose.msra.mxu0 0.0
    %1185 = vmatprep.subr.mxu0 0.0
    %1186 = vmatpush1.xpose.msra.mxu0 0.0
    %1187 = vmatprep.subr.mxu0 0.0
    %1188 = vmatpush1.xpose.msra.mxu0 0.0
    %1189 = vmatprep.subr.mxu0 0.0
    %1190 = vmatpush1.xpose.msra.mxu0 0.0
    %1191 = vmatprep.subr.mxu0 0.0
    %1192 = vmatpush1.xpose.msra.mxu0 0.0
    %1193 = vmatprep.subr.mxu0 0.0
    %1194 = vmatpush1.xpose.msra.mxu0 0.0
    %1195 = vmatprep.subr.mxu0 0.0
    %1196 = vmatpush1.xpose.msra.mxu0 0.0
    %1197 = vmatprep.subr.mxu0 0.0
    %1198 = vmatpush1.xpose.msra.mxu0 %v116
    %1199 = vmatprep.subr.mxu0 0.0
    %1200 = vmatpush1.xpose.msra.mxu0 %v115
    %1201 = vmatprep.subr.mxu0 0.0
    %1202 = vmatpush1.xpose.msra.mxu0 %v114
    %1203 = vmatprep.subr.mxu0 0.0
    %1204 = vmatpush2.xpose.msra.mxu0 0.0
    %1205 = vmatprep.subr.mxu0 0.0
    %1206 = vmatpush2.xpose.msra.mxu0 0.0
    %1207 = vmatprep.subr.mxu0 0.0
    %1208 = vmatpush2.xpose.msra.mxu0 0.0
    %1209 = vmatprep.subr.mxu0 0.0
    %1210 = vmatpush2.xpose.msra.mxu0 0.0
    %1211 = vmatprep.subr.mxu0 0.0
    %1212 = vmatpush2.xpose.msra.mxu0 0.0
    %1213 = vmatprep.subr.mxu0 0.0
    %1214 = vmatpush2.xpose.msra.mxu0 0.0
    %1215 = vmatprep.subr.mxu0 0.0
    %1216 = vmatpush2.xpose.msra.mxu0 0.0
    %1217 = vmatprep.subr.mxu0 0.0
    %1218 = vmatpush2.xpose.msra.mxu0 0.0
    %1219 = vmatprep.subr.mxu0 0.0
    %1220 = vmatpush2.xpose.msra.mxu0 0.0
    %1221 = vmatprep.subr.mxu0 0.0
    %1222 = vmatpush2.xpose.msra.mxu0 0.0
    %1223 = vmatprep.subr.mxu0 0.0
    %1224 = vmatpush2.xpose.msra.mxu0 0.0
    %1225 = vmatprep.subr.mxu0 0.0
    %1226 = vmatpush2.xpose.msra.mxu0 0.0
    %1227 = vmatprep.subr.mxu0 0.0
    %1228 = vmatpush2.xpose.msra.mxu0 0.0
    %1229 = vmatprep.subr.mxu0 0.0
    %1230 = vmatpush2.xpose.msra.mxu0 0.0
    %1231 = vmatprep.subr.mxu0 0.0
    %1232 = vmatpush2.xpose.msra.mxu0 0.0
    %1233 = vmatprep.subr.mxu0 0.0
    %1234 = vmatpush2.xpose.msra.mxu0 0.0
    %1235 = vmatprep.mubr.f32.mxu0 0.0
    %1236 = vmatmul.mubr.f32.gmra.mxu0 %v363
    %v1237 = vpop.f32.mrf.mxu0
    %v1238 = vadd.f32 0.0, %v1237
    %v1239 = vpop.f32.mrf.mxu0
    %1240 = vmatprep.mubr.f32.mxu0 0.0
    %1241 = vmatmul.mubr.f32.gmra.mxu0 %v368
    %v1242 = vpop.f32.mrf.mxu0
    %v1243 = vadd.f32 0.0, %v1242
    %v1244 = vpop.f32.mrf.mxu0
    %1245 = vdwg.mxu0
    %1246 = vmatprep.subr.mxu0 0.0
    %1247 = vmatpush1.xpose.msra.mxu0 0.0
    %1248 = vmatprep.subr.mxu0 0.0
    %1249 = vmatpush1.xpose.msra.mxu0 0.0
    %1250 = vmatprep.subr.mxu0 0.0
    %1251 = vmatpush1.xpose.msra.mxu0 0.0
    %1252 = vmatprep.subr.mxu0 0.0
    %1253 = vmatpush1.xpose.msra.mxu0 0.0
    %1254 = vmatprep.subr.mxu0 0.0
    %1255 = vmatpush1.xpose.msra.mxu0 0.0
    %1256 = vmatprep.subr.mxu0 0.0
    %1257 = vmatpush1.xpose.msra.mxu0 0.0
    %1258 = vmatprep.subr.mxu0 0.0
    %1259 = vmatpush1.xpose.msra.mxu0 0.0
    %1260 = vmatprep.subr.mxu0 0.0
    %1261 = vmatpush1.xpose.msra.mxu0 0.0
    %1262 = vmatprep.subr.mxu0 0.0
    %1263 = vmatpush1.xpose.msra.mxu0 0.0
    %1264 = vmatprep.subr.mxu0 0.0
    %1265 = vmatpush1.xpose.msra.mxu0 0.0
    %1266 = vmatprep.subr.mxu0 0.0
    %1267 = vmatpush1.xpose.msra.mxu0 0.0
    %1268 = vmatprep.subr.mxu0 0.0
    %1269 = vmatpush1.xpose.msra.mxu0 0.0
    %1270 = vmatprep.subr.mxu0 0.0
    %1271 = vmatpush1.xpose.msra.mxu0 0.0
    %1272 = vmatprep.subr.mxu0 0.0
    %1273 = vmatpush1.xpose.msra.mxu0 %v119
    %1274 = vmatprep.subr.mxu0 0.0
    %1275 = vmatpush1.xpose.msra.mxu0 %v118
    %1276 = vmatprep.subr.mxu0 0.0
    %1277 = vmatpush1.xpose.msra.mxu0 %v117
    %1278 = vmatprep.subr.mxu0 0.0
    %1279 = vmatpush2.xpose.msra.mxu0 0.0
    %1280 = vmatprep.subr.mxu0 0.0
    %1281 = vmatpush2.xpose.msra.mxu0 0.0
    %1282 = vmatprep.subr.mxu0 0.0
    %1283 = vmatpush2.xpose.msra.mxu0 0.0
    %1284 = vmatprep.subr.mxu0 0.0
    %1285 = vmatpush2.xpose.msra.mxu0 0.0
    %1286 = vmatprep.subr.mxu0 0.0
    %1287 = vmatpush2.xpose.msra.mxu0 0.0
    %1288 = vmatprep.subr.mxu0 0.0
    %1289 = vmatpush2.xpose.msra.mxu0 0.0
    %1290 = vmatprep.subr.mxu0 0.0
    %1291 = vmatpush2.xpose.msra.mxu0 0.0
    %1292 = vmatprep.subr.mxu0 0.0
    %1293 = vmatpush2.xpose.msra.mxu0 0.0
    %1294 = vmatprep.subr.mxu0 0.0
    %1295 = vmatpush2.xpose.msra.mxu0 0.0
    %1296 = vmatprep.subr.mxu0 0.0
    %1297 = vmatpush2.xpose.msra.mxu0 0.0
    %1298 = vmatprep.subr.mxu0 0.0
    %1299 = vmatpush2.xpose.msra.mxu0 0.0
    %1300 = vmatprep.subr.mxu0 0.0
    %1301 = vmatpush2.xpose.msra.mxu0 0.0
    %1302 = vmatprep.subr.mxu0 0.0
    %1303 = vmatpush2.xpose.msra.mxu0 0.0
    %1304 = vmatprep.subr.mxu0 0.0
    %1305 = vmatpush2.xpose.msra.mxu0 0.0
    %1306 = vmatprep.subr.mxu0 0.0
    %1307 = vmatpush2.xpose.msra.mxu0 0.0
    %1308 = vmatprep.subr.mxu0 0.0
    %1309 = vmatpush2.xpose.msra.mxu0 0.0
    %1310 = vmatprep.mubr.f32.mxu0 0.0
    %1311 = vmatmul.mubr.f32.gmra.mxu0 %v373
    %v1312 = vpop.f32.mrf.mxu0
    %v1313 = vadd.f32 0.0, %v1312
    %v1314 = vpop.f32.mrf.mxu0
    %1315 = vmatprep.mubr.f32.mxu0 0.0
    %1316 = vmatmul.mubr.f32.gmra.mxu0 %v378
    %v1317 = vpop.f32.mrf.mxu0
    %v1318 = vadd.f32 0.0, %v1317
    %v1319 = vpop.f32.mrf.mxu0
    %1320 = vdwg.mxu0
    %1321 = vmatprep.subr.mxu0 0.0
    %1322 = vmatpush1.xpose.msra.mxu0 0.0
    %1323 = vmatprep.subr.mxu0 0.0
    %1324 = vmatpush1.xpose.msra.mxu0 0.0
    %1325 = vmatprep.subr.mxu0 0.0
    %1326 = vmatpush1.xpose.msra.mxu0 0.0
    %1327 = vmatprep.subr.mxu0 0.0
    %1328 = vmatpush1.xpose.msra.mxu0 0.0
    %1329 = vmatprep.subr.mxu0 0.0
    %1330 = vmatpush1.xpose.msra.mxu0 0.0
    %1331 = vmatprep.subr.mxu0 0.0
    %1332 = vmatpush1.xpose.msra.mxu0 0.0
    %1333 = vmatprep.subr.mxu0 0.0
    %1334 = vmatpush1.xpose.msra.mxu0 0.0
    %1335 = vmatprep.subr.mxu0 0.0
    %1336 = vmatpush1.xpose.msra.mxu0 0.0
    %1337 = vmatprep.subr.mxu0 0.0
    %1338 = vmatpush1.xpose.msra.mxu0 0.0
    %1339 = vmatprep.subr.mxu0 0.0
    %1340 = vmatpush1.xpose.msra.mxu0 0.0
    %1341 = vmatprep.subr.mxu0 0.0
    %1342 = vmatpush1.xpose.msra.mxu0 0.0
    %1343 = vmatprep.subr.mxu0 0.0
    %1344 = vmatpush1.xpose.msra.mxu0 0.0
    %1345 = vmatprep.subr.mxu0 0.0
    %1346 = vmatpush1.xpose.msra.mxu0 0.0
    %1347 = vmatprep.subr.mxu0 0.0
    %1348 = vmatpush1.xpose.msra.mxu0 %v122
    %1349 = vmatprep.subr.mxu0 0.0
    %1350 = vmatpush1.xpose.msra.mxu0 %v121
    %1351 = vmatprep.subr.mxu0 0.0
    %1352 = vmatpush1.xpose.msra.mxu0 %v120
    %1353 = vmatprep.subr.mxu0 0.0
    %1354 = vmatpush2.xpose.msra.mxu0 0.0
    %1355 = vmatprep.subr.mxu0 0.0
    %1356 = vmatpush2.xpose.msra.mxu0 0.0
    %1357 = vmatprep.subr.mxu0 0.0
    %1358 = vmatpush2.xpose.msra.mxu0 0.0
    %1359 = vmatprep.subr.mxu0 0.0
    %1360 = vmatpush2.xpose.msra.mxu0 0.0
    %1361 = vmatprep.subr.mxu0 0.0
    %1362 = vmatpush2.xpose.msra.mxu0 0.0
    %1363 = vmatprep.subr.mxu0 0.0
    %1364 = vmatpush2.xpose.msra.mxu0 0.0
    %1365 = vmatprep.subr.mxu0 0.0
    %1366 = vmatpush2.xpose.msra.mxu0 0.0
    %1367 = vmatprep.subr.mxu0 0.0
    %1368 = vmatpush2.xpose.msra.mxu0 0.0
    %1369 = vmatprep.subr.mxu0 0.0
    %1370 = vmatpush2.xpose.msra.mxu0 0.0
    %1371 = vmatprep.subr.mxu0 0.0
    %1372 = vmatpush2.xpose.msra.mxu0 0.0
    %1373 = vmatprep.subr.mxu0 0.0
    %1374 = vmatpush2.xpose.msra.mxu0 0.0
    %1375 = vmatprep.subr.mxu0 0.0
    %1376 = vmatpush2.xpose.msra.mxu0 0.0
    %1377 = vmatprep.subr.mxu0 0.0
    %1378 = vmatpush2.xpose.msra.mxu0 0.0
    %1379 = vmatprep.subr.mxu0 0.0
    %1380 = vmatpush2.xpose.msra.mxu0 0.0
    %1381 = vmatprep.subr.mxu0 0.0
    %1382 = vmatpush2.xpose.msra.mxu0 0.0
    %1383 = vmatprep.subr.mxu0 0.0
    %1384 = vmatpush2.xpose.msra.mxu0 0.0
    %1385 = vmatprep.mubr.f32.mxu0 0.0
    %1386 = vmatmul.mubr.f32.gmra.mxu0 %v383
    %v1387 = vpop.f32.mrf.mxu0
    %v1388 = vadd.f32 0.0, %v1387
    %v1389 = vpop.f32.mrf.mxu0
    %1390 = vmatprep.mubr.f32.mxu0 0.0
    %1391 = vmatmul.mubr.f32.gmra.mxu0 %v388
    %v1392 = vpop.f32.mrf.mxu0
    %v1393 = vadd.f32 0.0, %v1392
    %v1394 = vpop.f32.mrf.mxu0
    %1395 = vdwg.mxu0
    %1396 = vmatprep.subr.mxu0 0.0
    %1397 = vmatpush1.xpose.msra.mxu0 0.0
    %1398 = vmatprep.subr.mxu0 0.0
    %1399 = vmatpush1.xpose.msra.mxu0 0.0
    %1400 = vmatprep.subr.mxu0 0.0
    %1401 = vmatpush1.xpose.msra.mxu0 0.0
    %1402 = vmatprep.subr.mxu0 0.0
    %1403 = vmatpush1.xpose.msra.mxu0 0.0
    %1404 = vmatprep.subr.mxu0 0.0
    %1405 = vmatpush1.xpose.msra.mxu0 0.0
    %1406 = vmatprep.subr.mxu0 0.0
    %1407 = vmatpush1.xpose.msra.mxu0 0.0
    %1408 = vmatprep.subr.mxu0 0.0
    %1409 = vmatpush1.xpose.msra.mxu0 0.0
    %1410 = vmatprep.subr.mxu0 0.0
    %1411 = vmatpush1.xpose.msra.mxu0 0.0
    %1412 = vmatprep.subr.mxu0 0.0
    %1413 = vmatpush1.xpose.msra.mxu0 0.0
    %1414 = vmatprep.subr.mxu0 0.0
    %1415 = vmatpush1.xpose.msra.mxu0 0.0
    %1416 = vmatprep.subr.mxu0 0.0
    %1417 = vmatpush1.xpose.msra.mxu0 0.0
    %1418 = vmatprep.subr.mxu0 0.0
    %1419 = vmatpush1.xpose.msra.mxu0 0.0
    %1420 = vmatprep.subr.mxu0 0.0
    %1421 = vmatpush1.xpose.msra.mxu0 0.0
    %1422 = vmatprep.subr.mxu0 0.0
    %1423 = vmatpush1.xpose.msra.mxu0 %v125
    %1424 = vmatprep.subr.mxu0 0.0
    %1425 = vmatpush1.xpose.msra.mxu0 %v124
    %1426 = vmatprep.subr.mxu0 0.0
    %1427 = vmatpush1.xpose.msra.mxu0 %v123
    %1428 = vmatprep.subr.mxu0 0.0
    %1429 = vmatpush2.xpose.msra.mxu0 0.0
    %1430 = vmatprep.subr.mxu0 0.0
    %1431 = vmatpush2.xpose.msra.mxu0 0.0
    %1432 = vmatprep.subr.mxu0 0.0
    %1433 = vmatpush2.xpose.msra.mxu0 0.0
    %1434 = vmatprep.subr.mxu0 0.0
    %1435 = vmatpush2.xpose.msra.mxu0 0.0
    %1436 = vmatprep.subr.mxu0 0.0
    %1437 = vmatpush2.xpose.msra.mxu0 0.0
    %1438 = vmatprep.subr.mxu0 0.0
    %1439 = vmatpush2.xpose.msra.mxu0 0.0
    %1440 = vmatprep.subr.mxu0 0.0
    %1441 = vmatpush2.xpose.msra.mxu0 0.0
    %1442 = vmatprep.subr.mxu0 0.0
    %1443 = vmatpush2.xpose.msra.mxu0 0.0
    %1444 = vmatprep.subr.mxu0 0.0
    %1445 = vmatpush2.xpose.msra.mxu0 0.0
    %1446 = vmatprep.subr.mxu0 0.0
    %1447 = vmatpush2.xpose.msra.mxu0 0.0
    %1448 = vmatprep.subr.mxu0 0.0
    %1449 = vmatpush2.xpose.msra.mxu0 0.0
    %1450 = vmatprep.subr.mxu0 0.0
    %1451 = vmatpush2.xpose.msra.mxu0 0.0
    %1452 = vmatprep.subr.mxu0 0.0
    %1453 = vmatpush2.xpose.msra.mxu0 0.0
    %1454 = vmatprep.subr.mxu0 0.0
    %1455 = vmatpush2.xpose.msra.mxu0 0.0
    %1456 = vmatprep.subr.mxu0 0.0
    %1457 = vmatpush2.xpose.msra.mxu0 0.0
    %1458 = vmatprep.subr.mxu0 0.0
    %1459 = vmatpush2.xpose.msra.mxu0 0.0
    %1460 = vmatprep.mubr.f32.mxu0 0.0
    %1461 = vmatmul.mubr.f32.gmra.mxu0 %v393
    %v1462 = vpop.f32.mrf.mxu0
    %v1463 = vadd.f32 0.0, %v1462
    %v1464 = vpop.f32.mrf.mxu0
    %1465 = vmatprep.mubr.f32.mxu0 0.0
    %1466 = vmatmul.mubr.f32.gmra.mxu0 %v398
    %v1467 = vpop.f32.mrf.mxu0
    %v1468 = vadd.f32 0.0, %v1467
    %v1469 = vpop.f32.mrf.mxu0
    %1470 = vdwg.mxu0
    %1471 = vmatprep.subr.mxu0 0.0
    %1472 = vmatpush1.xpose.msra.mxu0 0.0
    %1473 = vmatprep.subr.mxu0 0.0
    %1474 = vmatpush1.xpose.msra.mxu0 0.0
    %1475 = vmatprep.subr.mxu0 0.0
    %1476 = vmatpush1.xpose.msra.mxu0 0.0
    %1477 = vmatprep.subr.mxu0 0.0
    %1478 = vmatpush1.xpose.msra.mxu0 0.0
    %1479 = vmatprep.subr.mxu0 0.0
    %1480 = vmatpush1.xpose.msra.mxu0 0.0
    %1481 = vmatprep.subr.mxu0 0.0
    %1482 = vmatpush1.xpose.msra.mxu0 0.0
    %1483 = vmatprep.subr.mxu0 0.0
    %1484 = vmatpush1.xpose.msra.mxu0 0.0
    %1485 = vmatprep.subr.mxu0 0.0
    %1486 = vmatpush1.xpose.msra.mxu0 0.0
    %1487 = vmatprep.subr.mxu0 0.0
    %1488 = vmatpush1.xpose.msra.mxu0 0.0
    %1489 = vmatprep.subr.mxu0 0.0
    %1490 = vmatpush1.xpose.msra.mxu0 0.0
    %1491 = vmatprep.subr.mxu0 0.0
    %1492 = vmatpush1.xpose.msra.mxu0 0.0
    %1493 = vmatprep.subr.mxu0 0.0
    %1494 = vmatpush1.xpose.msra.mxu0 0.0
    %1495 = vmatprep.subr.mxu0 0.0
    %1496 = vmatpush1.xpose.msra.mxu0 0.0
    %1497 = vmatprep.subr.mxu0 0.0
    %1498 = vmatpush1.xpose.msra.mxu0 %v128
    %1499 = vmatprep.subr.mxu0 0.0
    %1500 = vmatpush1.xpose.msra.mxu0 %v127
    %1501 = vmatprep.subr.mxu0 0.0
    %1502 = vmatpush1.xpose.msra.mxu0 %v126
    %1503 = vmatprep.subr.mxu0 0.0
    %1504 = vmatpush2.xpose.msra.mxu0 0.0
    %1505 = vmatprep.subr.mxu0 0.0
    %1506 = vmatpush2.xpose.msra.mxu0 0.0
    %1507 = vmatprep.subr.mxu0 0.0
    %1508 = vmatpush2.xpose.msra.mxu0 0.0
    %1509 = vmatprep.subr.mxu0 0.0
    %1510 = vmatpush2.xpose.msra.mxu0 0.0
    %1511 = vmatprep.subr.mxu0 0.0
    %1512 = vmatpush2.xpose.msra.mxu0 0.0
    %1513 = vmatprep.subr.mxu0 0.0
    %1514 = vmatpush2.xpose.msra.mxu0 0.0
    %1515 = vmatprep.subr.mxu0 0.0
    %1516 = vmatpush2.xpose.msra.mxu0 0.0
    %1517 = vmatprep.subr.mxu0 0.0
    %1518 = vmatpush2.xpose.msra.mxu0 0.0
    %1519 = vmatprep.subr.mxu0 0.0
    %1520 = vmatpush2.xpose.msra.mxu0 0.0
    %1521 = vmatprep.subr.mxu0 0.0
    %1522 = vmatpush2.xpose.msra.mxu0 0.0
    %1523 = vmatprep.subr.mxu0 0.0
    %1524 = vmatpush2.xpose.msra.mxu0 0.0
    %1525 = vmatprep.subr.mxu0 0.0
    %1526 = vmatpush2.xpose.msra.mxu0 0.0
    %1527 = vmatprep.subr.mxu0 0.0
    %1528 = vmatpush2.xpose.msra.mxu0 0.0
    %1529 = vmatprep.subr.mxu0 0.0
    %1530 = vmatpush2.xpose.msra.mxu0 0.0
    %1531 = vmatprep.subr.mxu0 0.0
    %1532 = vmatpush2.xpose.msra.mxu0 0.0
    %1533 = vmatprep.subr.mxu0 0.0
    %1534 = vmatpush2.xpose.msra.mxu0 0.0
    %1535 = vmatprep.mubr.f32.mxu0 0.0
    %1536 = vmatmul.mubr.f32.gmra.mxu0 %v403
    %v1537 = vpop.f32.mrf.mxu0
    %v1538 = vadd.f32 0.0, %v1537
    %v1539 = vpop.f32.mrf.mxu0
    %1540 = vmatprep.mubr.f32.mxu0 0.0
    %1541 = vmatmul.mubr.f32.gmra.mxu0 %v408
    %v1542 = vpop.f32.mrf.mxu0
    %v1543 = vadd.f32 0.0, %v1542
    %v1544 = vpop.f32.mrf.mxu0
    %1545 = vdwg.mxu0
    %1546 = vmatprep.subr.mxu0 0.0
    %1547 = vmatpush1.xpose.msra.mxu0 0.0
    %1548 = vmatprep.subr.mxu0 0.0
    %1549 = vmatpush1.xpose.msra.mxu0 0.0
    %1550 = vmatprep.subr.mxu0 0.0
    %1551 = vmatpush1.xpose.msra.mxu0 0.0
    %1552 = vmatprep.subr.mxu0 0.0
    %1553 = vmatpush1.xpose.msra.mxu0 0.0
    %1554 = vmatprep.subr.mxu0 0.0
    %1555 = vmatpush1.xpose.msra.mxu0 0.0
    %1556 = vmatprep.subr.mxu0 0.0
    %1557 = vmatpush1.xpose.msra.mxu0 0.0
    %1558 = vmatprep.subr.mxu0 0.0
    %1559 = vmatpush1.xpose.msra.mxu0 0.0
    %1560 = vmatprep.subr.mxu0 0.0
    %1561 = vmatpush1.xpose.msra.mxu0 0.0
    %1562 = vmatprep.subr.mxu0 0.0
    %1563 = vmatpush1.xpose.msra.mxu0 0.0
    %1564 = vmatprep.subr.mxu0 0.0
    %1565 = vmatpush1.xpose.msra.mxu0 0.0
    %1566 = vmatprep.subr.mxu0 0.0
    %1567 = vmatpush1.xpose.msra.mxu0 0.0
    %1568 = vmatprep.subr.mxu0 0.0
    %1569 = vmatpush1.xpose.msra.mxu0 0.0
    %1570 = vmatprep.subr.mxu0 0.0
    %1571 = vmatpush1.xpose.msra.mxu0 0.0
    %1572 = vmatprep.subr.mxu0 0.0
    %1573 = vmatpush1.xpose.msra.mxu0 %v131
    %1574 = vmatprep.subr.mxu0 0.0
    %1575 = vmatpush1.xpose.msra.mxu0 %v130
    %1576 = vmatprep.subr.mxu0 0.0
    %1577 = vmatpush1.xpose.msra.mxu0 %v129
    %1578 = vmatprep.subr.mxu0 0.0
    %1579 = vmatpush2.xpose.msra.mxu0 0.0
    %1580 = vmatprep.subr.mxu0 0.0
    %1581 = vmatpush2.xpose.msra.mxu0 0.0
    %1582 = vmatprep.subr.mxu0 0.0
    %1583 = vmatpush2.xpose.msra.mxu0 0.0
    %1584 = vmatprep.subr.mxu0 0.0
    %1585 = vmatpush2.xpose.msra.mxu0 0.0
    %1586 = vmatprep.subr.mxu0 0.0
    %1587 = vmatpush2.xpose.msra.mxu0 0.0
    %1588 = vmatprep.subr.mxu0 0.0
    %1589 = vmatpush2.xpose.msra.mxu0 0.0
    %1590 = vmatprep.subr.mxu0 0.0
    %1591 = vmatpush2.xpose.msra.mxu0 0.0
    %1592 = vmatprep.subr.mxu0 0.0
    %1593 = vmatpush2.xpose.msra.mxu0 0.0
    %1594 = vmatprep.subr.mxu0 0.0
    %1595 = vmatpush2.xpose.msra.mxu0 0.0
    %1596 = vmatprep.subr.mxu0 0.0
    %1597 = vmatpush2.xpose.msra.mxu0 0.0
    %1598 = vmatprep.subr.mxu0 0.0
    %1599 = vmatpush2.xpose.msra.mxu0 0.0
    %1600 = vmatprep.subr.mxu0 0.0
    %1601 = vmatpush2.xpose.msra.mxu0 0.0
    %1602 = vmatprep.subr.mxu0 0.0
    %1603 = vmatpush2.xpose.msra.mxu0 0.0
    %1604 = vmatprep.subr.mxu0 0.0
    %1605 = vmatpush2.xpose.msra.mxu0 0.0
    %1606 = vmatprep.subr.mxu0 0.0
    %1607 = vmatpush2.xpose.msra.mxu0 0.0
    %1608 = vmatprep.subr.mxu0 0.0
    %1609 = vmatpush2.xpose.msra.mxu0 0.0
    %1610 = vmatprep.mubr.f32.mxu0 0.0
    %1611 = vmatmul.mubr.f32.gmra.mxu0 %v413
    %v1612 = vpop.f32.mrf.mxu0
    %v1613 = vadd.f32 0.0, %v1612
    %v1614 = vpop.f32.mrf.mxu0
    %1615 = vmatprep.mubr.f32.mxu0 0.0
    %1616 = vmatmul.mubr.f32.gmra.mxu0 %v418
    %v1617 = vpop.f32.mrf.mxu0
    %v1618 = vadd.f32 0.0, %v1617
    %v1619 = vpop.f32.mrf.mxu0
    %1620 = vdwg.mxu0
    %1622 = vset.pattern.permute.xlu0 0
    %1623 = vperm.xlu0 %1622, %v148
    %v1624 = vpop.permute.xlu0 %1623
    %1627 = vset.pattern.permute.xlu0 0
    %1628 = vperm.xlu0 %1627, %v149
    %v1629 = vpop.permute.xlu0 %1628
    %1632 = vset.pattern.permute.xlu0 0
    %1633 = vperm.xlu0 %1632, %v150
    %v1634 = vpop.permute.xlu0 %1633
    %1637 = vset.pattern.permute.xlu0 0
    %1638 = vperm.xlu0 %1637, %v151
    %v1639 = vpop.permute.xlu0 %1638
    %1642 = vset.pattern.permute.xlu0 0
    %1643 = vperm.xlu0 %1642, %v152
    %v1644 = vpop.permute.xlu0 %1643
    %1647 = vset.pattern.permute.xlu0 0
    %1648 = vperm.xlu0 %1647, %v153
    %v1649 = vpop.permute.xlu0 %1648
    %1652 = vset.pattern.permute.xlu0 0
    %1653 = vperm.xlu0 %1652, %v154
    %v1654 = vpop.permute.xlu0 %1653
    %1657 = vset.pattern.permute.xlu0 0
    %1658 = vperm.xlu0 %1657, %v155
    %v1659 = vpop.permute.xlu0 %1658
    %1662 = vset.pattern.permute.xlu0 0
    %1663 = vperm.xlu0 %1662, %v156
    %v1664 = vpop.permute.xlu0 %1663
    %1667 = vset.pattern.permute.xlu0 0
    %1668 = vperm.xlu0 %1667, %v157
    %v1669 = vpop.permute.xlu0 %1668
    %1672 = vset.pattern.permute.xlu0 0
    %1673 = vperm.xlu0 %1672, %v158
    %v1674 = vpop.permute.xlu0 %1673
    %1677 = vset.pattern.permute.xlu0 0
    %1678 = vperm.xlu0 %1677, %v159
    %v1679 = vpop.permute.xlu0 %1678
    %1682 = vset.pattern.permute.xlu0 0
    %1683 = vperm.xlu0 %1682, %v160
    %v1684 = vpop.permute.xlu0 %1683
    %1687 = vset.pattern.permute.xlu0 0
    %1688 = vperm.xlu0 %1687, %v161
    %v1689 = vpop.permute.xlu0 %1688
    %1692 = vset.pattern.permute.xlu0 0
    %1693 = vperm.xlu0 %1692, %v162
    %v1694 = vpop.permute.xlu0 %1693
    %1697 = vset.pattern.permute.xlu0 0
    %1698 = vperm.xlu0 %1697, %v163
    %v1699 = vpop.permute.xlu0 %1698
    %1702 = vset.pattern.permute.xlu0 0
    %1703 = vperm.xlu0 %1702, %v164
    %v1704 = vpop.permute.xlu0 %1703
    %1707 = vset.pattern.permute.xlu0 0
    %1708 = vperm.xlu0 %1707, %v165
    %v1709 = vpop.permute.xlu0 %1708
    %1712 = vset.pattern.permute.xlu0 0
    %1713 = vperm.xlu0 %1712, %v166
    %v1714 = vpop.permute.xlu0 %1713
    %1717 = vset.pattern.permute.xlu0 0
    %1718 = vperm.xlu0 %1717, %v167
    %v1719 = vpop.permute.xlu0 %1718
    %1722 = vset.pattern.permute.xlu0 0
    %1723 = vperm.xlu0 %1722, %v168
    %v1724 = vpop.permute.xlu0 %1723
    %1727 = vset.pattern.permute.xlu0 0
    %1728 = vperm.xlu0 %1727, %v169
    %v1729 = vpop.permute.xlu0 %1728
    %1732 = vset.pattern.permute.xlu0 0
    %1733 = vperm.xlu0 %1732, %v170
    %v1734 = vpop.permute.xlu0 %1733
    %1737 = vset.pattern.permute.xlu0 0
    %1738 = vperm.xlu0 %1737, %v171
    %v1739 = vpop.permute.xlu0 %1738
    %1742 = vset.pattern.permute.xlu0 0
    %1743 = vperm.xlu0 %1742, %v172
    %v1744 = vpop.permute.xlu0 %1743
    %1747 = vset.pattern.permute.xlu0 0
    %1748 = vperm.xlu0 %1747, %v173
    %v1749 = vpop.permute.xlu0 %1748
    %1752 = vset.pattern.permute.xlu0 0
    %1753 = vperm.xlu0 %1752, %v174
    %v1754 = vpop.permute.xlu0 %1753
    %1757 = vset.pattern.permute.xlu0 0
    %1758 = vperm.xlu0 %1757, %v175
    %v1759 = vpop.permute.xlu0 %1758
    %1762 = vset.pattern.permute.xlu0 0
    %1763 = vperm.xlu0 %1762, %v176
    %v1764 = vpop.permute.xlu0 %1763
    %1767 = vset.pattern.permute.xlu0 0
    %1768 = vperm.xlu0 %1767, %v177
    %v1769 = vpop.permute.xlu0 %1768
    %1772 = vset.pattern.permute.xlu0 0
    %1773 = vperm.xlu0 %1772, %v178
    %v1774 = vpop.permute.xlu0 %1773
    %1777 = vset.pattern.permute.xlu0 0
    %1778 = vperm.xlu0 %1777, %v179
    %v1779 = vpop.permute.xlu0 %1778
    %v1797 = vlaneseq
    %v1798 = vshrl.u32 %v1797, 7
    %v1799 = vsub.s32 0, %v1798
    %v1800 = vrot.slane %v180, %v1799
    %v1801 = vlaneseq
    %v1802 = vshrl.u32 %v1801, 7
    %v1803 = vsub.s32 0, %v1802
    %v1804 = vrot.slane %v181, %v1803
    %v1805 = vlaneseq
    %v1806 = vshrl.u32 %v1805, 7
    %v1807 = vsub.s32 0, %v1806
    %v1808 = vrot.slane %v182, %v1807
    %v1809 = vlaneseq
    %v1810 = vshrl.u32 %v1809, 7
    %v1811 = vsub.s32 0, %v1810
    %v1812 = vrot.slane %v183, %v1811
    %v1813 = vlaneseq
    %v1814 = vshrl.u32 %v1813, 7
    %v1815 = vsub.s32 0, %v1814
    %v1816 = vrot.slane %v184, %v1815
    %v1817 = vlaneseq
    %v1818 = vshrl.u32 %v1817, 7
    %v1819 = vsub.s32 0, %v1818
    %v1820 = vrot.slane %v185, %v1819
    %v1821 = vlaneseq
    %v1822 = vshrl.u32 %v1821, 7
    %v1823 = vsub.s32 0, %v1822
    %v1824 = vrot.slane %v186, %v1823
    %v1825 = vlaneseq
    %v1826 = vshrl.u32 %v1825, 7
    %v1827 = vsub.s32 0, %v1826
    %v1828 = vrot.slane %v187, %v1827
    %v1829 = vlaneseq
    %v1830 = vshrl.u32 %v1829, 7
    %v1831 = vsub.s32 0, %v1830
    %v1832 = vrot.slane %v188, %v1831
    %v1833 = vlaneseq
    %v1834 = vshrl.u32 %v1833, 7
    %v1835 = vsub.s32 0, %v1834
    %v1836 = vrot.slane %v189, %v1835
    %v1837 = vlaneseq
    %v1838 = vshrl.u32 %v1837, 7
    %v1839 = vsub.s32 0, %v1838
    %v1840 = vrot.slane %v190, %v1839
    %v1841 = vlaneseq
    %v1842 = vshrl.u32 %v1841, 7
    %v1843 = vsub.s32 0, %v1842
    %v1844 = vrot.slane %v191, %v1843
    %v1845 = vlaneseq
    %v1846 = vshrl.u32 %v1845, 7
    %v1847 = vsub.s32 0, %v1846
    %v1848 = vrot.slane %v192, %v1847
    %v1849 = vlaneseq
    %v1850 = vshrl.u32 %v1849, 7
    %v1851 = vsub.s32 0, %v1850
    %v1852 = vrot.slane %v193, %v1851
    %v1853 = vlaneseq
    %v1854 = vshrl.u32 %v1853, 7
    %v1855 = vsub.s32 0, %v1854
    %v1856 = vrot.slane %v194, %v1855
    %v1857 = vlaneseq
    %v1858 = vshrl.u32 %v1857, 7
    %v1859 = vsub.s32 0, %v1858
    %v1860 = vrot.slane %v195, %v1859
    %v1877 = vadd.f32 %v1624, %v1800
    %v1878 = vadd.f32 %v1629, %v1800
    %v1879 = vadd.f32 %v1634, %v1804
    %v1880 = vadd.f32 %v1639, %v1804
    %v1881 = vadd.f32 %v1644, %v1808
    %v1882 = vadd.f32 %v1649, %v1808
    %v1883 = vadd.f32 %v1654, %v1812
    %v1884 = vadd.f32 %v1659, %v1812
    %v1885 = vadd.f32 %v1664, %v1816
    %v1886 = vadd.f32 %v1669, %v1816
    %v1887 = vadd.f32 %v1674, %v1820
    %v1888 = vadd.f32 %v1679, %v1820
    %v1889 = vadd.f32 %v1684, %v1824
    %v1890 = vadd.f32 %v1689, %v1824
    %v1891 = vadd.f32 %v1694, %v1828
    %v1892 = vadd.f32 %v1699, %v1828
    %v1893 = vadd.f32 %v1704, %v1832
    %v1894 = vadd.f32 %v1709, %v1832
    %v1895 = vadd.f32 %v1714, %v1836
    %v1896 = vadd.f32 %v1719, %v1836
    %v1897 = vadd.f32 %v1724, %v1840
    %v1898 = vadd.f32 %v1729, %v1840
    %v1899 = vadd.f32 %v1734, %v1844
    %v1900 = vadd.f32 %v1739, %v1844
    %v1901 = vadd.f32 %v1744, %v1848
    %v1902 = vadd.f32 %v1749, %v1848
    %v1903 = vadd.f32 %v1754, %v1852
    %v1904 = vadd.f32 %v1759, %v1852
    %v1905 = vadd.f32 %v1764, %v1856
    %v1906 = vadd.f32 %v1769, %v1856
    %v1907 = vadd.f32 %v1774, %v1860
    %v1908 = vadd.f32 %v1779, %v1860
    %vm1909 = vcmp.gt.f32.partialorder %v1877, 0.0
    %vm1910 = vcmp.gt.f32.partialorder %v1878, 0.0
    %vm1911 = vcmp.gt.f32.partialorder %v1879, 0.0
    %vm1912 = vcmp.gt.f32.partialorder %v1880, 0.0
    %vm1913 = vcmp.gt.f32.partialorder %v1881, 0.0
    %vm1914 = vcmp.gt.f32.partialorder %v1882, 0.0
    %vm1915 = vcmp.gt.f32.partialorder %v1883, 0.0
    %vm1916 = vcmp.gt.f32.partialorder %v1884, 0.0
    %vm1917 = vcmp.gt.f32.partialorder %v1885, 0.0
    %vm1918 = vcmp.gt.f32.partialorder %v1886, 0.0
    %vm1919 = vcmp.gt.f32.partialorder %v1887, 0.0
    %vm1920 = vcmp.gt.f32.partialorder %v1888, 0.0
    %vm1921 = vcmp.gt.f32.partialorder %v1889, 0.0
    %vm1922 = vcmp.gt.f32.partialorder %v1890, 0.0
    %vm1923 = vcmp.gt.f32.partialorder %v1891, 0.0
    %vm1924 = vcmp.gt.f32.partialorder %v1892, 0.0
    %vm1925 = vcmp.gt.f32.partialorder %v1893, 0.0
    %vm1926 = vcmp.gt.f32.partialorder %v1894, 0.0
    %vm1927 = vcmp.gt.f32.partialorder %v1895, 0.0
    %vm1928 = vcmp.gt.f32.partialorder %v1896, 0.0
    %vm1929 = vcmp.gt.f32.partialorder %v1897, 0.0
    %vm1930 = vcmp.gt.f32.partialorder %v1898, 0.0
    %vm1931 = vcmp.gt.f32.partialorder %v1899, 0.0
    %vm1932 = vcmp.gt.f32.partialorder %v1900, 0.0
    %vm1933 = vcmp.gt.f32.partialorder %v1901, 0.0
    %vm1934 = vcmp.gt.f32.partialorder %v1902, 0.0
    %vm1935 = vcmp.gt.f32.partialorder %v1903, 0.0
    %vm1936 = vcmp.gt.f32.partialorder %v1904, 0.0
    %vm1937 = vcmp.gt.f32.partialorder %v1905, 0.0
    %vm1938 = vcmp.gt.f32.partialorder %v1906, 0.0
    %vm1939 = vcmp.gt.f32.partialorder %v1907, 0.0
    %vm1940 = vcmp.gt.f32.partialorder %v1908, 0.0
    %v1941 = vmax.f32 %v488, 0.0
    %v1942 = vmax.f32 %v493, 0.0
    %v1943 = vmax.f32 %v563, 0.0
    %v1944 = vmax.f32 %v568, 0.0
    %v1945 = vmax.f32 %v638, 0.0
    %v1946 = vmax.f32 %v643, 0.0
    %v1947 = vmax.f32 %v713, 0.0
    %v1948 = vmax.f32 %v718, 0.0
    %v1949 = vmax.f32 %v788, 0.0
    %v1950 = vmax.f32 %v793, 0.0
    %v1951 = vmax.f32 %v863, 0.0
    %v1952 = vmax.f32 %v868, 0.0
    %v1953 = vmax.f32 %v938, 0.0
    %v1954 = vmax.f32 %v943, 0.0
    %v1955 = vmax.f32 %v1013, 0.0
    %v1956 = vmax.f32 %v1018, 0.0
    %v1957 = vmax.f32 %v1088, 0.0
    %v1958 = vmax.f32 %v1093, 0.0
    %v1959 = vmax.f32 %v1163, 0.0
    %v1960 = vmax.f32 %v1168, 0.0
    %v1961 = vmax.f32 %v1238, 0.0
    %v1962 = vmax.f32 %v1243, 0.0
    %v1963 = vmax.f32 %v1313, 0.0
    %v1964 = vmax.f32 %v1318, 0.0
    %v1965 = vmax.f32 %v1388, 0.0
    %v1966 = vmax.f32 %v1393, 0.0
    %v1967 = vmax.f32 %v1463, 0.0
    %v1968 = vmax.f32 %v1468, 0.0
    %v1969 = vmax.f32 %v1538, 0.0
    %v1970 = vmax.f32 %v1543, 0.0
    %v1971 = vmax.f32 %v1613, 0.0
    %v1972 = vmax.f32 %v1618, 0.0
    %v1973 = vsel %vm1909, -10000.0, %v1941
    %v1974 = vsel %vm1910, -10000.0, %v1942
    %v1975 = vsel %vm1911, -10000.0, %v1943
    %v1976 = vsel %vm1912, -10000.0, %v1944
    %v1977 = vsel %vm1913, -10000.0, %v1945
    %v1978 = vsel %vm1914, -10000.0, %v1946
    %v1979 = vsel %vm1915, -10000.0, %v1947
    %v1980 = vsel %vm1916, -10000.0, %v1948
    %v1981 = vsel %vm1917, -10000.0, %v1949
    %v1982 = vsel %vm1918, -10000.0, %v1950
    %v1983 = vsel %vm1919, -10000.0, %v1951
    %v1984 = vsel %vm1920, -10000.0, %v1952
    %v1985 = vsel %vm1921, -10000.0, %v1953
    %v1986 = vsel %vm1922, -10000.0, %v1954
    %v1987 = vsel %vm1923, -10000.0, %v1955
    %v1988 = vsel %vm1924, -10000.0, %v1956
    %v1989 = vsel %vm1925, -10000.0, %v1957
    %v1990 = vsel %vm1926, -10000.0, %v1958
    %v1991 = vsel %vm1927, -10000.0, %v1959
    %v1992 = vsel %vm1928, -10000.0, %v1960
    %v1993 = vsel %vm1929, -10000.0, %v1961
    %v1994 = vsel %vm1930, -10000.0, %v1962
    %v1995 = vsel %vm1931, -10000.0, %v1963
    %v1996 = vsel %vm1932, -10000.0, %v1964
    %v1997 = vsel %vm1933, -10000.0, %v1965
    %v1998 = vsel %vm1934, -10000.0, %v1966
    %v1999 = vsel %vm1935, -10000.0, %v1967
    %v2000 = vsel %vm1936, -10000.0, %v1968
    %v2001 = vsel %vm1937, -10000.0, %v1969
    %v2002 = vsel %vm1938, -10000.0, %v1970
    %v2003 = vsel %vm1939, -10000.0, %v1971
    %v2004 = vsel %vm1940, -10000.0, %v1972
    %vm2005 = vcmask 195584
    %v2006 = vsel %vm2005, %v1973, -inf
    %2007 = vmax.xlane.f32.xlu0 %v2006
    %v2008 = vpop.xlane.xlu0 %2007
    %v2009 = vsel %vm2005, %v1974, -inf
    %2010 = vmax.xlane.f32.xlu0 %v2009
    %v2011 = vpop.xlane.xlu0 %2010
    %v2012 = vsel %vm2005, %v1975, -inf
    %2013 = vmax.xlane.f32.xlu0 %v2012
    %v2014 = vpop.xlane.xlu0 %2013
    %v2015 = vsel %vm2005, %v1976, -inf
    %2016 = vmax.xlane.f32.xlu0 %v2015
    %v2017 = vpop.xlane.xlu0 %2016
    %v2018 = vsel %vm2005, %v1977, -inf
    %2019 = vmax.xlane.f32.xlu0 %v2018
    %v2020 = vpop.xlane.xlu0 %2019
    %v2021 = vsel %vm2005, %v1978, -inf
    %2022 = vmax.xlane.f32.xlu0 %v2021
    %v2023 = vpop.xlane.xlu0 %2022
    %v2024 = vsel %vm2005, %v1979, -inf
    %2025 = vmax.xlane.f32.xlu0 %v2024
    %v2026 = vpop.xlane.xlu0 %2025
    %v2027 = vsel %vm2005, %v1980, -inf
    %2028 = vmax.xlane.f32.xlu0 %v2027
    %v2029 = vpop.xlane.xlu0 %2028
    %v2030 = vsel %vm2005, %v1981, -inf
    %2031 = vmax.xlane.f32.xlu0 %v2030
    %v2032 = vpop.xlane.xlu0 %2031
    %v2033 = vsel %vm2005, %v1982, -inf
    %2034 = vmax.xlane.f32.xlu0 %v2033
    %v2035 = vpop.xlane.xlu0 %2034
    %v2036 = vsel %vm2005, %v1983, -inf
    %2037 = vmax.xlane.f32.xlu0 %v2036
    %v2038 = vpop.xlane.xlu0 %2037
    %v2039 = vsel %vm2005, %v1984, -inf
    %2040 = vmax.xlane.f32.xlu0 %v2039
    %v2041 = vpop.xlane.xlu0 %2040
    %v2042 = vsel %vm2005, %v1985, -inf
    %2043 = vmax.xlane.f32.xlu0 %v2042
    %v2044 = vpop.xlane.xlu0 %2043
    %v2045 = vsel %vm2005, %v1986, -inf
    %2046 = vmax.xlane.f32.xlu0 %v2045
    %v2047 = vpop.xlane.xlu0 %2046
    %v2048 = vsel %vm2005, %v1987, -inf
    %2049 = vmax.xlane.f32.xlu0 %v2048
    %v2050 = vpop.xlane.xlu0 %2049
    %v2051 = vsel %vm2005, %v1988, -inf
    %2052 = vmax.xlane.f32.xlu0 %v2051
    %v2053 = vpop.xlane.xlu0 %2052
    %v2054 = vsel %vm2005, %v1989, -inf
    %2055 = vmax.xlane.f32.xlu0 %v2054
    %v2056 = vpop.xlane.xlu0 %2055
    %v2057 = vsel %vm2005, %v1990, -inf
    %2058 = vmax.xlane.f32.xlu0 %v2057
    %v2059 = vpop.xlane.xlu0 %2058
    %v2060 = vsel %vm2005, %v1991, -inf
    %2061 = vmax.xlane.f32.xlu0 %v2060
    %v2062 = vpop.xlane.xlu0 %2061
    %v2063 = vsel %vm2005, %v1992, -inf
    %2064 = vmax.xlane.f32.xlu0 %v2063
    %v2065 = vpop.xlane.xlu0 %2064
    %v2066 = vsel %vm2005, %v1993, -inf
    %2067 = vmax.xlane.f32.xlu0 %v2066
    %v2068 = vpop.xlane.xlu0 %2067
    %v2069 = vsel %vm2005, %v1994, -inf
    %2070 = vmax.xlane.f32.xlu0 %v2069
    %v2071 = vpop.xlane.xlu0 %2070
    %v2072 = vsel %vm2005, %v1995, -inf
    %2073 = vmax.xlane.f32.xlu0 %v2072
    %v2074 = vpop.xlane.xlu0 %2073
    %v2075 = vsel %vm2005, %v1996, -inf
    %2076 = vmax.xlane.f32.xlu0 %v2075
    %v2077 = vpop.xlane.xlu0 %2076
    %v2078 = vsel %vm2005, %v1997, -inf
    %2079 = vmax.xlane.f32.xlu0 %v2078
    %v2080 = vpop.xlane.xlu0 %2079
    %v2081 = vsel %vm2005, %v1998, -inf
    %2082 = vmax.xlane.f32.xlu0 %v2081
    %v2083 = vpop.xlane.xlu0 %2082
    %v2084 = vsel %vm2005, %v1999, -inf
    %2085 = vmax.xlane.f32.xlu0 %v2084
    %v2086 = vpop.xlane.xlu0 %2085
    %v2087 = vsel %vm2005, %v2000, -inf
    %2088 = vmax.xlane.f32.xlu0 %v2087
    %v2089 = vpop.xlane.xlu0 %2088
    %v2090 = vsel %vm2005, %v2001, -inf
    %2091 = vmax.xlane.f32.xlu0 %v2090
    %v2092 = vpop.xlane.xlu0 %2091
    %v2093 = vsel %vm2005, %v2002, -inf
    %2094 = vmax.xlane.f32.xlu0 %v2093
    %v2095 = vpop.xlane.xlu0 %2094
    %v2096 = vsel %vm2005, %v2003, -inf
    %2097 = vmax.xlane.f32.xlu0 %v2096
    %v2098 = vpop.xlane.xlu0 %2097
    %v2099 = vsel %vm2005, %v2004, -inf
    %2100 = vmax.xlane.f32.xlu0 %v2099
    %v2101 = vpop.xlane.xlu0 %2100
    %v2102 = vmax.f32 %v2006, %v2009
    %v2103 = vrot.slane %v2102, 4
    %v2104 = vmax.f32 %v2102, %v2103
    %v2105 = vrot.slane %v2104, 2
    %v2106 = vmax.f32 %v2104, %v2105
    %v2107 = vrot.slane %v2106, 1
    %v2108 = vmax.f32 %v2106, %v2107
    %v2109 = vmax.f32 %v2012, %v2015
    %v2110 = vrot.slane %v2109, 4
    %v2111 = vmax.f32 %v2109, %v2110
    %v2112 = vrot.slane %v2111, 2
    %v2113 = vmax.f32 %v2111, %v2112
    %v2114 = vrot.slane %v2113, 1
    %v2115 = vmax.f32 %v2113, %v2114
    %v2116 = vmax.f32 %v2018, %v2021
    %v2117 = vrot.slane %v2116, 4
    %v2118 = vmax.f32 %v2116, %v2117
    %v2119 = vrot.slane %v2118, 2
    %v2120 = vmax.f32 %v2118, %v2119
    %v2121 = vrot.slane %v2120, 1
    %v2122 = vmax.f32 %v2120, %v2121
    %v2123 = vmax.f32 %v2024, %v2027
    %v2124 = vrot.slane %v2123, 4
    %v2125 = vmax.f32 %v2123, %v2124
    %v2126 = vrot.slane %v2125, 2
    %v2127 = vmax.f32 %v2125, %v2126
    %v2128 = vrot.slane %v2127, 1
    %v2129 = vmax.f32 %v2127, %v2128
    %v2130 = vmax.f32 %v2030, %v2033
    %v2131 = vrot.slane %v2130, 4
    %v2132 = vmax.f32 %v2130, %v2131
    %v2133 = vrot.slane %v2132, 2
    %v2134 = vmax.f32 %v2132, %v2133
    %v2135 = vrot.slane %v2134, 1
    %v2136 = vmax.f32 %v2134, %v2135
    %v2137 = vmax.f32 %v2036, %v2039
    %v2138 = vrot.slane %v2137, 4
    %v2139 = vmax.f32 %v2137, %v2138
    %v2140 = vrot.slane %v2139, 2
    %v2141 = vmax.f32 %v2139, %v2140
    %v2142 = vrot.slane %v2141, 1
    %v2143 = vmax.f32 %v2141, %v2142
    %v2144 = vmax.f32 %v2042, %v2045
    %v2145 = vrot.slane %v2144, 4
    %v2146 = vmax.f32 %v2144, %v2145
    %v2147 = vrot.slane %v2146, 2
    %v2148 = vmax.f32 %v2146, %v2147
    %v2149 = vrot.slane %v2148, 1
    %v2150 = vmax.f32 %v2148, %v2149
    %v2151 = vmax.f32 %v2048, %v2051
    %v2152 = vrot.slane %v2151, 4
    %v2153 = vmax.f32 %v2151, %v2152
    %v2154 = vrot.slane %v2153, 2
    %v2155 = vmax.f32 %v2153, %v2154
    %v2156 = vrot.slane %v2155, 1
    %v2157 = vmax.f32 %v2155, %v2156
    %v2158 = vmax.f32 %v2054, %v2057
    %v2159 = vrot.slane %v2158, 4
    %v2160 = vmax.f32 %v2158, %v2159
    %v2161 = vrot.slane %v2160, 2
    %v2162 = vmax.f32 %v2160, %v2161
    %v2163 = vrot.slane %v2162, 1
    %v2164 = vmax.f32 %v2162, %v2163
    %v2165 = vmax.f32 %v2060, %v2063
    %v2166 = vrot.slane %v2165, 4
    %v2167 = vmax.f32 %v2165, %v2166
    %v2168 = vrot.slane %v2167, 2
    %v2169 = vmax.f32 %v2167, %v2168
    %v2170 = vrot.slane %v2169, 1
    %v2171 = vmax.f32 %v2169, %v2170
    %v2172 = vmax.f32 %v2066, %v2069
    %v2173 = vrot.slane %v2172, 4
    %v2174 = vmax.f32 %v2172, %v2173
    %v2175 = vrot.slane %v2174, 2
    %v2176 = vmax.f32 %v2174, %v2175
    %v2177 = vrot.slane %v2176, 1
    %v2178 = vmax.f32 %v2176, %v2177
    %v2179 = vmax.f32 %v2072, %v2075
    %v2180 = vrot.slane %v2179, 4
    %v2181 = vmax.f32 %v2179, %v2180
    %v2182 = vrot.slane %v2181, 2
    %v2183 = vmax.f32 %v2181, %v2182
    %v2184 = vrot.slane %v2183, 1
    %v2185 = vmax.f32 %v2183, %v2184
    %v2186 = vmax.f32 %v2078, %v2081
    %v2187 = vrot.slane %v2186, 4
    %v2188 = vmax.f32 %v2186, %v2187
    %v2189 = vrot.slane %v2188, 2
    %v2190 = vmax.f32 %v2188, %v2189
    %v2191 = vrot.slane %v2190, 1
    %v2192 = vmax.f32 %v2190, %v2191
    %v2193 = vmax.f32 %v2084, %v2087
    %v2194 = vrot.slane %v2193, 4
    %v2195 = vmax.f32 %v2193, %v2194
    %v2196 = vrot.slane %v2195, 2
    %v2197 = vmax.f32 %v2195, %v2196
    %v2198 = vrot.slane %v2197, 1
    %v2199 = vmax.f32 %v2197, %v2198
    %v2200 = vmax.f32 %v2090, %v2093
    %v2201 = vrot.slane %v2200, 4
    %v2202 = vmax.f32 %v2200, %v2201
    %v2203 = vrot.slane %v2202, 2
    %v2204 = vmax.f32 %v2202, %v2203
    %v2205 = vrot.slane %v2204, 1
    %v2206 = vmax.f32 %v2204, %v2205
    %v2207 = vmax.f32 %v2096, %v2099
    %v2208 = vrot.slane %v2207, 4
    %v2209 = vmax.f32 %v2207, %v2208
    %v2210 = vrot.slane %v2209, 2
    %v2211 = vmax.f32 %v2209, %v2210
    %v2212 = vrot.slane %v2211, 1
    %v2213 = vmax.f32 %v2211, %v2212
    %v2214 = vsub.f32 %v1973, %v2008
    %v2215 = vsub.f32 %v1974, %v2011
    %v2216 = vsub.f32 %v1975, %v2014
    %v2217 = vsub.f32 %v1976, %v2017
    %v2218 = vsub.f32 %v1977, %v2020
    %v2219 = vsub.f32 %v1978, %v2023
    %v2220 = vsub.f32 %v1979, %v2026
    %v2221 = vsub.f32 %v1980, %v2029
    %v2222 = vsub.f32 %v1981, %v2032
    %v2223 = vsub.f32 %v1982, %v2035
    %v2224 = vsub.f32 %v1983, %v2038
    %v2225 = vsub.f32 %v1984, %v2041
    %v2226 = vsub.f32 %v1985, %v2044
    %v2227 = vsub.f32 %v1986, %v2047
    %v2228 = vsub.f32 %v1987, %v2050
    %v2229 = vsub.f32 %v1988, %v2053
    %v2230 = vsub.f32 %v1989, %v2056
    %v2231 = vsub.f32 %v1990, %v2059
    %v2232 = vsub.f32 %v1991, %v2062
    %v2233 = vsub.f32 %v1992, %v2065
    %v2234 = vsub.f32 %v1993, %v2068
    %v2235 = vsub.f32 %v1994, %v2071
    %v2236 = vsub.f32 %v1995, %v2074
    %v2237 = vsub.f32 %v1996, %v2077
    %v2238 = vsub.f32 %v1997, %v2080
    %v2239 = vsub.f32 %v1998, %v2083
    %v2240 = vsub.f32 %v1999, %v2086
    %v2241 = vsub.f32 %v2000, %v2089
    %v2242 = vsub.f32 %v2001, %v2092
    %v2243 = vsub.f32 %v2002, %v2095
    %v2244 = vsub.f32 %v2003, %v2098
    %v2245 = vsub.f32 %v2004, %v2101
    %v2246 = vmul.f32 %v2214, 1.442695
    %v2247 = vpow.pop %v2246
    %v2248 = vmul.f32 %v2215, 1.442695
    %v2249 = vpow.pop %v2248
    %v2250 = vmul.f32 %v2216, 1.442695
    %v2251 = vpow.pop %v2250
    %v2252 = vmul.f32 %v2217, 1.442695
    %v2253 = vpow.pop %v2252
    %v2254 = vmul.f32 %v2218, 1.442695
    %v2255 = vpow.pop %v2254
    %v2256 = vmul.f32 %v2219, 1.442695
    %v2257 = vpow.pop %v2256
    %v2258 = vmul.f32 %v2220, 1.442695
    %v2259 = vpow.pop %v2258
    %v2260 = vmul.f32 %v2221, 1.442695
    %v2261 = vpow.pop %v2260
    %v2262 = vmul.f32 %v2222, 1.442695
    %v2263 = vpow.pop %v2262
    %v2264 = vmul.f32 %v2223, 1.442695
    %v2265 = vpow.pop %v2264
    %v2266 = vmul.f32 %v2224, 1.442695
    %v2267 = vpow.pop %v2266
    %v2268 = vmul.f32 %v2225, 1.442695
    %v2269 = vpow.pop %v2268
    %v2270 = vmul.f32 %v2226, 1.442695
    %v2271 = vpow.pop %v2270
    %v2272 = vmul.f32 %v2227, 1.442695
    %v2273 = vpow.pop %v2272
    %v2274 = vmul.f32 %v2228, 1.442695
    %v2275 = vpow.pop %v2274
    %v2276 = vmul.f32 %v2229, 1.442695
    %v2277 = vpow.pop %v2276
    %v2278 = vmul.f32 %v2230, 1.442695
    %v2279 = vpow.pop %v2278
    %v2280 = vmul.f32 %v2231, 1.442695
    %v2281 = vpow.pop %v2280
    %v2282 = vmul.f32 %v2232, 1.442695
    %v2283 = vpow.pop %v2282
    %v2284 = vmul.f32 %v2233, 1.442695
    %v2285 = vpow.pop %v2284
    %v2286 = vmul.f32 %v2234, 1.442695
    %v2287 = vpow.pop %v2286
    %v2288 = vmul.f32 %v2235, 1.442695
    %v2289 = vpow.pop %v2288
    %v2290 = vmul.f32 %v2236, 1.442695
    %v2291 = vpow.pop %v2290
    %v2292 = vmul.f32 %v2237, 1.442695
    %v2293 = vpow.pop %v2292
    %v2294 = vmul.f32 %v2238, 1.442695
    %v2295 = vpow.pop %v2294
    %v2296 = vmul.f32 %v2239, 1.442695
    %v2297 = vpow.pop %v2296
    %v2298 = vmul.f32 %v2240, 1.442695
    %v2299 = vpow.pop %v2298
    %v2300 = vmul.f32 %v2241, 1.442695
    %v2301 = vpow.pop %v2300
    %v2302 = vmul.f32 %v2242, 1.442695
    %v2303 = vpow.pop %v2302
    %v2304 = vmul.f32 %v2243, 1.442695
    %v2305 = vpow.pop %v2304
    %v2306 = vmul.f32 %v2244, 1.442695
    %v2307 = vpow.pop %v2306
    %v2308 = vmul.f32 %v2245, 1.442695
    %v2309 = vpow.pop %v2308
    %v2310 = vsub.f32 %v1973, %v2108
    %v2311 = vsub.f32 %v1974, %v2108
    %v2312 = vsub.f32 %v1975, %v2115
    %v2313 = vsub.f32 %v1976, %v2115
    %v2314 = vsub.f32 %v1977, %v2122
    %v2315 = vsub.f32 %v1978, %v2122
    %v2316 = vsub.f32 %v1979, %v2129
    %v2317 = vsub.f32 %v1980, %v2129
    %v2318 = vsub.f32 %v1981, %v2136
    %v2319 = vsub.f32 %v1982, %v2136
    %v2320 = vsub.f32 %v1983, %v2143
    %v2321 = vsub.f32 %v1984, %v2143
    %v2322 = vsub.f32 %v1985, %v2150
    %v2323 = vsub.f32 %v1986, %v2150
    %v2324 = vsub.f32 %v1987, %v2157
    %v2325 = vsub.f32 %v1988, %v2157
    %v2326 = vsub.f32 %v1989, %v2164
    %v2327 = vsub.f32 %v1990, %v2164
    %v2328 = vsub.f32 %v1991, %v2171
    %v2329 = vsub.f32 %v1992, %v2171
    %v2330 = vsub.f32 %v1993, %v2178
    %v2331 = vsub.f32 %v1994, %v2178
    %v2332 = vsub.f32 %v1995, %v2185
    %v2333 = vsub.f32 %v1996, %v2185
    %v2334 = vsub.f32 %v1997, %v2192
    %v2335 = vsub.f32 %v1998, %v2192
    %v2336 = vsub.f32 %v1999, %v2199
    %v2337 = vsub.f32 %v2000, %v2199
    %v2338 = vsub.f32 %v2001, %v2206
    %v2339 = vsub.f32 %v2002, %v2206
    %v2340 = vsub.f32 %v2003, %v2213
    %v2341 = vsub.f32 %v2004, %v2213
    %v2342 = vmul.f32 %v2310, 1.442695
    %v2343 = vpow.pop %v2342
    %v2344 = vmul.f32 %v2311, 1.442695
    %v2345 = vpow.pop %v2344
    %v2346 = vmul.f32 %v2312, 1.442695
    %v2347 = vpow.pop %v2346
    %v2348 = vmul.f32 %v2313, 1.442695
    %v2349 = vpow.pop %v2348
    %v2350 = vmul.f32 %v2314, 1.442695
    %v2351 = vpow.pop %v2350
    %v2352 = vmul.f32 %v2315, 1.442695
    %v2353 = vpow.pop %v2352
    %v2354 = vmul.f32 %v2316, 1.442695
    %v2355 = vpow.pop %v2354
    %v2356 = vmul.f32 %v2317, 1.442695
    %v2357 = vpow.pop %v2356
    %v2358 = vmul.f32 %v2318, 1.442695
    %v2359 = vpow.pop %v2358
    %v2360 = vmul.f32 %v2319, 1.442695
    %v2361 = vpow.pop %v2360
    %v2362 = vmul.f32 %v2320, 1.442695
    %v2363 = vpow.pop %v2362
    %v2364 = vmul.f32 %v2321, 1.442695
    %v2365 = vpow.pop %v2364
    %v2366 = vmul.f32 %v2322, 1.442695
    %v2367 = vpow.pop %v2366
    %v2368 = vmul.f32 %v2323, 1.442695
    %v2369 = vpow.pop %v2368
    %v2370 = vmul.f32 %v2324, 1.442695
    %v2371 = vpow.pop %v2370
    %v2372 = vmul.f32 %v2325, 1.442695
    %v2373 = vpow.pop %v2372
    %v2374 = vmul.f32 %v2326, 1.442695
    %v2375 = vpow.pop %v2374
    %v2376 = vmul.f32 %v2327, 1.442695
    %v2377 = vpow.pop %v2376
    %v2378 = vmul.f32 %v2328, 1.442695
    %v2379 = vpow.pop %v2378
    %v2380 = vmul.f32 %v2329, 1.442695
    %v2381 = vpow.pop %v2380
    %v2382 = vmul.f32 %v2330, 1.442695
    %v2383 = vpow.pop %v2382
    %v2384 = vmul.f32 %v2331, 1.442695
    %v2385 = vpow.pop %v2384
    %v2386 = vmul.f32 %v2332, 1.442695
    %v2387 = vpow.pop %v2386
    %v2388 = vmul.f32 %v2333, 1.442695
    %v2389 = vpow.pop %v2388
    %v2390 = vmul.f32 %v2334, 1.442695
    %v2391 = vpow.pop %v2390
    %v2392 = vmul.f32 %v2335, 1.442695
    %v2393 = vpow.pop %v2392
    %v2394 = vmul.f32 %v2336, 1.442695
    %v2395 = vpow.pop %v2394
    %v2396 = vmul.f32 %v2337, 1.442695
    %v2397 = vpow.pop %v2396
    %v2398 = vmul.f32 %v2338, 1.442695
    %v2399 = vpow.pop %v2398
    %v2400 = vmul.f32 %v2339, 1.442695
    %v2401 = vpow.pop %v2400
    %v2402 = vmul.f32 %v2340, 1.442695
    %v2403 = vpow.pop %v2402
    %v2404 = vmul.f32 %v2341, 1.442695
    %v2405 = vpow.pop %v2404
    %v2406 = vsel %vm2005, %v2247, 0.0
    %2407 = vadd.xlane.f32.xlu0 %v2406
    %v2408 = vpop.xlane.xlu0 %2407
    %v2409 = vsel %vm2005, %v2249, 0.0
    %2410 = vadd.xlane.f32.xlu0 %v2409
    %v2411 = vpop.xlane.xlu0 %2410
    %v2412 = vsel %vm2005, %v2251, 0.0
    %2413 = vadd.xlane.f32.xlu0 %v2412
    %v2414 = vpop.xlane.xlu0 %2413
    %v2415 = vsel %vm2005, %v2253, 0.0
    %2416 = vadd.xlane.f32.xlu0 %v2415
    %v2417 = vpop.xlane.xlu0 %2416
    %v2418 = vsel %vm2005, %v2255, 0.0
    %2419 = vadd.xlane.f32.xlu0 %v2418
    %v2420 = vpop.xlane.xlu0 %2419
    %v2421 = vsel %vm2005, %v2257, 0.0
    %2422 = vadd.xlane.f32.xlu0 %v2421
    %v2423 = vpop.xlane.xlu0 %2422
    %v2424 = vsel %vm2005, %v2259, 0.0
    %2425 = vadd.xlane.f32.xlu0 %v2424
    %v2426 = vpop.xlane.xlu0 %2425
    %v2427 = vsel %vm2005, %v2261, 0.0
    %2428 = vadd.xlane.f32.xlu0 %v2427
    %v2429 = vpop.xlane.xlu0 %2428
    %v2430 = vsel %vm2005, %v2263, 0.0
    %2431 = vadd.xlane.f32.xlu0 %v2430
    %v2432 = vpop.xlane.xlu0 %2431
    %v2433 = vsel %vm2005, %v2265, 0.0
    %2434 = vadd.xlane.f32.xlu0 %v2433
    %v2435 = vpop.xlane.xlu0 %2434
    %v2436 = vsel %vm2005, %v2267, 0.0
    %2437 = vadd.xlane.f32.xlu0 %v2436
    %v2438 = vpop.xlane.xlu0 %2437
    %v2439 = vsel %vm2005, %v2269, 0.0
    %2440 = vadd.xlane.f32.xlu0 %v2439
    %v2441 = vpop.xlane.xlu0 %2440
    %v2442 = vsel %vm2005, %v2271, 0.0
    %2443 = vadd.xlane.f32.xlu0 %v2442
    %v2444 = vpop.xlane.xlu0 %2443
    %v2445 = vsel %vm2005, %v2273, 0.0
    %2446 = vadd.xlane.f32.xlu0 %v2445
    %v2447 = vpop.xlane.xlu0 %2446
    %v2448 = vsel %vm2005, %v2275, 0.0
    %2449 = vadd.xlane.f32.xlu0 %v2448
    %v2450 = vpop.xlane.xlu0 %2449
    %v2451 = vsel %vm2005, %v2277, 0.0
    %2452 = vadd.xlane.f32.xlu0 %v2451
    %v2453 = vpop.xlane.xlu0 %2452
    %v2454 = vsel %vm2005, %v2279, 0.0
    %2455 = vadd.xlane.f32.xlu0 %v2454
    %v2456 = vpop.xlane.xlu0 %2455
    %v2457 = vsel %vm2005, %v2281, 0.0
    %2458 = vadd.xlane.f32.xlu0 %v2457
    %v2459 = vpop.xlane.xlu0 %2458
    %v2460 = vsel %vm2005, %v2283, 0.0
    %2461 = vadd.xlane.f32.xlu0 %v2460
    %v2462 = vpop.xlane.xlu0 %2461
    %v2463 = vsel %vm2005, %v2285, 0.0
    %2464 = vadd.xlane.f32.xlu0 %v2463
    %v2465 = vpop.xlane.xlu0 %2464
    %v2466 = vsel %vm2005, %v2287, 0.0
    %2467 = vadd.xlane.f32.xlu0 %v2466
    %v2468 = vpop.xlane.xlu0 %2467
    %v2469 = vsel %vm2005, %v2289, 0.0
    %2470 = vadd.xlane.f32.xlu0 %v2469
    %v2471 = vpop.xlane.xlu0 %2470
    %v2472 = vsel %vm2005, %v2291, 0.0
    %2473 = vadd.xlane.f32.xlu0 %v2472
    %v2474 = vpop.xlane.xlu0 %2473
    %v2475 = vsel %vm2005, %v2293, 0.0
    %2476 = vadd.xlane.f32.xlu0 %v2475
    %v2477 = vpop.xlane.xlu0 %2476
    %v2478 = vsel %vm2005, %v2295, 0.0
    %2479 = vadd.xlane.f32.xlu0 %v2478
    %v2480 = vpop.xlane.xlu0 %2479
    %v2481 = vsel %vm2005, %v2297, 0.0
    %2482 = vadd.xlane.f32.xlu0 %v2481
    %v2483 = vpop.xlane.xlu0 %2482
    %v2484 = vsel %vm2005, %v2299, 0.0
    %2485 = vadd.xlane.f32.xlu0 %v2484
    %v2486 = vpop.xlane.xlu0 %2485
    %v2487 = vsel %vm2005, %v2301, 0.0
    %2488 = vadd.xlane.f32.xlu0 %v2487
    %v2489 = vpop.xlane.xlu0 %2488
    %v2490 = vsel %vm2005, %v2303, 0.0
    %2491 = vadd.xlane.f32.xlu0 %v2490
    %v2492 = vpop.xlane.xlu0 %2491
    %v2493 = vsel %vm2005, %v2305, 0.0
    %2494 = vadd.xlane.f32.xlu0 %v2493
    %v2495 = vpop.xlane.xlu0 %2494
    %v2496 = vsel %vm2005, %v2307, 0.0
    %2497 = vadd.xlane.f32.xlu0 %v2496
    %v2498 = vpop.xlane.xlu0 %2497
    %v2499 = vsel %vm2005, %v2309, 0.0
    %2500 = vadd.xlane.f32.xlu0 %v2499
    %v2501 = vpop.xlane.xlu0 %2500
    %v2503 = vsel %vm2005, %v2247, 0
    %v2506 = vsel %vm2005, %v2249, 0
    %2508 = vmatprep.subr.mxu0 0.0
    %2509 = vmatpush1.msra.mxu0 0.0
    %2510 = vmatprep.subr.mxu0 0.0
    %2511 = vmatpush1.msra.mxu0 0.0
    %2512 = vmatprep.subr.mxu0 0.0
    %2513 = vmatpush1.msra.mxu0 0.0
    %2514 = vmatprep.subr.mxu0 0.0
    %2515 = vmatpush1.msra.mxu0 0.0
    %2516 = vmatprep.subr.mxu0 0.0
    %2517 = vmatpush1.msra.mxu0 0.0
    %2518 = vmatprep.subr.mxu0 0.0
    %2519 = vmatpush1.msra.mxu0 0.0
    %2520 = vmatprep.subr.mxu0 0.0
    %2521 = vmatpush1.msra.mxu0 0.0
    %2522 = vmatprep.subr.mxu0 0.0
    %2523 = vmatpush1.msra.mxu0 0.0
    %2524 = vmatprep.subr.mxu0 0.0
    %2525 = vmatpush1.msra.mxu0 0.0
    %2526 = vmatprep.subr.mxu0 0.0
    %2527 = vmatpush1.msra.mxu0 0.0
    %2528 = vmatprep.subr.mxu0 0.0
    %2529 = vmatpush1.msra.mxu0 0.0
    %2530 = vmatprep.subr.mxu0 0.0
    %2531 = vmatpush1.msra.mxu0 0.0
    %2532 = vmatprep.subr.mxu0 0.0
    %2533 = vmatpush1.msra.mxu0 0.0
    %2534 = vmatprep.subr.mxu0 0.0
    %2535 = vmatpush1.msra.mxu0 %v86
    %2536 = vmatprep.subr.mxu0 0.0
    %2537 = vmatpush1.msra.mxu0 %v85
    %2538 = vmatprep.subr.mxu0 0.0
    %2539 = vmatpush1.msra.mxu0 %v84
    %2540 = vmatprep.subr.mxu0 0.0
    %2541 = vmatpush2.msra.mxu0 0.0
    %2542 = vmatprep.subr.mxu0 0.0
    %2543 = vmatpush2.msra.mxu0 0.0
    %2544 = vmatprep.subr.mxu0 0.0
    %2545 = vmatpush2.msra.mxu0 0.0
    %2546 = vmatprep.subr.mxu0 0.0
    %2547 = vmatpush2.msra.mxu0 0.0
    %2548 = vmatprep.subr.mxu0 0.0
    %2549 = vmatpush2.msra.mxu0 0.0
    %2550 = vmatprep.subr.mxu0 0.0
    %2551 = vmatpush2.msra.mxu0 0.0
    %2552 = vmatprep.subr.mxu0 0.0
    %2553 = vmatpush2.msra.mxu0 0.0
    %2554 = vmatprep.subr.mxu0 0.0
    %2555 = vmatpush2.msra.mxu0 0.0
    %2556 = vmatprep.subr.mxu0 0.0
    %2557 = vmatpush2.msra.mxu0 0.0
    %2558 = vmatprep.subr.mxu0 0.0
    %2559 = vmatpush2.msra.mxu0 0.0
    %2560 = vmatprep.subr.mxu0 0.0
    %2561 = vmatpush2.msra.mxu0 0.0
    %2562 = vmatprep.subr.mxu0 0.0
    %2563 = vmatpush2.msra.mxu0 0.0
    %2564 = vmatprep.subr.mxu0 0.0
    %2565 = vmatpush2.msra.mxu0 0.0
    %2566 = vmatprep.subr.mxu0 0.0
    %2567 = vmatpush2.msra.mxu0 0.0
    %2568 = vmatprep.subr.mxu0 0.0
    %2569 = vmatpush2.msra.mxu0 0.0
    %2570 = vmatprep.subr.mxu0 0.0
    %2571 = vmatpush2.msra.mxu0 0.0
    %2572 = vmatprep.mubr.f32.mxu0 0.0
    %2573 = vmatmul.mubr.f32.gmra.mxu0 %v2503
    %v2574 = vpop.f32.mrf.mxu0
    %v2575 = vadd.f32 0.0, %v2574
    %v2576 = vpop.f32.mrf.mxu0
    %2577 = vmatprep.mubr.f32.mxu0 0.0
    %2578 = vmatmul.mubr.f32.gmra.mxu0 %v2506
    %v2579 = vpop.f32.mrf.mxu0
    %v2580 = vadd.f32 0.0, %v2579
    %v2581 = vpop.f32.mrf.mxu0
    %2582 = vdwg.mxu0
    %v2584 = vsel %vm2005, %v2251, 0
    %v2587 = vsel %vm2005, %v2253, 0
    %2589 = vmatprep.subr.mxu0 0.0
    %2590 = vmatpush1.msra.mxu0 0.0
    %2591 = vmatprep.subr.mxu0 0.0
    %2592 = vmatpush1.msra.mxu0 0.0
    %2593 = vmatprep.subr.mxu0 0.0
    %2594 = vmatpush1.msra.mxu0 0.0
    %2595 = vmatprep.subr.mxu0 0.0
    %2596 = vmatpush1.msra.mxu0 0.0
    %2597 = vmatprep.subr.mxu0 0.0
    %2598 = vmatpush1.msra.mxu0 0.0
    %2599 = vmatprep.subr.mxu0 0.0
    %2600 = vmatpush1.msra.mxu0 0.0
    %2601 = vmatprep.subr.mxu0 0.0
    %2602 = vmatpush1.msra.mxu0 0.0
    %2603 = vmatprep.subr.mxu0 0.0
    %2604 = vmatpush1.msra.mxu0 0.0
    %2605 = vmatprep.subr.mxu0 0.0
    %2606 = vmatpush1.msra.mxu0 0.0
    %2607 = vmatprep.subr.mxu0 0.0
    %2608 = vmatpush1.msra.mxu0 0.0
    %2609 = vmatprep.subr.mxu0 0.0
    %2610 = vmatpush1.msra.mxu0 0.0
    %2611 = vmatprep.subr.mxu0 0.0
    %2612 = vmatpush1.msra.mxu0 0.0
    %2613 = vmatprep.subr.mxu0 0.0
    %2614 = vmatpush1.msra.mxu0 0.0
    %2615 = vmatprep.subr.mxu0 0.0
    %2616 = vmatpush1.msra.mxu0 %v89
    %2617 = vmatprep.subr.mxu0 0.0
    %2618 = vmatpush1.msra.mxu0 %v88
    %2619 = vmatprep.subr.mxu0 0.0
    %2620 = vmatpush1.msra.mxu0 %v87
    %2621 = vmatprep.subr.mxu0 0.0
    %2622 = vmatpush2.msra.mxu0 0.0
    %2623 = vmatprep.subr.mxu0 0.0
    %2624 = vmatpush2.msra.mxu0 0.0
    %2625 = vmatprep.subr.mxu0 0.0
    %2626 = vmatpush2.msra.mxu0 0.0
    %2627 = vmatprep.subr.mxu0 0.0
    %2628 = vmatpush2.msra.mxu0 0.0
    %2629 = vmatprep.subr.mxu0 0.0
    %2630 = vmatpush2.msra.mxu0 0.0
    %2631 = vmatprep.subr.mxu0 0.0
    %2632 = vmatpush2.msra.mxu0 0.0
    %2633 = vmatprep.subr.mxu0 0.0
    %2634 = vmatpush2.msra.mxu0 0.0
    %2635 = vmatprep.subr.mxu0 0.0
    %2636 = vmatpush2.msra.mxu0 0.0
    %2637 = vmatprep.subr.mxu0 0.0
    %2638 = vmatpush2.msra.mxu0 0.0
    %2639 = vmatprep.subr.mxu0 0.0
    %2640 = vmatpush2.msra.mxu0 0.0
    %2641 = vmatprep.subr.mxu0 0.0
    %2642 = vmatpush2.msra.mxu0 0.0
    %2643 = vmatprep.subr.mxu0 0.0
    %2644 = vmatpush2.msra.mxu0 0.0
    %2645 = vmatprep.subr.mxu0 0.0
    %2646 = vmatpush2.msra.mxu0 0.0
    %2647 = vmatprep.subr.mxu0 0.0
    %2648 = vmatpush2.msra.mxu0 0.0
    %2649 = vmatprep.subr.mxu0 0.0
    %2650 = vmatpush2.msra.mxu0 0.0
    %2651 = vmatprep.subr.mxu0 0.0
    %2652 = vmatpush2.msra.mxu0 0.0
    %2653 = vmatprep.mubr.f32.mxu0 0.0
    %2654 = vmatmul.mubr.f32.gmra.mxu0 %v2584
    %v2655 = vpop.f32.mrf.mxu0
    %v2656 = vadd.f32 0.0, %v2655
    %v2657 = vpop.f32.mrf.mxu0
    %2658 = vmatprep.mubr.f32.mxu0 0.0
    %2659 = vmatmul.mubr.f32.gmra.mxu0 %v2587
    %v2660 = vpop.f32.mrf.mxu0
    %v2661 = vadd.f32 0.0, %v2660
    %v2662 = vpop.f32.mrf.mxu0
    %2663 = vdwg.mxu0
    %v2665 = vsel %vm2005, %v2255, 0
    %v2668 = vsel %vm2005, %v2257, 0
    %2670 = vmatprep.subr.mxu0 0.0
    %2671 = vmatpush1.msra.mxu0 0.0
    %2672 = vmatprep.subr.mxu0 0.0
    %2673 = vmatpush1.msra.mxu0 0.0
    %2674 = vmatprep.subr.mxu0 0.0
    %2675 = vmatpush1.msra.mxu0 0.0
    %2676 = vmatprep.subr.mxu0 0.0
    %2677 = vmatpush1.msra.mxu0 0.0
    %2678 = vmatprep.subr.mxu0 0.0
    %2679 = vmatpush1.msra.mxu0 0.0
    %2680 = vmatprep.subr.mxu0 0.0
    %2681 = vmatpush1.msra.mxu0 0.0
    %2682 = vmatprep.subr.mxu0 0.0
    %2683 = vmatpush1.msra.mxu0 0.0
    %2684 = vmatprep.subr.mxu0 0.0
    %2685 = vmatpush1.msra.mxu0 0.0
    %2686 = vmatprep.subr.mxu0 0.0
    %2687 = vmatpush1.msra.mxu0 0.0
    %2688 = vmatprep.subr.mxu0 0.0
    %2689 = vmatpush1.msra.mxu0 0.0
    %2690 = vmatprep.subr.mxu0 0.0
    %2691 = vmatpush1.msra.mxu0 0.0
    %2692 = vmatprep.subr.mxu0 0.0
    %2693 = vmatpush1.msra.mxu0 0.0
    %2694 = vmatprep.subr.mxu0 0.0
    %2695 = vmatpush1.msra.mxu0 0.0
    %2696 = vmatprep.subr.mxu0 0.0
    %2697 = vmatpush1.msra.mxu0 %v92
    %2698 = vmatprep.subr.mxu0 0.0
    %2699 = vmatpush1.msra.mxu0 %v91
    %2700 = vmatprep.subr.mxu0 0.0
    %2701 = vmatpush1.msra.mxu0 %v90
    %2702 = vmatprep.subr.mxu0 0.0
    %2703 = vmatpush2.msra.mxu0 0.0
    %2704 = vmatprep.subr.mxu0 0.0
    %2705 = vmatpush2.msra.mxu0 0.0
    %2706 = vmatprep.subr.mxu0 0.0
    %2707 = vmatpush2.msra.mxu0 0.0
    %2708 = vmatprep.subr.mxu0 0.0
    %2709 = vmatpush2.msra.mxu0 0.0
    %2710 = vmatprep.subr.mxu0 0.0
    %2711 = vmatpush2.msra.mxu0 0.0
    %2712 = vmatprep.subr.mxu0 0.0
    %2713 = vmatpush2.msra.mxu0 0.0
    %2714 = vmatprep.subr.mxu0 0.0
    %2715 = vmatpush2.msra.mxu0 0.0
    %2716 = vmatprep.subr.mxu0 0.0
    %2717 = vmatpush2.msra.mxu0 0.0
    %2718 = vmatprep.subr.mxu0 0.0
    %2719 = vmatpush2.msra.mxu0 0.0
    %2720 = vmatprep.subr.mxu0 0.0
    %2721 = vmatpush2.msra.mxu0 0.0
    %2722 = vmatprep.subr.mxu0 0.0
    %2723 = vmatpush2.msra.mxu0 0.0
    %2724 = vmatprep.subr.mxu0 0.0
    %2725 = vmatpush2.msra.mxu0 0.0
    %2726 = vmatprep.subr.mxu0 0.0
    %2727 = vmatpush2.msra.mxu0 0.0
    %2728 = vmatprep.subr.mxu0 0.0
    %2729 = vmatpush2.msra.mxu0 0.0
    %2730 = vmatprep.subr.mxu0 0.0
    %2731 = vmatpush2.msra.mxu0 0.0
    %2732 = vmatprep.subr.mxu0 0.0
    %2733 = vmatpush2.msra.mxu0 0.0
    %2734 = vmatprep.mubr.f32.mxu0 0.0
    %2735 = vmatmul.mubr.f32.gmra.mxu0 %v2665
    %v2736 = vpop.f32.mrf.mxu0
    %v2737 = vadd.f32 0.0, %v2736
    %v2738 = vpop.f32.mrf.mxu0
    %2739 = vmatprep.mubr.f32.mxu0 0.0
    %2740 = vmatmul.mubr.f32.gmra.mxu0 %v2668
    %v2741 = vpop.f32.mrf.mxu0
    %v2742 = vadd.f32 0.0, %v2741
    %v2743 = vpop.f32.mrf.mxu0
    %2744 = vdwg.mxu0
    %v2746 = vsel %vm2005, %v2259, 0
    %v2749 = vsel %vm2005, %v2261, 0
    %2751 = vmatprep.subr.mxu0 0.0
    %2752 = vmatpush1.msra.mxu0 0.0
    %2753 = vmatprep.subr.mxu0 0.0
    %2754 = vmatpush1.msra.mxu0 0.0
    %2755 = vmatprep.subr.mxu0 0.0
    %2756 = vmatpush1.msra.mxu0 0.0
    %2757 = vmatprep.subr.mxu0 0.0
    %2758 = vmatpush1.msra.mxu0 0.0
    %2759 = vmatprep.subr.mxu0 0.0
    %2760 = vmatpush1.msra.mxu0 0.0
    %2761 = vmatprep.subr.mxu0 0.0
    %2762 = vmatpush1.msra.mxu0 0.0
    %2763 = vmatprep.subr.mxu0 0.0
    %2764 = vmatpush1.msra.mxu0 0.0
    %2765 = vmatprep.subr.mxu0 0.0
    %2766 = vmatpush1.msra.mxu0 0.0
    %2767 = vmatprep.subr.mxu0 0.0
    %2768 = vmatpush1.msra.mxu0 0.0
    %2769 = vmatprep.subr.mxu0 0.0
    %2770 = vmatpush1.msra.mxu0 0.0
    %2771 = vmatprep.subr.mxu0 0.0
    %2772 = vmatpush1.msra.mxu0 0.0
    %2773 = vmatprep.subr.mxu0 0.0
    %2774 = vmatpush1.msra.mxu0 0.0
    %2775 = vmatprep.subr.mxu0 0.0
    %2776 = vmatpush1.msra.mxu0 0.0
    %2777 = vmatprep.subr.mxu0 0.0
    %2778 = vmatpush1.msra.mxu0 %v95
    %2779 = vmatprep.subr.mxu0 0.0
    %2780 = vmatpush1.msra.mxu0 %v94
    %2781 = vmatprep.subr.mxu0 0.0
    %2782 = vmatpush1.msra.mxu0 %v93
    %2783 = vmatprep.subr.mxu0 0.0
    %2784 = vmatpush2.msra.mxu0 0.0
    %2785 = vmatprep.subr.mxu0 0.0
    %2786 = vmatpush2.msra.mxu0 0.0
    %2787 = vmatprep.subr.mxu0 0.0
    %2788 = vmatpush2.msra.mxu0 0.0
    %2789 = vmatprep.subr.mxu0 0.0
    %2790 = vmatpush2.msra.mxu0 0.0
    %2791 = vmatprep.subr.mxu0 0.0
    %2792 = vmatpush2.msra.mxu0 0.0
    %2793 = vmatprep.subr.mxu0 0.0
    %2794 = vmatpush2.msra.mxu0 0.0
    %2795 = vmatprep.subr.mxu0 0.0
    %2796 = vmatpush2.msra.mxu0 0.0
    %2797 = vmatprep.subr.mxu0 0.0
    %2798 = vmatpush2.msra.mxu0 0.0
    %2799 = vmatprep.subr.mxu0 0.0
    %2800 = vmatpush2.msra.mxu0 0.0
    %2801 = vmatprep.subr.mxu0 0.0
    %2802 = vmatpush2.msra.mxu0 0.0
    %2803 = vmatprep.subr.mxu0 0.0
    %2804 = vmatpush2.msra.mxu0 0.0
    %2805 = vmatprep.subr.mxu0 0.0
    %2806 = vmatpush2.msra.mxu0 0.0
    %2807 = vmatprep.subr.mxu0 0.0
    %2808 = vmatpush2.msra.mxu0 0.0
    %2809 = vmatprep.subr.mxu0 0.0
    %2810 = vmatpush2.msra.mxu0 0.0
    %2811 = vmatprep.subr.mxu0 0.0
    %2812 = vmatpush2.msra.mxu0 0.0
    %2813 = vmatprep.subr.mxu0 0.0
    %2814 = vmatpush2.msra.mxu0 0.0
    %2815 = vmatprep.mubr.f32.mxu0 0.0
    %2816 = vmatmul.mubr.f32.gmra.mxu0 %v2746
    %v2817 = vpop.f32.mrf.mxu0
    %v2818 = vadd.f32 0.0, %v2817
    %v2819 = vpop.f32.mrf.mxu0
    %2820 = vmatprep.mubr.f32.mxu0 0.0
    %2821 = vmatmul.mubr.f32.gmra.mxu0 %v2749
    %v2822 = vpop.f32.mrf.mxu0
    %v2823 = vadd.f32 0.0, %v2822
    %v2824 = vpop.f32.mrf.mxu0
    %2825 = vdwg.mxu0
    %v2827 = vsel %vm2005, %v2263, 0
    %v2830 = vsel %vm2005, %v2265, 0
    %2832 = vmatprep.subr.mxu0 0.0
    %2833 = vmatpush1.msra.mxu0 0.0
    %2834 = vmatprep.subr.mxu0 0.0
    %2835 = vmatpush1.msra.mxu0 0.0
    %2836 = vmatprep.subr.mxu0 0.0
    %2837 = vmatpush1.msra.mxu0 0.0
    %2838 = vmatprep.subr.mxu0 0.0
    %2839 = vmatpush1.msra.mxu0 0.0
    %2840 = vmatprep.subr.mxu0 0.0
    %2841 = vmatpush1.msra.mxu0 0.0
    %2842 = vmatprep.subr.mxu0 0.0
    %2843 = vmatpush1.msra.mxu0 0.0
    %2844 = vmatprep.subr.mxu0 0.0
    %2845 = vmatpush1.msra.mxu0 0.0
    %2846 = vmatprep.subr.mxu0 0.0
    %2847 = vmatpush1.msra.mxu0 0.0
    %2848 = vmatprep.subr.mxu0 0.0
    %2849 = vmatpush1.msra.mxu0 0.0
    %2850 = vmatprep.subr.mxu0 0.0
    %2851 = vmatpush1.msra.mxu0 0.0
    %2852 = vmatprep.subr.mxu0 0.0
    %2853 = vmatpush1.msra.mxu0 0.0
    %2854 = vmatprep.subr.mxu0 0.0
    %2855 = vmatpush1.msra.mxu0 0.0
    %2856 = vmatprep.subr.mxu0 0.0
    %2857 = vmatpush1.msra.mxu0 0.0
    %2858 = vmatprep.subr.mxu0 0.0
    %2859 = vmatpush1.msra.mxu0 %v98
    %2860 = vmatprep.subr.mxu0 0.0
    %2861 = vmatpush1.msra.mxu0 %v97
    %2862 = vmatprep.subr.mxu0 0.0
    %2863 = vmatpush1.msra.mxu0 %v96
    %2864 = vmatprep.subr.mxu0 0.0
    %2865 = vmatpush2.msra.mxu0 0.0
    %2866 = vmatprep.subr.mxu0 0.0
    %2867 = vmatpush2.msra.mxu0 0.0
    %2868 = vmatprep.subr.mxu0 0.0
    %2869 = vmatpush2.msra.mxu0 0.0
    %2870 = vmatprep.subr.mxu0 0.0
    %2871 = vmatpush2.msra.mxu0 0.0
    %2872 = vmatprep.subr.mxu0 0.0
    %2873 = vmatpush2.msra.mxu0 0.0
    %2874 = vmatprep.subr.mxu0 0.0
    %2875 = vmatpush2.msra.mxu0 0.0
    %2876 = vmatprep.subr.mxu0 0.0
    %2877 = vmatpush2.msra.mxu0 0.0
    %2878 = vmatprep.subr.mxu0 0.0
    %2879 = vmatpush2.msra.mxu0 0.0
    %2880 = vmatprep.subr.mxu0 0.0
    %2881 = vmatpush2.msra.mxu0 0.0
    %2882 = vmatprep.subr.mxu0 0.0
    %2883 = vmatpush2.msra.mxu0 0.0
    %2884 = vmatprep.subr.mxu0 0.0
    %2885 = vmatpush2.msra.mxu0 0.0
    %2886 = vmatprep.subr.mxu0 0.0
    %2887 = vmatpush2.msra.mxu0 0.0
    %2888 = vmatprep.subr.mxu0 0.0
    %2889 = vmatpush2.msra.mxu0 0.0
    %2890 = vmatprep.subr.mxu0 0.0
    %2891 = vmatpush2.msra.mxu0 0.0
    %2892 = vmatprep.subr.mxu0 0.0
    %2893 = vmatpush2.msra.mxu0 0.0
    %2894 = vmatprep.subr.mxu0 0.0
    %2895 = vmatpush2.msra.mxu0 0.0
    %2896 = vmatprep.mubr.f32.mxu0 0.0
    %2897 = vmatmul.mubr.f32.gmra.mxu0 %v2827
    %v2898 = vpop.f32.mrf.mxu0
    %v2899 = vadd.f32 0.0, %v2898
    %v2900 = vpop.f32.mrf.mxu0
    %2901 = vmatprep.mubr.f32.mxu0 0.0
    %2902 = vmatmul.mubr.f32.gmra.mxu0 %v2830
    %v2903 = vpop.f32.mrf.mxu0
    %v2904 = vadd.f32 0.0, %v2903
    %v2905 = vpop.f32.mrf.mxu0
    %2906 = vdwg.mxu0
    %v2908 = vsel %vm2005, %v2267, 0
    %v2911 = vsel %vm2005, %v2269, 0
    %2913 = vmatprep.subr.mxu0 0.0
    %2914 = vmatpush1.msra.mxu0 0.0
    %2915 = vmatprep.subr.mxu0 0.0
    %2916 = vmatpush1.msra.mxu0 0.0
    %2917 = vmatprep.subr.mxu0 0.0
    %2918 = vmatpush1.msra.mxu0 0.0
    %2919 = vmatprep.subr.mxu0 0.0
    %2920 = vmatpush1.msra.mxu0 0.0
    %2921 = vmatprep.subr.mxu0 0.0
    %2922 = vmatpush1.msra.mxu0 0.0
    %2923 = vmatprep.subr.mxu0 0.0
    %2924 = vmatpush1.msra.mxu0 0.0
    %2925 = vmatprep.subr.mxu0 0.0
    %2926 = vmatpush1.msra.mxu0 0.0
    %2927 = vmatprep.subr.mxu0 0.0
    %2928 = vmatpush1.msra.mxu0 0.0
    %2929 = vmatprep.subr.mxu0 0.0
    %2930 = vmatpush1.msra.mxu0 0.0
    %2931 = vmatprep.subr.mxu0 0.0
    %2932 = vmatpush1.msra.mxu0 0.0
    %2933 = vmatprep.subr.mxu0 0.0
    %2934 = vmatpush1.msra.mxu0 0.0
    %2935 = vmatprep.subr.mxu0 0.0
    %2936 = vmatpush1.msra.mxu0 0.0
    %2937 = vmatprep.subr.mxu0 0.0
    %2938 = vmatpush1.msra.mxu0 0.0
    %2939 = vmatprep.subr.mxu0 0.0
    %2940 = vmatpush1.msra.mxu0 %v101
    %2941 = vmatprep.subr.mxu0 0.0
    %2942 = vmatpush1.msra.mxu0 %v100
    %2943 = vmatprep.subr.mxu0 0.0
    %2944 = vmatpush1.msra.mxu0 %v99
    %2945 = vmatprep.subr.mxu0 0.0
    %2946 = vmatpush2.msra.mxu0 0.0
    %2947 = vmatprep.subr.mxu0 0.0
    %2948 = vmatpush2.msra.mxu0 0.0
    %2949 = vmatprep.subr.mxu0 0.0
    %2950 = vmatpush2.msra.mxu0 0.0
    %2951 = vmatprep.subr.mxu0 0.0
    %2952 = vmatpush2.msra.mxu0 0.0
    %2953 = vmatprep.subr.mxu0 0.0
    %2954 = vmatpush2.msra.mxu0 0.0
    %2955 = vmatprep.subr.mxu0 0.0
    %2956 = vmatpush2.msra.mxu0 0.0
    %2957 = vmatprep.subr.mxu0 0.0
    %2958 = vmatpush2.msra.mxu0 0.0
    %2959 = vmatprep.subr.mxu0 0.0
    %2960 = vmatpush2.msra.mxu0 0.0
    %2961 = vmatprep.subr.mxu0 0.0
    %2962 = vmatpush2.msra.mxu0 0.0
    %2963 = vmatprep.subr.mxu0 0.0
    %2964 = vmatpush2.msra.mxu0 0.0
    %2965 = vmatprep.subr.mxu0 0.0
    %2966 = vmatpush2.msra.mxu0 0.0
    %2967 = vmatprep.subr.mxu0 0.0
    %2968 = vmatpush2.msra.mxu0 0.0
    %2969 = vmatprep.subr.mxu0 0.0
    %2970 = vmatpush2.msra.mxu0 0.0
    %2971 = vmatprep.subr.mxu0 0.0
    %2972 = vmatpush2.msra.mxu0 0.0
    %2973 = vmatprep.subr.mxu0 0.0
    %2974 = vmatpush2.msra.mxu0 0.0
    %2975 = vmatprep.subr.mxu0 0.0
    %2976 = vmatpush2.msra.mxu0 0.0
    %2977 = vmatprep.mubr.f32.mxu0 0.0
    %2978 = vmatmul.mubr.f32.gmra.mxu0 %v2908
    %v2979 = vpop.f32.mrf.mxu0
    %v2980 = vadd.f32 0.0, %v2979
    %v2981 = vpop.f32.mrf.mxu0
    %2982 = vmatprep.mubr.f32.mxu0 0.0
    %2983 = vmatmul.mubr.f32.gmra.mxu0 %v2911
    %v2984 = vpop.f32.mrf.mxu0
    %v2985 = vadd.f32 0.0, %v2984
    %v2986 = vpop.f32.mrf.mxu0
    %2987 = vdwg.mxu0
    %v2989 = vsel %vm2005, %v2271, 0
    %v2992 = vsel %vm2005, %v2273, 0
    %2994 = vmatprep.subr.mxu0 0.0
    %2995 = vmatpush1.msra.mxu0 0.0
    %2996 = vmatprep.subr.mxu0 0.0
    %2997 = vmatpush1.msra.mxu0 0.0
    %2998 = vmatprep.subr.mxu0 0.0
    %2999 = vmatpush1.msra.mxu0 0.0
    %3000 = vmatprep.subr.mxu0 0.0
    %3001 = vmatpush1.msra.mxu0 0.0
    %3002 = vmatprep.subr.mxu0 0.0
    %3003 = vmatpush1.msra.mxu0 0.0
    %3004 = vmatprep.subr.mxu0 0.0
    %3005 = vmatpush1.msra.mxu0 0.0
    %3006 = vmatprep.subr.mxu0 0.0
    %3007 = vmatpush1.msra.mxu0 0.0
    %3008 = vmatprep.subr.mxu0 0.0
    %3009 = vmatpush1.msra.mxu0 0.0
    %3010 = vmatprep.subr.mxu0 0.0
    %3011 = vmatpush1.msra.mxu0 0.0
    %3012 = vmatprep.subr.mxu0 0.0
    %3013 = vmatpush1.msra.mxu0 0.0
    %3014 = vmatprep.subr.mxu0 0.0
    %3015 = vmatpush1.msra.mxu0 0.0
    %3016 = vmatprep.subr.mxu0 0.0
    %3017 = vmatpush1.msra.mxu0 0.0
    %3018 = vmatprep.subr.mxu0 0.0
    %3019 = vmatpush1.msra.mxu0 0.0
    %3020 = vmatprep.subr.mxu0 0.0
    %3021 = vmatpush1.msra.mxu0 %v104
    %3022 = vmatprep.subr.mxu0 0.0
    %3023 = vmatpush1.msra.mxu0 %v103
    %3024 = vmatprep.subr.mxu0 0.0
    %3025 = vmatpush1.msra.mxu0 %v102
    %3026 = vmatprep.subr.mxu0 0.0
    %3027 = vmatpush2.msra.mxu0 0.0
    %3028 = vmatprep.subr.mxu0 0.0
    %3029 = vmatpush2.msra.mxu0 0.0
    %3030 = vmatprep.subr.mxu0 0.0
    %3031 = vmatpush2.msra.mxu0 0.0
    %3032 = vmatprep.subr.mxu0 0.0
    %3033 = vmatpush2.msra.mxu0 0.0
    %3034 = vmatprep.subr.mxu0 0.0
    %3035 = vmatpush2.msra.mxu0 0.0
    %3036 = vmatprep.subr.mxu0 0.0
    %3037 = vmatpush2.msra.mxu0 0.0
    %3038 = vmatprep.subr.mxu0 0.0
    %3039 = vmatpush2.msra.mxu0 0.0
    %3040 = vmatprep.subr.mxu0 0.0
    %3041 = vmatpush2.msra.mxu0 0.0
    %3042 = vmatprep.subr.mxu0 0.0
    %3043 = vmatpush2.msra.mxu0 0.0
    %3044 = vmatprep.subr.mxu0 0.0
    %3045 = vmatpush2.msra.mxu0 0.0
    %3046 = vmatprep.subr.mxu0 0.0
    %3047 = vmatpush2.msra.mxu0 0.0
    %3048 = vmatprep.subr.mxu0 0.0
    %3049 = vmatpush2.msra.mxu0 0.0
    %3050 = vmatprep.subr.mxu0 0.0
    %3051 = vmatpush2.msra.mxu0 0.0
    %3052 = vmatprep.subr.mxu0 0.0
    %3053 = vmatpush2.msra.mxu0 0.0
    %3054 = vmatprep.subr.mxu0 0.0
    %3055 = vmatpush2.msra.mxu0 0.0
    %3056 = vmatprep.subr.mxu0 0.0
    %3057 = vmatpush2.msra.mxu0 0.0
    %3058 = vmatprep.mubr.f32.mxu0 0.0
    %3059 = vmatmul.mubr.f32.gmra.mxu0 %v2989
    %v3060 = vpop.f32.mrf.mxu0
    %v3061 = vadd.f32 0.0, %v3060
    %v3062 = vpop.f32.mrf.mxu0
    %3063 = vmatprep.mubr.f32.mxu0 0.0
    %3064 = vmatmul.mubr.f32.gmra.mxu0 %v2992
    %v3065 = vpop.f32.mrf.mxu0
    %v3066 = vadd.f32 0.0, %v3065
    %v3067 = vpop.f32.mrf.mxu0
    %3068 = vdwg.mxu0
    %v3070 = vsel %vm2005, %v2275, 0
    %v3073 = vsel %vm2005, %v2277, 0
    %3075 = vmatprep.subr.mxu0 0.0
    %3076 = vmatpush1.msra.mxu0 0.0
    %3077 = vmatprep.subr.mxu0 0.0
    %3078 = vmatpush1.msra.mxu0 0.0
    %3079 = vmatprep.subr.mxu0 0.0
    %3080 = vmatpush1.msra.mxu0 0.0
    %3081 = vmatprep.subr.mxu0 0.0
    %3082 = vmatpush1.msra.mxu0 0.0
    %3083 = vmatprep.subr.mxu0 0.0
    %3084 = vmatpush1.msra.mxu0 0.0
    %3085 = vmatprep.subr.mxu0 0.0
    %3086 = vmatpush1.msra.mxu0 0.0
    %3087 = vmatprep.subr.mxu0 0.0
    %3088 = vmatpush1.msra.mxu0 0.0
    %3089 = vmatprep.subr.mxu0 0.0
    %3090 = vmatpush1.msra.mxu0 0.0
    %3091 = vmatprep.subr.mxu0 0.0
    %3092 = vmatpush1.msra.mxu0 0.0
    %3093 = vmatprep.subr.mxu0 0.0
    %3094 = vmatpush1.msra.mxu0 0.0
    %3095 = vmatprep.subr.mxu0 0.0
    %3096 = vmatpush1.msra.mxu0 0.0
    %3097 = vmatprep.subr.mxu0 0.0
    %3098 = vmatpush1.msra.mxu0 0.0
    %3099 = vmatprep.subr.mxu0 0.0
    %3100 = vmatpush1.msra.mxu0 0.0
    %3101 = vmatprep.subr.mxu0 0.0
    %3102 = vmatpush1.msra.mxu0 %v107
    %3103 = vmatprep.subr.mxu0 0.0
    %3104 = vmatpush1.msra.mxu0 %v106
    %3105 = vmatprep.subr.mxu0 0.0
    %3106 = vmatpush1.msra.mxu0 %v105
    %3107 = vmatprep.subr.mxu0 0.0
    %3108 = vmatpush2.msra.mxu0 0.0
    %3109 = vmatprep.subr.mxu0 0.0
    %3110 = vmatpush2.msra.mxu0 0.0
    %3111 = vmatprep.subr.mxu0 0.0
    %3112 = vmatpush2.msra.mxu0 0.0
    %3113 = vmatprep.subr.mxu0 0.0
    %3114 = vmatpush2.msra.mxu0 0.0
    %3115 = vmatprep.subr.mxu0 0.0
    %3116 = vmatpush2.msra.mxu0 0.0
    %3117 = vmatprep.subr.mxu0 0.0
    %3118 = vmatpush2.msra.mxu0 0.0
    %3119 = vmatprep.subr.mxu0 0.0
    %3120 = vmatpush2.msra.mxu0 0.0
    %3121 = vmatprep.subr.mxu0 0.0
    %3122 = vmatpush2.msra.mxu0 0.0
    %3123 = vmatprep.subr.mxu0 0.0
    %3124 = vmatpush2.msra.mxu0 0.0
    %3125 = vmatprep.subr.mxu0 0.0
    %3126 = vmatpush2.msra.mxu0 0.0
    %3127 = vmatprep.subr.mxu0 0.0
    %3128 = vmatpush2.msra.mxu0 0.0
    %3129 = vmatprep.subr.mxu0 0.0
    %3130 = vmatpush2.msra.mxu0 0.0
    %3131 = vmatprep.subr.mxu0 0.0
    %3132 = vmatpush2.msra.mxu0 0.0
    %3133 = vmatprep.subr.mxu0 0.0
    %3134 = vmatpush2.msra.mxu0 0.0
    %3135 = vmatprep.subr.mxu0 0.0
    %3136 = vmatpush2.msra.mxu0 0.0
    %3137 = vmatprep.subr.mxu0 0.0
    %3138 = vmatpush2.msra.mxu0 0.0
    %3139 = vmatprep.mubr.f32.mxu0 0.0
    %3140 = vmatmul.mubr.f32.gmra.mxu0 %v3070
    %v3141 = vpop.f32.mrf.mxu0
    %v3142 = vadd.f32 0.0, %v3141
    %v3143 = vpop.f32.mrf.mxu0
    %3144 = vmatprep.mubr.f32.mxu0 0.0
    %3145 = vmatmul.mubr.f32.gmra.mxu0 %v3073
    %v3146 = vpop.f32.mrf.mxu0
    %v3147 = vadd.f32 0.0, %v3146
    %v3148 = vpop.f32.mrf.mxu0
    %3149 = vdwg.mxu0
    %v3151 = vsel %vm2005, %v2279, 0
    %v3154 = vsel %vm2005, %v2281, 0
    %3156 = vmatprep.subr.mxu0 0.0
    %3157 = vmatpush1.msra.mxu0 0.0
    %3158 = vmatprep.subr.mxu0 0.0
    %3159 = vmatpush1.msra.mxu0 0.0
    %3160 = vmatprep.subr.mxu0 0.0
    %3161 = vmatpush1.msra.mxu0 0.0
    %3162 = vmatprep.subr.mxu0 0.0
    %3163 = vmatpush1.msra.mxu0 0.0
    %3164 = vmatprep.subr.mxu0 0.0
    %3165 = vmatpush1.msra.mxu0 0.0
    %3166 = vmatprep.subr.mxu0 0.0
    %3167 = vmatpush1.msra.mxu0 0.0
    %3168 = vmatprep.subr.mxu0 0.0
    %3169 = vmatpush1.msra.mxu0 0.0
    %3170 = vmatprep.subr.mxu0 0.0
    %3171 = vmatpush1.msra.mxu0 0.0
    %3172 = vmatprep.subr.mxu0 0.0
    %3173 = vmatpush1.msra.mxu0 0.0
    %3174 = vmatprep.subr.mxu0 0.0
    %3175 = vmatpush1.msra.mxu0 0.0
    %3176 = vmatprep.subr.mxu0 0.0
    %3177 = vmatpush1.msra.mxu0 0.0
    %3178 = vmatprep.subr.mxu0 0.0
    %3179 = vmatpush1.msra.mxu0 0.0
    %3180 = vmatprep.subr.mxu0 0.0
    %3181 = vmatpush1.msra.mxu0 0.0
    %3182 = vmatprep.subr.mxu0 0.0
    %3183 = vmatpush1.msra.mxu0 %v110
    %3184 = vmatprep.subr.mxu0 0.0
    %3185 = vmatpush1.msra.mxu0 %v109
    %3186 = vmatprep.subr.mxu0 0.0
    %3187 = vmatpush1.msra.mxu0 %v108
    %3188 = vmatprep.subr.mxu0 0.0
    %3189 = vmatpush2.msra.mxu0 0.0
    %3190 = vmatprep.subr.mxu0 0.0
    %3191 = vmatpush2.msra.mxu0 0.0
    %3192 = vmatprep.subr.mxu0 0.0
    %3193 = vmatpush2.msra.mxu0 0.0
    %3194 = vmatprep.subr.mxu0 0.0
    %3195 = vmatpush2.msra.mxu0 0.0
    %3196 = vmatprep.subr.mxu0 0.0
    %3197 = vmatpush2.msra.mxu0 0.0
    %3198 = vmatprep.subr.mxu0 0.0
    %3199 = vmatpush2.msra.mxu0 0.0
    %3200 = vmatprep.subr.mxu0 0.0
    %3201 = vmatpush2.msra.mxu0 0.0
    %3202 = vmatprep.subr.mxu0 0.0
    %3203 = vmatpush2.msra.mxu0 0.0
    %3204 = vmatprep.subr.mxu0 0.0
    %3205 = vmatpush2.msra.mxu0 0.0
    %3206 = vmatprep.subr.mxu0 0.0
    %3207 = vmatpush2.msra.mxu0 0.0
    %3208 = vmatprep.subr.mxu0 0.0
    %3209 = vmatpush2.msra.mxu0 0.0
    %3210 = vmatprep.subr.mxu0 0.0
    %3211 = vmatpush2.msra.mxu0 0.0
    %3212 = vmatprep.subr.mxu0 0.0
    %3213 = vmatpush2.msra.mxu0 0.0
    %3214 = vmatprep.subr.mxu0 0.0
    %3215 = vmatpush2.msra.mxu0 0.0
    %3216 = vmatprep.subr.mxu0 0.0
    %3217 = vmatpush2.msra.mxu0 0.0
    %3218 = vmatprep.subr.mxu0 0.0
    %3219 = vmatpush2.msra.mxu0 0.0
    %3220 = vmatprep.mubr.f32.mxu0 0.0
    %3221 = vmatmul.mubr.f32.gmra.mxu0 %v3151
    %v3222 = vpop.f32.mrf.mxu0
    %v3223 = vadd.f32 0.0, %v3222
    %v3224 = vpop.f32.mrf.mxu0
    %3225 = vmatprep.mubr.f32.mxu0 0.0
    %3226 = vmatmul.mubr.f32.gmra.mxu0 %v3154
    %v3227 = vpop.f32.mrf.mxu0
    %v3228 = vadd.f32 0.0, %v3227
    %v3229 = vpop.f32.mrf.mxu0
    %3230 = vdwg.mxu0
    %v3232 = vsel %vm2005, %v2283, 0
    %v3235 = vsel %vm2005, %v2285, 0
    %3237 = vmatprep.subr.mxu0 0.0
    %3238 = vmatpush1.msra.mxu0 0.0
    %3239 = vmatprep.subr.mxu0 0.0
    %3240 = vmatpush1.msra.mxu0 0.0
    %3241 = vmatprep.subr.mxu0 0.0
    %3242 = vmatpush1.msra.mxu0 0.0
    %3243 = vmatprep.subr.mxu0 0.0
    %3244 = vmatpush1.msra.mxu0 0.0
    %3245 = vmatprep.subr.mxu0 0.0
    %3246 = vmatpush1.msra.mxu0 0.0
    %3247 = vmatprep.subr.mxu0 0.0
    %3248 = vmatpush1.msra.mxu0 0.0
    %3249 = vmatprep.subr.mxu0 0.0
    %3250 = vmatpush1.msra.mxu0 0.0
    %3251 = vmatprep.subr.mxu0 0.0
    %3252 = vmatpush1.msra.mxu0 0.0
    %3253 = vmatprep.subr.mxu0 0.0
    %3254 = vmatpush1.msra.mxu0 0.0
    %3255 = vmatprep.subr.mxu0 0.0
    %3256 = vmatpush1.msra.mxu0 0.0
    %3257 = vmatprep.subr.mxu0 0.0
    %3258 = vmatpush1.msra.mxu0 0.0
    %3259 = vmatprep.subr.mxu0 0.0
    %3260 = vmatpush1.msra.mxu0 0.0
    %3261 = vmatprep.subr.mxu0 0.0
    %3262 = vmatpush1.msra.mxu0 0.0
    %3263 = vmatprep.subr.mxu0 0.0
    %3264 = vmatpush1.msra.mxu0 %v113
    %3265 = vmatprep.subr.mxu0 0.0
    %3266 = vmatpush1.msra.mxu0 %v112
    %3267 = vmatprep.subr.mxu0 0.0
    %3268 = vmatpush1.msra.mxu0 %v111
    %3269 = vmatprep.subr.mxu0 0.0
    %3270 = vmatpush2.msra.mxu0 0.0
    %3271 = vmatprep.subr.mxu0 0.0
    %3272 = vmatpush2.msra.mxu0 0.0
    %3273 = vmatprep.subr.mxu0 0.0
    %3274 = vmatpush2.msra.mxu0 0.0
    %3275 = vmatprep.subr.mxu0 0.0
    %3276 = vmatpush2.msra.mxu0 0.0
    %3277 = vmatprep.subr.mxu0 0.0
    %3278 = vmatpush2.msra.mxu0 0.0
    %3279 = vmatprep.subr.mxu0 0.0
    %3280 = vmatpush2.msra.mxu0 0.0
    %3281 = vmatprep.subr.mxu0 0.0
    %3282 = vmatpush2.msra.mxu0 0.0
    %3283 = vmatprep.subr.mxu0 0.0
    %3284 = vmatpush2.msra.mxu0 0.0
    %3285 = vmatprep.subr.mxu0 0.0
    %3286 = vmatpush2.msra.mxu0 0.0
    %3287 = vmatprep.subr.mxu0 0.0
    %3288 = vmatpush2.msra.mxu0 0.0
    %3289 = vmatprep.subr.mxu0 0.0
    %3290 = vmatpush2.msra.mxu0 0.0
    %3291 = vmatprep.subr.mxu0 0.0
    %3292 = vmatpush2.msra.mxu0 0.0
    %3293 = vmatprep.subr.mxu0 0.0
    %3294 = vmatpush2.msra.mxu0 0.0
    %3295 = vmatprep.subr.mxu0 0.0
    %3296 = vmatpush2.msra.mxu0 0.0
    %3297 = vmatprep.subr.mxu0 0.0
    %3298 = vmatpush2.msra.mxu0 0.0
    %3299 = vmatprep.subr.mxu0 0.0
    %3300 = vmatpush2.msra.mxu0 0.0
    %3301 = vmatprep.mubr.f32.mxu0 0.0
    %3302 = vmatmul.mubr.f32.gmra.mxu0 %v3232
    %v3303 = vpop.f32.mrf.mxu0
    %v3304 = vadd.f32 0.0, %v3303
    %v3305 = vpop.f32.mrf.mxu0
    %3306 = vmatprep.mubr.f32.mxu0 0.0
    %3307 = vmatmul.mubr.f32.gmra.mxu0 %v3235
    %v3308 = vpop.f32.mrf.mxu0
    %v3309 = vadd.f32 0.0, %v3308
    %v3310 = vpop.f32.mrf.mxu0
    %3311 = vdwg.mxu0
    %v3313 = vsel %vm2005, %v2287, 0
    %v3316 = vsel %vm2005, %v2289, 0
    %3318 = vmatprep.subr.mxu0 0.0
    %3319 = vmatpush1.msra.mxu0 0.0
    %3320 = vmatprep.subr.mxu0 0.0
    %3321 = vmatpush1.msra.mxu0 0.0
    %3322 = vmatprep.subr.mxu0 0.0
    %3323 = vmatpush1.msra.mxu0 0.0
    %3324 = vmatprep.subr.mxu0 0.0
    %3325 = vmatpush1.msra.mxu0 0.0
    %3326 = vmatprep.subr.mxu0 0.0
    %3327 = vmatpush1.msra.mxu0 0.0
    %3328 = vmatprep.subr.mxu0 0.0
    %3329 = vmatpush1.msra.mxu0 0.0
    %3330 = vmatprep.subr.mxu0 0.0
    %3331 = vmatpush1.msra.mxu0 0.0
    %3332 = vmatprep.subr.mxu0 0.0
    %3333 = vmatpush1.msra.mxu0 0.0
    %3334 = vmatprep.subr.mxu0 0.0
    %3335 = vmatpush1.msra.mxu0 0.0
    %3336 = vmatprep.subr.mxu0 0.0
    %3337 = vmatpush1.msra.mxu0 0.0
    %3338 = vmatprep.subr.mxu0 0.0
    %3339 = vmatpush1.msra.mxu0 0.0
    %3340 = vmatprep.subr.mxu0 0.0
    %3341 = vmatpush1.msra.mxu0 0.0
    %3342 = vmatprep.subr.mxu0 0.0
    %3343 = vmatpush1.msra.mxu0 0.0
    %3344 = vmatprep.subr.mxu0 0.0
    %3345 = vmatpush1.msra.mxu0 %v116
    %3346 = vmatprep.subr.mxu0 0.0
    %3347 = vmatpush1.msra.mxu0 %v115
    %3348 = vmatprep.subr.mxu0 0.0
    %3349 = vmatpush1.msra.mxu0 %v114
    %3350 = vmatprep.subr.mxu0 0.0
    %3351 = vmatpush2.msra.mxu0 0.0
    %3352 = vmatprep.subr.mxu0 0.0
    %3353 = vmatpush2.msra.mxu0 0.0
    %3354 = vmatprep.subr.mxu0 0.0
    %3355 = vmatpush2.msra.mxu0 0.0
    %3356 = vmatprep.subr.mxu0 0.0
    %3357 = vmatpush2.msra.mxu0 0.0
    %3358 = vmatprep.subr.mxu0 0.0
    %3359 = vmatpush2.msra.mxu0 0.0
    %3360 = vmatprep.subr.mxu0 0.0
    %3361 = vmatpush2.msra.mxu0 0.0
    %3362 = vmatprep.subr.mxu0 0.0
    %3363 = vmatpush2.msra.mxu0 0.0
    %3364 = vmatprep.subr.mxu0 0.0
    %3365 = vmatpush2.msra.mxu0 0.0
    %3366 = vmatprep.subr.mxu0 0.0
    %3367 = vmatpush2.msra.mxu0 0.0
    %3368 = vmatprep.subr.mxu0 0.0
    %3369 = vmatpush2.msra.mxu0 0.0
    %3370 = vmatprep.subr.mxu0 0.0
    %3371 = vmatpush2.msra.mxu0 0.0
    %3372 = vmatprep.subr.mxu0 0.0
    %3373 = vmatpush2.msra.mxu0 0.0
    %3374 = vmatprep.subr.mxu0 0.0
    %3375 = vmatpush2.msra.mxu0 0.0
    %3376 = vmatprep.subr.mxu0 0.0
    %3377 = vmatpush2.msra.mxu0 0.0
    %3378 = vmatprep.subr.mxu0 0.0
    %3379 = vmatpush2.msra.mxu0 0.0
    %3380 = vmatprep.subr.mxu0 0.0
    %3381 = vmatpush2.msra.mxu0 0.0
    %3382 = vmatprep.mubr.f32.mxu0 0.0
    %3383 = vmatmul.mubr.f32.gmra.mxu0 %v3313
    %v3384 = vpop.f32.mrf.mxu0
    %v3385 = vadd.f32 0.0, %v3384
    %v3386 = vpop.f32.mrf.mxu0
    %3387 = vmatprep.mubr.f32.mxu0 0.0
    %3388 = vmatmul.mubr.f32.gmra.mxu0 %v3316
    %v3389 = vpop.f32.mrf.mxu0
    %v3390 = vadd.f32 0.0, %v3389
    %v3391 = vpop.f32.mrf.mxu0
    %3392 = vdwg.mxu0
    %v3394 = vsel %vm2005, %v2291, 0
    %v3397 = vsel %vm2005, %v2293, 0
    %3399 = vmatprep.subr.mxu0 0.0
    %3400 = vmatpush1.msra.mxu0 0.0
    %3401 = vmatprep.subr.mxu0 0.0
    %3402 = vmatpush1.msra.mxu0 0.0
    %3403 = vmatprep.subr.mxu0 0.0
    %3404 = vmatpush1.msra.mxu0 0.0
    %3405 = vmatprep.subr.mxu0 0.0
    %3406 = vmatpush1.msra.mxu0 0.0
    %3407 = vmatprep.subr.mxu0 0.0
    %3408 = vmatpush1.msra.mxu0 0.0
    %3409 = vmatprep.subr.mxu0 0.0
    %3410 = vmatpush1.msra.mxu0 0.0
    %3411 = vmatprep.subr.mxu0 0.0
    %3412 = vmatpush1.msra.mxu0 0.0
    %3413 = vmatprep.subr.mxu0 0.0
    %3414 = vmatpush1.msra.mxu0 0.0
    %3415 = vmatprep.subr.mxu0 0.0
    %3416 = vmatpush1.msra.mxu0 0.0
    %3417 = vmatprep.subr.mxu0 0.0
    %3418 = vmatpush1.msra.mxu0 0.0
    %3419 = vmatprep.subr.mxu0 0.0
    %3420 = vmatpush1.msra.mxu0 0.0
    %3421 = vmatprep.subr.mxu0 0.0
    %3422 = vmatpush1.msra.mxu0 0.0
    %3423 = vmatprep.subr.mxu0 0.0
    %3424 = vmatpush1.msra.mxu0 0.0
    %3425 = vmatprep.subr.mxu0 0.0
    %3426 = vmatpush1.msra.mxu0 %v119
    %3427 = vmatprep.subr.mxu0 0.0
    %3428 = vmatpush1.msra.mxu0 %v118
    %3429 = vmatprep.subr.mxu0 0.0
    %3430 = vmatpush1.msra.mxu0 %v117
    %3431 = vmatprep.subr.mxu0 0.0
    %3432 = vmatpush2.msra.mxu0 0.0
    %3433 = vmatprep.subr.mxu0 0.0
    %3434 = vmatpush2.msra.mxu0 0.0
    %3435 = vmatprep.subr.mxu0 0.0
    %3436 = vmatpush2.msra.mxu0 0.0
    %3437 = vmatprep.subr.mxu0 0.0
    %3438 = vmatpush2.msra.mxu0 0.0
    %3439 = vmatprep.subr.mxu0 0.0
    %3440 = vmatpush2.msra.mxu0 0.0
    %3441 = vmatprep.subr.mxu0 0.0
    %3442 = vmatpush2.msra.mxu0 0.0
    %3443 = vmatprep.subr.mxu0 0.0
    %3444 = vmatpush2.msra.mxu0 0.0
    %3445 = vmatprep.subr.mxu0 0.0
    %3446 = vmatpush2.msra.mxu0 0.0
    %3447 = vmatprep.subr.mxu0 0.0
    %3448 = vmatpush2.msra.mxu0 0.0
    %3449 = vmatprep.subr.mxu0 0.0
    %3450 = vmatpush2.msra.mxu0 0.0
    %3451 = vmatprep.subr.mxu0 0.0
    %3452 = vmatpush2.msra.mxu0 0.0
    %3453 = vmatprep.subr.mxu0 0.0
    %3454 = vmatpush2.msra.mxu0 0.0
    %3455 = vmatprep.subr.mxu0 0.0
    %3456 = vmatpush2.msra.mxu0 0.0
    %3457 = vmatprep.subr.mxu0 0.0
    %3458 = vmatpush2.msra.mxu0 0.0
    %3459 = vmatprep.subr.mxu0 0.0
    %3460 = vmatpush2.msra.mxu0 0.0
    %3461 = vmatprep.subr.mxu0 0.0
    %3462 = vmatpush2.msra.mxu0 0.0
    %3463 = vmatprep.mubr.f32.mxu0 0.0
    %3464 = vmatmul.mubr.f32.gmra.mxu0 %v3394
    %v3465 = vpop.f32.mrf.mxu0
    %v3466 = vadd.f32 0.0, %v3465
    %v3467 = vpop.f32.mrf.mxu0
    %3468 = vmatprep.mubr.f32.mxu0 0.0
    %3469 = vmatmul.mubr.f32.gmra.mxu0 %v3397
    %v3470 = vpop.f32.mrf.mxu0
    %v3471 = vadd.f32 0.0, %v3470
    %v3472 = vpop.f32.mrf.mxu0
    %3473 = vdwg.mxu0
    %v3475 = vsel %vm2005, %v2295, 0
    %v3478 = vsel %vm2005, %v2297, 0
    %3480 = vmatprep.subr.mxu0 0.0
    %3481 = vmatpush1.msra.mxu0 0.0
    %3482 = vmatprep.subr.mxu0 0.0
    %3483 = vmatpush1.msra.mxu0 0.0
    %3484 = vmatprep.subr.mxu0 0.0
    %3485 = vmatpush1.msra.mxu0 0.0
    %3486 = vmatprep.subr.mxu0 0.0
    %3487 = vmatpush1.msra.mxu0 0.0
    %3488 = vmatprep.subr.mxu0 0.0
    %3489 = vmatpush1.msra.mxu0 0.0
    %3490 = vmatprep.subr.mxu0 0.0
    %3491 = vmatpush1.msra.mxu0 0.0
    %3492 = vmatprep.subr.mxu0 0.0
    %3493 = vmatpush1.msra.mxu0 0.0
    %3494 = vmatprep.subr.mxu0 0.0
    %3495 = vmatpush1.msra.mxu0 0.0
    %3496 = vmatprep.subr.mxu0 0.0
    %3497 = vmatpush1.msra.mxu0 0.0
    %3498 = vmatprep.subr.mxu0 0.0
    %3499 = vmatpush1.msra.mxu0 0.0
    %3500 = vmatprep.subr.mxu0 0.0
    %3501 = vmatpush1.msra.mxu0 0.0
    %3502 = vmatprep.subr.mxu0 0.0
    %3503 = vmatpush1.msra.mxu0 0.0
    %3504 = vmatprep.subr.mxu0 0.0
    %3505 = vmatpush1.msra.mxu0 0.0
    %3506 = vmatprep.subr.mxu0 0.0
    %3507 = vmatpush1.msra.mxu0 %v122
    %3508 = vmatprep.subr.mxu0 0.0
    %3509 = vmatpush1.msra.mxu0 %v121
    %3510 = vmatprep.subr.mxu0 0.0
    %3511 = vmatpush1.msra.mxu0 %v120
    %3512 = vmatprep.subr.mxu0 0.0
    %3513 = vmatpush2.msra.mxu0 0.0
    %3514 = vmatprep.subr.mxu0 0.0
    %3515 = vmatpush2.msra.mxu0 0.0
    %3516 = vmatprep.subr.mxu0 0.0
    %3517 = vmatpush2.msra.mxu0 0.0
    %3518 = vmatprep.subr.mxu0 0.0
    %3519 = vmatpush2.msra.mxu0 0.0
    %3520 = vmatprep.subr.mxu0 0.0
    %3521 = vmatpush2.msra.mxu0 0.0
    %3522 = vmatprep.subr.mxu0 0.0
    %3523 = vmatpush2.msra.mxu0 0.0
    %3524 = vmatprep.subr.mxu0 0.0
    %3525 = vmatpush2.msra.mxu0 0.0
    %3526 = vmatprep.subr.mxu0 0.0
    %3527 = vmatpush2.msra.mxu0 0.0
    %3528 = vmatprep.subr.mxu0 0.0
    %3529 = vmatpush2.msra.mxu0 0.0
    %3530 = vmatprep.subr.mxu0 0.0
    %3531 = vmatpush2.msra.mxu0 0.0
    %3532 = vmatprep.subr.mxu0 0.0
    %3533 = vmatpush2.msra.mxu0 0.0
    %3534 = vmatprep.subr.mxu0 0.0
    %3535 = vmatpush2.msra.mxu0 0.0
    %3536 = vmatprep.subr.mxu0 0.0
    %3537 = vmatpush2.msra.mxu0 0.0
    %3538 = vmatprep.subr.mxu0 0.0
    %3539 = vmatpush2.msra.mxu0 0.0
    %3540 = vmatprep.subr.mxu0 0.0
    %3541 = vmatpush2.msra.mxu0 0.0
    %3542 = vmatprep.subr.mxu0 0.0
    %3543 = vmatpush2.msra.mxu0 0.0
    %3544 = vmatprep.mubr.f32.mxu0 0.0
    %3545 = vmatmul.mubr.f32.gmra.mxu0 %v3475
    %v3546 = vpop.f32.mrf.mxu0
    %v3547 = vadd.f32 0.0, %v3546
    %v3548 = vpop.f32.mrf.mxu0
    %3549 = vmatprep.mubr.f32.mxu0 0.0
    %3550 = vmatmul.mubr.f32.gmra.mxu0 %v3478
    %v3551 = vpop.f32.mrf.mxu0
    %v3552 = vadd.f32 0.0, %v3551
    %v3553 = vpop.f32.mrf.mxu0
    %3554 = vdwg.mxu0
    %v3556 = vsel %vm2005, %v2299, 0
    %v3559 = vsel %vm2005, %v2301, 0
    %3561 = vmatprep.subr.mxu0 0.0
    %3562 = vmatpush1.msra.mxu0 0.0
    %3563 = vmatprep.subr.mxu0 0.0
    %3564 = vmatpush1.msra.mxu0 0.0
    %3565 = vmatprep.subr.mxu0 0.0
    %3566 = vmatpush1.msra.mxu0 0.0
    %3567 = vmatprep.subr.mxu0 0.0
    %3568 = vmatpush1.msra.mxu0 0.0
    %3569 = vmatprep.subr.mxu0 0.0
    %3570 = vmatpush1.msra.mxu0 0.0
    %3571 = vmatprep.subr.mxu0 0.0
    %3572 = vmatpush1.msra.mxu0 0.0
    %3573 = vmatprep.subr.mxu0 0.0
    %3574 = vmatpush1.msra.mxu0 0.0
    %3575 = vmatprep.subr.mxu0 0.0
    %3576 = vmatpush1.msra.mxu0 0.0
    %3577 = vmatprep.subr.mxu0 0.0
    %3578 = vmatpush1.msra.mxu0 0.0
    %3579 = vmatprep.subr.mxu0 0.0
    %3580 = vmatpush1.msra.mxu0 0.0
    %3581 = vmatprep.subr.mxu0 0.0
    %3582 = vmatpush1.msra.mxu0 0.0
    %3583 = vmatprep.subr.mxu0 0.0
    %3584 = vmatpush1.msra.mxu0 0.0
    %3585 = vmatprep.subr.mxu0 0.0
    %3586 = vmatpush1.msra.mxu0 0.0
    %3587 = vmatprep.subr.mxu0 0.0
    %3588 = vmatpush1.msra.mxu0 %v125
    %3589 = vmatprep.subr.mxu0 0.0
    %3590 = vmatpush1.msra.mxu0 %v124
    %3591 = vmatprep.subr.mxu0 0.0
    %3592 = vmatpush1.msra.mxu0 %v123
    %3593 = vmatprep.subr.mxu0 0.0
    %3594 = vmatpush2.msra.mxu0 0.0
    %3595 = vmatprep.subr.mxu0 0.0
    %3596 = vmatpush2.msra.mxu0 0.0
    %3597 = vmatprep.subr.mxu0 0.0
    %3598 = vmatpush2.msra.mxu0 0.0
    %3599 = vmatprep.subr.mxu0 0.0
    %3600 = vmatpush2.msra.mxu0 0.0
    %3601 = vmatprep.subr.mxu0 0.0
    %3602 = vmatpush2.msra.mxu0 0.0
    %3603 = vmatprep.subr.mxu0 0.0
    %3604 = vmatpush2.msra.mxu0 0.0
    %3605 = vmatprep.subr.mxu0 0.0
    %3606 = vmatpush2.msra.mxu0 0.0
    %3607 = vmatprep.subr.mxu0 0.0
    %3608 = vmatpush2.msra.mxu0 0.0
    %3609 = vmatprep.subr.mxu0 0.0
    %3610 = vmatpush2.msra.mxu0 0.0
    %3611 = vmatprep.subr.mxu0 0.0
    %3612 = vmatpush2.msra.mxu0 0.0
    %3613 = vmatprep.subr.mxu0 0.0
    %3614 = vmatpush2.msra.mxu0 0.0
    %3615 = vmatprep.subr.mxu0 0.0
    %3616 = vmatpush2.msra.mxu0 0.0
    %3617 = vmatprep.subr.mxu0 0.0
    %3618 = vmatpush2.msra.mxu0 0.0
    %3619 = vmatprep.subr.mxu0 0.0
    %3620 = vmatpush2.msra.mxu0 0.0
    %3621 = vmatprep.subr.mxu0 0.0
    %3622 = vmatpush2.msra.mxu0 0.0
    %3623 = vmatprep.subr.mxu0 0.0
    %3624 = vmatpush2.msra.mxu0 0.0
    %3625 = vmatprep.mubr.f32.mxu0 0.0
    %3626 = vmatmul.mubr.f32.gmra.mxu0 %v3556
    %v3627 = vpop.f32.mrf.mxu0
    %v3628 = vadd.f32 0.0, %v3627
    %v3629 = vpop.f32.mrf.mxu0
    %3630 = vmatprep.mubr.f32.mxu0 0.0
    %3631 = vmatmul.mubr.f32.gmra.mxu0 %v3559
    %v3632 = vpop.f32.mrf.mxu0
    %v3633 = vadd.f32 0.0, %v3632
    %v3634 = vpop.f32.mrf.mxu0
    %3635 = vdwg.mxu0
    %v3637 = vsel %vm2005, %v2303, 0
    %v3640 = vsel %vm2005, %v2305, 0
    %3642 = vmatprep.subr.mxu0 0.0
    %3643 = vmatpush1.msra.mxu0 0.0
    %3644 = vmatprep.subr.mxu0 0.0
    %3645 = vmatpush1.msra.mxu0 0.0
    %3646 = vmatprep.subr.mxu0 0.0
    %3647 = vmatpush1.msra.mxu0 0.0
    %3648 = vmatprep.subr.mxu0 0.0
    %3649 = vmatpush1.msra.mxu0 0.0
    %3650 = vmatprep.subr.mxu0 0.0
    %3651 = vmatpush1.msra.mxu0 0.0
    %3652 = vmatprep.subr.mxu0 0.0
    %3653 = vmatpush1.msra.mxu0 0.0
    %3654 = vmatprep.subr.mxu0 0.0
    %3655 = vmatpush1.msra.mxu0 0.0
    %3656 = vmatprep.subr.mxu0 0.0
    %3657 = vmatpush1.msra.mxu0 0.0
    %3658 = vmatprep.subr.mxu0 0.0
    %3659 = vmatpush1.msra.mxu0 0.0
    %3660 = vmatprep.subr.mxu0 0.0
    %3661 = vmatpush1.msra.mxu0 0.0
    %3662 = vmatprep.subr.mxu0 0.0
    %3663 = vmatpush1.msra.mxu0 0.0
    %3664 = vmatprep.subr.mxu0 0.0
    %3665 = vmatpush1.msra.mxu0 0.0
    %3666 = vmatprep.subr.mxu0 0.0
    %3667 = vmatpush1.msra.mxu0 0.0
    %3668 = vmatprep.subr.mxu0 0.0
    %3669 = vmatpush1.msra.mxu0 %v128
    %3670 = vmatprep.subr.mxu0 0.0
    %3671 = vmatpush1.msra.mxu0 %v127
    %3672 = vmatprep.subr.mxu0 0.0
    %3673 = vmatpush1.msra.mxu0 %v126
    %3674 = vmatprep.subr.mxu0 0.0
    %3675 = vmatpush2.msra.mxu0 0.0
    %3676 = vmatprep.subr.mxu0 0.0
    %3677 = vmatpush2.msra.mxu0 0.0
    %3678 = vmatprep.subr.mxu0 0.0
    %3679 = vmatpush2.msra.mxu0 0.0
    %3680 = vmatprep.subr.mxu0 0.0
    %3681 = vmatpush2.msra.mxu0 0.0
    %3682 = vmatprep.subr.mxu0 0.0
    %3683 = vmatpush2.msra.mxu0 0.0
    %3684 = vmatprep.subr.mxu0 0.0
    %3685 = vmatpush2.msra.mxu0 0.0
    %3686 = vmatprep.subr.mxu0 0.0
    %3687 = vmatpush2.msra.mxu0 0.0
    %3688 = vmatprep.subr.mxu0 0.0
    %3689 = vmatpush2.msra.mxu0 0.0
    %3690 = vmatprep.subr.mxu0 0.0
    %3691 = vmatpush2.msra.mxu0 0.0
    %3692 = vmatprep.subr.mxu0 0.0
    %3693 = vmatpush2.msra.mxu0 0.0
    %3694 = vmatprep.subr.mxu0 0.0
    %3695 = vmatpush2.msra.mxu0 0.0
    %3696 = vmatprep.subr.mxu0 0.0
    %3697 = vmatpush2.msra.mxu0 0.0
    %3698 = vmatprep.subr.mxu0 0.0
    %3699 = vmatpush2.msra.mxu0 0.0
    %3700 = vmatprep.subr.mxu0 0.0
    %3701 = vmatpush2.msra.mxu0 0.0
    %3702 = vmatprep.subr.mxu0 0.0
    %3703 = vmatpush2.msra.mxu0 0.0
    %3704 = vmatprep.subr.mxu0 0.0
    %3705 = vmatpush2.msra.mxu0 0.0
    %3706 = vmatprep.mubr.f32.mxu0 0.0
    %3707 = vmatmul.mubr.f32.gmra.mxu0 %v3637
    %v3708 = vpop.f32.mrf.mxu0
    %v3709 = vadd.f32 0.0, %v3708
    %v3710 = vpop.f32.mrf.mxu0
    %3711 = vmatprep.mubr.f32.mxu0 0.0
    %3712 = vmatmul.mubr.f32.gmra.mxu0 %v3640
    %v3713 = vpop.f32.mrf.mxu0
    %v3714 = vadd.f32 0.0, %v3713
    %v3715 = vpop.f32.mrf.mxu0
    %3716 = vdwg.mxu0
    %v3718 = vsel %vm2005, %v2307, 0
    %v3721 = vsel %vm2005, %v2309, 0
    %3723 = vmatprep.subr.mxu0 0.0
    %3724 = vmatpush1.msra.mxu0 0.0
    %3725 = vmatprep.subr.mxu0 0.0
    %3726 = vmatpush1.msra.mxu0 0.0
    %3727 = vmatprep.subr.mxu0 0.0
    %3728 = vmatpush1.msra.mxu0 0.0
    %3729 = vmatprep.subr.mxu0 0.0
    %3730 = vmatpush1.msra.mxu0 0.0
    %3731 = vmatprep.subr.mxu0 0.0
    %3732 = vmatpush1.msra.mxu0 0.0
    %3733 = vmatprep.subr.mxu0 0.0
    %3734 = vmatpush1.msra.mxu0 0.0
    %3735 = vmatprep.subr.mxu0 0.0
    %3736 = vmatpush1.msra.mxu0 0.0
    %3737 = vmatprep.subr.mxu0 0.0
    %3738 = vmatpush1.msra.mxu0 0.0
    %3739 = vmatprep.subr.mxu0 0.0
    %3740 = vmatpush1.msra.mxu0 0.0
    %3741 = vmatprep.subr.mxu0 0.0
    %3742 = vmatpush1.msra.mxu0 0.0
    %3743 = vmatprep.subr.mxu0 0.0
    %3744 = vmatpush1.msra.mxu0 0.0
    %3745 = vmatprep.subr.mxu0 0.0
    %3746 = vmatpush1.msra.mxu0 0.0
    %3747 = vmatprep.subr.mxu0 0.0
    %3748 = vmatpush1.msra.mxu0 0.0
    %3749 = vmatprep.subr.mxu0 0.0
    %3750 = vmatpush1.msra.mxu0 %v131
    %3751 = vmatprep.subr.mxu0 0.0
    %3752 = vmatpush1.msra.mxu0 %v130
    %3753 = vmatprep.subr.mxu0 0.0
    %3754 = vmatpush1.msra.mxu0 %v129
    %3755 = vmatprep.subr.mxu0 0.0
    %3756 = vmatpush2.msra.mxu0 0.0
    %3757 = vmatprep.subr.mxu0 0.0
    %3758 = vmatpush2.msra.mxu0 0.0
    %3759 = vmatprep.subr.mxu0 0.0
    %3760 = vmatpush2.msra.mxu0 0.0
    %3761 = vmatprep.subr.mxu0 0.0
    %3762 = vmatpush2.msra.mxu0 0.0
    %3763 = vmatprep.subr.mxu0 0.0
    %3764 = vmatpush2.msra.mxu0 0.0
    %3765 = vmatprep.subr.mxu0 0.0
    %3766 = vmatpush2.msra.mxu0 0.0
    %3767 = vmatprep.subr.mxu0 0.0
    %3768 = vmatpush2.msra.mxu0 0.0
    %3769 = vmatprep.subr.mxu0 0.0
    %3770 = vmatpush2.msra.mxu0 0.0
    %3771 = vmatprep.subr.mxu0 0.0
    %3772 = vmatpush2.msra.mxu0 0.0
    %3773 = vmatprep.subr.mxu0 0.0
    %3774 = vmatpush2.msra.mxu0 0.0
    %3775 = vmatprep.subr.mxu0 0.0
    %3776 = vmatpush2.msra.mxu0 0.0
    %3777 = vmatprep.subr.mxu0 0.0
    %3778 = vmatpush2.msra.mxu0 0.0
    %3779 = vmatprep.subr.mxu0 0.0
    %3780 = vmatpush2.msra.mxu0 0.0
    %3781 = vmatprep.subr.mxu0 0.0
    %3782 = vmatpush2.msra.mxu0 0.0
    %3783 = vmatprep.subr.mxu0 0.0
    %3784 = vmatpush2.msra.mxu0 0.0
    %3785 = vmatprep.subr.mxu0 0.0
    %3786 = vmatpush2.msra.mxu0 0.0
    %3787 = vmatprep.mubr.f32.mxu0 0.0
    %3788 = vmatmul.mubr.f32.gmra.mxu0 %v3718
    %v3789 = vpop.f32.mrf.mxu0
    %v3790 = vadd.f32 0.0, %v3789
    %v3791 = vpop.f32.mrf.mxu0
    %3792 = vmatprep.mubr.f32.mxu0 0.0
    %3793 = vmatmul.mubr.f32.gmra.mxu0 %v3721
    %v3794 = vpop.f32.mrf.mxu0
    %v3795 = vadd.f32 0.0, %v3794
    %v3796 = vpop.f32.mrf.mxu0
    %3797 = vdwg.mxu0
    %v3798 = vrcp.pop %v2408
    %v3799 = vrcp.pop %v2411
    %v3800 = vrcp.pop %v2414
    %v3801 = vrcp.pop %v2417
    %v3802 = vrcp.pop %v2420
    %v3803 = vrcp.pop %v2423
    %v3804 = vrcp.pop %v2426
    %v3805 = vrcp.pop %v2429
    %v3806 = vrcp.pop %v2432
    %v3807 = vrcp.pop %v2435
    %v3808 = vrcp.pop %v2438
    %v3809 = vrcp.pop %v2441
    %v3810 = vrcp.pop %v2444
    %v3811 = vrcp.pop %v2447
    %v3812 = vrcp.pop %v2450
    %v3813 = vrcp.pop %v2453
    %v3814 = vrcp.pop %v2456
    %v3815 = vrcp.pop %v2459
    %v3816 = vrcp.pop %v2462
    %v3817 = vrcp.pop %v2465
    %v3818 = vrcp.pop %v2468
    %v3819 = vrcp.pop %v2471
    %v3820 = vrcp.pop %v2474
    %v3821 = vrcp.pop %v2477
    %v3822 = vrcp.pop %v2480
    %v3823 = vrcp.pop %v2483
    %v3824 = vrcp.pop %v2486
    %v3825 = vrcp.pop %v2489
    %v3826 = vrcp.pop %v2492
    %v3827 = vrcp.pop %v2495
    %v3828 = vrcp.pop %v2498
    %v3829 = vrcp.pop %v2501
    %v3830 = vmul.f32 %v2408, %v3798
    %v3831 = vmul.f32 %v2411, %v3799
    %v3832 = vmul.f32 %v2414, %v3800
    %v3833 = vmul.f32 %v2417, %v3801
    %v3834 = vmul.f32 %v2420, %v3802
    %v3835 = vmul.f32 %v2423, %v3803
    %v3836 = vmul.f32 %v2426, %v3804
    %v3837 = vmul.f32 %v2429, %v3805
    %v3838 = vmul.f32 %v2432, %v3806
    %v3839 = vmul.f32 %v2435, %v3807
    %v3840 = vmul.f32 %v2438, %v3808
    %v3841 = vmul.f32 %v2441, %v3809
    %v3842 = vmul.f32 %v2444, %v3810
    %v3843 = vmul.f32 %v2447, %v3811
    %v3844 = vmul.f32 %v2450, %v3812
    %v3845 = vmul.f32 %v2453, %v3813
    %v3846 = vmul.f32 %v2456, %v3814
    %v3847 = vmul.f32 %v2459, %v3815
    %v3848 = vmul.f32 %v2462, %v3816
    %v3849 = vmul.f32 %v2465, %v3817
    %v3850 = vmul.f32 %v2468, %v3818
    %v3851 = vmul.f32 %v2471, %v3819
    %v3852 = vmul.f32 %v2474, %v3820
    %v3853 = vmul.f32 %v2477, %v3821
    %v3854 = vmul.f32 %v2480, %v3822
    %v3855 = vmul.f32 %v2483, %v3823
    %v3856 = vmul.f32 %v2486, %v3824
    %v3857 = vmul.f32 %v2489, %v3825
    %v3858 = vmul.f32 %v2492, %v3826
    %v3859 = vmul.f32 %v2495, %v3827
    %v3860 = vmul.f32 %v2498, %v3828
    %v3861 = vmul.f32 %v2501, %v3829
    %v3862 = vsub.f32 2.0, %v3830
    %v3863 = vsub.f32 2.0, %v3831
    %v3864 = vsub.f32 2.0, %v3832
    %v3865 = vsub.f32 2.0, %v3833
    %v3866 = vsub.f32 2.0, %v3834
    %v3867 = vsub.f32 2.0, %v3835
    %v3868 = vsub.f32 2.0, %v3836
    %v3869 = vsub.f32 2.0, %v3837
    %v3870 = vsub.f32 2.0, %v3838
    %v3871 = vsub.f32 2.0, %v3839
    %v3872 = vsub.f32 2.0, %v3840
    %v3873 = vsub.f32 2.0, %v3841
    %v3874 = vsub.f32 2.0, %v3842
    %v3875 = vsub.f32 2.0, %v3843
    %v3876 = vsub.f32 2.0, %v3844
    %v3877 = vsub.f32 2.0, %v3845
    %v3878 = vsub.f32 2.0, %v3846
    %v3879 = vsub.f32 2.0, %v3847
    %v3880 = vsub.f32 2.0, %v3848
    %v3881 = vsub.f32 2.0, %v3849
    %v3882 = vsub.f32 2.0, %v3850
    %v3883 = vsub.f32 2.0, %v3851
    %v3884 = vsub.f32 2.0, %v3852
    %v3885 = vsub.f32 2.0, %v3853
    %v3886 = vsub.f32 2.0, %v3854
    %v3887 = vsub.f32 2.0, %v3855
    %v3888 = vsub.f32 2.0, %v3856
    %v3889 = vsub.f32 2.0, %v3857
    %v3890 = vsub.f32 2.0, %v3858
    %v3891 = vsub.f32 2.0, %v3859
    %v3892 = vsub.f32 2.0, %v3860
    %v3893 = vsub.f32 2.0, %v3861
    %v3894 = vmul.f32 %v3798, %v3862
    %v3895 = vmul.f32 %v3799, %v3863
    %v3896 = vmul.f32 %v3800, %v3864
    %v3897 = vmul.f32 %v3801, %v3865
    %v3898 = vmul.f32 %v3802, %v3866
    %v3899 = vmul.f32 %v3803, %v3867
    %v3900 = vmul.f32 %v3804, %v3868
    %v3901 = vmul.f32 %v3805, %v3869
    %v3902 = vmul.f32 %v3806, %v3870
    %v3903 = vmul.f32 %v3807, %v3871
    %v3904 = vmul.f32 %v3808, %v3872
    %v3905 = vmul.f32 %v3809, %v3873
    %v3906 = vmul.f32 %v3810, %v3874
    %v3907 = vmul.f32 %v3811, %v3875
    %v3908 = vmul.f32 %v3812, %v3876
    %v3909 = vmul.f32 %v3813, %v3877
    %v3910 = vmul.f32 %v3814, %v3878
    %v3911 = vmul.f32 %v3815, %v3879
    %v3912 = vmul.f32 %v3816, %v3880
    %v3913 = vmul.f32 %v3817, %v3881
    %v3914 = vmul.f32 %v3818, %v3882
    %v3915 = vmul.f32 %v3819, %v3883
    %v3916 = vmul.f32 %v3820, %v3884
    %v3917 = vmul.f32 %v3821, %v3885
    %v3918 = vmul.f32 %v3822, %v3886
    %v3919 = vmul.f32 %v3823, %v3887
    %v3920 = vmul.f32 %v3824, %v3888
    %v3921 = vmul.f32 %v3825, %v3889
    %v3922 = vmul.f32 %v3826, %v3890
    %v3923 = vmul.f32 %v3827, %v3891
    %v3924 = vmul.f32 %v3828, %v3892
    %v3925 = vmul.f32 %v3829, %v3893
    %v3926 = vmul.f32 %v2575, %v3894
    %v3927 = vmul.f32 %v2580, %v3895
    %v3928 = vmul.f32 %v2656, %v3896
    %v3929 = vmul.f32 %v2661, %v3897
    %v3930 = vmul.f32 %v2737, %v3898
    %v3931 = vmul.f32 %v2742, %v3899
    %v3932 = vmul.f32 %v2818, %v3900
    %v3933 = vmul.f32 %v2823, %v3901
    %v3934 = vmul.f32 %v2899, %v3902
    %v3935 = vmul.f32 %v2904, %v3903
    %v3936 = vmul.f32 %v2980, %v3904
    %v3937 = vmul.f32 %v2985, %v3905
    %v3938 = vmul.f32 %v3061, %v3906
    %v3939 = vmul.f32 %v3066, %v3907
    %v3940 = vmul.f32 %v3142, %v3908
    %v3941 = vmul.f32 %v3147, %v3909
    %v3942 = vmul.f32 %v3223, %v3910
    %v3943 = vmul.f32 %v3228, %v3911
    %v3944 = vmul.f32 %v3304, %v3912
    %v3945 = vmul.f32 %v3309, %v3913
    %v3946 = vmul.f32 %v3385, %v3914
    %v3947 = vmul.f32 %v3390, %v3915
    %v3948 = vmul.f32 %v3466, %v3916
    %v3949 = vmul.f32 %v3471, %v3917
    %v3950 = vmul.f32 %v3547, %v3918
    %v3951 = vmul.f32 %v3552, %v3919
    %v3952 = vmul.f32 %v3628, %v3920
    %v3953 = vmul.f32 %v3633, %v3921
    %v3954 = vmul.f32 %v3709, %v3922
    %v3955 = vmul.f32 %v3714, %v3923
    %v3956 = vmul.f32 %v3790, %v3924
    %v3957 = vmul.f32 %v3795, %v3925
    %3958 = vst [vmem:[#allocation7] sm:$0xff] %v3926
    %3959 = vst [vmem:[#allocation7 + $0x8] sm:$0xff] %v3927
    %3960 = vst [vmem:[#allocation7 + $0x10] sm:$0xff] %v3928
    %3961 = vst [vmem:[#allocation7 + $0x18] sm:$0xff] %v3929
    %3962 = vst [vmem:[#allocation7 + $0x20] sm:$0xff] %v3930
    %3963 = vst [vmem:[#allocation7 + $0x28] sm:$0xff] %v3931
    %3964 = vst [vmem:[#allocation7 + $0x30] sm:$0xff] %v3932
    %3965 = vst [vmem:[#allocation7 + $0x38] sm:$0xff] %v3933
    %3966 = vst [vmem:[#allocation7 + $0x40] sm:$0xff] %v3934
    %3967 = vst [vmem:[#allocation7 + $0x48] sm:$0xff] %v3935
    %3968 = vst [vmem:[#allocation7 + $0x50] sm:$0xff] %v3936
    %3969 = vst [vmem:[#allocation7 + $0x58] sm:$0xff] %v3937
    %3970 = vst [vmem:[#allocation7 + $0x60] sm:$0xff] %v3938
    %3971 = vst [vmem:[#allocation7 + $0x68] sm:$0xff] %v3939
    %3972 = vst [vmem:[#allocation7 + $0x70] sm:$0xff] %v3940
    %3973 = vst [vmem:[#allocation7 + $0x78] sm:$0xff] %v3941
    %3974 = vst [vmem:[#allocation7 + $0x80] sm:$0xff] %v3942
    %3975 = vst [vmem:[#allocation7 + $0x88] sm:$0xff] %v3943
    %3976 = vst [vmem:[#allocation7 + $0x90] sm:$0xff] %v3944
    %3977 = vst [vmem:[#allocation7 + $0x98] sm:$0xff] %v3945
    %3978 = vst [vmem:[#allocation7 + $0xa0] sm:$0xff] %v3946
    %3979 = vst [vmem:[#allocation7 + $0xa8] sm:$0xff] %v3947
    %3980 = vst [vmem:[#allocation7 + $0xb0] sm:$0xff] %v3948
    %3981 = vst [vmem:[#allocation7 + $0xb8] sm:$0xff] %v3949
    %3982 = vst [vmem:[#allocation7 + $0xc0] sm:$0xff] %v3950
    %3983 = vst [vmem:[#allocation7 + $0xc8] sm:$0xff] %v3951
    %3984 = vst [vmem:[#allocation7 + $0xd0] sm:$0xff] %v3952
    %3985 = vst [vmem:[#allocation7 + $0xd8] sm:$0xff] %v3953
    %3986 = vst [vmem:[#allocation7 + $0xe0] sm:$0xff] %v3954
    %3987 = vst [vmem:[#allocation7 + $0xe8] sm:$0xff] %v3955
    %3988 = vst [vmem:[#allocation7 + $0xf0] sm:$0xff] %v3956
    %3989 = vst [vmem:[#allocation7 + $0xf8] sm:$0xff] %v3957
    %v3990 = vsel %vm2005, %v2343, 0.0
    %v3991 = vsel %vm2005, %v2345, 0.0
    %v3992 = vadd.f32 %v3990, %v3991
    %v3993 = vrot.slane %v3992, 4
    %v3994 = vadd.f32 %v3992, %v3993
    %v3995 = vrot.slane %v3994, 2
    %v3996 = vadd.f32 %v3994, %v3995
    %v3997 = vrot.slane %v3996, 1
    %v3998 = vadd.f32 %v3996, %v3997
    %v3999 = vsel %vm2005, %v2347, 0.0
    %v4000 = vsel %vm2005, %v2349, 0.0
    %v4001 = vadd.f32 %v3999, %v4000
    %v4002 = vrot.slane %v4001, 4
    %v4003 = vadd.f32 %v4001, %v4002
    %v4004 = vrot.slane %v4003, 2
    %v4005 = vadd.f32 %v4003, %v4004
    %v4006 = vrot.slane %v4005, 1
    %v4007 = vadd.f32 %v4005, %v4006
    %v4008 = vsel %vm2005, %v2351, 0.0
    %v4009 = vsel %vm2005, %v2353, 0.0
    %v4010 = vadd.f32 %v4008, %v4009
    %v4011 = vrot.slane %v4010, 4
    %v4012 = vadd.f32 %v4010, %v4011
    %v4013 = vrot.slane %v4012, 2
    %v4014 = vadd.f32 %v4012, %v4013
    %v4015 = vrot.slane %v4014, 1
    %v4016 = vadd.f32 %v4014, %v4015
    %v4017 = vsel %vm2005, %v2355, 0.0
    %v4018 = vsel %vm2005, %v2357, 0.0
    %v4019 = vadd.f32 %v4017, %v4018
    %v4020 = vrot.slane %v4019, 4
    %v4021 = vadd.f32 %v4019, %v4020
    %v4022 = vrot.slane %v4021, 2
    %v4023 = vadd.f32 %v4021, %v4022
    %v4024 = vrot.slane %v4023, 1
    %v4025 = vadd.f32 %v4023, %v4024
    %v4026 = vsel %vm2005, %v2359, 0.0
    %v4027 = vsel %vm2005, %v2361, 0.0
    %v4028 = vadd.f32 %v4026, %v4027
    %v4029 = vrot.slane %v4028, 4
    %v4030 = vadd.f32 %v4028, %v4029
    %v4031 = vrot.slane %v4030, 2
    %v4032 = vadd.f32 %v4030, %v4031
    %v4033 = vrot.slane %v4032, 1
    %v4034 = vadd.f32 %v4032, %v4033
    %v4035 = vsel %vm2005, %v2363, 0.0
    %v4036 = vsel %vm2005, %v2365, 0.0
    %v4037 = vadd.f32 %v4035, %v4036
    %v4038 = vrot.slane %v4037, 4
    %v4039 = vadd.f32 %v4037, %v4038
    %v4040 = vrot.slane %v4039, 2
    %v4041 = vadd.f32 %v4039, %v4040
    %v4042 = vrot.slane %v4041, 1
    %v4043 = vadd.f32 %v4041, %v4042
    %v4044 = vsel %vm2005, %v2367, 0.0
    %v4045 = vsel %vm2005, %v2369, 0.0
    %v4046 = vadd.f32 %v4044, %v4045
    %v4047 = vrot.slane %v4046, 4
    %v4048 = vadd.f32 %v4046, %v4047
    %v4049 = vrot.slane %v4048, 2
    %v4050 = vadd.f32 %v4048, %v4049
    %v4051 = vrot.slane %v4050, 1
    %v4052 = vadd.f32 %v4050, %v4051
    %v4053 = vsel %vm2005, %v2371, 0.0
    %v4054 = vsel %vm2005, %v2373, 0.0
    %v4055 = vadd.f32 %v4053, %v4054
    %v4056 = vrot.slane %v4055, 4
    %v4057 = vadd.f32 %v4055, %v4056
    %v4058 = vrot.slane %v4057, 2
    %v4059 = vadd.f32 %v4057, %v4058
    %v4060 = vrot.slane %v4059, 1
    %v4061 = vadd.f32 %v4059, %v4060
    %v4062 = vsel %vm2005, %v2375, 0.0
    %v4063 = vsel %vm2005, %v2377, 0.0
    %v4064 = vadd.f32 %v4062, %v4063
    %v4065 = vrot.slane %v4064, 4
    %v4066 = vadd.f32 %v4064, %v4065
    %v4067 = vrot.slane %v4066, 2
    %v4068 = vadd.f32 %v4066, %v4067
    %v4069 = vrot.slane %v4068, 1
    %v4070 = vadd.f32 %v4068, %v4069
    %v4071 = vsel %vm2005, %v2379, 0.0
    %v4072 = vsel %vm2005, %v2381, 0.0
    %v4073 = vadd.f32 %v4071, %v4072
    %v4074 = vrot.slane %v4073, 4
    %v4075 = vadd.f32 %v4073, %v4074
    %v4076 = vrot.slane %v4075, 2
    %v4077 = vadd.f32 %v4075, %v4076
    %v4078 = vrot.slane %v4077, 1
    %v4079 = vadd.f32 %v4077, %v4078
    %v4080 = vsel %vm2005, %v2383, 0.0
    %v4081 = vsel %vm2005, %v2385, 0.0
    %v4082 = vadd.f32 %v4080, %v4081
    %v4083 = vrot.slane %v4082, 4
    %v4084 = vadd.f32 %v4082, %v4083
    %v4085 = vrot.slane %v4084, 2
    %v4086 = vadd.f32 %v4084, %v4085
    %v4087 = vrot.slane %v4086, 1
    %v4088 = vadd.f32 %v4086, %v4087
    %v4089 = vsel %vm2005, %v2387, 0.0
    %v4090 = vsel %vm2005, %v2389, 0.0
    %v4091 = vadd.f32 %v4089, %v4090
    %v4092 = vrot.slane %v4091, 4
    %v4093 = vadd.f32 %v4091, %v4092
    %v4094 = vrot.slane %v4093, 2
    %v4095 = vadd.f32 %v4093, %v4094
    %v4096 = vrot.slane %v4095, 1
    %v4097 = vadd.f32 %v4095, %v4096
    %v4098 = vsel %vm2005, %v2391, 0.0
    %v4099 = vsel %vm2005, %v2393, 0.0
    %v4100 = vadd.f32 %v4098, %v4099
    %v4101 = vrot.slane %v4100, 4
    %v4102 = vadd.f32 %v4100, %v4101
    %v4103 = vrot.slane %v4102, 2
    %v4104 = vadd.f32 %v4102, %v4103
    %v4105 = vrot.slane %v4104, 1
    %v4106 = vadd.f32 %v4104, %v4105
    %v4107 = vsel %vm2005, %v2395, 0.0
    %v4108 = vsel %vm2005, %v2397, 0.0
    %v4109 = vadd.f32 %v4107, %v4108
    %v4110 = vrot.slane %v4109, 4
    %v4111 = vadd.f32 %v4109, %v4110
    %v4112 = vrot.slane %v4111, 2
    %v4113 = vadd.f32 %v4111, %v4112
    %v4114 = vrot.slane %v4113, 1
    %v4115 = vadd.f32 %v4113, %v4114
    %v4116 = vsel %vm2005, %v2399, 0.0
    %v4117 = vsel %vm2005, %v2401, 0.0
    %v4118 = vadd.f32 %v4116, %v4117
    %v4119 = vrot.slane %v4118, 4
    %v4120 = vadd.f32 %v4118, %v4119
    %v4121 = vrot.slane %v4120, 2
    %v4122 = vadd.f32 %v4120, %v4121
    %v4123 = vrot.slane %v4122, 1
    %v4124 = vadd.f32 %v4122, %v4123
    %v4125 = vsel %vm2005, %v2403, 0.0
    %v4126 = vsel %vm2005, %v2405, 0.0
    %v4127 = vadd.f32 %v4125, %v4126
    %v4128 = vrot.slane %v4127, 4
    %v4129 = vadd.f32 %v4127, %v4128
    %v4130 = vrot.slane %v4129, 2
    %v4131 = vadd.f32 %v4129, %v4130
    %v4132 = vrot.slane %v4131, 1
    %v4133 = vadd.f32 %v4131, %v4132
    %v4134 = vrcp.pop %v3998
    %v4135 = vrcp.pop %v4007
    %v4136 = vrcp.pop %v4016
    %v4137 = vrcp.pop %v4025
    %v4138 = vrcp.pop %v4034
    %v4139 = vrcp.pop %v4043
    %v4140 = vrcp.pop %v4052
    %v4141 = vrcp.pop %v4061
    %v4142 = vrcp.pop %v4070
    %v4143 = vrcp.pop %v4079
    %v4144 = vrcp.pop %v4088
    %v4145 = vrcp.pop %v4097
    %v4146 = vrcp.pop %v4106
    %v4147 = vrcp.pop %v4115
    %v4148 = vrcp.pop %v4124
    %v4149 = vrcp.pop %v4133
    %v4150 = vmul.f32 %v3998, %v4134
    %v4151 = vmul.f32 %v4007, %v4135
    %v4152 = vmul.f32 %v4016, %v4136
    %v4153 = vmul.f32 %v4025, %v4137
    %v4154 = vmul.f32 %v4034, %v4138
    %v4155 = vmul.f32 %v4043, %v4139
    %v4156 = vmul.f32 %v4052, %v4140
    %v4157 = vmul.f32 %v4061, %v4141
    %v4158 = vmul.f32 %v4070, %v4142
    %v4159 = vmul.f32 %v4079, %v4143
    %v4160 = vmul.f32 %v4088, %v4144
    %v4161 = vmul.f32 %v4097, %v4145
    %v4162 = vmul.f32 %v4106, %v4146
    %v4163 = vmul.f32 %v4115, %v4147
    %v4164 = vmul.f32 %v4124, %v4148
    %v4165 = vmul.f32 %v4133, %v4149
    %v4166 = vsub.f32 2.0, %v4150
    %v4167 = vsub.f32 2.0, %v4151
    %v4168 = vsub.f32 2.0, %v4152
    %v4169 = vsub.f32 2.0, %v4153
    %v4170 = vsub.f32 2.0, %v4154
    %v4171 = vsub.f32 2.0, %v4155
    %v4172 = vsub.f32 2.0, %v4156
    %v4173 = vsub.f32 2.0, %v4157
    %v4174 = vsub.f32 2.0, %v4158
    %v4175 = vsub.f32 2.0, %v4159
    %v4176 = vsub.f32 2.0, %v4160
    %v4177 = vsub.f32 2.0, %v4161
    %v4178 = vsub.f32 2.0, %v4162
    %v4179 = vsub.f32 2.0, %v4163
    %v4180 = vsub.f32 2.0, %v4164
    %v4181 = vsub.f32 2.0, %v4165
    %v4182 = vmul.f32 %v4134, %v4166
    %v4183 = vmul.f32 %v4135, %v4167
    %v4184 = vmul.f32 %v4136, %v4168
    %v4185 = vmul.f32 %v4137, %v4169
    %v4186 = vmul.f32 %v4138, %v4170
    %v4187 = vmul.f32 %v4139, %v4171
    %v4188 = vmul.f32 %v4140, %v4172
    %v4189 = vmul.f32 %v4141, %v4173
    %v4190 = vmul.f32 %v4142, %v4174
    %v4191 = vmul.f32 %v4143, %v4175
    %v4192 = vmul.f32 %v4144, %v4176
    %v4193 = vmul.f32 %v4145, %v4177
    %v4194 = vmul.f32 %v4146, %v4178
    %v4195 = vmul.f32 %v4147, %v4179
    %v4196 = vmul.f32 %v4148, %v4180
    %v4197 = vmul.f32 %v4149, %v4181
    %v4198 = vmul.f32 %v2343, %v4182
    %v4199 = vmul.f32 %v2345, %v4182
    %v4200 = vmul.f32 %v2347, %v4183
    %v4201 = vmul.f32 %v2349, %v4183
    %v4202 = vmul.f32 %v2351, %v4184
    %v4203 = vmul.f32 %v2353, %v4184
    %v4204 = vmul.f32 %v2355, %v4185
    %v4205 = vmul.f32 %v2357, %v4185
    %v4206 = vmul.f32 %v2359, %v4186
    %v4207 = vmul.f32 %v2361, %v4186
    %v4208 = vmul.f32 %v2363, %v4187
    %v4209 = vmul.f32 %v2365, %v4187
    %v4210 = vmul.f32 %v2367, %v4188
    %v4211 = vmul.f32 %v2369, %v4188
    %v4212 = vmul.f32 %v2371, %v4189
    %v4213 = vmul.f32 %v2373, %v4189
    %v4214 = vmul.f32 %v2375, %v4190
    %v4215 = vmul.f32 %v2377, %v4190
    %v4216 = vmul.f32 %v2379, %v4191
    %v4217 = vmul.f32 %v2381, %v4191
    %v4218 = vmul.f32 %v2383, %v4192
    %v4219 = vmul.f32 %v2385, %v4192
    %v4220 = vmul.f32 %v2387, %v4193
    %v4221 = vmul.f32 %v2389, %v4193
    %v4222 = vmul.f32 %v2391, %v4194
    %v4223 = vmul.f32 %v2393, %v4194
    %v4224 = vmul.f32 %v2395, %v4195
    %v4225 = vmul.f32 %v2397, %v4195
    %v4226 = vmul.f32 %v2399, %v4196
    %v4227 = vmul.f32 %v2401, %v4196
    %v4228 = vmul.f32 %v2403, %v4197
    %v4229 = vmul.f32 %v2405, %v4197
    %4230 = vxpose.xlu0.b32.start [1/16] %v4198, 128
    %4231 = vxpose.xlu0.b32.cont [2/16] %v4199, 128
    %4232 = vxpose.xlu0.b32.cont [3/16] 0.0, 128
    %4233 = vxpose.xlu0.b32.cont [4/16] 0.0, 128
    %4234 = vxpose.xlu0.b32.cont [5/16] 0.0, 128
    %4235 = vxpose.xlu0.b32.cont [6/16] 0.0, 128
    %4236 = vxpose.xlu0.b32.cont [7/16] 0.0, 128
    %4237 = vxpose.xlu0.b32.cont [8/16] 0.0, 128
    %4238 = vxpose.xlu0.b32.cont [9/16] 0.0, 128
    %4239 = vxpose.xlu0.b32.cont [10/16] 0.0, 128
    %4240 = vxpose.xlu0.b32.cont [11/16] 0.0, 128
    %4241 = vxpose.xlu0.b32.cont [12/16] 0.0, 128
    %4242 = vxpose.xlu0.b32.cont [13/16] 0.0, 128
    %4243 = vxpose.xlu0.b32.cont [14/16] 0.0, 128
    %4244 = vxpose.xlu0.b32.cont [15/16] 0.0, 128
    %4245 = vxpose.xlu0.b32.end [16/16] 0.0, 128
    %v4246 = vpop.trf.xlu0
    %v4247 = vpop.trf.xlu0
    %v4248 = vpop.trf.xlu0
    %v4249 = vpop.trf.xlu0
    %v4250 = vpop.trf.xlu0
    %v4251 = vpop.trf.xlu0
    %v4252 = vpop.trf.xlu0
    %v4253 = vpop.trf.xlu0
    %v4254 = vpop.trf.xlu0
    %v4255 = vpop.trf.xlu0
    %v4256 = vpop.trf.xlu0
    %v4257 = vpop.trf.xlu0
    %v4258 = vpop.trf.xlu0
    %v4259 = vpop.trf.xlu0
    %v4260 = vpop.trf.xlu0
    %v4261 = vpop.trf.xlu0
    %4262 = vxpose.xlu0.b32.start [1/16] %v4200, 128
    %4263 = vxpose.xlu0.b32.cont [2/16] %v4201, 128
    %4264 = vxpose.xlu0.b32.cont [3/16] 0.0, 128
    %4265 = vxpose.xlu0.b32.cont [4/16] 0.0, 128
    %4266 = vxpose.xlu0.b32.cont [5/16] 0.0, 128
    %4267 = vxpose.xlu0.b32.cont [6/16] 0.0, 128
    %4268 = vxpose.xlu0.b32.cont [7/16] 0.0, 128
    %4269 = vxpose.xlu0.b32.cont [8/16] 0.0, 128
    %4270 = vxpose.xlu0.b32.cont [9/16] 0.0, 128
    %4271 = vxpose.xlu0.b32.cont [10/16] 0.0, 128
    %4272 = vxpose.xlu0.b32.cont [11/16] 0.0, 128
    %4273 = vxpose.xlu0.b32.cont [12/16] 0.0, 128
    %4274 = vxpose.xlu0.b32.cont [13/16] 0.0, 128
    %4275 = vxpose.xlu0.b32.cont [14/16] 0.0, 128
    %4276 = vxpose.xlu0.b32.cont [15/16] 0.0, 128
    %4277 = vxpose.xlu0.b32.end [16/16] 0.0, 128
    %v4278 = vpop.trf.xlu0
    %v4279 = vpop.trf.xlu0
    %v4280 = vpop.trf.xlu0
    %v4281 = vpop.trf.xlu0
    %v4282 = vpop.trf.xlu0
    %v4283 = vpop.trf.xlu0
    %v4284 = vpop.trf.xlu0
    %v4285 = vpop.trf.xlu0
    %v4286 = vpop.trf.xlu0
    %v4287 = vpop.trf.xlu0
    %v4288 = vpop.trf.xlu0
    %v4289 = vpop.trf.xlu0
    %v4290 = vpop.trf.xlu0
    %v4291 = vpop.trf.xlu0
    %v4292 = vpop.trf.xlu0
    %v4293 = vpop.trf.xlu0
    %4294 = vxpose.xlu0.b32.start [1/16] %v4202, 128
    %4295 = vxpose.xlu0.b32.cont [2/16] %v4203, 128
    %4296 = vxpose.xlu0.b32.cont [3/16] 0.0, 128
    %4297 = vxpose.xlu0.b32.cont [4/16] 0.0, 128
    %4298 = vxpose.xlu0.b32.cont [5/16] 0.0, 128
    %4299 = vxpose.xlu0.b32.cont [6/16] 0.0, 128
    %4300 = vxpose.xlu0.b32.cont [7/16] 0.0, 128
    %4301 = vxpose.xlu0.b32.cont [8/16] 0.0, 128
    %4302 = vxpose.xlu0.b32.cont [9/16] 0.0, 128
    %4303 = vxpose.xlu0.b32.cont [10/16] 0.0, 128
    %4304 = vxpose.xlu0.b32.cont [11/16] 0.0, 128
    %4305 = vxpose.xlu0.b32.cont [12/16] 0.0, 128
    %4306 = vxpose.xlu0.b32.cont [13/16] 0.0, 128
    %4307 = vxpose.xlu0.b32.cont [14/16] 0.0, 128
    %4308 = vxpose.xlu0.b32.cont [15/16] 0.0, 128
    %4309 = vxpose.xlu0.b32.end [16/16] 0.0, 128
    %v4310 = vpop.trf.xlu0
    %v4311 = vpop.trf.xlu0
    %v4312 = vpop.trf.xlu0
    %v4313 = vpop.trf.xlu0
    %v4314 = vpop.trf.xlu0
    %v4315 = vpop.trf.xlu0
    %v4316 = vpop.trf.xlu0
    %v4317 = vpop.trf.xlu0
    %v4318 = vpop.trf.xlu0
    %v4319 = vpop.trf.xlu0
    %v4320 = vpop.trf.xlu0
    %v4321 = vpop.trf.xlu0
    %v4322 = vpop.trf.xlu0
    %v4323 = vpop.trf.xlu0
    %v4324 = vpop.trf.xlu0
    %v4325 = vpop.trf.xlu0
    %4326 = vxpose.xlu0.b32.start [1/16] %v4204, 128
    %4327 = vxpose.xlu0.b32.cont [2/16] %v4205, 128
    %4328 = vxpose.xlu0.b32.cont [3/16] 0.0, 128
    %4329 = vxpose.xlu0.b32.cont [4/16] 0.0, 128
    %4330 = vxpose.xlu0.b32.cont [5/16] 0.0, 128
    %4331 = vxpose.xlu0.b32.cont [6/16] 0.0, 128
    %4332 = vxpose.xlu0.b32.cont [7/16] 0.0, 128
    %4333 = vxpose.xlu0.b32.cont [8/16] 0.0, 128
    %4334 = vxpose.xlu0.b32.cont [9/16] 0.0, 128
    %4335 = vxpose.xlu0.b32.cont [10/16] 0.0, 128
    %4336 = vxpose.xlu0.b32.cont [11/16] 0.0, 128
    %4337 = vxpose.xlu0.b32.cont [12/16] 0.0, 128
    %4338 = vxpose.xlu0.b32.cont [13/16] 0.0, 128
    %4339 = vxpose.xlu0.b32.cont [14/16] 0.0, 128
    %4340 = vxpose.xlu0.b32.cont [15/16] 0.0, 128
    %4341 = vxpose.xlu0.b32.end [16/16] 0.0, 128
    %v4342 = vpop.trf.xlu0
    %v4343 = vpop.trf.xlu0
    %v4344 = vpop.trf.xlu0
    %v4345 = vpop.trf.xlu0
    %v4346 = vpop.trf.xlu0
    %v4347 = vpop.trf.xlu0
    %v4348 = vpop.trf.xlu0
    %v4349 = vpop.trf.xlu0
    %v4350 = vpop.trf.xlu0
    %v4351 = vpop.trf.xlu0
    %v4352 = vpop.trf.xlu0
    %v4353 = vpop.trf.xlu0
    %v4354 = vpop.trf.xlu0
    %v4355 = vpop.trf.xlu0
    %v4356 = vpop.trf.xlu0
    %v4357 = vpop.trf.xlu0
    %4358 = vxpose.xlu0.b32.start [1/16] %v4206, 128
    %4359 = vxpose.xlu0.b32.cont [2/16] %v4207, 128
    %4360 = vxpose.xlu0.b32.cont [3/16] 0.0, 128
    %4361 = vxpose.xlu0.b32.cont [4/16] 0.0, 128
    %4362 = vxpose.xlu0.b32.cont [5/16] 0.0, 128
    %4363 = vxpose.xlu0.b32.cont [6/16] 0.0, 128
    %4364 = vxpose.xlu0.b32.cont [7/16] 0.0, 128
    %4365 = vxpose.xlu0.b32.cont [8/16] 0.0, 128
    %4366 = vxpose.xlu0.b32.cont [9/16] 0.0, 128
    %4367 = vxpose.xlu0.b32.cont [10/16] 0.0, 128
    %4368 = vxpose.xlu0.b32.cont [11/16] 0.0, 128
    %4369 = vxpose.xlu0.b32.cont [12/16] 0.0, 128
    %4370 = vxpose.xlu0.b32.cont [13/16] 0.0, 128
    %4371 = vxpose.xlu0.b32.cont [14/16] 0.0, 128
    %4372 = vxpose.xlu0.b32.cont [15/16] 0.0, 128
    %4373 = vxpose.xlu0.b32.end [16/16] 0.0, 128
    %v4374 = vpop.trf.xlu0
    %v4375 = vpop.trf.xlu0
    %v4376 = vpop.trf.xlu0
    %v4377 = vpop.trf.xlu0
    %v4378 = vpop.trf.xlu0
    %v4379 = vpop.trf.xlu0
    %v4380 = vpop.trf.xlu0
    %v4381 = vpop.trf.xlu0
    %v4382 = vpop.trf.xlu0
    %v4383 = vpop.trf.xlu0
    %v4384 = vpop.trf.xlu0
    %v4385 = vpop.trf.xlu0
    %v4386 = vpop.trf.xlu0
    %v4387 = vpop.trf.xlu0
    %v4388 = vpop.trf.xlu0
    %v4389 = vpop.trf.xlu0
    %4390 = vxpose.xlu0.b32.start [1/16] %v4208, 128
    %4391 = vxpose.xlu0.b32.cont [2/16] %v4209, 128
    %4392 = vxpose.xlu0.b32.cont [3/16] 0.0, 128
    %4393 = vxpose.xlu0.b32.cont [4/16] 0.0, 128
    %4394 = vxpose.xlu0.b32.cont [5/16] 0.0, 128
    %4395 = vxpose.xlu0.b32.cont [6/16] 0.0, 128
    %4396 = vxpose.xlu0.b32.cont [7/16] 0.0, 128
    %4397 = vxpose.xlu0.b32.cont [8/16] 0.0, 128
    %4398 = vxpose.xlu0.b32.cont [9/16] 0.0, 128
    %4399 = vxpose.xlu0.b32.cont [10/16] 0.0, 128
    %4400 = vxpose.xlu0.b32.cont [11/16] 0.0, 128
    %4401 = vxpose.xlu0.b32.cont [12/16] 0.0, 128
    %4402 = vxpose.xlu0.b32.cont [13/16] 0.0, 128
    %4403 = vxpose.xlu0.b32.cont [14/16] 0.0, 128
    %4404 = vxpose.xlu0.b32.cont [15/16] 0.0, 128
    %4405 = vxpose.xlu0.b32.end [16/16] 0.0, 128
    %v4406 = vpop.trf.xlu0
    %v4407 = vpop.trf.xlu0
    %v4408 = vpop.trf.xlu0
    %v4409 = vpop.trf.xlu0
    %v4410 = vpop.trf.xlu0
    %v4411 = vpop.trf.xlu0
    %v4412 = vpop.trf.xlu0
    %v4413 = vpop.trf.xlu0
    %v4414 = vpop.trf.xlu0
    %v4415 = vpop.trf.xlu0
    %v4416 = vpop.trf.xlu0
    %v4417 = vpop.trf.xlu0
    %v4418 = vpop.trf.xlu0
    %v4419 = vpop.trf.xlu0
    %v4420 = vpop.trf.xlu0
    %v4421 = vpop.trf.xlu0
    %4422 = vxpose.xlu0.b32.start [1/16] %v4210, 128
    %4423 = vxpose.xlu0.b32.cont [2/16] %v4211, 128
    %4424 = vxpose.xlu0.b32.cont [3/16] 0.0, 128
    %4425 = vxpose.xlu0.b32.cont [4/16] 0.0, 128
    %4426 = vxpose.xlu0.b32.cont [5/16] 0.0, 128
    %4427 = vxpose.xlu0.b32.cont [6/16] 0.0, 128
    %4428 = vxpose.xlu0.b32.cont [7/16] 0.0, 128
    %4429 = vxpose.xlu0.b32.cont [8/16] 0.0, 128
    %4430 = vxpose.xlu0.b32.cont [9/16] 0.0, 128
    %4431 = vxpose.xlu0.b32.cont [10/16] 0.0, 128
    %4432 = vxpose.xlu0.b32.cont [11/16] 0.0, 128
    %4433 = vxpose.xlu0.b32.cont [12/16] 0.0, 128
    %4434 = vxpose.xlu0.b32.cont [13/16] 0.0, 128
    %4435 = vxpose.xlu0.b32.cont [14/16] 0.0, 128
    %4436 = vxpose.xlu0.b32.cont [15/16] 0.0, 128
    %4437 = vxpose.xlu0.b32.end [16/16] 0.0, 128
    %v4438 = vpop.trf.xlu0
    %v4439 = vpop.trf.xlu0
    %v4440 = vpop.trf.xlu0
    %v4441 = vpop.trf.xlu0
    %v4442 = vpop.trf.xlu0
    %v4443 = vpop.trf.xlu0
    %v4444 = vpop.trf.xlu0
    %v4445 = vpop.trf.xlu0
    %v4446 = vpop.trf.xlu0
    %v4447 = vpop.trf.xlu0
    %v4448 = vpop.trf.xlu0
    %v4449 = vpop.trf.xlu0
    %v4450 = vpop.trf.xlu0
    %v4451 = vpop.trf.xlu0
    %v4452 = vpop.trf.xlu0
    %v4453 = vpop.trf.xlu0
    %4454 = vxpose.xlu0.b32.start [1/16] %v4212, 128
    %4455 = vxpose.xlu0.b32.cont [2/16] %v4213, 128
    %4456 = vxpose.xlu0.b32.cont [3/16] 0.0, 128
    %4457 = vxpose.xlu0.b32.cont [4/16] 0.0, 128
    %4458 = vxpose.xlu0.b32.cont [5/16] 0.0, 128
    %4459 = vxpose.xlu0.b32.cont [6/16] 0.0, 128
    %4460 = vxpose.xlu0.b32.cont [7/16] 0.0, 128
    %4461 = vxpose.xlu0.b32.cont [8/16] 0.0, 128
    %4462 = vxpose.xlu0.b32.cont [9/16] 0.0, 128
    %4463 = vxpose.xlu0.b32.cont [10/16] 0.0, 128
    %4464 = vxpose.xlu0.b32.cont [11/16] 0.0, 128
    %4465 = vxpose.xlu0.b32.cont [12/16] 0.0, 128
    %4466 = vxpose.xlu0.b32.cont [13/16] 0.0, 128
    %4467 = vxpose.xlu0.b32.cont [14/16] 0.0, 128
    %4468 = vxpose.xlu0.b32.cont [15/16] 0.0, 128
    %4469 = vxpose.xlu0.b32.end [16/16] 0.0, 128
    %v4470 = vpop.trf.xlu0
    %v4471 = vpop.trf.xlu0
    %v4472 = vpop.trf.xlu0
    %v4473 = vpop.trf.xlu0
    %v4474 = vpop.trf.xlu0
    %v4475 = vpop.trf.xlu0
    %v4476 = vpop.trf.xlu0
    %v4477 = vpop.trf.xlu0
    %v4478 = vpop.trf.xlu0
    %v4479 = vpop.trf.xlu0
    %v4480 = vpop.trf.xlu0
    %v4481 = vpop.trf.xlu0
    %v4482 = vpop.trf.xlu0
    %v4483 = vpop.trf.xlu0
    %v4484 = vpop.trf.xlu0
    %v4485 = vpop.trf.xlu0
    %4486 = vxpose.xlu0.b32.start [1/16] %v4214, 128
    %4487 = vxpose.xlu0.b32.cont [2/16] %v4215, 128
    %4488 = vxpose.xlu0.b32.cont [3/16] 0.0, 128
    %4489 = vxpose.xlu0.b32.cont [4/16] 0.0, 128
    %4490 = vxpose.xlu0.b32.cont [5/16] 0.0, 128
    %4491 = vxpose.xlu0.b32.cont [6/16] 0.0, 128
    %4492 = vxpose.xlu0.b32.cont [7/16] 0.0, 128
    %4493 = vxpose.xlu0.b32.cont [8/16] 0.0, 128
    %4494 = vxpose.xlu0.b32.cont [9/16] 0.0, 128
    %4495 = vxpose.xlu0.b32.cont [10/16] 0.0, 128
    %4496 = vxpose.xlu0.b32.cont [11/16] 0.0, 128
    %4497 = vxpose.xlu0.b32.cont [12/16] 0.0, 128
    %4498 = vxpose.xlu0.b32.cont [13/16] 0.0, 128
    %4499 = vxpose.xlu0.b32.cont [14/16] 0.0, 128
    %4500 = vxpose.xlu0.b32.cont [15/16] 0.0, 128
    %4501 = vxpose.xlu0.b32.end [16/16] 0.0, 128
    %v4502 = vpop.trf.xlu0
    %v4503 = vpop.trf.xlu0
    %v4504 = vpop.trf.xlu0
    %v4505 = vpop.trf.xlu0
    %v4506 = vpop.trf.xlu0
    %v4507 = vpop.trf.xlu0
    %v4508 = vpop.trf.xlu0
    %v4509 = vpop.trf.xlu0
    %v4510 = vpop.trf.xlu0
    %v4511 = vpop.trf.xlu0
    %v4512 = vpop.trf.xlu0
    %v4513 = vpop.trf.xlu0
    %v4514 = vpop.trf.xlu0
    %v4515 = vpop.trf.xlu0
    %v4516 = vpop.trf.xlu0
    %v4517 = vpop.trf.xlu0
    %4518 = vxpose.xlu0.b32.start [1/16] %v4216, 128
    %4519 = vxpose.xlu0.b32.cont [2/16] %v4217, 128
    %4520 = vxpose.xlu0.b32.cont [3/16] 0.0, 128
    %4521 = vxpose.xlu0.b32.cont [4/16] 0.0, 128
    %4522 = vxpose.xlu0.b32.cont [5/16] 0.0, 128
    %4523 = vxpose.xlu0.b32.cont [6/16] 0.0, 128
    %4524 = vxpose.xlu0.b32.cont [7/16] 0.0, 128
    %4525 = vxpose.xlu0.b32.cont [8/16] 0.0, 128
    %4526 = vxpose.xlu0.b32.cont [9/16] 0.0, 128
    %4527 = vxpose.xlu0.b32.cont [10/16] 0.0, 128
    %4528 = vxpose.xlu0.b32.cont [11/16] 0.0, 128
    %4529 = vxpose.xlu0.b32.cont [12/16] 0.0, 128
    %4530 = vxpose.xlu0.b32.cont [13/16] 0.0, 128
    %4531 = vxpose.xlu0.b32.cont [14/16] 0.0, 128
    %4532 = vxpose.xlu0.b32.cont [15/16] 0.0, 128
    %4533 = vxpose.xlu0.b32.end [16/16] 0.0, 128
    %v4534 = vpop.trf.xlu0
    %v4535 = vpop.trf.xlu0
    %v4536 = vpop.trf.xlu0
    %v4537 = vpop.trf.xlu0
    %v4538 = vpop.trf.xlu0
    %v4539 = vpop.trf.xlu0
    %v4540 = vpop.trf.xlu0
    %v4541 = vpop.trf.xlu0
    %v4542 = vpop.trf.xlu0
    %v4543 = vpop.trf.xlu0
    %v4544 = vpop.trf.xlu0
    %v4545 = vpop.trf.xlu0
    %v4546 = vpop.trf.xlu0
    %v4547 = vpop.trf.xlu0
    %v4548 = vpop.trf.xlu0
    %v4549 = vpop.trf.xlu0
    %4550 = vxpose.xlu0.b32.start [1/16] %v4218, 128
    %4551 = vxpose.xlu0.b32.cont [2/16] %v4219, 128
    %4552 = vxpose.xlu0.b32.cont [3/16] 0.0, 128
    %4553 = vxpose.xlu0.b32.cont [4/16] 0.0, 128
    %4554 = vxpose.xlu0.b32.cont [5/16] 0.0, 128
    %4555 = vxpose.xlu0.b32.cont [6/16] 0.0, 128
    %4556 = vxpose.xlu0.b32.cont [7/16] 0.0, 128
    %4557 = vxpose.xlu0.b32.cont [8/16] 0.0, 128
    %4558 = vxpose.xlu0.b32.cont [9/16] 0.0, 128
    %4559 = vxpose.xlu0.b32.cont [10/16] 0.0, 128
    %4560 = vxpose.xlu0.b32.cont [11/16] 0.0, 128
    %4561 = vxpose.xlu0.b32.cont [12/16] 0.0, 128
    %4562 = vxpose.xlu0.b32.cont [13/16] 0.0, 128
    %4563 = vxpose.xlu0.b32.cont [14/16] 0.0, 128
    %4564 = vxpose.xlu0.b32.cont [15/16] 0.0, 128
    %4565 = vxpose.xlu0.b32.end [16/16] 0.0, 128
    %v4566 = vpop.trf.xlu0
    %v4567 = vpop.trf.xlu0
    %v4568 = vpop.trf.xlu0
    %v4569 = vpop.trf.xlu0
    %v4570 = vpop.trf.xlu0
    %v4571 = vpop.trf.xlu0
    %v4572 = vpop.trf.xlu0
    %v4573 = vpop.trf.xlu0
    %v4574 = vpop.trf.xlu0
    %v4575 = vpop.trf.xlu0
    %v4576 = vpop.trf.xlu0
    %v4577 = vpop.trf.xlu0
    %v4578 = vpop.trf.xlu0
    %v4579 = vpop.trf.xlu0
    %v4580 = vpop.trf.xlu0
    %v4581 = vpop.trf.xlu0
    %4582 = vxpose.xlu0.b32.start [1/16] %v4220, 128
    %4583 = vxpose.xlu0.b32.cont [2/16] %v4221, 128
    %4584 = vxpose.xlu0.b32.cont [3/16] 0.0, 128
    %4585 = vxpose.xlu0.b32.cont [4/16] 0.0, 128
    %4586 = vxpose.xlu0.b32.cont [5/16] 0.0, 128
    %4587 = vxpose.xlu0.b32.cont [6/16] 0.0, 128
    %4588 = vxpose.xlu0.b32.cont [7/16] 0.0, 128
    %4589 = vxpose.xlu0.b32.cont [8/16] 0.0, 128
    %4590 = vxpose.xlu0.b32.cont [9/16] 0.0, 128
    %4591 = vxpose.xlu0.b32.cont [10/16] 0.0, 128
    %4592 = vxpose.xlu0.b32.cont [11/16] 0.0, 128
    %4593 = vxpose.xlu0.b32.cont [12/16] 0.0, 128
    %4594 = vxpose.xlu0.b32.cont [13/16] 0.0, 128
    %4595 = vxpose.xlu0.b32.cont [14/16] 0.0, 128
    %4596 = vxpose.xlu0.b32.cont [15/16] 0.0, 128
    %4597 = vxpose.xlu0.b32.end [16/16] 0.0, 128
    %v4598 = vpop.trf.xlu0
    %v4599 = vpop.trf.xlu0
    %v4600 = vpop.trf.xlu0
    %v4601 = vpop.trf.xlu0
    %v4602 = vpop.trf.xlu0
    %v4603 = vpop.trf.xlu0
    %v4604 = vpop.trf.xlu0
    %v4605 = vpop.trf.xlu0
    %v4606 = vpop.trf.xlu0
    %v4607 = vpop.trf.xlu0
    %v4608 = vpop.trf.xlu0
    %v4609 = vpop.trf.xlu0
    %v4610 = vpop.trf.xlu0
    %v4611 = vpop.trf.xlu0
    %v4612 = vpop.trf.xlu0
    %v4613 = vpop.trf.xlu0
    %4614 = vxpose.xlu0.b32.start [1/16] %v4222, 128
    %4615 = vxpose.xlu0.b32.cont [2/16] %v4223, 128
    %4616 = vxpose.xlu0.b32.cont [3/16] 0.0, 128
    %4617 = vxpose.xlu0.b32.cont [4/16] 0.0, 128
    %4618 = vxpose.xlu0.b32.cont [5/16] 0.0, 128
    %4619 = vxpose.xlu0.b32.cont [6/16] 0.0, 128
    %4620 = vxpose.xlu0.b32.cont [7/16] 0.0, 128
    %4621 = vxpose.xlu0.b32.cont [8/16] 0.0, 128
    %4622 = vxpose.xlu0.b32.cont [9/16] 0.0, 128
    %4623 = vxpose.xlu0.b32.cont [10/16] 0.0, 128
    %4624 = vxpose.xlu0.b32.cont [11/16] 0.0, 128
    %4625 = vxpose.xlu0.b32.cont [12/16] 0.0, 128
    %4626 = vxpose.xlu0.b32.cont [13/16] 0.0, 128
    %4627 = vxpose.xlu0.b32.cont [14/16] 0.0, 128
    %4628 = vxpose.xlu0.b32.cont [15/16] 0.0, 128
    %4629 = vxpose.xlu0.b32.end [16/16] 0.0, 128
    %v4630 = vpop.trf.xlu0
    %v4631 = vpop.trf.xlu0
    %v4632 = vpop.trf.xlu0
    %v4633 = vpop.trf.xlu0
    %v4634 = vpop.trf.xlu0
    %v4635 = vpop.trf.xlu0
    %v4636 = vpop.trf.xlu0
    %v4637 = vpop.trf.xlu0
    %v4638 = vpop.trf.xlu0
    %v4639 = vpop.trf.xlu0
    %v4640 = vpop.trf.xlu0
    %v4641 = vpop.trf.xlu0
    %v4642 = vpop.trf.xlu0
    %v4643 = vpop.trf.xlu0
    %v4644 = vpop.trf.xlu0
    %v4645 = vpop.trf.xlu0
    %4646 = vxpose.xlu0.b32.start [1/16] %v4224, 128
    %4647 = vxpose.xlu0.b32.cont [2/16] %v4225, 128
    %4648 = vxpose.xlu0.b32.cont [3/16] 0.0, 128
    %4649 = vxpose.xlu0.b32.cont [4/16] 0.0, 128
    %4650 = vxpose.xlu0.b32.cont [5/16] 0.0, 128
    %4651 = vxpose.xlu0.b32.cont [6/16] 0.0, 128
    %4652 = vxpose.xlu0.b32.cont [7/16] 0.0, 128
    %4653 = vxpose.xlu0.b32.cont [8/16] 0.0, 128
    %4654 = vxpose.xlu0.b32.cont [9/16] 0.0, 128
    %4655 = vxpose.xlu0.b32.cont [10/16] 0.0, 128
    %4656 = vxpose.xlu0.b32.cont [11/16] 0.0, 128
    %4657 = vxpose.xlu0.b32.cont [12/16] 0.0, 128
    %4658 = vxpose.xlu0.b32.cont [13/16] 0.0, 128
    %4659 = vxpose.xlu0.b32.cont [14/16] 0.0, 128
    %4660 = vxpose.xlu0.b32.cont [15/16] 0.0, 128
    %4661 = vxpose.xlu0.b32.end [16/16] 0.0, 128
    %v4662 = vpop.trf.xlu0
    %v4663 = vpop.trf.xlu0
    %v4664 = vpop.trf.xlu0
    %v4665 = vpop.trf.xlu0
    %v4666 = vpop.trf.xlu0
    %v4667 = vpop.trf.xlu0
    %v4668 = vpop.trf.xlu0
    %v4669 = vpop.trf.xlu0
    %v4670 = vpop.trf.xlu0
    %v4671 = vpop.trf.xlu0
    %v4672 = vpop.trf.xlu0
    %v4673 = vpop.trf.xlu0
    %v4674 = vpop.trf.xlu0
    %v4675 = vpop.trf.xlu0
    %v4676 = vpop.trf.xlu0
    %v4677 = vpop.trf.xlu0
    %4678 = vxpose.xlu0.b32.start [1/16] %v4226, 128
    %4679 = vxpose.xlu0.b32.cont [2/16] %v4227, 128
    %4680 = vxpose.xlu0.b32.cont [3/16] 0.0, 128
    %4681 = vxpose.xlu0.b32.cont [4/16] 0.0, 128
    %4682 = vxpose.xlu0.b32.cont [5/16] 0.0, 128
    %4683 = vxpose.xlu0.b32.cont [6/16] 0.0, 128
    %4684 = vxpose.xlu0.b32.cont [7/16] 0.0, 128
    %4685 = vxpose.xlu0.b32.cont [8/16] 0.0, 128
    %4686 = vxpose.xlu0.b32.cont [9/16] 0.0, 128
    %4687 = vxpose.xlu0.b32.cont [10/16] 0.0, 128
    %4688 = vxpose.xlu0.b32.cont [11/16] 0.0, 128
    %4689 = vxpose.xlu0.b32.cont [12/16] 0.0, 128
    %4690 = vxpose.xlu0.b32.cont [13/16] 0.0, 128
    %4691 = vxpose.xlu0.b32.cont [14/16] 0.0, 128
    %4692 = vxpose.xlu0.b32.cont [15/16] 0.0, 128
    %4693 = vxpose.xlu0.b32.end [16/16] 0.0, 128
    %v4694 = vpop.trf.xlu0
    %v4695 = vpop.trf.xlu0
    %v4696 = vpop.trf.xlu0
    %v4697 = vpop.trf.xlu0
    %v4698 = vpop.trf.xlu0
    %v4699 = vpop.trf.xlu0
    %v4700 = vpop.trf.xlu0
    %v4701 = vpop.trf.xlu0
    %v4702 = vpop.trf.xlu0
    %v4703 = vpop.trf.xlu0
    %v4704 = vpop.trf.xlu0
    %v4705 = vpop.trf.xlu0
    %v4706 = vpop.trf.xlu0
    %v4707 = vpop.trf.xlu0
    %v4708 = vpop.trf.xlu0
    %v4709 = vpop.trf.xlu0
    %4710 = vxpose.xlu0.b32.start [1/16] %v4228, 128
    %4711 = vxpose.xlu0.b32.cont [2/16] %v4229, 128
    %4712 = vxpose.xlu0.b32.cont [3/16] 0.0, 128
    %4713 = vxpose.xlu0.b32.cont [4/16] 0.0, 128
    %4714 = vxpose.xlu0.b32.cont [5/16] 0.0, 128
    %4715 = vxpose.xlu0.b32.cont [6/16] 0.0, 128
    %4716 = vxpose.xlu0.b32.cont [7/16] 0.0, 128
    %4717 = vxpose.xlu0.b32.cont [8/16] 0.0, 128
    %4718 = vxpose.xlu0.b32.cont [9/16] 0.0, 128
    %4719 = vxpose.xlu0.b32.cont [10/16] 0.0, 128
    %4720 = vxpose.xlu0.b32.cont [11/16] 0.0, 128
    %4721 = vxpose.xlu0.b32.cont [12/16] 0.0, 128
    %4722 = vxpose.xlu0.b32.cont [13/16] 0.0, 128
    %4723 = vxpose.xlu0.b32.cont [14/16] 0.0, 128
    %4724 = vxpose.xlu0.b32.cont [15/16] 0.0, 128
    %4725 = vxpose.xlu0.b32.end [16/16] 0.0, 128
    %v4726 = vpop.trf.xlu0
    %v4727 = vpop.trf.xlu0
    %v4728 = vpop.trf.xlu0
    %v4729 = vpop.trf.xlu0
    %v4730 = vpop.trf.xlu0
    %v4731 = vpop.trf.xlu0
    %v4732 = vpop.trf.xlu0
    %v4733 = vpop.trf.xlu0
    %v4734 = vpop.trf.xlu0
    %v4735 = vpop.trf.xlu0
    %v4736 = vpop.trf.xlu0
    %v4737 = vpop.trf.xlu0
    %v4738 = vpop.trf.xlu0
    %v4739 = vpop.trf.xlu0
    %v4740 = vpop.trf.xlu0
    %v4741 = vpop.trf.xlu0
    %vm4742 = vcmask 130048
    %v4744 = vsel %vm4742, %v4246, 0
    %v4747 = vsel %vm4742, %v4247, 0
    %v4750 = vsel %vm4742, %v4248, 0
    %4752 = vmatprep.subr.mxu0 0.0
    %4753 = vmatpush1.msra.mxu0 0.0
    %4754 = vmatprep.subr.mxu0 0.0
    %4755 = vmatpush1.msra.mxu0 0.0
    %4756 = vmatprep.subr.mxu0 0.0
    %4757 = vmatpush1.msra.mxu0 0.0
    %4758 = vmatprep.subr.mxu0 0.0
    %4759 = vmatpush1.msra.mxu0 0.0
    %4760 = vmatprep.subr.mxu0 0.0
    %4761 = vmatpush1.msra.mxu0 0.0
    %4762 = vmatprep.subr.mxu0 0.0
    %4763 = vmatpush1.msra.mxu0 0.0
    %4764 = vmatprep.subr.mxu0 0.0
    %4765 = vmatpush1.msra.mxu0 0.0
    %4766 = vmatprep.subr.mxu0 0.0
    %4767 = vmatpush1.msra.mxu0 0.0
    %4768 = vmatprep.subr.mxu0 0.0
    %4769 = vmatpush1.msra.mxu0 0.0
    %4770 = vmatprep.subr.mxu0 0.0
    %4771 = vmatpush1.msra.mxu0 0.0
    %4772 = vmatprep.subr.mxu0 0.0
    %4773 = vmatpush1.msra.mxu0 0.0
    %4774 = vmatprep.subr.mxu0 0.0
    %4775 = vmatpush1.msra.mxu0 0.0
    %4776 = vmatprep.subr.mxu0 0.0
    %4777 = vmatpush1.msra.mxu0 0.0
    %4778 = vmatprep.subr.mxu0 0.0
    %4779 = vmatpush1.msra.mxu0 0.0
    %4780 = vmatprep.subr.mxu0 0.0
    %4781 = vmatpush1.msra.mxu0 %v53
    %4782 = vmatprep.subr.mxu0 0.0
    %4783 = vmatpush1.msra.mxu0 %v52
    %4784 = vmatprep.subr.mxu0 0.0
    %4785 = vmatpush2.msra.mxu0 0.0
    %4786 = vmatprep.subr.mxu0 0.0
    %4787 = vmatpush2.msra.mxu0 0.0
    %4788 = vmatprep.subr.mxu0 0.0
    %4789 = vmatpush2.msra.mxu0 0.0
    %4790 = vmatprep.subr.mxu0 0.0
    %4791 = vmatpush2.msra.mxu0 0.0
    %4792 = vmatprep.subr.mxu0 0.0
    %4793 = vmatpush2.msra.mxu0 0.0
    %4794 = vmatprep.subr.mxu0 0.0
    %4795 = vmatpush2.msra.mxu0 0.0
    %4796 = vmatprep.subr.mxu0 0.0
    %4797 = vmatpush2.msra.mxu0 0.0
    %4798 = vmatprep.subr.mxu0 0.0
    %4799 = vmatpush2.msra.mxu0 0.0
    %4800 = vmatprep.subr.mxu0 0.0
    %4801 = vmatpush2.msra.mxu0 0.0
    %4802 = vmatprep.subr.mxu0 0.0
    %4803 = vmatpush2.msra.mxu0 0.0
    %4804 = vmatprep.subr.mxu0 0.0
    %4805 = vmatpush2.msra.mxu0 0.0
    %4806 = vmatprep.subr.mxu0 0.0
    %4807 = vmatpush2.msra.mxu0 0.0
    %4808 = vmatprep.subr.mxu0 0.0
    %4809 = vmatpush2.msra.mxu0 0.0
    %4810 = vmatprep.subr.mxu0 0.0
    %4811 = vmatpush2.msra.mxu0 0.0
    %4812 = vmatprep.subr.mxu0 0.0
    %4813 = vmatpush2.msra.mxu0 0.0
    %4814 = vmatprep.subr.mxu0 0.0
    %4815 = vmatpush2.msra.mxu0 0.0
    %4816 = vmatprep.mubr.f32.mxu0 0.0
    %4817 = vmatmul.mubr.f32.gmra.mxu0 %v4744
    %v4818 = vpop.f32.mrf.mxu0
    %v4819 = vadd.f32 0.0, %v4818
    %v4820 = vpop.f32.mrf.mxu0
    %4821 = vmatprep.mubr.f32.mxu0 0.0
    %4822 = vmatmul.mubr.f32.gmra.mxu0 %v4747
    %v4823 = vpop.f32.mrf.mxu0
    %v4824 = vadd.f32 0.0, %v4823
    %v4825 = vpop.f32.mrf.mxu0
    %4826 = vmatprep.mubr.f32.mxu0 0.0
    %4827 = vmatmul.mubr.f32.gmra.mxu0 %v4750
    %v4828 = vpop.f32.mrf.mxu0
    %v4829 = vadd.f32 0.0, %v4828
    %v4830 = vpop.f32.mrf.mxu0
    %4831 = vdwg.mxu0
    %v4833 = vsel %vm4742, %v4278, 0
    %v4836 = vsel %vm4742, %v4279, 0
    %v4839 = vsel %vm4742, %v4280, 0
    %4841 = vmatprep.subr.mxu0 0.0
    %4842 = vmatpush1.msra.mxu0 0.0
    %4843 = vmatprep.subr.mxu0 0.0
    %4844 = vmatpush1.msra.mxu0 0.0
    %4845 = vmatprep.subr.mxu0 0.0
    %4846 = vmatpush1.msra.mxu0 0.0
    %4847 = vmatprep.subr.mxu0 0.0
    %4848 = vmatpush1.msra.mxu0 0.0
    %4849 = vmatprep.subr.mxu0 0.0
    %4850 = vmatpush1.msra.mxu0 0.0
    %4851 = vmatprep.subr.mxu0 0.0
    %4852 = vmatpush1.msra.mxu0 0.0
    %4853 = vmatprep.subr.mxu0 0.0
    %4854 = vmatpush1.msra.mxu0 0.0
    %4855 = vmatprep.subr.mxu0 0.0
    %4856 = vmatpush1.msra.mxu0 0.0
    %4857 = vmatprep.subr.mxu0 0.0
    %4858 = vmatpush1.msra.mxu0 0.0
    %4859 = vmatprep.subr.mxu0 0.0
    %4860 = vmatpush1.msra.mxu0 0.0
    %4861 = vmatprep.subr.mxu0 0.0
    %4862 = vmatpush1.msra.mxu0 0.0
    %4863 = vmatprep.subr.mxu0 0.0
    %4864 = vmatpush1.msra.mxu0 0.0
    %4865 = vmatprep.subr.mxu0 0.0
    %4866 = vmatpush1.msra.mxu0 0.0
    %4867 = vmatprep.subr.mxu0 0.0
    %4868 = vmatpush1.msra.mxu0 0.0
    %4869 = vmatprep.subr.mxu0 0.0
    %4870 = vmatpush1.msra.mxu0 %v55
    %4871 = vmatprep.subr.mxu0 0.0
    %4872 = vmatpush1.msra.mxu0 %v54
    %4873 = vmatprep.subr.mxu0 0.0
    %4874 = vmatpush2.msra.mxu0 0.0
    %4875 = vmatprep.subr.mxu0 0.0
    %4876 = vmatpush2.msra.mxu0 0.0
    %4877 = vmatprep.subr.mxu0 0.0
    %4878 = vmatpush2.msra.mxu0 0.0
    %4879 = vmatprep.subr.mxu0 0.0
    %4880 = vmatpush2.msra.mxu0 0.0
    %4881 = vmatprep.subr.mxu0 0.0
    %4882 = vmatpush2.msra.mxu0 0.0
    %4883 = vmatprep.subr.mxu0 0.0
    %4884 = vmatpush2.msra.mxu0 0.0
    %4885 = vmatprep.subr.mxu0 0.0
    %4886 = vmatpush2.msra.mxu0 0.0
    %4887 = vmatprep.subr.mxu0 0.0
    %4888 = vmatpush2.msra.mxu0 0.0
    %4889 = vmatprep.subr.mxu0 0.0
    %4890 = vmatpush2.msra.mxu0 0.0
    %4891 = vmatprep.subr.mxu0 0.0
    %4892 = vmatpush2.msra.mxu0 0.0
    %4893 = vmatprep.subr.mxu0 0.0
    %4894 = vmatpush2.msra.mxu0 0.0
    %4895 = vmatprep.subr.mxu0 0.0
    %4896 = vmatpush2.msra.mxu0 0.0
    %4897 = vmatprep.subr.mxu0 0.0
    %4898 = vmatpush2.msra.mxu0 0.0
    %4899 = vmatprep.subr.mxu0 0.0
    %4900 = vmatpush2.msra.mxu0 0.0
    %4901 = vmatprep.subr.mxu0 0.0
    %4902 = vmatpush2.msra.mxu0 0.0
    %4903 = vmatprep.subr.mxu0 0.0
    %4904 = vmatpush2.msra.mxu0 0.0
    %4905 = vmatprep.mubr.f32.mxu0 0.0
    %4906 = vmatmul.mubr.f32.gmra.mxu0 %v4833
    %v4907 = vpop.f32.mrf.mxu0
    %v4908 = vadd.f32 0.0, %v4907
    %v4909 = vpop.f32.mrf.mxu0
    %4910 = vmatprep.mubr.f32.mxu0 0.0
    %4911 = vmatmul.mubr.f32.gmra.mxu0 %v4836
    %v4912 = vpop.f32.mrf.mxu0
    %v4913 = vadd.f32 0.0, %v4912
    %v4914 = vpop.f32.mrf.mxu0
    %4915 = vmatprep.mubr.f32.mxu0 0.0
    %4916 = vmatmul.mubr.f32.gmra.mxu0 %v4839
    %v4917 = vpop.f32.mrf.mxu0
    %v4918 = vadd.f32 0.0, %v4917
    %v4919 = vpop.f32.mrf.mxu0
    %4920 = vdwg.mxu0
    %v4922 = vsel %vm4742, %v4310, 0
    %v4925 = vsel %vm4742, %v4311, 0
    %v4928 = vsel %vm4742, %v4312, 0
    %4930 = vmatprep.subr.mxu0 0.0
    %4931 = vmatpush1.msra.mxu0 0.0
    %4932 = vmatprep.subr.mxu0 0.0
    %4933 = vmatpush1.msra.mxu0 0.0
    %4934 = vmatprep.subr.mxu0 0.0
    %4935 = vmatpush1.msra.mxu0 0.0
    %4936 = vmatprep.subr.mxu0 0.0
    %4937 = vmatpush1.msra.mxu0 0.0
    %4938 = vmatprep.subr.mxu0 0.0
    %4939 = vmatpush1.msra.mxu0 0.0
    %4940 = vmatprep.subr.mxu0 0.0
    %4941 = vmatpush1.msra.mxu0 0.0
    %4942 = vmatprep.subr.mxu0 0.0
    %4943 = vmatpush1.msra.mxu0 0.0
    %4944 = vmatprep.subr.mxu0 0.0
    %4945 = vmatpush1.msra.mxu0 0.0
    %4946 = vmatprep.subr.mxu0 0.0
    %4947 = vmatpush1.msra.mxu0 0.0
    %4948 = vmatprep.subr.mxu0 0.0
    %4949 = vmatpush1.msra.mxu0 0.0
    %4950 = vmatprep.subr.mxu0 0.0
    %4951 = vmatpush1.msra.mxu0 0.0
    %4952 = vmatprep.subr.mxu0 0.0
    %4953 = vmatpush1.msra.mxu0 0.0
    %4954 = vmatprep.subr.mxu0 0.0
    %4955 = vmatpush1.msra.mxu0 0.0
    %4956 = vmatprep.subr.mxu0 0.0
    %4957 = vmatpush1.msra.mxu0 0.0
    %4958 = vmatprep.subr.mxu0 0.0
    %4959 = vmatpush1.msra.mxu0 %v57
    %4960 = vmatprep.subr.mxu0 0.0
    %4961 = vmatpush1.msra.mxu0 %v56
    %4962 = vmatprep.subr.mxu0 0.0
    %4963 = vmatpush2.msra.mxu0 0.0
    %4964 = vmatprep.subr.mxu0 0.0
    %4965 = vmatpush2.msra.mxu0 0.0
    %4966 = vmatprep.subr.mxu0 0.0
    %4967 = vmatpush2.msra.mxu0 0.0
    %4968 = vmatprep.subr.mxu0 0.0
    %4969 = vmatpush2.msra.mxu0 0.0
    %4970 = vmatprep.subr.mxu0 0.0
    %4971 = vmatpush2.msra.mxu0 0.0
    %4972 = vmatprep.subr.mxu0 0.0
    %4973 = vmatpush2.msra.mxu0 0.0
    %4974 = vmatprep.subr.mxu0 0.0
    %4975 = vmatpush2.msra.mxu0 0.0
    %4976 = vmatprep.subr.mxu0 0.0
    %4977 = vmatpush2.msra.mxu0 0.0
    %4978 = vmatprep.subr.mxu0 0.0
    %4979 = vmatpush2.msra.mxu0 0.0
    %4980 = vmatprep.subr.mxu0 0.0
    %4981 = vmatpush2.msra.mxu0 0.0
    %4982 = vmatprep.subr.mxu0 0.0
    %4983 = vmatpush2.msra.mxu0 0.0
    %4984 = vmatprep.subr.mxu0 0.0
    %4985 = vmatpush2.msra.mxu0 0.0
    %4986 = vmatprep.subr.mxu0 0.0
    %4987 = vmatpush2.msra.mxu0 0.0
    %4988 = vmatprep.subr.mxu0 0.0
    %4989 = vmatpush2.msra.mxu0 0.0
    %4990 = vmatprep.subr.mxu0 0.0
    %4991 = vmatpush2.msra.mxu0 0.0
    %4992 = vmatprep.subr.mxu0 0.0
    %4993 = vmatpush2.msra.mxu0 0.0
    %4994 = vmatprep.mubr.f32.mxu0 0.0
    %4995 = vmatmul.mubr.f32.gmra.mxu0 %v4922
    %v4996 = vpop.f32.mrf.mxu0
    %v4997 = vadd.f32 0.0, %v4996
    %v4998 = vpop.f32.mrf.mxu0
    %4999 = vmatprep.mubr.f32.mxu0 0.0
    %5000 = vmatmul.mubr.f32.gmra.mxu0 %v4925
    %v5001 = vpop.f32.mrf.mxu0
    %v5002 = vadd.f32 0.0, %v5001
    %v5003 = vpop.f32.mrf.mxu0
    %5004 = vmatprep.mubr.f32.mxu0 0.0
    %5005 = vmatmul.mubr.f32.gmra.mxu0 %v4928
    %v5006 = vpop.f32.mrf.mxu0
    %v5007 = vadd.f32 0.0, %v5006
    %v5008 = vpop.f32.mrf.mxu0
    %5009 = vdwg.mxu0
    %v5011 = vsel %vm4742, %v4342, 0
    %v5014 = vsel %vm4742, %v4343, 0
    %v5017 = vsel %vm4742, %v4344, 0
    %5019 = vmatprep.subr.mxu0 0.0
    %5020 = vmatpush1.msra.mxu0 0.0
    %5021 = vmatprep.subr.mxu0 0.0
    %5022 = vmatpush1.msra.mxu0 0.0
    %5023 = vmatprep.subr.mxu0 0.0
    %5024 = vmatpush1.msra.mxu0 0.0
    %5025 = vmatprep.subr.mxu0 0.0
    %5026 = vmatpush1.msra.mxu0 0.0
    %5027 = vmatprep.subr.mxu0 0.0
    %5028 = vmatpush1.msra.mxu0 0.0
    %5029 = vmatprep.subr.mxu0 0.0
    %5030 = vmatpush1.msra.mxu0 0.0
    %5031 = vmatprep.subr.mxu0 0.0
    %5032 = vmatpush1.msra.mxu0 0.0
    %5033 = vmatprep.subr.mxu0 0.0
    %5034 = vmatpush1.msra.mxu0 0.0
    %5035 = vmatprep.subr.mxu0 0.0
    %5036 = vmatpush1.msra.mxu0 0.0
    %5037 = vmatprep.subr.mxu0 0.0
    %5038 = vmatpush1.msra.mxu0 0.0
    %5039 = vmatprep.subr.mxu0 0.0
    %5040 = vmatpush1.msra.mxu0 0.0
    %5041 = vmatprep.subr.mxu0 0.0
    %5042 = vmatpush1.msra.mxu0 0.0
    %5043 = vmatprep.subr.mxu0 0.0
    %5044 = vmatpush1.msra.mxu0 0.0
    %5045 = vmatprep.subr.mxu0 0.0
    %5046 = vmatpush1.msra.mxu0 0.0
    %5047 = vmatprep.subr.mxu0 0.0
    %5048 = vmatpush1.msra.mxu0 %v59
    %5049 = vmatprep.subr.mxu0 0.0
    %5050 = vmatpush1.msra.mxu0 %v58
    %5051 = vmatprep.subr.mxu0 0.0
    %5052 = vmatpush2.msra.mxu0 0.0
    %5053 = vmatprep.subr.mxu0 0.0
    %5054 = vmatpush2.msra.mxu0 0.0
    %5055 = vmatprep.subr.mxu0 0.0
    %5056 = vmatpush2.msra.mxu0 0.0
    %5057 = vmatprep.subr.mxu0 0.0
    %5058 = vmatpush2.msra.mxu0 0.0
    %5059 = vmatprep.subr.mxu0 0.0
    %5060 = vmatpush2.msra.mxu0 0.0
    %5061 = vmatprep.subr.mxu0 0.0
    %5062 = vmatpush2.msra.mxu0 0.0
    %5063 = vmatprep.subr.mxu0 0.0
    %5064 = vmatpush2.msra.mxu0 0.0
    %5065 = vmatprep.subr.mxu0 0.0
    %5066 = vmatpush2.msra.mxu0 0.0
    %5067 = vmatprep.subr.mxu0 0.0
    %5068 = vmatpush2.msra.mxu0 0.0
    %5069 = vmatprep.subr.mxu0 0.0
    %5070 = vmatpush2.msra.mxu0 0.0
    %5071 = vmatprep.subr.mxu0 0.0
    %5072 = vmatpush2.msra.mxu0 0.0
    %5073 = vmatprep.subr.mxu0 0.0
    %5074 = vmatpush2.msra.mxu0 0.0
    %5075 = vmatprep.subr.mxu0 0.0
    %5076 = vmatpush2.msra.mxu0 0.0
    %5077 = vmatprep.subr.mxu0 0.0
    %5078 = vmatpush2.msra.mxu0 0.0
    %5079 = vmatprep.subr.mxu0 0.0
    %5080 = vmatpush2.msra.mxu0 0.0
    %5081 = vmatprep.subr.mxu0 0.0
    %5082 = vmatpush2.msra.mxu0 0.0
    %5083 = vmatprep.mubr.f32.mxu0 0.0
    %5084 = vmatmul.mubr.f32.gmra.mxu0 %v5011
    %v5085 = vpop.f32.mrf.mxu0
    %v5086 = vadd.f32 0.0, %v5085
    %v5087 = vpop.f32.mrf.mxu0
    %5088 = vmatprep.mubr.f32.mxu0 0.0
    %5089 = vmatmul.mubr.f32.gmra.mxu0 %v5014
    %v5090 = vpop.f32.mrf.mxu0
    %v5091 = vadd.f32 0.0, %v5090
    %v5092 = vpop.f32.mrf.mxu0
    %5093 = vmatprep.mubr.f32.mxu0 0.0
    %5094 = vmatmul.mubr.f32.gmra.mxu0 %v5017
    %v5095 = vpop.f32.mrf.mxu0
    %v5096 = vadd.f32 0.0, %v5095
    %v5097 = vpop.f32.mrf.mxu0
    %5098 = vdwg.mxu0
    %v5100 = vsel %vm4742, %v4374, 0
    %v5103 = vsel %vm4742, %v4375, 0
    %v5106 = vsel %vm4742, %v4376, 0
    %5108 = vmatprep.subr.mxu0 0.0
    %5109 = vmatpush1.msra.mxu0 0.0
    %5110 = vmatprep.subr.mxu0 0.0
    %5111 = vmatpush1.msra.mxu0 0.0
    %5112 = vmatprep.subr.mxu0 0.0
    %5113 = vmatpush1.msra.mxu0 0.0
    %5114 = vmatprep.subr.mxu0 0.0
    %5115 = vmatpush1.msra.mxu0 0.0
    %5116 = vmatprep.subr.mxu0 0.0
    %5117 = vmatpush1.msra.mxu0 0.0
    %5118 = vmatprep.subr.mxu0 0.0
    %5119 = vmatpush1.msra.mxu0 0.0
    %5120 = vmatprep.subr.mxu0 0.0
    %5121 = vmatpush1.msra.mxu0 0.0
    %5122 = vmatprep.subr.mxu0 0.0
    %5123 = vmatpush1.msra.mxu0 0.0
    %5124 = vmatprep.subr.mxu0 0.0
    %5125 = vmatpush1.msra.mxu0 0.0
    %5126 = vmatprep.subr.mxu0 0.0
    %5127 = vmatpush1.msra.mxu0 0.0
    %5128 = vmatprep.subr.mxu0 0.0
    %5129 = vmatpush1.msra.mxu0 0.0
    %5130 = vmatprep.subr.mxu0 0.0
    %5131 = vmatpush1.msra.mxu0 0.0
    %5132 = vmatprep.subr.mxu0 0.0
    %5133 = vmatpush1.msra.mxu0 0.0
    %5134 = vmatprep.subr.mxu0 0.0
    %5135 = vmatpush1.msra.mxu0 0.0
    %5136 = vmatprep.subr.mxu0 0.0
    %5137 = vmatpush1.msra.mxu0 %v61
    %5138 = vmatprep.subr.mxu0 0.0
    %5139 = vmatpush1.msra.mxu0 %v60
    %5140 = vmatprep.subr.mxu0 0.0
    %5141 = vmatpush2.msra.mxu0 0.0
    %5142 = vmatprep.subr.mxu0 0.0
    %5143 = vmatpush2.msra.mxu0 0.0
    %5144 = vmatprep.subr.mxu0 0.0
    %5145 = vmatpush2.msra.mxu0 0.0
    %5146 = vmatprep.subr.mxu0 0.0
    %5147 = vmatpush2.msra.mxu0 0.0
    %5148 = vmatprep.subr.mxu0 0.0
    %5149 = vmatpush2.msra.mxu0 0.0
    %5150 = vmatprep.subr.mxu0 0.0
    %5151 = vmatpush2.msra.mxu0 0.0
    %5152 = vmatprep.subr.mxu0 0.0
    %5153 = vmatpush2.msra.mxu0 0.0
    %5154 = vmatprep.subr.mxu0 0.0
    %5155 = vmatpush2.msra.mxu0 0.0
    %5156 = vmatprep.subr.mxu0 0.0
    %5157 = vmatpush2.msra.mxu0 0.0
    %5158 = vmatprep.subr.mxu0 0.0
    %5159 = vmatpush2.msra.mxu0 0.0
    %5160 = vmatprep.subr.mxu0 0.0
    %5161 = vmatpush2.msra.mxu0 0.0
    %5162 = vmatprep.subr.mxu0 0.0
    %5163 = vmatpush2.msra.mxu0 0.0
    %5164 = vmatprep.subr.mxu0 0.0
    %5165 = vmatpush2.msra.mxu0 0.0
    %5166 = vmatprep.subr.mxu0 0.0
    %5167 = vmatpush2.msra.mxu0 0.0
    %5168 = vmatprep.subr.mxu0 0.0
    %5169 = vmatpush2.msra.mxu0 0.0
    %5170 = vmatprep.subr.mxu0 0.0
    %5171 = vmatpush2.msra.mxu0 0.0
    %5172 = vmatprep.mubr.f32.mxu0 0.0
    %5173 = vmatmul.mubr.f32.gmra.mxu0 %v5100
    %v5174 = vpop.f32.mrf.mxu0
    %v5175 = vadd.f32 0.0, %v5174
    %v5176 = vpop.f32.mrf.mxu0
    %5177 = vmatprep.mubr.f32.mxu0 0.0
    %5178 = vmatmul.mubr.f32.gmra.mxu0 %v5103
    %v5179 = vpop.f32.mrf.mxu0
    %v5180 = vadd.f32 0.0, %v5179
    %v5181 = vpop.f32.mrf.mxu0
    %5182 = vmatprep.mubr.f32.mxu0 0.0
    %5183 = vmatmul.mubr.f32.gmra.mxu0 %v5106
    %v5184 = vpop.f32.mrf.mxu0
    %v5185 = vadd.f32 0.0, %v5184
    %v5186 = vpop.f32.mrf.mxu0
    %5187 = vdwg.mxu0
    %v5189 = vsel %vm4742, %v4406, 0
    %v5192 = vsel %vm4742, %v4407, 0
    %v5195 = vsel %vm4742, %v4408, 0
    %5197 = vmatprep.subr.mxu0 0.0
    %5198 = vmatpush1.msra.mxu0 0.0
    %5199 = vmatprep.subr.mxu0 0.0
    %5200 = vmatpush1.msra.mxu0 0.0
    %5201 = vmatprep.subr.mxu0 0.0
    %5202 = vmatpush1.msra.mxu0 0.0
    %5203 = vmatprep.subr.mxu0 0.0
    %5204 = vmatpush1.msra.mxu0 0.0
    %5205 = vmatprep.subr.mxu0 0.0
    %5206 = vmatpush1.msra.mxu0 0.0
    %5207 = vmatprep.subr.mxu0 0.0
    %5208 = vmatpush1.msra.mxu0 0.0
    %5209 = vmatprep.subr.mxu0 0.0
    %5210 = vmatpush1.msra.mxu0 0.0
    %5211 = vmatprep.subr.mxu0 0.0
    %5212 = vmatpush1.msra.mxu0 0.0
    %5213 = vmatprep.subr.mxu0 0.0
    %5214 = vmatpush1.msra.mxu0 0.0
    %5215 = vmatprep.subr.mxu0 0.0
    %5216 = vmatpush1.msra.mxu0 0.0
    %5217 = vmatprep.subr.mxu0 0.0
    %5218 = vmatpush1.msra.mxu0 0.0
    %5219 = vmatprep.subr.mxu0 0.0
    %5220 = vmatpush1.msra.mxu0 0.0
    %5221 = vmatprep.subr.mxu0 0.0
    %5222 = vmatpush1.msra.mxu0 0.0
    %5223 = vmatprep.subr.mxu0 0.0
    %5224 = vmatpush1.msra.mxu0 0.0
    %5225 = vmatprep.subr.mxu0 0.0
    %5226 = vmatpush1.msra.mxu0 %v63
    %5227 = vmatprep.subr.mxu0 0.0
    %5228 = vmatpush1.msra.mxu0 %v62
    %5229 = vmatprep.subr.mxu0 0.0
    %5230 = vmatpush2.msra.mxu0 0.0
    %5231 = vmatprep.subr.mxu0 0.0
    %5232 = vmatpush2.msra.mxu0 0.0
    %5233 = vmatprep.subr.mxu0 0.0
    %5234 = vmatpush2.msra.mxu0 0.0
    %5235 = vmatprep.subr.mxu0 0.0
    %5236 = vmatpush2.msra.mxu0 0.0
    %5237 = vmatprep.subr.mxu0 0.0
    %5238 = vmatpush2.msra.mxu0 0.0
    %5239 = vmatprep.subr.mxu0 0.0
    %5240 = vmatpush2.msra.mxu0 0.0
    %5241 = vmatprep.subr.mxu0 0.0
    %5242 = vmatpush2.msra.mxu0 0.0
    %5243 = vmatprep.subr.mxu0 0.0
    %5244 = vmatpush2.msra.mxu0 0.0
    %5245 = vmatprep.subr.mxu0 0.0
    %5246 = vmatpush2.msra.mxu0 0.0
    %5247 = vmatprep.subr.mxu0 0.0
    %5248 = vmatpush2.msra.mxu0 0.0
    %5249 = vmatprep.subr.mxu0 0.0
    %5250 = vmatpush2.msra.mxu0 0.0
    %5251 = vmatprep.subr.mxu0 0.0
    %5252 = vmatpush2.msra.mxu0 0.0
    %5253 = vmatprep.subr.mxu0 0.0
    %5254 = vmatpush2.msra.mxu0 0.0
    %5255 = vmatprep.subr.mxu0 0.0
    %5256 = vmatpush2.msra.mxu0 0.0
    %5257 = vmatprep.subr.mxu0 0.0
    %5258 = vmatpush2.msra.mxu0 0.0
    %5259 = vmatprep.subr.mxu0 0.0
    %5260 = vmatpush2.msra.mxu0 0.0
    %5261 = vmatprep.mubr.f32.mxu0 0.0
    %5262 = vmatmul.mubr.f32.gmra.mxu0 %v5189
    %v5263 = vpop.f32.mrf.mxu0
    %v5264 = vadd.f32 0.0, %v5263
    %v5265 = vpop.f32.mrf.mxu0
    %5266 = vmatprep.mubr.f32.mxu0 0.0
    %5267 = vmatmul.mubr.f32.gmra.mxu0 %v5192
    %v5268 = vpop.f32.mrf.mxu0
    %v5269 = vadd.f32 0.0, %v5268
    %v5270 = vpop.f32.mrf.mxu0
    %5271 = vmatprep.mubr.f32.mxu0 0.0
    %5272 = vmatmul.mubr.f32.gmra.mxu0 %v5195
    %v5273 = vpop.f32.mrf.mxu0
    %v5274 = vadd.f32 0.0, %v5273
    %v5275 = vpop.f32.mrf.mxu0
    %5276 = vdwg.mxu0
    %v5278 = vsel %vm4742, %v4438, 0
    %v5281 = vsel %vm4742, %v4439, 0
    %v5284 = vsel %vm4742, %v4440, 0
    %5286 = vmatprep.subr.mxu0 0.0
    %5287 = vmatpush1.msra.mxu0 0.0
    %5288 = vmatprep.subr.mxu0 0.0
    %5289 = vmatpush1.msra.mxu0 0.0
    %5290 = vmatprep.subr.mxu0 0.0
    %5291 = vmatpush1.msra.mxu0 0.0
    %5292 = vmatprep.subr.mxu0 0.0
    %5293 = vmatpush1.msra.mxu0 0.0
    %5294 = vmatprep.subr.mxu0 0.0
    %5295 = vmatpush1.msra.mxu0 0.0
    %5296 = vmatprep.subr.mxu0 0.0
    %5297 = vmatpush1.msra.mxu0 0.0
    %5298 = vmatprep.subr.mxu0 0.0
    %5299 = vmatpush1.msra.mxu0 0.0
    %5300 = vmatprep.subr.mxu0 0.0
    %5301 = vmatpush1.msra.mxu0 0.0
    %5302 = vmatprep.subr.mxu0 0.0
    %5303 = vmatpush1.msra.mxu0 0.0
    %5304 = vmatprep.subr.mxu0 0.0
    %5305 = vmatpush1.msra.mxu0 0.0
    %5306 = vmatprep.subr.mxu0 0.0
    %5307 = vmatpush1.msra.mxu0 0.0
    %5308 = vmatprep.subr.mxu0 0.0
    %5309 = vmatpush1.msra.mxu0 0.0
    %5310 = vmatprep.subr.mxu0 0.0
    %5311 = vmatpush1.msra.mxu0 0.0
    %5312 = vmatprep.subr.mxu0 0.0
    %5313 = vmatpush1.msra.mxu0 0.0
    %5314 = vmatprep.subr.mxu0 0.0
    %5315 = vmatpush1.msra.mxu0 %v65
    %5316 = vmatprep.subr.mxu0 0.0
    %5317 = vmatpush1.msra.mxu0 %v64
    %5318 = vmatprep.subr.mxu0 0.0
    %5319 = vmatpush2.msra.mxu0 0.0
    %5320 = vmatprep.subr.mxu0 0.0
    %5321 = vmatpush2.msra.mxu0 0.0
    %5322 = vmatprep.subr.mxu0 0.0
    %5323 = vmatpush2.msra.mxu0 0.0
    %5324 = vmatprep.subr.mxu0 0.0
    %5325 = vmatpush2.msra.mxu0 0.0
    %5326 = vmatprep.subr.mxu0 0.0
    %5327 = vmatpush2.msra.mxu0 0.0
    %5328 = vmatprep.subr.mxu0 0.0
    %5329 = vmatpush2.msra.mxu0 0.0
    %5330 = vmatprep.subr.mxu0 0.0
    %5331 = vmatpush2.msra.mxu0 0.0
    %5332 = vmatprep.subr.mxu0 0.0
    %5333 = vmatpush2.msra.mxu0 0.0
    %5334 = vmatprep.subr.mxu0 0.0
    %5335 = vmatpush2.msra.mxu0 0.0
    %5336 = vmatprep.subr.mxu0 0.0
    %5337 = vmatpush2.msra.mxu0 0.0
    %5338 = vmatprep.subr.mxu0 0.0
    %5339 = vmatpush2.msra.mxu0 0.0
    %5340 = vmatprep.subr.mxu0 0.0
    %5341 = vmatpush2.msra.mxu0 0.0
    %5342 = vmatprep.subr.mxu0 0.0
    %5343 = vmatpush2.msra.mxu0 0.0
    %5344 = vmatprep.subr.mxu0 0.0
    %5345 = vmatpush2.msra.mxu0 0.0
    %5346 = vmatprep.subr.mxu0 0.0
    %5347 = vmatpush2.msra.mxu0 0.0
    %5348 = vmatprep.subr.mxu0 0.0
    %5349 = vmatpush2.msra.mxu0 0.0
    %5350 = vmatprep.mubr.f32.mxu0 0.0
    %5351 = vmatmul.mubr.f32.gmra.mxu0 %v5278
    %v5352 = vpop.f32.mrf.mxu0
    %v5353 = vadd.f32 0.0, %v5352
    %v5354 = vpop.f32.mrf.mxu0
    %5355 = vmatprep.mubr.f32.mxu0 0.0
    %5356 = vmatmul.mubr.f32.gmra.mxu0 %v5281
    %v5357 = vpop.f32.mrf.mxu0
    %v5358 = vadd.f32 0.0, %v5357
    %v5359 = vpop.f32.mrf.mxu0
    %5360 = vmatprep.mubr.f32.mxu0 0.0
    %5361 = vmatmul.mubr.f32.gmra.mxu0 %v5284
    %v5362 = vpop.f32.mrf.mxu0
    %v5363 = vadd.f32 0.0, %v5362
    %v5364 = vpop.f32.mrf.mxu0
    %5365 = vdwg.mxu0
    %v5367 = vsel %vm4742, %v4470, 0
    %v5370 = vsel %vm4742, %v4471, 0
    %v5373 = vsel %vm4742, %v4472, 0
    %5375 = vmatprep.subr.mxu0 0.0
    %5376 = vmatpush1.msra.mxu0 0.0
    %5377 = vmatprep.subr.mxu0 0.0
    %5378 = vmatpush1.msra.mxu0 0.0
    %5379 = vmatprep.subr.mxu0 0.0
    %5380 = vmatpush1.msra.mxu0 0.0
    %5381 = vmatprep.subr.mxu0 0.0
    %5382 = vmatpush1.msra.mxu0 0.0
    %5383 = vmatprep.subr.mxu0 0.0
    %5384 = vmatpush1.msra.mxu0 0.0
    %5385 = vmatprep.subr.mxu0 0.0
    %5386 = vmatpush1.msra.mxu0 0.0
    %5387 = vmatprep.subr.mxu0 0.0
    %5388 = vmatpush1.msra.mxu0 0.0
    %5389 = vmatprep.subr.mxu0 0.0
    %5390 = vmatpush1.msra.mxu0 0.0
    %5391 = vmatprep.subr.mxu0 0.0
    %5392 = vmatpush1.msra.mxu0 0.0
    %5393 = vmatprep.subr.mxu0 0.0
    %5394 = vmatpush1.msra.mxu0 0.0
    %5395 = vmatprep.subr.mxu0 0.0
    %5396 = vmatpush1.msra.mxu0 0.0
    %5397 = vmatprep.subr.mxu0 0.0
    %5398 = vmatpush1.msra.mxu0 0.0
    %5399 = vmatprep.subr.mxu0 0.0
    %5400 = vmatpush1.msra.mxu0 0.0
    %5401 = vmatprep.subr.mxu0 0.0
    %5402 = vmatpush1.msra.mxu0 0.0
    %5403 = vmatprep.subr.mxu0 0.0
    %5404 = vmatpush1.msra.mxu0 %v67
    %5405 = vmatprep.subr.mxu0 0.0
    %5406 = vmatpush1.msra.mxu0 %v66
    %5407 = vmatprep.subr.mxu0 0.0
    %5408 = vmatpush2.msra.mxu0 0.0
    %5409 = vmatprep.subr.mxu0 0.0
    %5410 = vmatpush2.msra.mxu0 0.0
    %5411 = vmatprep.subr.mxu0 0.0
    %5412 = vmatpush2.msra.mxu0 0.0
    %5413 = vmatprep.subr.mxu0 0.0
    %5414 = vmatpush2.msra.mxu0 0.0
    %5415 = vmatprep.subr.mxu0 0.0
    %5416 = vmatpush2.msra.mxu0 0.0
    %5417 = vmatprep.subr.mxu0 0.0
    %5418 = vmatpush2.msra.mxu0 0.0
    %5419 = vmatprep.subr.mxu0 0.0
    %5420 = vmatpush2.msra.mxu0 0.0
    %5421 = vmatprep.subr.mxu0 0.0
    %5422 = vmatpush2.msra.mxu0 0.0
    %5423 = vmatprep.subr.mxu0 0.0
    %5424 = vmatpush2.msra.mxu0 0.0
    %5425 = vmatprep.subr.mxu0 0.0
    %5426 = vmatpush2.msra.mxu0 0.0
    %5427 = vmatprep.subr.mxu0 0.0
    %5428 = vmatpush2.msra.mxu0 0.0
    %5429 = vmatprep.subr.mxu0 0.0
    %5430 = vmatpush2.msra.mxu0 0.0
    %5431 = vmatprep.subr.mxu0 0.0
    %5432 = vmatpush2.msra.mxu0 0.0
    %5433 = vmatprep.subr.mxu0 0.0
    %5434 = vmatpush2.msra.mxu0 0.0
    %5435 = vmatprep.subr.mxu0 0.0
    %5436 = vmatpush2.msra.mxu0 0.0
    %5437 = vmatprep.subr.mxu0 0.0
    %5438 = vmatpush2.msra.mxu0 0.0
    %5439 = vmatprep.mubr.f32.mxu0 0.0
    %5440 = vmatmul.mubr.f32.gmra.mxu0 %v5367
    %v5441 = vpop.f32.mrf.mxu0
    %v5442 = vadd.f32 0.0, %v5441
    %v5443 = vpop.f32.mrf.mxu0
    %5444 = vmatprep.mubr.f32.mxu0 0.0
    %5445 = vmatmul.mubr.f32.gmra.mxu0 %v5370
    %v5446 = vpop.f32.mrf.mxu0
    %v5447 = vadd.f32 0.0, %v5446
    %v5448 = vpop.f32.mrf.mxu0
    %5449 = vmatprep.mubr.f32.mxu0 0.0
    %5450 = vmatmul.mubr.f32.gmra.mxu0 %v5373
    %v5451 = vpop.f32.mrf.mxu0
    %v5452 = vadd.f32 0.0, %v5451
    %v5453 = vpop.f32.mrf.mxu0
    %5454 = vdwg.mxu0
    %v5456 = vsel %vm4742, %v4502, 0
    %v5459 = vsel %vm4742, %v4503, 0
    %v5462 = vsel %vm4742, %v4504, 0
    %5464 = vmatprep.subr.mxu0 0.0
    %5465 = vmatpush1.msra.mxu0 0.0
    %5466 = vmatprep.subr.mxu0 0.0
    %5467 = vmatpush1.msra.mxu0 0.0
    %5468 = vmatprep.subr.mxu0 0.0
    %5469 = vmatpush1.msra.mxu0 0.0
    %5470 = vmatprep.subr.mxu0 0.0
    %5471 = vmatpush1.msra.mxu0 0.0
    %5472 = vmatprep.subr.mxu0 0.0
    %5473 = vmatpush1.msra.mxu0 0.0
    %5474 = vmatprep.subr.mxu0 0.0
    %5475 = vmatpush1.msra.mxu0 0.0
    %5476 = vmatprep.subr.mxu0 0.0
    %5477 = vmatpush1.msra.mxu0 0.0
    %5478 = vmatprep.subr.mxu0 0.0
    %5479 = vmatpush1.msra.mxu0 0.0
    %5480 = vmatprep.subr.mxu0 0.0
    %5481 = vmatpush1.msra.mxu0 0.0
    %5482 = vmatprep.subr.mxu0 0.0
    %5483 = vmatpush1.msra.mxu0 0.0
    %5484 = vmatprep.subr.mxu0 0.0
    %5485 = vmatpush1.msra.mxu0 0.0
    %5486 = vmatprep.subr.mxu0 0.0
    %5487 = vmatpush1.msra.mxu0 0.0
    %5488 = vmatprep.subr.mxu0 0.0
    %5489 = vmatpush1.msra.mxu0 0.0
    %5490 = vmatprep.subr.mxu0 0.0
    %5491 = vmatpush1.msra.mxu0 0.0
    %5492 = vmatprep.subr.mxu0 0.0
    %5493 = vmatpush1.msra.mxu0 %v69
    %5494 = vmatprep.subr.mxu0 0.0
    %5495 = vmatpush1.msra.mxu0 %v68
    %5496 = vmatprep.subr.mxu0 0.0
    %5497 = vmatpush2.msra.mxu0 0.0
    %5498 = vmatprep.subr.mxu0 0.0
    %5499 = vmatpush2.msra.mxu0 0.0
    %5500 = vmatprep.subr.mxu0 0.0
    %5501 = vmatpush2.msra.mxu0 0.0
    %5502 = vmatprep.subr.mxu0 0.0
    %5503 = vmatpush2.msra.mxu0 0.0
    %5504 = vmatprep.subr.mxu0 0.0
    %5505 = vmatpush2.msra.mxu0 0.0
    %5506 = vmatprep.subr.mxu0 0.0
    %5507 = vmatpush2.msra.mxu0 0.0
    %5508 = vmatprep.subr.mxu0 0.0
    %5509 = vmatpush2.msra.mxu0 0.0
    %5510 = vmatprep.subr.mxu0 0.0
    %5511 = vmatpush2.msra.mxu0 0.0
    %5512 = vmatprep.subr.mxu0 0.0
    %5513 = vmatpush2.msra.mxu0 0.0
    %5514 = vmatprep.subr.mxu0 0.0
    %5515 = vmatpush2.msra.mxu0 0.0
    %5516 = vmatprep.subr.mxu0 0.0
    %5517 = vmatpush2.msra.mxu0 0.0
    %5518 = vmatprep.subr.mxu0 0.0
    %5519 = vmatpush2.msra.mxu0 0.0
    %5520 = vmatprep.subr.mxu0 0.0
    %5521 = vmatpush2.msra.mxu0 0.0
    %5522 = vmatprep.subr.mxu0 0.0
    %5523 = vmatpush2.msra.mxu0 0.0
    %5524 = vmatprep.subr.mxu0 0.0
    %5525 = vmatpush2.msra.mxu0 0.0
    %5526 = vmatprep.subr.mxu0 0.0
    %5527 = vmatpush2.msra.mxu0 0.0
    %5528 = vmatprep.mubr.f32.mxu0 0.0
    %5529 = vmatmul.mubr.f32.gmra.mxu0 %v5456
    %v5530 = vpop.f32.mrf.mxu0
    %v5531 = vadd.f32 0.0, %v5530
    %v5532 = vpop.f32.mrf.mxu0
    %5533 = vmatprep.mubr.f32.mxu0 0.0
    %5534 = vmatmul.mubr.f32.gmra.mxu0 %v5459
    %v5535 = vpop.f32.mrf.mxu0
    %v5536 = vadd.f32 0.0, %v5535
    %v5537 = vpop.f32.mrf.mxu0
    %5538 = vmatprep.mubr.f32.mxu0 0.0
    %5539 = vmatmul.mubr.f32.gmra.mxu0 %v5462
    %v5540 = vpop.f32.mrf.mxu0
    %v5541 = vadd.f32 0.0, %v5540
    %v5542 = vpop.f32.mrf.mxu0
    %5543 = vdwg.mxu0
    %v5545 = vsel %vm4742, %v4534, 0
    %v5548 = vsel %vm4742, %v4535, 0
    %v5551 = vsel %vm4742, %v4536, 0
    %5553 = vmatprep.subr.mxu0 0.0
    %5554 = vmatpush1.msra.mxu0 0.0
    %5555 = vmatprep.subr.mxu0 0.0
    %5556 = vmatpush1.msra.mxu0 0.0
    %5557 = vmatprep.subr.mxu0 0.0
    %5558 = vmatpush1.msra.mxu0 0.0
    %5559 = vmatprep.subr.mxu0 0.0
    %5560 = vmatpush1.msra.mxu0 0.0
    %5561 = vmatprep.subr.mxu0 0.0
    %5562 = vmatpush1.msra.mxu0 0.0
    %5563 = vmatprep.subr.mxu0 0.0
    %5564 = vmatpush1.msra.mxu0 0.0
    %5565 = vmatprep.subr.mxu0 0.0
    %5566 = vmatpush1.msra.mxu0 0.0
    %5567 = vmatprep.subr.mxu0 0.0
    %5568 = vmatpush1.msra.mxu0 0.0
    %5569 = vmatprep.subr.mxu0 0.0
    %5570 = vmatpush1.msra.mxu0 0.0
    %5571 = vmatprep.subr.mxu0 0.0
    %5572 = vmatpush1.msra.mxu0 0.0
    %5573 = vmatprep.subr.mxu0 0.0
    %5574 = vmatpush1.msra.mxu0 0.0
    %5575 = vmatprep.subr.mxu0 0.0
    %5576 = vmatpush1.msra.mxu0 0.0
    %5577 = vmatprep.subr.mxu0 0.0
    %5578 = vmatpush1.msra.mxu0 0.0
    %5579 = vmatprep.subr.mxu0 0.0
    %5580 = vmatpush1.msra.mxu0 0.0
    %5581 = vmatprep.subr.mxu0 0.0
    %5582 = vmatpush1.msra.mxu0 %v71
    %5583 = vmatprep.subr.mxu0 0.0
    %5584 = vmatpush1.msra.mxu0 %v70
    %5585 = vmatprep.subr.mxu0 0.0
    %5586 = vmatpush2.msra.mxu0 0.0
    %5587 = vmatprep.subr.mxu0 0.0
    %5588 = vmatpush2.msra.mxu0 0.0
    %5589 = vmatprep.subr.mxu0 0.0
    %5590 = vmatpush2.msra.mxu0 0.0
    %5591 = vmatprep.subr.mxu0 0.0
    %5592 = vmatpush2.msra.mxu0 0.0
    %5593 = vmatprep.subr.mxu0 0.0
    %5594 = vmatpush2.msra.mxu0 0.0
    %5595 = vmatprep.subr.mxu0 0.0
    %5596 = vmatpush2.msra.mxu0 0.0
    %5597 = vmatprep.subr.mxu0 0.0
    %5598 = vmatpush2.msra.mxu0 0.0
    %5599 = vmatprep.subr.mxu0 0.0
    %5600 = vmatpush2.msra.mxu0 0.0
    %5601 = vmatprep.subr.mxu0 0.0
    %5602 = vmatpush2.msra.mxu0 0.0
    %5603 = vmatprep.subr.mxu0 0.0
    %5604 = vmatpush2.msra.mxu0 0.0
    %5605 = vmatprep.subr.mxu0 0.0
    %5606 = vmatpush2.msra.mxu0 0.0
    %5607 = vmatprep.subr.mxu0 0.0
    %5608 = vmatpush2.msra.mxu0 0.0
    %5609 = vmatprep.subr.mxu0 0.0
    %5610 = vmatpush2.msra.mxu0 0.0
    %5611 = vmatprep.subr.mxu0 0.0
    %5612 = vmatpush2.msra.mxu0 0.0
    %5613 = vmatprep.subr.mxu0 0.0
    %5614 = vmatpush2.msra.mxu0 0.0
    %5615 = vmatprep.subr.mxu0 0.0
    %5616 = vmatpush2.msra.mxu0 0.0
    %5617 = vmatprep.mubr.f32.mxu0 0.0
    %5618 = vmatmul.mubr.f32.gmra.mxu0 %v5545
    %v5619 = vpop.f32.mrf.mxu0
    %v5620 = vadd.f32 0.0, %v5619
    %v5621 = vpop.f32.mrf.mxu0
    %5622 = vmatprep.mubr.f32.mxu0 0.0
    %5623 = vmatmul.mubr.f32.gmra.mxu0 %v5548
    %v5624 = vpop.f32.mrf.mxu0
    %v5625 = vadd.f32 0.0, %v5624
    %v5626 = vpop.f32.mrf.mxu0
    %5627 = vmatprep.mubr.f32.mxu0 0.0
    %5628 = vmatmul.mubr.f32.gmra.mxu0 %v5551
    %v5629 = vpop.f32.mrf.mxu0
    %v5630 = vadd.f32 0.0, %v5629
    %v5631 = vpop.f32.mrf.mxu0
    %5632 = vdwg.mxu0
    %v5634 = vsel %vm4742, %v4566, 0
    %v5637 = vsel %vm4742, %v4567, 0
    %v5640 = vsel %vm4742, %v4568, 0
    %5642 = vmatprep.subr.mxu0 0.0
    %5643 = vmatpush1.msra.mxu0 0.0
    %5644 = vmatprep.subr.mxu0 0.0
    %5645 = vmatpush1.msra.mxu0 0.0
    %5646 = vmatprep.subr.mxu0 0.0
    %5647 = vmatpush1.msra.mxu0 0.0
    %5648 = vmatprep.subr.mxu0 0.0
    %5649 = vmatpush1.msra.mxu0 0.0
    %5650 = vmatprep.subr.mxu0 0.0
    %5651 = vmatpush1.msra.mxu0 0.0
    %5652 = vmatprep.subr.mxu0 0.0
    %5653 = vmatpush1.msra.mxu0 0.0
    %5654 = vmatprep.subr.mxu0 0.0
    %5655 = vmatpush1.msra.mxu0 0.0
    %5656 = vmatprep.subr.mxu0 0.0
    %5657 = vmatpush1.msra.mxu0 0.0
    %5658 = vmatprep.subr.mxu0 0.0
    %5659 = vmatpush1.msra.mxu0 0.0
    %5660 = vmatprep.subr.mxu0 0.0
    %5661 = vmatpush1.msra.mxu0 0.0
    %5662 = vmatprep.subr.mxu0 0.0
    %5663 = vmatpush1.msra.mxu0 0.0
    %5664 = vmatprep.subr.mxu0 0.0
    %5665 = vmatpush1.msra.mxu0 0.0
    %5666 = vmatprep.subr.mxu0 0.0
    %5667 = vmatpush1.msra.mxu0 0.0
    %5668 = vmatprep.subr.mxu0 0.0
    %5669 = vmatpush1.msra.mxu0 0.0
    %5670 = vmatprep.subr.mxu0 0.0
    %5671 = vmatpush1.msra.mxu0 %v73
    %5672 = vmatprep.subr.mxu0 0.0
    %5673 = vmatpush1.msra.mxu0 %v72
    %5674 = vmatprep.subr.mxu0 0.0
    %5675 = vmatpush2.msra.mxu0 0.0
    %5676 = vmatprep.subr.mxu0 0.0
    %5677 = vmatpush2.msra.mxu0 0.0
    %5678 = vmatprep.subr.mxu0 0.0
    %5679 = vmatpush2.msra.mxu0 0.0
    %5680 = vmatprep.subr.mxu0 0.0
    %5681 = vmatpush2.msra.mxu0 0.0
    %5682 = vmatprep.subr.mxu0 0.0
    %5683 = vmatpush2.msra.mxu0 0.0
    %5684 = vmatprep.subr.mxu0 0.0
    %5685 = vmatpush2.msra.mxu0 0.0
    %5686 = vmatprep.subr.mxu0 0.0
    %5687 = vmatpush2.msra.mxu0 0.0
    %5688 = vmatprep.subr.mxu0 0.0
    %5689 = vmatpush2.msra.mxu0 0.0
    %5690 = vmatprep.subr.mxu0 0.0
    %5691 = vmatpush2.msra.mxu0 0.0
    %5692 = vmatprep.subr.mxu0 0.0
    %5693 = vmatpush2.msra.mxu0 0.0
    %5694 = vmatprep.subr.mxu0 0.0
    %5695 = vmatpush2.msra.mxu0 0.0
    %5696 = vmatprep.subr.mxu0 0.0
    %5697 = vmatpush2.msra.mxu0 0.0
    %5698 = vmatprep.subr.mxu0 0.0
    %5699 = vmatpush2.msra.mxu0 0.0
    %5700 = vmatprep.subr.mxu0 0.0
    %5701 = vmatpush2.msra.mxu0 0.0
    %5702 = vmatprep.subr.mxu0 0.0
    %5703 = vmatpush2.msra.mxu0 0.0
    %5704 = vmatprep.subr.mxu0 0.0
    %5705 = vmatpush2.msra.mxu0 0.0
    %5706 = vmatprep.mubr.f32.mxu0 0.0
    %5707 = vmatmul.mubr.f32.gmra.mxu0 %v5634
    %v5708 = vpop.f32.mrf.mxu0
    %v5709 = vadd.f32 0.0, %v5708
    %v5710 = vpop.f32.mrf.mxu0
    %5711 = vmatprep.mubr.f32.mxu0 0.0
    %5712 = vmatmul.mubr.f32.gmra.mxu0 %v5637
    %v5713 = vpop.f32.mrf.mxu0
    %v5714 = vadd.f32 0.0, %v5713
    %v5715 = vpop.f32.mrf.mxu0
    %5716 = vmatprep.mubr.f32.mxu0 0.0
    %5717 = vmatmul.mubr.f32.gmra.mxu0 %v5640
    %v5718 = vpop.f32.mrf.mxu0
    %v5719 = vadd.f32 0.0, %v5718
    %v5720 = vpop.f32.mrf.mxu0
    %5721 = vdwg.mxu0
    %v5723 = vsel %vm4742, %v4598, 0
    %v5726 = vsel %vm4742, %v4599, 0
    %v5729 = vsel %vm4742, %v4600, 0
    %5731 = vmatprep.subr.mxu0 0.0
    %5732 = vmatpush1.msra.mxu0 0.0
    %5733 = vmatprep.subr.mxu0 0.0
    %5734 = vmatpush1.msra.mxu0 0.0
    %5735 = vmatprep.subr.mxu0 0.0
    %5736 = vmatpush1.msra.mxu0 0.0
    %5737 = vmatprep.subr.mxu0 0.0
    %5738 = vmatpush1.msra.mxu0 0.0
    %5739 = vmatprep.subr.mxu0 0.0
    %5740 = vmatpush1.msra.mxu0 0.0
    %5741 = vmatprep.subr.mxu0 0.0
    %5742 = vmatpush1.msra.mxu0 0.0
    %5743 = vmatprep.subr.mxu0 0.0
    %5744 = vmatpush1.msra.mxu0 0.0
    %5745 = vmatprep.subr.mxu0 0.0
    %5746 = vmatpush1.msra.mxu0 0.0
    %5747 = vmatprep.subr.mxu0 0.0
    %5748 = vmatpush1.msra.mxu0 0.0
    %5749 = vmatprep.subr.mxu0 0.0
    %5750 = vmatpush1.msra.mxu0 0.0
    %5751 = vmatprep.subr.mxu0 0.0
    %5752 = vmatpush1.msra.mxu0 0.0
    %5753 = vmatprep.subr.mxu0 0.0
    %5754 = vmatpush1.msra.mxu0 0.0
    %5755 = vmatprep.subr.mxu0 0.0
    %5756 = vmatpush1.msra.mxu0 0.0
    %5757 = vmatprep.subr.mxu0 0.0
    %5758 = vmatpush1.msra.mxu0 0.0
    %5759 = vmatprep.subr.mxu0 0.0
    %5760 = vmatpush1.msra.mxu0 %v75
    %5761 = vmatprep.subr.mxu0 0.0
    %5762 = vmatpush1.msra.mxu0 %v74
    %5763 = vmatprep.subr.mxu0 0.0
    %5764 = vmatpush2.msra.mxu0 0.0
    %5765 = vmatprep.subr.mxu0 0.0
    %5766 = vmatpush2.msra.mxu0 0.0
    %5767 = vmatprep.subr.mxu0 0.0
    %5768 = vmatpush2.msra.mxu0 0.0
    %5769 = vmatprep.subr.mxu0 0.0
    %5770 = vmatpush2.msra.mxu0 0.0
    %5771 = vmatprep.subr.mxu0 0.0
    %5772 = vmatpush2.msra.mxu0 0.0
    %5773 = vmatprep.subr.mxu0 0.0
    %5774 = vmatpush2.msra.mxu0 0.0
    %5775 = vmatprep.subr.mxu0 0.0
    %5776 = vmatpush2.msra.mxu0 0.0
    %5777 = vmatprep.subr.mxu0 0.0
    %5778 = vmatpush2.msra.mxu0 0.0
    %5779 = vmatprep.subr.mxu0 0.0
    %5780 = vmatpush2.msra.mxu0 0.0
    %5781 = vmatprep.subr.mxu0 0.0
    %5782 = vmatpush2.msra.mxu0 0.0
    %5783 = vmatprep.subr.mxu0 0.0
    %5784 = vmatpush2.msra.mxu0 0.0
    %5785 = vmatprep.subr.mxu0 0.0
    %5786 = vmatpush2.msra.mxu0 0.0
    %5787 = vmatprep.subr.mxu0 0.0
    %5788 = vmatpush2.msra.mxu0 0.0
    %5789 = vmatprep.subr.mxu0 0.0
    %5790 = vmatpush2.msra.mxu0 0.0
    %5791 = vmatprep.subr.mxu0 0.0
    %5792 = vmatpush2.msra.mxu0 0.0
    %5793 = vmatprep.subr.mxu0 0.0
    %5794 = vmatpush2.msra.mxu0 0.0
    %5795 = vmatprep.mubr.f32.mxu0 0.0
    %5796 = vmatmul.mubr.f32.gmra.mxu0 %v5723
    %v5797 = vpop.f32.mrf.mxu0
    %v5798 = vadd.f32 0.0, %v5797
    %v5799 = vpop.f32.mrf.mxu0
    %5800 = vmatprep.mubr.f32.mxu0 0.0
    %5801 = vmatmul.mubr.f32.gmra.mxu0 %v5726
    %v5802 = vpop.f32.mrf.mxu0
    %v5803 = vadd.f32 0.0, %v5802
    %v5804 = vpop.f32.mrf.mxu0
    %5805 = vmatprep.mubr.f32.mxu0 0.0
    %5806 = vmatmul.mubr.f32.gmra.mxu0 %v5729
    %v5807 = vpop.f32.mrf.mxu0
    %v5808 = vadd.f32 0.0, %v5807
    %v5809 = vpop.f32.mrf.mxu0
    %5810 = vdwg.mxu0
    %v5812 = vsel %vm4742, %v4630, 0
    %v5815 = vsel %vm4742, %v4631, 0
    %v5818 = vsel %vm4742, %v4632, 0
    %5820 = vmatprep.subr.mxu0 0.0
    %5821 = vmatpush1.msra.mxu0 0.0
    %5822 = vmatprep.subr.mxu0 0.0
    %5823 = vmatpush1.msra.mxu0 0.0
    %5824 = vmatprep.subr.mxu0 0.0
    %5825 = vmatpush1.msra.mxu0 0.0
    %5826 = vmatprep.subr.mxu0 0.0
    %5827 = vmatpush1.msra.mxu0 0.0
    %5828 = vmatprep.subr.mxu0 0.0
    %5829 = vmatpush1.msra.mxu0 0.0
    %5830 = vmatprep.subr.mxu0 0.0
    %5831 = vmatpush1.msra.mxu0 0.0
    %5832 = vmatprep.subr.mxu0 0.0
    %5833 = vmatpush1.msra.mxu0 0.0
    %5834 = vmatprep.subr.mxu0 0.0
    %5835 = vmatpush1.msra.mxu0 0.0
    %5836 = vmatprep.subr.mxu0 0.0
    %5837 = vmatpush1.msra.mxu0 0.0
    %5838 = vmatprep.subr.mxu0 0.0
    %5839 = vmatpush1.msra.mxu0 0.0
    %5840 = vmatprep.subr.mxu0 0.0
    %5841 = vmatpush1.msra.mxu0 0.0
    %5842 = vmatprep.subr.mxu0 0.0
    %5843 = vmatpush1.msra.mxu0 0.0
    %5844 = vmatprep.subr.mxu0 0.0
    %5845 = vmatpush1.msra.mxu0 0.0
    %5846 = vmatprep.subr.mxu0 0.0
    %5847 = vmatpush1.msra.mxu0 0.0
    %5848 = vmatprep.subr.mxu0 0.0
    %5849 = vmatpush1.msra.mxu0 %v77
    %5850 = vmatprep.subr.mxu0 0.0
    %5851 = vmatpush1.msra.mxu0 %v76
    %5852 = vmatprep.subr.mxu0 0.0
    %5853 = vmatpush2.msra.mxu0 0.0
    %5854 = vmatprep.subr.mxu0 0.0
    %5855 = vmatpush2.msra.mxu0 0.0
    %5856 = vmatprep.subr.mxu0 0.0
    %5857 = vmatpush2.msra.mxu0 0.0
    %5858 = vmatprep.subr.mxu0 0.0
    %5859 = vmatpush2.msra.mxu0 0.0
    %5860 = vmatprep.subr.mxu0 0.0
    %5861 = vmatpush2.msra.mxu0 0.0
    %5862 = vmatprep.subr.mxu0 0.0
    %5863 = vmatpush2.msra.mxu0 0.0
    %5864 = vmatprep.subr.mxu0 0.0
    %5865 = vmatpush2.msra.mxu0 0.0
    %5866 = vmatprep.subr.mxu0 0.0
    %5867 = vmatpush2.msra.mxu0 0.0
    %5868 = vmatprep.subr.mxu0 0.0
    %5869 = vmatpush2.msra.mxu0 0.0
    %5870 = vmatprep.subr.mxu0 0.0
    %5871 = vmatpush2.msra.mxu0 0.0
    %5872 = vmatprep.subr.mxu0 0.0
    %5873 = vmatpush2.msra.mxu0 0.0
    %5874 = vmatprep.subr.mxu0 0.0
    %5875 = vmatpush2.msra.mxu0 0.0
    %5876 = vmatprep.subr.mxu0 0.0
    %5877 = vmatpush2.msra.mxu0 0.0
    %5878 = vmatprep.subr.mxu0 0.0
    %5879 = vmatpush2.msra.mxu0 0.0
    %5880 = vmatprep.subr.mxu0 0.0
    %5881 = vmatpush2.msra.mxu0 0.0
    %5882 = vmatprep.subr.mxu0 0.0
    %5883 = vmatpush2.msra.mxu0 0.0
    %5884 = vmatprep.mubr.f32.mxu0 0.0
    %5885 = vmatmul.mubr.f32.gmra.mxu0 %v5812
    %v5886 = vpop.f32.mrf.mxu0
    %v5887 = vadd.f32 0.0, %v5886
    %v5888 = vpop.f32.mrf.mxu0
    %5889 = vmatprep.mubr.f32.mxu0 0.0
    %5890 = vmatmul.mubr.f32.gmra.mxu0 %v5815
    %v5891 = vpop.f32.mrf.mxu0
    %v5892 = vadd.f32 0.0, %v5891
    %v5893 = vpop.f32.mrf.mxu0
    %5894 = vmatprep.mubr.f32.mxu0 0.0
    %5895 = vmatmul.mubr.f32.gmra.mxu0 %v5818
    %v5896 = vpop.f32.mrf.mxu0
    %v5897 = vadd.f32 0.0, %v5896
    %v5898 = vpop.f32.mrf.mxu0
    %5899 = vdwg.mxu0
    %v5901 = vsel %vm4742, %v4662, 0
    %v5904 = vsel %vm4742, %v4663, 0
    %v5907 = vsel %vm4742, %v4664, 0
    %5909 = vmatprep.subr.mxu0 0.0
    %5910 = vmatpush1.msra.mxu0 0.0
    %5911 = vmatprep.subr.mxu0 0.0
    %5912 = vmatpush1.msra.mxu0 0.0
    %5913 = vmatprep.subr.mxu0 0.0
    %5914 = vmatpush1.msra.mxu0 0.0
    %5915 = vmatprep.subr.mxu0 0.0
    %5916 = vmatpush1.msra.mxu0 0.0
    %5917 = vmatprep.subr.mxu0 0.0
    %5918 = vmatpush1.msra.mxu0 0.0
    %5919 = vmatprep.subr.mxu0 0.0
    %5920 = vmatpush1.msra.mxu0 0.0
    %5921 = vmatprep.subr.mxu0 0.0
    %5922 = vmatpush1.msra.mxu0 0.0
    %5923 = vmatprep.subr.mxu0 0.0
    %5924 = vmatpush1.msra.mxu0 0.0
    %5925 = vmatprep.subr.mxu0 0.0
    %5926 = vmatpush1.msra.mxu0 0.0
    %5927 = vmatprep.subr.mxu0 0.0
    %5928 = vmatpush1.msra.mxu0 0.0
    %5929 = vmatprep.subr.mxu0 0.0
    %5930 = vmatpush1.msra.mxu0 0.0
    %5931 = vmatprep.subr.mxu0 0.0
    %5932 = vmatpush1.msra.mxu0 0.0
    %5933 = vmatprep.subr.mxu0 0.0
    %5934 = vmatpush1.msra.mxu0 0.0
    %5935 = vmatprep.subr.mxu0 0.0
    %5936 = vmatpush1.msra.mxu0 0.0
    %5937 = vmatprep.subr.mxu0 0.0
    %5938 = vmatpush1.msra.mxu0 %v79
    %5939 = vmatprep.subr.mxu0 0.0
    %5940 = vmatpush1.msra.mxu0 %v78
    %5941 = vmatprep.subr.mxu0 0.0
    %5942 = vmatpush2.msra.mxu0 0.0
    %5943 = vmatprep.subr.mxu0 0.0
    %5944 = vmatpush2.msra.mxu0 0.0
    %5945 = vmatprep.subr.mxu0 0.0
    %5946 = vmatpush2.msra.mxu0 0.0
    %5947 = vmatprep.subr.mxu0 0.0
    %5948 = vmatpush2.msra.mxu0 0.0
    %5949 = vmatprep.subr.mxu0 0.0
    %5950 = vmatpush2.msra.mxu0 0.0
    %5951 = vmatprep.subr.mxu0 0.0
    %5952 = vmatpush2.msra.mxu0 0.0
    %5953 = vmatprep.subr.mxu0 0.0
    %5954 = vmatpush2.msra.mxu0 0.0
    %5955 = vmatprep.subr.mxu0 0.0
    %5956 = vmatpush2.msra.mxu0 0.0
    %5957 = vmatprep.subr.mxu0 0.0
    %5958 = vmatpush2.msra.mxu0 0.0
    %5959 = vmatprep.subr.mxu0 0.0
    %5960 = vmatpush2.msra.mxu0 0.0
    %5961 = vmatprep.subr.mxu0 0.0
    %5962 = vmatpush2.msra.mxu0 0.0
    %5963 = vmatprep.subr.mxu0 0.0
    %5964 = vmatpush2.msra.mxu0 0.0
    %5965 = vmatprep.subr.mxu0 0.0
    %5966 = vmatpush2.msra.mxu0 0.0
    %5967 = vmatprep.subr.mxu0 0.0
    %5968 = vmatpush2.msra.mxu0 0.0
    %5969 = vmatprep.subr.mxu0 0.0
    %5970 = vmatpush2.msra.mxu0 0.0
    %5971 = vmatprep.subr.mxu0 0.0
    %5972 = vmatpush2.msra.mxu0 0.0
    %5973 = vmatprep.mubr.f32.mxu0 0.0
    %5974 = vmatmul.mubr.f32.gmra.mxu0 %v5901
    %v5975 = vpop.f32.mrf.mxu0
    %v5976 = vadd.f32 0.0, %v5975
    %v5977 = vpop.f32.mrf.mxu0
    %5978 = vmatprep.mubr.f32.mxu0 0.0
    %5979 = vmatmul.mubr.f32.gmra.mxu0 %v5904
    %v5980 = vpop.f32.mrf.mxu0
    %v5981 = vadd.f32 0.0, %v5980
    %v5982 = vpop.f32.mrf.mxu0
    %5983 = vmatprep.mubr.f32.mxu0 0.0
    %5984 = vmatmul.mubr.f32.gmra.mxu0 %v5907
    %v5985 = vpop.f32.mrf.mxu0
    %v5986 = vadd.f32 0.0, %v5985
    %v5987 = vpop.f32.mrf.mxu0
    %5988 = vdwg.mxu0
    %v5990 = vsel %vm4742, %v4694, 0
    %v5993 = vsel %vm4742, %v4695, 0
    %v5996 = vsel %vm4742, %v4696, 0
    %5998 = vmatprep.subr.mxu0 0.0
    %5999 = vmatpush1.msra.mxu0 0.0
    %6000 = vmatprep.subr.mxu0 0.0
    %6001 = vmatpush1.msra.mxu0 0.0
    %6002 = vmatprep.subr.mxu0 0.0
    %6003 = vmatpush1.msra.mxu0 0.0
    %6004 = vmatprep.subr.mxu0 0.0
    %6005 = vmatpush1.msra.mxu0 0.0
    %6006 = vmatprep.subr.mxu0 0.0
    %6007 = vmatpush1.msra.mxu0 0.0
    %6008 = vmatprep.subr.mxu0 0.0
    %6009 = vmatpush1.msra.mxu0 0.0
    %6010 = vmatprep.subr.mxu0 0.0
    %6011 = vmatpush1.msra.mxu0 0.0
    %6012 = vmatprep.subr.mxu0 0.0
    %6013 = vmatpush1.msra.mxu0 0.0
    %6014 = vmatprep.subr.mxu0 0.0
    %6015 = vmatpush1.msra.mxu0 0.0
    %6016 = vmatprep.subr.mxu0 0.0
    %6017 = vmatpush1.msra.mxu0 0.0
    %6018 = vmatprep.subr.mxu0 0.0
    %6019 = vmatpush1.msra.mxu0 0.0
    %6020 = vmatprep.subr.mxu0 0.0
    %6021 = vmatpush1.msra.mxu0 0.0
    %6022 = vmatprep.subr.mxu0 0.0
    %6023 = vmatpush1.msra.mxu0 0.0
    %6024 = vmatprep.subr.mxu0 0.0
    %6025 = vmatpush1.msra.mxu0 0.0
    %6026 = vmatprep.subr.mxu0 0.0
    %6027 = vmatpush1.msra.mxu0 %v81
    %6028 = vmatprep.subr.mxu0 0.0
    %6029 = vmatpush1.msra.mxu0 %v80
    %6030 = vmatprep.subr.mxu0 0.0
    %6031 = vmatpush2.msra.mxu0 0.0
    %6032 = vmatprep.subr.mxu0 0.0
    %6033 = vmatpush2.msra.mxu0 0.0
    %6034 = vmatprep.subr.mxu0 0.0
    %6035 = vmatpush2.msra.mxu0 0.0
    %6036 = vmatprep.subr.mxu0 0.0
    %6037 = vmatpush2.msra.mxu0 0.0
    %6038 = vmatprep.subr.mxu0 0.0
    %6039 = vmatpush2.msra.mxu0 0.0
    %6040 = vmatprep.subr.mxu0 0.0
    %6041 = vmatpush2.msra.mxu0 0.0
    %6042 = vmatprep.subr.mxu0 0.0
    %6043 = vmatpush2.msra.mxu0 0.0
    %6044 = vmatprep.subr.mxu0 0.0
    %6045 = vmatpush2.msra.mxu0 0.0
    %6046 = vmatprep.subr.mxu0 0.0
    %6047 = vmatpush2.msra.mxu0 0.0
    %6048 = vmatprep.subr.mxu0 0.0
    %6049 = vmatpush2.msra.mxu0 0.0
    %6050 = vmatprep.subr.mxu0 0.0
    %6051 = vmatpush2.msra.mxu0 0.0
    %6052 = vmatprep.subr.mxu0 0.0
    %6053 = vmatpush2.msra.mxu0 0.0
    %6054 = vmatprep.subr.mxu0 0.0
    %6055 = vmatpush2.msra.mxu0 0.0
    %6056 = vmatprep.subr.mxu0 0.0
    %6057 = vmatpush2.msra.mxu0 0.0
    %6058 = vmatprep.subr.mxu0 0.0
    %6059 = vmatpush2.msra.mxu0 0.0
    %6060 = vmatprep.subr.mxu0 0.0
    %6061 = vmatpush2.msra.mxu0 0.0
    %6062 = vmatprep.mubr.f32.mxu0 0.0
    %6063 = vmatmul.mubr.f32.gmra.mxu0 %v5990
    %v6064 = vpop.f32.mrf.mxu0
    %v6065 = vadd.f32 0.0, %v6064
    %v6066 = vpop.f32.mrf.mxu0
    %6067 = vmatprep.mubr.f32.mxu0 0.0
    %6068 = vmatmul.mubr.f32.gmra.mxu0 %v5993
    %v6069 = vpop.f32.mrf.mxu0
    %v6070 = vadd.f32 0.0, %v6069
    %v6071 = vpop.f32.mrf.mxu0
    %6072 = vmatprep.mubr.f32.mxu0 0.0
    %6073 = vmatmul.mubr.f32.gmra.mxu0 %v5996
    %v6074 = vpop.f32.mrf.mxu0
    %v6075 = vadd.f32 0.0, %v6074
    %v6076 = vpop.f32.mrf.mxu0
    %6077 = vdwg.mxu0
    %v6079 = vsel %vm4742, %v4726, 0
    %v6082 = vsel %vm4742, %v4727, 0
    %v6085 = vsel %vm4742, %v4728, 0
    %6087 = vmatprep.subr.mxu0 0.0
    %6088 = vmatpush1.msra.mxu0 0.0
    %6089 = vmatprep.subr.mxu0 0.0
    %6090 = vmatpush1.msra.mxu0 0.0
    %6091 = vmatprep.subr.mxu0 0.0
    %6092 = vmatpush1.msra.mxu0 0.0
    %6093 = vmatprep.subr.mxu0 0.0
    %6094 = vmatpush1.msra.mxu0 0.0
    %6095 = vmatprep.subr.mxu0 0.0
    %6096 = vmatpush1.msra.mxu0 0.0
    %6097 = vmatprep.subr.mxu0 0.0
    %6098 = vmatpush1.msra.mxu0 0.0
    %6099 = vmatprep.subr.mxu0 0.0
    %6100 = vmatpush1.msra.mxu0 0.0
    %6101 = vmatprep.subr.mxu0 0.0
    %6102 = vmatpush1.msra.mxu0 0.0
    %6103 = vmatprep.subr.mxu0 0.0
    %6104 = vmatpush1.msra.mxu0 0.0
    %6105 = vmatprep.subr.mxu0 0.0
    %6106 = vmatpush1.msra.mxu0 0.0
    %6107 = vmatprep.subr.mxu0 0.0
    %6108 = vmatpush1.msra.mxu0 0.0
    %6109 = vmatprep.subr.mxu0 0.0
    %6110 = vmatpush1.msra.mxu0 0.0
    %6111 = vmatprep.subr.mxu0 0.0
    %6112 = vmatpush1.msra.mxu0 0.0
    %6113 = vmatprep.subr.mxu0 0.0
    %6114 = vmatpush1.msra.mxu0 0.0
    %6115 = vmatprep.subr.mxu0 0.0
    %6116 = vmatpush1.msra.mxu0 %v83
    %6117 = vmatprep.subr.mxu0 0.0
    %6118 = vmatpush1.msra.mxu0 %v82
    %6119 = vmatprep.subr.mxu0 0.0
    %6120 = vmatpush2.msra.mxu0 0.0
    %6121 = vmatprep.subr.mxu0 0.0
    %6122 = vmatpush2.msra.mxu0 0.0
    %6123 = vmatprep.subr.mxu0 0.0
    %6124 = vmatpush2.msra.mxu0 0.0
    %6125 = vmatprep.subr.mxu0 0.0
    %6126 = vmatpush2.msra.mxu0 0.0
    %6127 = vmatprep.subr.mxu0 0.0
    %6128 = vmatpush2.msra.mxu0 0.0
    %6129 = vmatprep.subr.mxu0 0.0
    %6130 = vmatpush2.msra.mxu0 0.0
    %6131 = vmatprep.subr.mxu0 0.0
    %6132 = vmatpush2.msra.mxu0 0.0
    %6133 = vmatprep.subr.mxu0 0.0
    %6134 = vmatpush2.msra.mxu0 0.0
    %6135 = vmatprep.subr.mxu0 0.0
    %6136 = vmatpush2.msra.mxu0 0.0
    %6137 = vmatprep.subr.mxu0 0.0
    %6138 = vmatpush2.msra.mxu0 0.0
    %6139 = vmatprep.subr.mxu0 0.0
    %6140 = vmatpush2.msra.mxu0 0.0
    %6141 = vmatprep.subr.mxu0 0.0
    %6142 = vmatpush2.msra.mxu0 0.0
    %6143 = vmatprep.subr.mxu0 0.0
    %6144 = vmatpush2.msra.mxu0 0.0
    %6145 = vmatprep.subr.mxu0 0.0
    %6146 = vmatpush2.msra.mxu0 0.0
    %6147 = vmatprep.subr.mxu0 0.0
    %6148 = vmatpush2.msra.mxu0 0.0
    %6149 = vmatprep.subr.mxu0 0.0
    %6150 = vmatpush2.msra.mxu0 0.0
    %6151 = vmatprep.mubr.f32.mxu0 0.0
    %6152 = vmatmul.mubr.f32.gmra.mxu0 %v6079
    %v6153 = vpop.f32.mrf.mxu0
    %v6154 = vadd.f32 0.0, %v6153
    %v6155 = vpop.f32.mrf.mxu0
    %6156 = vmatprep.mubr.f32.mxu0 0.0
    %6157 = vmatmul.mubr.f32.gmra.mxu0 %v6082
    %v6158 = vpop.f32.mrf.mxu0
    %v6159 = vadd.f32 0.0, %v6158
    %v6160 = vpop.f32.mrf.mxu0
    %6161 = vmatprep.mubr.f32.mxu0 0.0
    %6162 = vmatmul.mubr.f32.gmra.mxu0 %v6085
    %v6163 = vpop.f32.mrf.mxu0
    %v6164 = vadd.f32 0.0, %v6163
    %v6165 = vpop.f32.mrf.mxu0
    %6166 = vdwg.mxu0
    %6167 = vst [vmem:[#allocation8] sm:$0xff] %v4819
    %6168 = vst [vmem:[#allocation8 + $0x8] sm:$0xff] %v4824
    %6169 = vst [vmem:[#allocation8 + $0x10] sm:$0xff] %v4829
    %6170 = vst [vmem:[#allocation8 + $0x18] sm:$0xff] %v4908
    %6171 = vst [vmem:[#allocation8 + $0x20] sm:$0xff] %v4913
    %6172 = vst [vmem:[#allocation8 + $0x28] sm:$0xff] %v4918
    %6173 = vst [vmem:[#allocation8 + $0x30] sm:$0xff] %v4997
    %6174 = vst [vmem:[#allocation8 + $0x38] sm:$0xff] %v5002
    %6175 = vst [vmem:[#allocation8 + $0x40] sm:$0xff] %v5007
    %6176 = vst [vmem:[#allocation8 + $0x48] sm:$0xff] %v5086
    %6177 = vst [vmem:[#allocation8 + $0x50] sm:$0xff] %v5091
    %6178 = vst [vmem:[#allocation8 + $0x58] sm:$0xff] %v5096
    %6179 = vst [vmem:[#allocation8 + $0x60] sm:$0xff] %v5175
    %6180 = vst [vmem:[#allocation8 + $0x68] sm:$0xff] %v5180
    %6181 = vst [vmem:[#allocation8 + $0x70] sm:$0xff] %v5185
    %6182 = vst [vmem:[#allocation8 + $0x78] sm:$0xff] %v5264
    %6183 = vst [vmem:[#allocation8 + $0x80] sm:$0xff] %v5269
    %6184 = vst [vmem:[#allocation8 + $0x88] sm:$0xff] %v5274
    %6185 = vst [vmem:[#allocation8 + $0x90] sm:$0xff] %v5353
    %6186 = vst [vmem:[#allocation8 + $0x98] sm:$0xff] %v5358
    %6187 = vst [vmem:[#allocation8 + $0xa0] sm:$0xff] %v5363
    %6188 = vst [vmem:[#allocation8 + $0xa8] sm:$0xff] %v5442
    %6189 = vst [vmem:[#allocation8 + $0xb0] sm:$0xff] %v5447
    %6190 = vst [vmem:[#allocation8 + $0xb8] sm:$0xff] %v5452
    %6191 = vst [vmem:[#allocation8 + $0xc0] sm:$0xff] %v5531
    %6192 = vst [vmem:[#allocation8 + $0xc8] sm:$0xff] %v5536
    %6193 = vst [vmem:[#allocation8 + $0xd0] sm:$0xff] %v5541
    %6194 = vst [vmem:[#allocation8 + $0xd8] sm:$0xff] %v5620
    %6195 = vst [vmem:[#allocation8 + $0xe0] sm:$0xff] %v5625
    %6196 = vst [vmem:[#allocation8 + $0xe8] sm:$0xff] %v5630
    %6197 = vst [vmem:[#allocation8 + $0xf0] sm:$0xff] %v5709
    %6198 = vst [vmem:[#allocation8 + $0xf8] sm:$0xff] %v5714
    %6199 = vst [vmem:[#allocation8 + $0x100] sm:$0xff] %v5719
    %6200 = vst [vmem:[#allocation8 + $0x108] sm:$0xff] %v5798
    %6201 = vst [vmem:[#allocation8 + $0x110] sm:$0xff] %v5803
    %6202 = vst [vmem:[#allocation8 + $0x118] sm:$0xff] %v5808
    %6203 = vst [vmem:[#allocation8 + $0x120] sm:$0xff] %v5887
    %6204 = vst [vmem:[#allocation8 + $0x128] sm:$0xff] %v5892
    %6205 = vst [vmem:[#allocation8 + $0x130] sm:$0xff] %v5897
    %6206 = vst [vmem:[#allocation8 + $0x138] sm:$0xff] %v5976
    %6207 = vst [vmem:[#allocation8 + $0x140] sm:$0xff] %v5981
    %6208 = vst [vmem:[#allocation8 + $0x148] sm:$0xff] %v5986
    %6209 = vst [vmem:[#allocation8 + $0x150] sm:$0xff] %v6065
    %6210 = vst [vmem:[#allocation8 + $0x158] sm:$0xff] %v6070
    %6211 = vst [vmem:[#allocation8 + $0x160] sm:$0xff] %v6075
    %6212 = vst [vmem:[#allocation8 + $0x168] sm:$0xff] %v6154
    %6213 = vst [vmem:[#allocation8 + $0x170] sm:$0xff] %v6159
    %6214 = vst [vmem:[#allocation8 + $0x178] sm:$0xff] %v6164
    // Predicated region
    $region30: #{tpu_custom_call.1} parent=1 // pred_check
      _
    $region31: #{tpu_custom_call.1} parent=1 // pred_check_branch
      %6216 = sbr.rel (0) target = $region33
    $region32: #{tpu_custom_call.1} parent=1 // pred_region
      %s6218 = ssub.s32 4096, 4096
      %6219 = vsyncadd [#allocation4], %s6218
      %s6220 = sshll.u32 [#allocation7], 4
      %s6221 = int_to_ptr.vmem [resolvable:$true] %s6220
      %6226 = dma.vmem_to_hbm [thread:$0]  %s6221, 4096, %s5, [#allocation4], 128, 128, 8
    $region33: #{tpu_custom_call.1} parent=1 // pred_fallthru
      _
    // Predicated region
    $region34: #{tpu_custom_call.1} parent=1 // pred_check
      _
    $region35: #{tpu_custom_call.1} parent=1 // pred_check_branch
      %6228 = sbr.rel (0) target = $region37
    $region36: #{tpu_custom_call.1} parent=1 // pred_region
      %s6230 = ssub.s32 6144, 6144
      %6231 = vsyncadd [#allocation9], %s6230
      %s6232 = sshll.u32 [#allocation8], 4
      %s6233 = int_to_ptr.vmem [resolvable:$true] %s6232
      %6238 = dma.vmem_to_hbm [thread:$0]  %s6233, 6144, %s6, [#allocation9], 128, 128, 8
    $region37: #{tpu_custom_call.1} parent=1 // pred_fallthru
      _
    // Predicated region
    $region38: #{tpu_custom_call.1} parent=1 // pred_check
      _
    $region39: #{tpu_custom_call.1} parent=1 // pred_check_branch
      %6240 = sbr.rel (0) target = $region41
    $region40: #{tpu_custom_call.1} parent=1 // pred_region
      %6241 = dma.done [#allocation4], 4096
    $region41: #{tpu_custom_call.1} parent=1 // pred_fallthru
      _
    // Predicated region
    $region42: #{tpu_custom_call.1} parent=1 // pred_check
      _
    $region43: #{tpu_custom_call.1} parent=1 // pred_check_branch
      %6243 = sbr.rel (0) target = $region45
    $region44: #{tpu_custom_call.1} parent=1 // pred_region
      %6244 = dma.done [#allocation9], 6144
    $region45: #{tpu_custom_call.1} parent=1 // pred_fallthru
      _
    %6245 = vsyncpa [#allocation3], 1
    %6246 = vsyncpa [#allocation6], 1
    %6247 = vsyncpa [#allocation4], 1
    %6248 = vsyncpa [#allocation9], 1

// kernel: tpu_custom_call.1
$region0: #{tpu_custom_call.1}
  #allocation0 [shape = 'u32[]', space=smem, size = 0x4, offset = 0x4, fixed_abs, tag = 'smem constant byte address 0x4 - core index']
  #allocation1 [shape = 'u32[144,128]{1,0:T(1,128)}', space=vmem, size = 0x12000, scoped, tag = 'internal scratch']
  %s0 = inlined_call_operand.vmem [shape: f32[16,16,128], index: 0, kind: input, shape index: {}]
  %s1 = inlined_call_operand.hbm [shape: f32[16,24,128], index: 1, kind: input, shape index: {}]
  %s2 = inlined_call_operand.hbm [shape: f32[128,128], index: 2, kind: input, shape index: {}]
  %s3 = inlined_call_operand.vmem [shape: f32[16,16,1], index: 3, kind: input, shape index: {}]
  %s4 = inlined_call_operand.vmem [shape: f32[16,1,24], index: 4, kind: input, shape index: {}]
  %s5 = inlined_call_operand.hbm [shape: f32[16,16,128], index: 5, kind: output, shape index: {0}]
  %s6 = inlined_call_operand.hbm [shape: f32[16,24,128], index: 6, kind: output, shape index: {1}]
  %7 = xla_tuple %s5, %s6
  %s8 = sld [smem:[#allocation0]]
  $region46: #{tpu_custom_call.1} parent=0
    _
  %s10 = ssub.s32 1, %s8
  %s11 = scalar_select 0, %s10, %s8
  $region1: #{tpu_custom_call.1} parent=0
    #allocation2 [shape = 'u8[196608]{0}', space=vmem, size = 0x30000, scoped, tag = 'input window, operand 1, single buffered']
    #allocation3 [shape = 's32[1]{0}', space=sflag, size = 0x4, scoped, tag = 'scoped memory for tpu_custom_call.1']
    #allocation4 [shape = 's32[1]{0}', space=sflag, size = 0x4, scoped, tag = 'scoped memory for tpu_custom_call.1']
    #allocation5 [shape = 'u8[65536]{0}', space=vmem, size = 0x10000, scoped, tag = 'input window, operand 2, single buffered']
    #allocation6 [shape = 's32[1]{0}', space=sflag, size = 0x4, scoped, tag = 'scoped memory for tpu_custom_call.1']
    #allocation7 [shape = 'u8[131072]{0}', space=vmem, size = 0x20000, scoped, tag = 'output window, operand 0, single buffered']
    #allocation8 [shape = 'u8[196608]{0}', space=vmem, size = 0x30000, scoped, tag = 'output window, operand 1, single buffered']
    #allocation9 [shape = 's32[1]{0}', space=sflag, size = 0x4, scoped, tag = 'scoped memory for tpu_custom_call.1']
    %12 = vsyncpa [#allocation3], 0
    %13 = vsyncpa [#allocation6], 0
    %14 = vsyncpa [#allocation4], 0
    %15 = vsyncpa [#allocation9], 0
    // Predicated region
    $region2: #{tpu_custom_call.1} parent=1 // pred_check
      _
    $region3: #{tpu_custom_call.1} parent=1 // pred_check_branch
      %17 = sbr.rel (0) target = $region5
    $region4: #{tpu_custom_call.1} parent=1 // pred_region
      _
    $region5: #{tpu_custom_call.1} parent=1 // pred_fallthru
      _
    // Predicated region
    $region6: #{tpu_custom_call.1} parent=1 // pred_check
      _
    $region7: #{tpu_custom_call.1} parent=1 // pred_check_branch
      %19 = sbr.rel (0) target = $region9
    $region8: #{tpu_custom_call.1} parent=1 // pred_region
      %s21 = ssub.s32 6144, 6144
      %22 = vsyncadd [#allocation3], %s21
      %s23 = sshll.u32 [#allocation2], 4
      %s24 = int_to_ptr.vmem [resolvable:$true] %s23
      %29 = dma.hbm_to_vmem [thread:$0]  %s1, 6144, %s24, [#allocation3], 128, 128, 8
    $region9: #{tpu_custom_call.1} parent=1 // pred_fallthru
      _
    // Predicated region
    $region10: #{tpu_custom_call.1} parent=1 // pred_check
      _
    $region11: #{tpu_custom_call.1} parent=1 // pred_check_branch
      %31 = sbr.rel (0) target = $region13
    $region12: #{tpu_custom_call.1} parent=1 // pred_region
      %s33 = ssub.s32 2048, 2048
      %34 = vsyncadd [#allocation6], %s33
      %s35 = sshll.u32 [#allocation5], 4
      %s36 = int_to_ptr.vmem [resolvable:$true] %s35
      %41 = dma.hbm_to_vmem [thread:$0]  %s2, 2048, %s36, [#allocation6], 128, 128, 8
    $region13: #{tpu_custom_call.1} parent=1 // pred_fallthru
      _
    // Predicated region
    $region14: #{tpu_custom_call.1} parent=1 // pred_check
      _
    $region15: #{tpu_custom_call.1} parent=1 // pred_check_branch
      %43 = sbr.rel (0) target = $region17
    $region16: #{tpu_custom_call.1} parent=1 // pred_region
      _
    $region17: #{tpu_custom_call.1} parent=1 // pred_fallthru
      _
    // Predicated region
    $region18: #{tpu_custom_call.1} parent=1 // pred_check
      _
    $region19: #{tpu_custom_call.1} parent=1 // pred_check_branch
      %45 = sbr.rel (0) target = $region21
    $region20: #{tpu_custom_call.1} parent=1 // pred_region
      _
    $region21: #{tpu_custom_call.1} parent=1 // pred_fallthru
      _
    // Predicated region
    $region22: #{tpu_custom_call.1} parent=1 // pred_check
      _
    $region23: #{tpu_custom_call.1} parent=1 // pred_check_branch
      %47 = sbr.rel (0) target = $region25
    $region24: #{tpu_custom_call.1} parent=1 // pred_region
      %48 = dma.done [#allocation3], 6144
    $region25: #{tpu_custom_call.1} parent=1 // pred_fallthru
      _
    // Predicated region
    $region26: #{tpu_custom_call.1} parent=1 // pred_check
      _
    $region27: #{tpu_custom_call.1} parent=1 // pred_check_branch
      %50 = sbr.rel (0) target = $region29
    $region28: #{tpu_custom_call.1} parent=1 // pred_region
      %51 = dma.done [#allocation6], 2048
    $region29: #{tpu_custom_call.1} parent=1 // pred_fallthru
      _
    %v52 = vld [vmem:[%s0] sm:$0xff]
    %v53 = vld [vmem:[%s0 + $0x8] sm:$0xff]
    %v54 = vld [vmem:[%s0 + $0x10] sm:$0xff]
    %v55 = vld [vmem:[%s0 + $0x18] sm:$0xff]
    %v56 = vld [vmem:[%s0 + $0x20] sm:$0xff]
    %v57 = vld [vmem:[%s0 + $0x28] sm:$0xff]
    %v58 = vld [vmem:[%s0 + $0x30] sm:$0xff]
    %v59 = vld [vmem:[%s0 + $0x38] sm:$0xff]
    %v60 = vld [vmem:[%s0 + $0x40] sm:$0xff]
    %v61 = vld [vmem:[%s0 + $0x48] sm:$0xff]
    %v62 = vld [vmem:[%s0 + $0x50] sm:$0xff]
    %v63 = vld [vmem:[%s0 + $0x58] sm:$0xff]
    %v64 = vld [vmem:[%s0 + $0x60] sm:$0xff]
    %v65 = vld [vmem:[%s0 + $0x68] sm:$0xff]
    %v66 = vld [vmem:[%s0 + $0x70] sm:$0xff]
    %v67 = vld [vmem:[%s0 + $0x78] sm:$0xff]
    %v68 = vld [vmem:[%s0 + $0x80] sm:$0xff]
    %v69 = vld [vmem:[%s0 + $0x88] sm:$0xff]
    %v70 = vld [vmem:[%s0 + $0x90] sm:$0xff]
    %v71 = vld [vmem:[%s0 + $0x98] sm:$0xff]
    %v72 = vld [vmem:[%s0 + $0xa0] sm:$0xff]
    %v73 = vld [vmem:[%s0 + $0xa8] sm:$0xff]
    %v74 = vld [vmem:[%s0 + $0xb0] sm:$0xff]
    %v75 = vld [vmem:[%s0 + $0xb8] sm:$0xff]
    %v76 = vld [vmem:[%s0 + $0xc0] sm:$0xff]
    %v77 = vld [vmem:[%s0 + $0xc8] sm:$0xff]
    %v78 = vld [vmem:[%s0 + $0xd0] sm:$0xff]
    %v79 = vld [vmem:[%s0 + $0xd8] sm:$0xff]
    %v80 = vld [vmem:[%s0 + $0xe0] sm:$0xff]
    %v81 = vld [vmem:[%s0 + $0xe8] sm:$0xff]
    %v82 = vld [vmem:[%s0 + $0xf0] sm:$0xff]
    %v83 = vld [vmem:[%s0 + $0xf8] sm:$0xff]
    %v84 = vld [vmem:[#allocation2] sm:$0xff]
    %v85 = vld [vmem:[#allocation2 + $0x8] sm:$0xff]
    %v86 = vld [vmem:[#allocation2 + $0x10] sm:$0xff]
    %v87 = vld [vmem:[#allocation2 + $0x18] sm:$0xff]
    %v88 = vld [vmem:[#allocation2 + $0x20] sm:$0xff]
    %v89 = vld [vmem:[#allocation2 + $0x28] sm:$0xff]
    %v90 = vld [vmem:[#allocation2 + $0x30] sm:$0xff]
    %v91 = vld [vmem:[#allocation2 + $0x38] sm:$0xff]
    %v92 = vld [vmem:[#allocation2 + $0x40] sm:$0xff]
    %v93 = vld [vmem:[#allocation2 + $0x48] sm:$0xff]
    %v94 = vld [vmem:[#allocation2 + $0x50] sm:$0xff]
    %v95 = vld [vmem:[#allocation2 + $0x58] sm:$0xff]
    %v96 = vld [vmem:[#allocation2 + $0x60] sm:$0xff]
    %v97 = vld [vmem:[#allocation2 + $0x68] sm:$0xff]
    %v98 = vld [vmem:[#allocation2 + $0x70] sm:$0xff]
    %v99 = vld [vmem:[#allocation2 + $0x78] sm:$0xff]
    %v100 = vld [vmem:[#allocation2 + $0x80] sm:$0xff]
    %v101 = vld [vmem:[#allocation2 + $0x88] sm:$0xff]
    %v102 = vld [vmem:[#allocation2 + $0x90] sm:$0xff]
    %v103 = vld [vmem:[#allocation2 + $0x98] sm:$0xff]
    %v104 = vld [vmem:[#allocation2 + $0xa0] sm:$0xff]
    %v105 = vld [vmem:[#allocation2 + $0xa8] sm:$0xff]
    %v106 = vld [vmem:[#allocation2 + $0xb0] sm:$0xff]
    %v107 = vld [vmem:[#allocation2 + $0xb8] sm:$0xff]
    %v108 = vld [vmem:[#allocation2 + $0xc0] sm:$0xff]
    %v109 = vld [vmem:[#allocation2 + $0xc8] sm:$0xff]
    %v110 = vld [vmem:[#allocation2 + $0xd0] sm:$0xff]
    %v111 = vld [vmem:[#allocation2 + $0xd8] sm:$0xff]
    %v112 = vld [vmem:[#allocation2 + $0xe0] sm:$0xff]
    %v113 = vld [vmem:[#allocation2 + $0xe8] sm:$0xff]
    %v114 = vld [vmem:[#allocation2 + $0xf0] sm:$0xff]
    %v115 = vld [vmem:[#allocation2 + $0xf8] sm:$0xff]
    %v116 = vld [vmem:[#allocation2 + $0x100] sm:$0xff]
    %v117 = vld [vmem:[#allocation2 + $0x108] sm:$0xff]
    %v118 = vld [vmem:[#allocation2 + $0x110] sm:$0xff]
    %v119 = vld [vmem:[#allocation2 + $0x118] sm:$0xff]
    %v120 = vld [vmem:[#allocation2 + $0x120] sm:$0xff]
    %v121 = vld [vmem:[#allocation2 + $0x128] sm:$0xff]
    %v122 = vld [vmem:[#allocation2 + $0x130] sm:$0xff]
    %v123 = vld [vmem:[#allocation2 + $0x138] sm:$0xff]
    %v124 = vld [vmem:[#allocation2 + $0x140] sm:$0xff]
    %v125 = vld [vmem:[#allocation2 + $0x148] sm:$0xff]
    %v126 = vld [vmem:[#allocation2 + $0x150] sm:$0xff]
    %v127 = vld [vmem:[#allocation2 + $0x158] sm:$0xff]
    %v128 = vld [vmem:[#allocation2 + $0x160] sm:$0xff]
    %v129 = vld [vmem:[#allocation2 + $0x168] sm:$0xff]
    %v130 = vld [vmem:[#allocation2 + $0x170] sm:$0xff]
    %v131 = vld [vmem:[#allocation2 + $0x178] sm:$0xff]
    %v132 = vld [vmem:[#allocation5] sm:$0xff]
    %v133 = vld [vmem:[#allocation5 + $0x8] sm:$0xff]
    %v134 = vld [vmem:[#allocation5 + $0x10] sm:$0xff]
    %v135 = vld [vmem:[#allocation5 + $0x18] sm:$0xff]
    %v136 = vld [vmem:[#allocation5 + $0x20] sm:$0xff]
    %v137 = vld [vmem:[#allocation5 + $0x28] sm:$0xff]
    %v138 = vld [vmem:[#allocation5 + $0x30] sm:$0xff]
    %v139 = vld [vmem:[#allocation5 + $0x38] sm:$0xff]
    %v140 = vld [vmem:[#allocation5 + $0x40] sm:$0xff]
    %v141 = vld [vmem:[#allocation5 + $0x48] sm:$0xff]
    %v142 = vld [vmem:[#allocation5 + $0x50] sm:$0xff]
    %v143 = vld [vmem:[#allocation5 + $0x58] sm:$0xff]
    %v144 = vld [vmem:[#allocation5 + $0x60] sm:$0xff]
    %v145 = vld [vmem:[#allocation5 + $0x68] sm:$0xff]
    %v146 = vld [vmem:[#allocation5 + $0x70] sm:$0xff]
    %v147 = vld [vmem:[#allocation5 + $0x78] sm:$0xff]
    %v148 = vld [vmem:[%s3] sm:$0xff]
    %v149 = vld [vmem:[%s3 + $0x8] sm:$0xff]
    %v150 = vld [vmem:[%s3 + $0x10] sm:$0xff]
    %v151 = vld [vmem:[%s3 + $0x18] sm:$0xff]
    %v152 = vld [vmem:[%s3 + $0x20] sm:$0xff]
    %v153 = vld [vmem:[%s3 + $0x28] sm:$0xff]
    %v154 = vld [vmem:[%s3 + $0x30] sm:$0xff]
    %v155 = vld [vmem:[%s3 + $0x38] sm:$0xff]
    %v156 = vld [vmem:[%s3 + $0x40] sm:$0xff]
    %v157 = vld [vmem:[%s3 + $0x48] sm:$0xff]
    %v158 = vld [vmem:[%s3 + $0x50] sm:$0xff]
    %v159 = vld [vmem:[%s3 + $0x58] sm:$0xff]
    %v160 = vld [vmem:[%s3 + $0x60] sm:$0xff]
    %v161 = vld [vmem:[%s3 + $0x68] sm:$0xff]
    %v162 = vld [vmem:[%s3 + $0x70] sm:$0xff]
    %v163 = vld [vmem:[%s3 + $0x78] sm:$0xff]
    %v164 = vld [vmem:[%s3 + $0x80] sm:$0xff]
    %v165 = vld [vmem:[%s3 + $0x88] sm:$0xff]
    %v166 = vld [vmem:[%s3 + $0x90] sm:$0xff]
    %v167 = vld [vmem:[%s3 + $0x98] sm:$0xff]
    %v168 = vld [vmem:[%s3 + $0xa0] sm:$0xff]
    %v169 = vld [vmem:[%s3 + $0xa8] sm:$0xff]
    %v170 = vld [vmem:[%s3 + $0xb0] sm:$0xff]
    %v171 = vld [vmem:[%s3 + $0xb8] sm:$0xff]
    %v172 = vld [vmem:[%s3 + $0xc0] sm:$0xff]
    %v173 = vld [vmem:[%s3 + $0xc8] sm:$0xff]
    %v174 = vld [vmem:[%s3 + $0xd0] sm:$0xff]
    %v175 = vld [vmem:[%s3 + $0xd8] sm:$0xff]
    %v176 = vld [vmem:[%s3 + $0xe0] sm:$0xff]
    %v177 = vld [vmem:[%s3 + $0xe8] sm:$0xff]
    %v178 = vld [vmem:[%s3 + $0xf0] sm:$0xff]
    %v179 = vld [vmem:[%s3 + $0xf8] sm:$0xff]
    %v180 = vld [vmem:[%s4] sm:$0x1]
    %v181 = vld [vmem:[%s4 + $0x1] sm:$0x1]
    %v182 = vld [vmem:[%s4 + $0x2] sm:$0x1]
    %v183 = vld [vmem:[%s4 + $0x3] sm:$0x1]
    %v184 = vld [vmem:[%s4 + $0x4] sm:$0x1]
    %v185 = vld [vmem:[%s4 + $0x5] sm:$0x1]
    %v186 = vld [vmem:[%s4 + $0x6] sm:$0x1]
    %v187 = vld [vmem:[%s4 + $0x7] sm:$0x1]
    %v188 = vld [vmem:[%s4 + $0x8] sm:$0x1]
    %v189 = vld [vmem:[%s4 + $0x9] sm:$0x1]
    %v190 = vld [vmem:[%s4 + $0xa] sm:$0x1]
    %v191 = vld [vmem:[%s4 + $0xb] sm:$0x1]
    %v192 = vld [vmem:[%s4 + $0xc] sm:$0x1]
    %v193 = vld [vmem:[%s4 + $0xd] sm:$0x1]
    %v194 = vld [vmem:[%s4 + $0xe] sm:$0x1]
    %v195 = vld [vmem:[%s4 + $0xf] sm:$0x1]
    %196 = vmatprep.subr.mxu0 0.0
    %197 = vmatpush1.msra.mxu0 %v147
    %198 = vmatprep.subr.mxu0 0.0
    %199 = vmatpush1.msra.mxu0 %v146
    %200 = vmatprep.subr.mxu0 0.0
    %201 = vmatpush1.msra.mxu0 %v145
    %202 = vmatprep.subr.mxu0 0.0
    %203 = vmatpush1.msra.mxu0 %v144
    %204 = vmatprep.subr.mxu0 0.0
    %205 = vmatpush1.msra.mxu0 %v143
    %206 = vmatprep.subr.mxu0 0.0
    %207 = vmatpush1.msra.mxu0 %v142
    %208 = vmatprep.subr.mxu0 0.0
    %209 = vmatpush1.msra.mxu0 %v141
    %210 = vmatprep.subr.mxu0 0.0
    %211 = vmatpush1.msra.mxu0 %v140
    %212 = vmatprep.subr.mxu0 0.0
    %213 = vmatpush1.msra.mxu0 %v139
    %214 = vmatprep.subr.mxu0 0.0
    %215 = vmatpush1.msra.mxu0 %v138
    %216 = vmatprep.subr.mxu0 0.0
    %217 = vmatpush1.msra.mxu0 %v137
    %218 = vmatprep.subr.mxu0 0.0
    %219 = vmatpush1.msra.mxu0 %v136
    %220 = vmatprep.subr.mxu0 0.0
    %221 = vmatpush1.msra.mxu0 %v135
    %222 = vmatprep.subr.mxu0 0.0
    %223 = vmatpush1.msra.mxu0 %v134
    %224 = vmatprep.subr.mxu0 0.0
    %225 = vmatpush1.msra.mxu0 %v133
    %226 = vmatprep.subr.mxu0 0.0
    %227 = vmatpush1.msra.mxu0 %v132
    %228 = vmatprep.subr.mxu0 0.0
    %229 = vmatpush2.msra.mxu0 0.0
    %230 = vmatprep.subr.mxu0 0.0
    %231 = vmatpush2.msra.mxu0 0.0
    %232 = vmatprep.subr.mxu0 0.0
    %233 = vmatpush2.msra.mxu0 0.0
    %234 = vmatprep.subr.mxu0 0.0
    %235 = vmatpush2.msra.mxu0 0.0
    %236 = vmatprep.subr.mxu0 0.0
    %237 = vmatpush2.msra.mxu0 0.0
    %238 = vmatprep.subr.mxu0 0.0
    %239 = vmatpush2.msra.mxu0 0.0
    %240 = vmatprep.subr.mxu0 0.0
    %241 = vmatpush2.msra.mxu0 0.0
    %242 = vmatprep.subr.mxu0 0.0
    %243 = vmatpush2.msra.mxu0 0.0
    %244 = vmatprep.subr.mxu0 0.0
    %245 = vmatpush2.msra.mxu0 0.0
    %246 = vmatprep.subr.mxu0 0.0
    %247 = vmatpush2.msra.mxu0 0.0
    %248 = vmatprep.subr.mxu0 0.0
    %249 = vmatpush2.msra.mxu0 0.0
    %250 = vmatprep.subr.mxu0 0.0
    %251 = vmatpush2.msra.mxu0 0.0
    %252 = vmatprep.subr.mxu0 0.0
    %253 = vmatpush2.msra.mxu0 0.0
    %254 = vmatprep.subr.mxu0 0.0
    %255 = vmatpush2.msra.mxu0 0.0
    %256 = vmatprep.subr.mxu0 0.0
    %257 = vmatpush2.msra.mxu0 0.0
    %258 = vmatprep.subr.mxu0 0.0
    %259 = vmatpush2.msra.mxu0 0.0
    %260 = vmatprep.mubr.f32.mxu0 0.0
    %261 = vmatmul.mubr.f32.gmra.mxu0 %v52
    %v262 = vpop.f32.mrf.mxu0
    %v263 = vadd.f32 0.0, %v262
    %v264 = vpop.f32.mrf.mxu0
    %265 = vmatprep.mubr.f32.mxu0 0.0
    %266 = vmatmul.mubr.f32.gmra.mxu0 %v53
    %v267 = vpop.f32.mrf.mxu0
    %v268 = vadd.f32 0.0, %v267
    %v269 = vpop.f32.mrf.mxu0
    %270 = vmatprep.mubr.f32.mxu0 0.0
    %271 = vmatmul.mubr.f32.gmra.mxu0 %v54
    %v272 = vpop.f32.mrf.mxu0
    %v273 = vadd.f32 0.0, %v272
    %v274 = vpop.f32.mrf.mxu0
    %275 = vmatprep.mubr.f32.mxu0 0.0
    %276 = vmatmul.mubr.f32.gmra.mxu0 %v55
    %v277 = vpop.f32.mrf.mxu0
    %v278 = vadd.f32 0.0, %v277
    %v279 = vpop.f32.mrf.mxu0
    %280 = vmatprep.mubr.f32.mxu0 0.0
    %281 = vmatmul.mubr.f32.gmra.mxu0 %v56
    %v282 = vpop.f32.mrf.mxu0
    %v283 = vadd.f32 0.0, %v282
    %v284 = vpop.f32.mrf.mxu0
    %285 = vmatprep.mubr.f32.mxu0 0.0
    %286 = vmatmul.mubr.f32.gmra.mxu0 %v57
    %v287 = vpop.f32.mrf.mxu0
    %v288 = vadd.f32 0.0, %v287
    %v289 = vpop.f32.mrf.mxu0
    %290 = vmatprep.mubr.f32.mxu0 0.0
    %291 = vmatmul.mubr.f32.gmra.mxu0 %v58
    %v292 = vpop.f32.mrf.mxu0
    %v293 = vadd.f32 0.0, %v292
    %v294 = vpop.f32.mrf.mxu0
    %295 = vmatprep.mubr.f32.mxu0 0.0
    %296 = vmatmul.mubr.f32.gmra.mxu0 %v59
    %v297 = vpop.f32.mrf.mxu0
    %v298 = vadd.f32 0.0, %v297
    %v299 = vpop.f32.mrf.mxu0
    %300 = vmatprep.mubr.f32.mxu0 0.0
    %301 = vmatmul.mubr.f32.gmra.mxu0 %v60
    %v302 = vpop.f32.mrf.mxu0
    %v303 = vadd.f32 0.0, %v302
    %v304 = vpop.f32.mrf.mxu0
    %305 = vmatprep.mubr.f32.mxu0 0.0
    %306 = vmatmul.mubr.f32.gmra.mxu0 %v61
    %v307 = vpop.f32.mrf.mxu0
    %v308 = vadd.f32 0.0, %v307
    %v309 = vpop.f32.mrf.mxu0
    %310 = vmatprep.mubr.f32.mxu0 0.0
    %311 = vmatmul.mubr.f32.gmra.mxu0 %v62
    %v312 = vpop.f32.mrf.mxu0
    %v313 = vadd.f32 0.0, %v312
    %v314 = vpop.f32.mrf.mxu0
    %315 = vmatprep.mubr.f32.mxu0 0.0
    %316 = vmatmul.mubr.f32.gmra.mxu0 %v63
    %v317 = vpop.f32.mrf.mxu0
    %v318 = vadd.f32 0.0, %v317
    %v319 = vpop.f32.mrf.mxu0
    %320 = vmatprep.mubr.f32.mxu0 0.0
    %321 = vmatmul.mubr.f32.gmra.mxu0 %v64
    %v322 = vpop.f32.mrf.mxu0
    %v323 = vadd.f32 0.0, %v322
    %v324 = vpop.f32.mrf.mxu0
    %325 = vmatprep.mubr.f32.mxu0 0.0
    %326 = vmatmul.mubr.f32.gmra.mxu0 %v65
    %v327 = vpop.f32.mrf.mxu0
    %v328 = vadd.f32 0.0, %v327
    %v329 = vpop.f32.mrf.mxu0
    %330 = vmatprep.mubr.f32.mxu0 0.0
    %331 = vmatmul.mubr.f32.gmra.mxu0 %v66
    %v332 = vpop.f32.mrf.mxu0
    %v333 = vadd.f32 0.0, %v332
    %v334 = vpop.f32.mrf.mxu0
    %335 = vmatprep.mubr.f32.mxu0 0.0
    %336 = vmatmul.mubr.f32.gmra.mxu0 %v67
    %v337 = vpop.f32.mrf.mxu0
    %v338 = vadd.f32 0.0, %v337
    %v339 = vpop.f32.mrf.mxu0
    %340 = vmatprep.mubr.f32.mxu0 0.0
    %341 = vmatmul.mubr.f32.gmra.mxu0 %v68
    %v342 = vpop.f32.mrf.mxu0
    %v343 = vadd.f32 0.0, %v342
    %v344 = vpop.f32.mrf.mxu0
    %345 = vmatprep.mubr.f32.mxu0 0.0
    %346 = vmatmul.mubr.f32.gmra.mxu0 %v69
    %v347 = vpop.f32.mrf.mxu0
    %v348 = vadd.f32 0.0, %v347
    %v349 = vpop.f32.mrf.mxu0
    %350 = vmatprep.mubr.f32.mxu0 0.0
    %351 = vmatmul.mubr.f32.gmra.mxu0 %v70
    %v352 = vpop.f32.mrf.mxu0
    %v353 = vadd.f32 0.0, %v352
    %v354 = vpop.f32.mrf.mxu0
    %355 = vmatprep.mubr.f32.mxu0 0.0
    %356 = vmatmul.mubr.f32.gmra.mxu0 %v71
    %v357 = vpop.f32.mrf.mxu0
    %v358 = vadd.f32 0.0, %v357
    %v359 = vpop.f32.mrf.mxu0
    %360 = vmatprep.mubr.f32.mxu0 0.0
    %361 = vmatmul.mubr.f32.gmra.mxu0 %v72
    %v362 = vpop.f32.mrf.mxu0
    %v363 = vadd.f32 0.0, %v362
    %v364 = vpop.f32.mrf.mxu0
    %365 = vmatprep.mubr.f32.mxu0 0.0
    %366 = vmatmul.mubr.f32.gmra.mxu0 %v73
    %v367 = vpop.f32.mrf.mxu0
    %v368 = vadd.f32 0.0, %v367
    %v369 = vpop.f32.mrf.mxu0
    %370 = vmatprep.mubr.f32.mxu0 0.0
    %371 = vmatmul.mubr.f32.gmra.mxu0 %v74
    %v372 = vpop.f32.mrf.mxu0
    %v373 = vadd.f32 0.0, %v372
    %v374 = vpop.f32.mrf.mxu0
    %375 = vmatprep.mubr.f32.mxu0 0.0
    %376 = vmatmul.mubr.f32.gmra.mxu0 %v75
    %v377 = vpop.f32.mrf.mxu0
    %v378 = vadd.f32 0.0, %v377
    %v379 = vpop.f32.mrf.mxu0
    %380 = vmatprep.mubr.f32.mxu0 0.0
    %381 = vmatmul.mubr.f32.gmra.mxu0 %v76
    %v382 = vpop.f32.mrf.mxu0
    %v383 = vadd.f32 0.0, %v382
    %v384 = vpop.f32.mrf.mxu0
    %385 = vmatprep.mubr.f32.mxu0 0.0
    %386 = vmatmul.mubr.f32.gmra.mxu0 %v77
    %v387 = vpop.f32.mrf.mxu0
    %v388 = vadd.f32 0.0, %v387
    %v389 = vpop.f32.mrf.mxu0
    %390 = vmatprep.mubr.f32.mxu0 0.0
    %391 = vmatmul.mubr.f32.gmra.mxu0 %v78
    %v392 = vpop.f32.mrf.mxu0
    %v393 = vadd.f32 0.0, %v392
    %v394 = vpop.f32.mrf.mxu0
    %395 = vmatprep.mubr.f32.mxu0 0.0
    %396 = vmatmul.mubr.f32.gmra.mxu0 %v79
    %v397 = vpop.f32.mrf.mxu0
    %v398 = vadd.f32 0.0, %v397
    %v399 = vpop.f32.mrf.mxu0
    %400 = vmatprep.mubr.f32.mxu0 0.0
    %401 = vmatmul.mubr.f32.gmra.mxu0 %v80
    %v402 = vpop.f32.mrf.mxu0
    %v403 = vadd.f32 0.0, %v402
    %v404 = vpop.f32.mrf.mxu0
    %405 = vmatprep.mubr.f32.mxu0 0.0
    %406 = vmatmul.mubr.f32.gmra.mxu0 %v81
    %v407 = vpop.f32.mrf.mxu0
    %v408 = vadd.f32 0.0, %v407
    %v409 = vpop.f32.mrf.mxu0
    %410 = vmatprep.mubr.f32.mxu0 0.0
    %411 = vmatmul.mubr.f32.gmra.mxu0 %v82
    %v412 = vpop.f32.mrf.mxu0
    %v413 = vadd.f32 0.0, %v412
    %v414 = vpop.f32.mrf.mxu0
    %415 = vmatprep.mubr.f32.mxu0 0.0
    %416 = vmatmul.mubr.f32.gmra.mxu0 %v83
    %v417 = vpop.f32.mrf.mxu0
    %v418 = vadd.f32 0.0, %v417
    %v419 = vpop.f32.mrf.mxu0
    %420 = vdwg.mxu0
    %421 = vmatprep.subr.mxu0 0.0
    %422 = vmatpush1.xpose.msra.mxu0 0.0
    %423 = vmatprep.subr.mxu0 0.0
    %424 = vmatpush1.xpose.msra.mxu0 0.0
    %425 = vmatprep.subr.mxu0 0.0
    %426 = vmatpush1.xpose.msra.mxu0 0.0
    %427 = vmatprep.subr.mxu0 0.0
    %428 = vmatpush1.xpose.msra.mxu0 0.0
    %429 = vmatprep.subr.mxu0 0.0
    %430 = vmatpush1.xpose.msra.mxu0 0.0
    %431 = vmatprep.subr.mxu0 0.0
    %432 = vmatpush1.xpose.msra.mxu0 0.0
    %433 = vmatprep.subr.mxu0 0.0
    %434 = vmatpush1.xpose.msra.mxu0 0.0
    %435 = vmatprep.subr.mxu0 0.0
    %436 = vmatpush1.xpose.msra.mxu0 0.0
    %437 = vmatprep.subr.mxu0 0.0
    %438 = vmatpush1.xpose.msra.mxu0 0.0
    %439 = vmatprep.subr.mxu0 0.0
    %440 = vmatpush1.xpose.msra.mxu0 0.0
    %441 = vmatprep.subr.mxu0 0.0
    %442 = vmatpush1.xpose.msra.mxu0 0.0
    %443 = vmatprep.subr.mxu0 0.0
    %444 = vmatpush1.xpose.msra.mxu0 0.0
    %445 = vmatprep.subr.mxu0 0.0
    %446 = vmatpush1.xpose.msra.mxu0 0.0
    %447 = vmatprep.subr.mxu0 0.0
    %448 = vmatpush1.xpose.msra.mxu0 %v86
    %449 = vmatprep.subr.mxu0 0.0
    %450 = vmatpush1.xpose.msra.mxu0 %v85
    %451 = vmatprep.subr.mxu0 0.0
    %452 = vmatpush1.xpose.msra.mxu0 %v84
    %453 = vmatprep.subr.mxu0 0.0
    %454 = vmatpush2.xpose.msra.mxu0 0.0
    %455 = vmatprep.subr.mxu0 0.0
    %456 = vmatpush2.xpose.msra.mxu0 0.0
    %457 = vmatprep.subr.mxu0 0.0
    %458 = vmatpush2.xpose.msra.mxu0 0.0
    %459 = vmatprep.subr.mxu0 0.0
    %460 = vmatpush2.xpose.msra.mxu0 0.0
    %461 = vmatprep.subr.mxu0 0.0
    %462 = vmatpush2.xpose.msra.mxu0 0.0
    %463 = vmatprep.subr.mxu0 0.0
    %464 = vmatpush2.xpose.msra.mxu0 0.0
    %465 = vmatprep.subr.mxu0 0.0
    %466 = vmatpush2.xpose.msra.mxu0 0.0
    %467 = vmatprep.subr.mxu0 0.0
    %468 = vmatpush2.xpose.msra.mxu0 0.0
    %469 = vmatprep.subr.mxu0 0.0
    %470 = vmatpush2.xpose.msra.mxu0 0.0
    %471 = vmatprep.subr.mxu0 0.0
    %472 = vmatpush2.xpose.msra.mxu0 0.0
    %473 = vmatprep.subr.mxu0 0.0
    %474 = vmatpush2.xpose.msra.mxu0 0.0
    %475 = vmatprep.subr.mxu0 0.0
    %476 = vmatpush2.xpose.msra.mxu0 0.0
    %477 = vmatprep.subr.mxu0 0.0
    %478 = vmatpush2.xpose.msra.mxu0 0.0
    %479 = vmatprep.subr.mxu0 0.0
    %480 = vmatpush2.xpose.msra.mxu0 0.0
    %481 = vmatprep.subr.mxu0 0.0
    %482 = vmatpush2.xpose.msra.mxu0 0.0
    %483 = vmatprep.subr.mxu0 0.0
    %484 = vmatpush2.xpose.msra.mxu0 0.0
    %485 = vmatprep.mubr.f32.mxu0 0.0
    %486 = vmatmul.mubr.f32.gmra.mxu0 %v263
    %v487 = vpop.f32.mrf.mxu0
    %v488 = vadd.f32 0.0, %v487
    %v489 = vpop.f32.mrf.mxu0
    %490 = vmatprep.mubr.f32.mxu0 0.0
    %491 = vmatmul.mubr.f32.gmra.mxu0 %v268
    %v492 = vpop.f32.mrf.mxu0
    %v493 = vadd.f32 0.0, %v492
    %v494 = vpop.f32.mrf.mxu0
    %495 = vdwg.mxu0
    %496 = vmatprep.subr.mxu0 0.0
    %497 = vmatpush1.xpose.msra.mxu0 0.0
    %498 = vmatprep.subr.mxu0 0.0
    %499 = vmatpush1.xpose.msra.mxu0 0.0
    %500 = vmatprep.subr.mxu0 0.0
    %501 = vmatpush1.xpose.msra.mxu0 0.0
    %502 = vmatprep.subr.mxu0 0.0
    %503 = vmatpush1.xpose.msra.mxu0 0.0
    %504 = vmatprep.subr.mxu0 0.0
    %505 = vmatpush1.xpose.msra.mxu0 0.0
    %506 = vmatprep.subr.mxu0 0.0
    %507 = vmatpush1.xpose.msra.mxu0 0.0
    %508 = vmatprep.subr.mxu0 0.0
    %509 = vmatpush1.xpose.msra.mxu0 0.0
    %510 = vmatprep.subr.mxu0 0.0
    %511 = vmatpush1.xpose.msra.mxu0 0.0
    %512 = vmatprep.subr.mxu0 0.0
    %513 = vmatpush1.xpose.msra.mxu0 0.0
    %514 = vmatprep.subr.mxu0 0.0
    %515 = vmatpush1.xpose.msra.mxu0 0.0
    %516 = vmatprep.subr.mxu0 0.0
    %517 = vmatpush1.xpose.msra.mxu0 0.0
    %518 = vmatprep.subr.mxu0 0.0
    %519 = vmatpush1.xpose.msra.mxu0 0.0
    %520 = vmatprep.subr.mxu0 0.0
    %521 = vmatpush1.xpose.msra.mxu0 0.0
    %522 = vmatprep.subr.mxu0 0.0
    %523 = vmatpush1.xpose.msra.mxu0 %v89
    %524 = vmatprep.subr.mxu0 0.0
    %525 = vmatpush1.xpose.msra.mxu0 %v88
    %526 = vmatprep.subr.mxu0 0.0
    %527 = vmatpush1.xpose.msra.mxu0 %v87
    %528 = vmatprep.subr.mxu0 0.0
    %529 = vmatpush2.xpose.msra.mxu0 0.0
    %530 = vmatprep.subr.mxu0 0.0
    %531 = vmatpush2.xpose.msra.mxu0 0.0
    %532 = vmatprep.subr.mxu0 0.0
    %533 = vmatpush2.xpose.msra.mxu0 0.0
    %534 = vmatprep.subr.mxu0 0.0
    %535 = vmatpush2.xpose.msra.mxu0 0.0
    %536 = vmatprep.subr.mxu0 0.0
    %537 = vmatpush2.xpose.msra.mxu0 0.0
    %538 = vmatprep.subr.mxu0 0.0
    %539 = vmatpush2.xpose.msra.mxu0 0.0
    %540 = vmatprep.subr.mxu0 0.0
    %541 = vmatpush2.xpose.msra.mxu0 0.0
    %542 = vmatprep.subr.mxu0 0.0
    %543 = vmatpush2.xpose.msra.mxu0 0.0
    %544 = vmatprep.subr.mxu0 0.0
    %545 = vmatpush2.xpose.msra.mxu0 0.0
    %546 = vmatprep.subr.mxu0 0.0
    %547 = vmatpush2.xpose.msra.mxu0 0.0
    %548 = vmatprep.subr.mxu0 0.0
    %549 = vmatpush2.xpose.msra.mxu0 0.0
    %550 = vmatprep.subr.mxu0 0.0
    %551 = vmatpush2.xpose.msra.mxu0 0.0
    %552 = vmatprep.subr.mxu0 0.0
    %553 = vmatpush2.xpose.msra.mxu0 0.0
    %554 = vmatprep.subr.mxu0 0.0
    %555 = vmatpush2.xpose.msra.mxu0 0.0
    %556 = vmatprep.subr.mxu0 0.0
    %557 = vmatpush2.xpose.msra.mxu0 0.0
    %558 = vmatprep.subr.mxu0 0.0
    %559 = vmatpush2.xpose.msra.mxu0 0.0
    %560 = vmatprep.mubr.f32.mxu0 0.0
    %561 = vmatmul.mubr.f32.gmra.mxu0 %v273
    %v562 = vpop.f32.mrf.mxu0
    %v563 = vadd.f32 0.0, %v562
    %v564 = vpop.f32.mrf.mxu0
    %565 = vmatprep.mubr.f32.mxu0 0.0
    %566 = vmatmul.mubr.f32.gmra.mxu0 %v278
    %v567 = vpop.f32.mrf.mxu0
    %v568 = vadd.f32 0.0, %v567
    %v569 = vpop.f32.mrf.mxu0
    %570 = vdwg.mxu0
    %571 = vmatprep.subr.mxu0 0.0
    %572 = vmatpush1.xpose.msra.mxu0 0.0
    %573 = vmatprep.subr.mxu0 0.0
    %574 = vmatpush1.xpose.msra.mxu0 0.0
    %575 = vmatprep.subr.mxu0 0.0
    %576 = vmatpush1.xpose.msra.mxu0 0.0
    %577 = vmatprep.subr.mxu0 0.0
    %578 = vmatpush1.xpose.msra.mxu0 0.0
    %579 = vmatprep.subr.mxu0 0.0
    %580 = vmatpush1.xpose.msra.mxu0 0.0
    %581 = vmatprep.subr.mxu0 0.0
    %582 = vmatpush1.xpose.msra.mxu0 0.0
    %583 = vmatprep.subr.mxu0 0.0
    %584 = vmatpush1.xpose.msra.mxu0 0.0
    %585 = vmatprep.subr.mxu0 0.0
    %586 = vmatpush1.xpose.msra.mxu0 0.0
    %587 = vmatprep.subr.mxu0 0.0
    %588 = vmatpush1.xpose.msra.mxu0 0.0
    %589 = vmatprep.subr.mxu0 0.0
    %590 = vmatpush1.xpose.msra.mxu0 0.0
    %591 = vmatprep.subr.mxu0 0.0
    %592 = vmatpush1.xpose.msra.mxu0 0.0
    %593 = vmatprep.subr.mxu0 0.0
    %594 = vmatpush1.xpose.msra.mxu0 0.0
    %595 = vmatprep.subr.mxu0 0.0
    %596 = vmatpush1.xpose.msra.mxu0 0.0
    %597 = vmatprep.subr.mxu0 0.0
    %598 = vmatpush1.xpose.msra.mxu0 %v92
    %599 = vmatprep.subr.mxu0 0.0
    %600 = vmatpush1.xpose.msra.mxu0 %v91
    %601 = vmatprep.subr.mxu0 0.0
    %602 = vmatpush1.xpose.msra.mxu0 %v90
    %603 = vmatprep.subr.mxu0 0.0
    %604 = vmatpush2.xpose.msra.mxu0 0.0
    %605 = vmatprep.subr.mxu0 0.0
    %606 = vmatpush2.xpose.msra.mxu0 0.0
    %607 = vmatprep.subr.mxu0 0.0
    %608 = vmatpush2.xpose.msra.mxu0 0.0
    %609 = vmatprep.subr.mxu0 0.0
    %610 = vmatpush2.xpose.msra.mxu0 0.0
    %611 = vmatprep.subr.mxu0 0.0
    %612 = vmatpush2.xpose.msra.mxu0 0.0
    %613 = vmatprep.subr.mxu0 0.0
    %614 = vmatpush2.xpose.msra.mxu0 0.0
    %615 = vmatprep.subr.mxu0 0.0
    %616 = vmatpush2.xpose.msra.mxu0 0.0
    %617 = vmatprep.subr.mxu0 0.0
    %618 = vmatpush2.xpose.msra.mxu0 0.0
    %619 = vmatprep.subr.mxu0 0.0
    %620 = vmatpush2.xpose.msra.mxu0 0.0
    %621 = vmatprep.subr.mxu0 0.0
    %622 = vmatpush2.xpose.msra.mxu0 0.0
    %623 = vmatprep.subr.mxu0 0.0
    %624 = vmatpush2.xpose.msra.mxu0 0.0
    %625 = vmatprep.subr.mxu0 0.0
    %626 = vmatpush2.xpose.msra.mxu0 0.0
    %627 = vmatprep.subr.mxu0 0.0
    %628 = vmatpush2.xpose.msra.mxu0 0.0
    %629 = vmatprep.subr.mxu0 0.0
    %630 = vmatpush2.xpose.msra.mxu0 0.0
    %631 = vmatprep.subr.mxu0 0.0
    %632 = vmatpush2.xpose.msra.mxu0 0.0
    %633 = vmatprep.subr.mxu0 0.0
    %634 = vmatpush2.xpose.msra.mxu0 0.0
    %635 = vmatprep.mubr.f32.mxu0 0.0
    %636 = vmatmul.mubr.f32.gmra.mxu0 %v283
    %v637 = vpop.f32.mrf.mxu0
    %v638 = vadd.f32 0.0, %v637
    %v639 = vpop.f32.mrf.mxu0
    %640 = vmatprep.mubr.f32.mxu0 0.0
    %641 = vmatmul.mubr.f32.gmra.mxu0 %v288
    %v642 = vpop.f32.mrf.mxu0
    %v643 = vadd.f32 0.0, %v642
    %v644 = vpop.f32.mrf.mxu0
    %645 = vdwg.mxu0
    %646 = vmatprep.subr.mxu0 0.0
    %647 = vmatpush1.xpose.msra.mxu0 0.0
    %648 = vmatprep.subr.mxu0 0.0
    %649 = vmatpush1.xpose.msra.mxu0 0.0
    %650 = vmatprep.subr.mxu0 0.0
    %651 = vmatpush1.xpose.msra.mxu0 0.0
    %652 = vmatprep.subr.mxu0 0.0
    %653 = vmatpush1.xpose.msra.mxu0 0.0
    %654 = vmatprep.subr.mxu0 0.0
    %655 = vmatpush1.xpose.msra.mxu0 0.0
    %656 = vmatprep.subr.mxu0 0.0
    %657 = vmatpush1.xpose.msra.mxu0 0.0
    %658 = vmatprep.subr.mxu0 0.0
    %659 = vmatpush1.xpose.msra.mxu0 0.0
    %660 = vmatprep.subr.mxu0 0.0
    %661 = vmatpush1.xpose.msra.mxu0 0.0
    %662 = vmatprep.subr.mxu0 0.0
    %663 = vmatpush1.xpose.msra.mxu0 0.0
    %664 = vmatprep.subr.mxu0 0.0
    %665 = vmatpush1.xpose.msra.mxu0 0.0
    %666 = vmatprep.subr.mxu0 0.0
    %667 = vmatpush1.xpose.msra.mxu0 0.0
    %668 = vmatprep.subr.mxu0 0.0
    %669 = vmatpush1.xpose.msra.mxu0 0.0
    %670 = vmatprep.subr.mxu0 0.0
    %671 = vmatpush1.xpose.msra.mxu0 0.0
    %672 = vmatprep.subr.mxu0 0.0
    %673 = vmatpush1.xpose.msra.mxu0 %v95
    %674 = vmatprep.subr.mxu0 0.0
    %675 = vmatpush1.xpose.msra.mxu0 %v94
    %676 = vmatprep.subr.mxu0 0.0
    %677 = vmatpush1.xpose.msra.mxu0 %v93
    %678 = vmatprep.subr.mxu0 0.0
    %679 = vmatpush2.xpose.msra.mxu0 0.0
    %680 = vmatprep.subr.mxu0 0.0
    %681 = vmatpush2.xpose.msra.mxu0 0.0
    %682 = vmatprep.subr.mxu0 0.0
    %683 = vmatpush2.xpose.msra.mxu0 0.0
    %684 = vmatprep.subr.mxu0 0.0
    %685 = vmatpush2.xpose.msra.mxu0 0.0
    %686 = vmatprep.subr.mxu0 0.0
    %687 = vmatpush2.xpose.msra.mxu0 0.0
    %688 = vmatprep.subr.mxu0 0.0
    %689 = vmatpush2.xpose.msra.mxu0 0.0
    %690 = vmatprep.subr.mxu0 0.0
    %691 = vmatpush2.xpose.msra.mxu0 0.0
    %692 = vmatprep.subr.mxu0 0.0
    %693 = vmatpush2.xpose.msra.mxu0 0.0
    %694 = vmatprep.subr.mxu0 0.0
    %695 = vmatpush2.xpose.msra.mxu0 0.0
    %696 = vmatprep.subr.mxu0 0.0
    %697 = vmatpush2.xpose.msra.mxu0 0.0
    %698 = vmatprep.subr.mxu0 0.0
    %699 = vmatpush2.xpose.msra.mxu0 0.0
    %700 = vmatprep.subr.mxu0 0.0
    %701 = vmatpush2.xpose.msra.mxu0 0.0
    %702 = vmatprep.subr.mxu0 0.0
    %703 = vmatpush2.xpose.msra.mxu0 0.0
    %704 = vmatprep.subr.mxu0 0.0
    %705 = vmatpush2.xpose.msra.mxu0 0.0
    %706 = vmatprep.subr.mxu0 0.0
    %707 = vmatpush2.xpose.msra.mxu0 0.0
    %708 = vmatprep.subr.mxu0 0.0
    %709 = vmatpush2.xpose.msra.mxu0 0.0
    %710 = vmatprep.mubr.f32.mxu0 0.0
    %711 = vmatmul.mubr.f32.gmra.mxu0 %v293
    %v712 = vpop.f32.mrf.mxu0
    %v713 = vadd.f32 0.0, %v712
    %v714 = vpop.f32.mrf.mxu0
    %715 = vmatprep.mubr.f32.mxu0 0.0
    %716 = vmatmul.mubr.f32.gmra.mxu0 %v298
    %v717 = vpop.f32.mrf.mxu0
    %v718 = vadd.f32 0.0, %v717
    %v719 = vpop.f32.mrf.mxu0
    %720 = vdwg.mxu0
    %721 = vmatprep.subr.mxu0 0.0
    %722 = vmatpush1.xpose.msra.mxu0 0.0
    %723 = vmatprep.subr.mxu0 0.0
    %724 = vmatpush1.xpose.msra.mxu0 0.0
    %725 = vmatprep.subr.mxu0 0.0
    %726 = vmatpush1.xpose.msra.mxu0 0.0
    %727 = vmatprep.subr.mxu0 0.0
    %728 = vmatpush1.xpose.msra.mxu0 0.0
    %729 = vmatprep.subr.mxu0 0.0
    %730 = vmatpush1.xpose.msra.mxu0 0.0
    %731 = vmatprep.subr.mxu0 0.0
    %732 = vmatpush1.xpose.msra.mxu0 0.0
    %733 = vmatprep.subr.mxu0 0.0
    %734 = vmatpush1.xpose.msra.mxu0 0.0
    %735 = vmatprep.subr.mxu0 0.0
    %736 = vmatpush1.xpose.msra.mxu0 0.0
    %737 = vmatprep.subr.mxu0 0.0
    %738 = vmatpush1.xpose.msra.mxu0 0.0
    %739 = vmatprep.subr.mxu0 0.0
    %740 = vmatpush1.xpose.msra.mxu0 0.0
    %741 = vmatprep.subr.mxu0 0.0
    %742 = vmatpush1.xpose.msra.mxu0 0.0
    %743 = vmatprep.subr.mxu0 0.0
    %744 = vmatpush1.xpose.msra.mxu0 0.0
    %745 = vmatprep.subr.mxu0 0.0
    %746 = vmatpush1.xpose.msra.mxu0 0.0
    %747 = vmatprep.subr.mxu0 0.0
    %748 = vmatpush1.xpose.msra.mxu0 %v98
    %749 = vmatprep.subr.mxu0 0.0
    %750 = vmatpush1.xpose.msra.mxu0 %v97
    %751 = vmatprep.subr.mxu0 0.0
    %752 = vmatpush1.xpose.msra.mxu0 %v96
    %753 = vmatprep.subr.mxu0 0.0
    %754 = vmatpush2.xpose.msra.mxu0 0.0
    %755 = vmatprep.subr.mxu0 0.0
    %756 = vmatpush2.xpose.msra.mxu0 0.0
    %757 = vmatprep.subr.mxu0 0.0
    %758 = vmatpush2.xpose.msra.mxu0 0.0
    %759 = vmatprep.subr.mxu0 0.0
    %760 = vmatpush2.xpose.msra.mxu0 0.0
    %761 = vmatprep.subr.mxu0 0.0
    %762 = vmatpush2.xpose.msra.mxu0 0.0
    %763 = vmatprep.subr.mxu0 0.0
    %764 = vmatpush2.xpose.msra.mxu0 0.0
    %765 = vmatprep.subr.mxu0 0.0
    %766 = vmatpush2.xpose.msra.mxu0 0.0
    %767 = vmatprep.subr.mxu0 0.0
    %768 = vmatpush2.xpose.msra.mxu0 0.0
    %769 = vmatprep.subr.mxu0 0.0
    %770 = vmatpush2.xpose.msra.mxu0 0.0
    %771 = vmatprep.subr.mxu0 0.0
    %772 = vmatpush2.xpose.msra.mxu0 0.0
    %773 = vmatprep.subr.mxu0 0.0
    %774 = vmatpush2.xpose.msra.mxu0 0.0
    %775 = vmatprep.subr.mxu0 0.0
    %776 = vmatpush2.xpose.msra.mxu0 0.0
    %777 = vmatprep.subr.mxu0 0.0
    %778 = vmatpush2.xpose.msra.mxu0 0.0
    %779 = vmatprep.subr.mxu0 0.0
    %780 = vmatpush2.xpose.msra.mxu0 0.0
    %781 = vmatprep.subr.mxu0 0.0
    %782 = vmatpush2.xpose.msra.mxu0 0.0
    %783 = vmatprep.subr.mxu0 0.0
    %784 = vmatpush2.xpose.msra.mxu0 0.0
    %785 = vmatprep.mubr.f32.mxu0 0.0
    %786 = vmatmul.mubr.f32.gmra.mxu0 %v303
    %v787 = vpop.f32.mrf.mxu0
    %v788 = vadd.f32 0.0, %v787
    %v789 = vpop.f32.mrf.mxu0
    %790 = vmatprep.mubr.f32.mxu0 0.0
    %791 = vmatmul.mubr.f32.gmra.mxu0 %v308
    %v792 = vpop.f32.mrf.mxu0
    %v793 = vadd.f32 0.0, %v792
    %v794 = vpop.f32.mrf.mxu0
    %795 = vdwg.mxu0
    %796 = vmatprep.subr.mxu0 0.0
    %797 = vmatpush1.xpose.msra.mxu0 0.0
    %798 = vmatprep.subr.mxu0 0.0
    %799 = vmatpush1.xpose.msra.mxu0 0.0
    %800 = vmatprep.subr.mxu0 0.0
    %801 = vmatpush1.xpose.msra.mxu0 0.0
    %802 = vmatprep.subr.mxu0 0.0
    %803 = vmatpush1.xpose.msra.mxu0 0.0
    %804 = vmatprep.subr.mxu0 0.0
    %805 = vmatpush1.xpose.msra.mxu0 0.0
    %806 = vmatprep.subr.mxu0 0.0
    %807 = vmatpush1.xpose.msra.mxu0 0.0
    %808 = vmatprep.subr.mxu0 0.0
    %809 = vmatpush1.xpose.msra.mxu0 0.0
    %810 = vmatprep.subr.mxu0 0.0
    %811 = vmatpush1.xpose.msra.mxu0 0.0
    %812 = vmatprep.subr.mxu0 0.0
    %813 = vmatpush1.xpose.msra.mxu0 0.0
    %814 = vmatprep.subr.mxu0 0.0
    %815 = vmatpush1.xpose.msra.mxu0 0.0
    %816 = vmatprep.subr.mxu0 0.0
    %817 = vmatpush1.xpose.msra.mxu0 0.0
    %818 = vmatprep.subr.mxu0 0.0
    %819 = vmatpush1.xpose.msra.mxu0 0.0
    %820 = vmatprep.subr.mxu0 0.0
    %821 = vmatpush1.xpose.msra.mxu0 0.0
    %822 = vmatprep.subr.mxu0 0.0
    %823 = vmatpush1.xpose.msra.mxu0 %v101
    %824 = vmatprep.subr.mxu0 0.0
    %825 = vmatpush1.xpose.msra.mxu0 %v100
    %826 = vmatprep.subr.mxu0 0.0
    %827 = vmatpush1.xpose.msra.mxu0 %v99
    %828 = vmatprep.subr.mxu0 0.0
    %829 = vmatpush2.xpose.msra.mxu0 0.0
    %830 = vmatprep.subr.mxu0 0.0
    %831 = vmatpush2.xpose.msra.mxu0 0.0
    %832 = vmatprep.subr.mxu0 0.0
    %833 = vmatpush2.xpose.msra.mxu0 0.0
    %834 = vmatprep.subr.mxu0 0.0
    %835 = vmatpush2.xpose.msra.mxu0 0.0
    %836 = vmatprep.subr.mxu0 0.0
    %837 = vmatpush2.xpose.msra.mxu0 0.0
    %838 = vmatprep.subr.mxu0 0.0
    %839 = vmatpush2.xpose.msra.mxu0 0.0
    %840 = vmatprep.subr.mxu0 0.0
    %841 = vmatpush2.xpose.msra.mxu0 0.0
    %842 = vmatprep.subr.mxu0 0.0
    %843 = vmatpush2.xpose.msra.mxu0 0.0
    %844 = vmatprep.subr.mxu0 0.0
    %845 = vmatpush2.xpose.msra.mxu0 0.0
    %846 = vmatprep.subr.mxu0 0.0
    %847 = vmatpush2.xpose.msra.mxu0 0.0
    %848 = vmatprep.subr.mxu0 0.0
    %849 = vmatpush2.xpose.msra.mxu0 0.0
    %850 = vmatprep.subr.mxu0 0.0
    %851 = vmatpush2.xpose.msra.mxu0 0.0
    %852 = vmatprep.subr.mxu0 0.0
    %853 = vmatpush2.xpose.msra.mxu0 0.0
    %854 = vmatprep.subr.mxu0 0.0
    %855 = vmatpush2.xpose.msra.mxu0 0.0
    %856 = vmatprep.subr.mxu0 0.0
    %857 = vmatpush2.xpose.msra.mxu0 0.0
    %858 = vmatprep.subr.mxu0 0.0
    %859 = vmatpush2.xpose.msra.mxu0 0.0
    %860 = vmatprep.mubr.f32.mxu0 0.0
    %861 = vmatmul.mubr.f32.gmra.mxu0 %v313
    %v862 = vpop.f32.mrf.mxu0
    %v863 = vadd.f32 0.0, %v862
    %v864 = vpop.f32.mrf.mxu0
    %865 = vmatprep.mubr.f32.mxu0 0.0
    %866 = vmatmul.mubr.f32.gmra.mxu0 %v318
    %v867 = vpop.f32.mrf.mxu0
    %v868 = vadd.f32 0.0, %v867
    %v869 = vpop.f32.mrf.mxu0
    %870 = vdwg.mxu0
    %871 = vmatprep.subr.mxu0 0.0
    %872 = vmatpush1.xpose.msra.mxu0 0.0
    %873 = vmatprep.subr.mxu0 0.0
    %874 = vmatpush1.xpose.msra.mxu0 0.0
    %875 = vmatprep.subr.mxu0 0.0
    %876 = vmatpush1.xpose.msra.mxu0 0.0
    %877 = vmatprep.subr.mxu0 0.0
    %878 = vmatpush1.xpose.msra.mxu0 0.0
    %879 = vmatprep.subr.mxu0 0.0
    %880 = vmatpush1.xpose.msra.mxu0 0.0
    %881 = vmatprep.subr.mxu0 0.0
    %882 = vmatpush1.xpose.msra.mxu0 0.0
    %883 = vmatprep.subr.mxu0 0.0
    %884 = vmatpush1.xpose.msra.mxu0 0.0
    %885 = vmatprep.subr.mxu0 0.0
    %886 = vmatpush1.xpose.msra.mxu0 0.0
    %887 = vmatprep.subr.mxu0 0.0
    %888 = vmatpush1.xpose.msra.mxu0 0.0
    %889 = vmatprep.subr.mxu0 0.0
    %890 = vmatpush1.xpose.msra.mxu0 0.0
    %891 = vmatprep.subr.mxu0 0.0
    %892 = vmatpush1.xpose.msra.mxu0 0.0
    %893 = vmatprep.subr.mxu0 0.0
    %894 = vmatpush1.xpose.msra.mxu0 0.0
    %895 = vmatprep.subr.mxu0 0.0
    %896 = vmatpush1.xpose.msra.mxu0 0.0
    %897 = vmatprep.subr.mxu0 0.0
    %898 = vmatpush1.xpose.msra.mxu0 %v104
    %899 = vmatprep.subr.mxu0 0.0
    %900 = vmatpush1.xpose.msra.mxu0 %v103
    %901 = vmatprep.subr.mxu0 0.0
    %902 = vmatpush1.xpose.msra.mxu0 %v102
    %903 = vmatprep.subr.mxu0 0.0
    %904 = vmatpush2.xpose.msra.mxu0 0.0
    %905 = vmatprep.subr.mxu0 0.0
    %906 = vmatpush2.xpose.msra.mxu0 0.0
    %907 = vmatprep.subr.mxu0 0.0
    %908 = vmatpush2.xpose.msra.mxu0 0.0
    %909 = vmatprep.subr.mxu0 0.0
    %910 = vmatpush2.xpose.msra.mxu0 0.0
    %911 = vmatprep.subr.mxu0 0.0
    %912 = vmatpush2.xpose.msra.mxu0 0.0
    %913 = vmatprep.subr.mxu0 0.0
    %914 = vmatpush2.xpose.msra.mxu0 0.0
    %915 = vmatprep.subr.mxu0 0.0
    %916 = vmatpush2.xpose.msra.mxu0 0.0
    %917 = vmatprep.subr.mxu0 0.0
    %918 = vmatpush2.xpose.msra.mxu0 0.0
    %919 = vmatprep.subr.mxu0 0.0
    %920 = vmatpush2.xpose.msra.mxu0 0.0
    %921 = vmatprep.subr.mxu0 0.0
    %922 = vmatpush2.xpose.msra.mxu0 0.0
    %923 = vmatprep.subr.mxu0 0.0
    %924 = vmatpush2.xpose.msra.mxu0 0.0
    %925 = vmatprep.subr.mxu0 0.0
    %926 = vmatpush2.xpose.msra.mxu0 0.0
    %927 = vmatprep.subr.mxu0 0.0
    %928 = vmatpush2.xpose.msra.mxu0 0.0
    %929 = vmatprep.subr.mxu0 0.0
    %930 = vmatpush2.xpose.msra.mxu0 0.0
    %931 = vmatprep.subr.mxu0 0.0
    %932 = vmatpush2.xpose.msra.mxu0 0.0
    %933 = vmatprep.subr.mxu0 0.0
    %934 = vmatpush2.xpose.msra.mxu0 0.0
    %935 = vmatprep.mubr.f32.mxu0 0.0
    %936 = vmatmul.mubr.f32.gmra.mxu0 %v323
    %v937 = vpop.f32.mrf.mxu0
    %v938 = vadd.f32 0.0, %v937
    %v939 = vpop.f32.mrf.mxu0
    %940 = vmatprep.mubr.f32.mxu0 0.0
    %941 = vmatmul.mubr.f32.gmra.mxu0 %v328
    %v942 = vpop.f32.mrf.mxu0
    %v943 = vadd.f32 0.0, %v942
    %v944 = vpop.f32.mrf.mxu0
    %945 = vdwg.mxu0
    %946 = vmatprep.subr.mxu0 0.0
    %947 = vmatpush1.xpose.msra.mxu0 0.0
    %948 = vmatprep.subr.mxu0 0.0
    %949 = vmatpush1.xpose.msra.mxu0 0.0
    %950 = vmatprep.subr.mxu0 0.0
    %951 = vmatpush1.xpose.msra.mxu0 0.0
    %952 = vmatprep.subr.mxu0 0.0
    %953 = vmatpush1.xpose.msra.mxu0 0.0
    %954 = vmatprep.subr.mxu0 0.0
    %955 = vmatpush1.xpose.msra.mxu0 0.0
    %956 = vmatprep.subr.mxu0 0.0
    %957 = vmatpush1.xpose.msra.mxu0 0.0
    %958 = vmatprep.subr.mxu0 0.0
    %959 = vmatpush1.xpose.msra.mxu0 0.0
    %960 = vmatprep.subr.mxu0 0.0
    %961 = vmatpush1.xpose.msra.mxu0 0.0
    %962 = vmatprep.subr.mxu0 0.0
    %963 = vmatpush1.xpose.msra.mxu0 0.0
    %964 = vmatprep.subr.mxu0 0.0
    %965 = vmatpush1.xpose.msra.mxu0 0.0
    %966 = vmatprep.subr.mxu0 0.0
    %967 = vmatpush1.xpose.msra.mxu0 0.0
    %968 = vmatprep.subr.mxu0 0.0
    %969 = vmatpush1.xpose.msra.mxu0 0.0
    %970 = vmatprep.subr.mxu0 0.0
    %971 = vmatpush1.xpose.msra.mxu0 0.0
    %972 = vmatprep.subr.mxu0 0.0
    %973 = vmatpush1.xpose.msra.mxu0 %v107
    %974 = vmatprep.subr.mxu0 0.0
    %975 = vmatpush1.xpose.msra.mxu0 %v106
    %976 = vmatprep.subr.mxu0 0.0
    %977 = vmatpush1.xpose.msra.mxu0 %v105
    %978 = vmatprep.subr.mxu0 0.0
    %979 = vmatpush2.xpose.msra.mxu0 0.0
    %980 = vmatprep.subr.mxu0 0.0
    %981 = vmatpush2.xpose.msra.mxu0 0.0
    %982 = vmatprep.subr.mxu0 0.0
    %983 = vmatpush2.xpose.msra.mxu0 0.0
    %984 = vmatprep.subr.mxu0 0.0
    %985 = vmatpush2.xpose.msra.mxu0 0.0
    %986 = vmatprep.subr.mxu0 0.0
    %987 = vmatpush2.xpose.msra.mxu0 0.0
    %988 = vmatprep.subr.mxu0 0.0
    %989 = vmatpush2.xpose.msra.mxu0 0.0
    %990 = vmatprep.subr.mxu0 0.0
    %991 = vmatpush2.xpose.msra.mxu0 0.0
    %992 = vmatprep.subr.mxu0 0.0
    %993 = vmatpush2.xpose.msra.mxu0 0.0
    %994 = vmatprep.subr.mxu0 0.0
    %995 = vmatpush2.xpose.msra.mxu0 0.0
    %996 = vmatprep.subr.mxu0 0.0
    %997 = vmatpush2.xpose.msra.mxu0 0.0
    %998 = vmatprep.subr.mxu0 0.0
    %999 = vmatpush2.xpose.msra.mxu0 0.0
    %1000 = vmatprep.subr.mxu0 0.0
    %1001 = vmatpush2.xpose.msra.mxu0 0.0
    %1002 = vmatprep.subr.mxu0 0.0
    %1003 = vmatpush2.xpose.msra.mxu0 0.0
    %1004 = vmatprep.subr.mxu0 0.0
    %1005 = vmatpush2.xpose.msra.mxu0 0.0
    %1006 = vmatprep.subr.mxu0 0.0
    %1007 = vmatpush2.xpose.msra.mxu0 0.0
    %1008 = vmatprep.subr.mxu0 0.0
    %1009 = vmatpush2.xpose.msra.mxu0 0.0
    %1010 = vmatprep.mubr.f32.mxu0 0.0
    %1011 = vmatmul.mubr.f32.gmra.mxu0 %v333
    %v1012 = vpop.f32.mrf.mxu0
    %v1013 = vadd.f32 0.0, %v1012
    %v1014 = vpop.f32.mrf.mxu0
    %1015 = vmatprep.mubr.f32.mxu0 0.0
    %1016 = vmatmul.mubr.f32.gmra.mxu0 %v338
    %v1017 = vpop.f32.mrf.mxu0
    %v1018 = vadd.f32 0.0, %v1017
    %v1019 = vpop.f32.mrf.mxu0
    %1020 = vdwg.mxu0
    %1021 = vmatprep.subr.mxu0 0.0
    %1022 = vmatpush1.xpose.msra.mxu0 0.0
    %1023 = vmatprep.subr.mxu0 0.0
    %1024 = vmatpush1.xpose.msra.mxu0 0.0
    %1025 = vmatprep.subr.mxu0 0.0
    %1026 = vmatpush1.xpose.msra.mxu0 0.0
    %1027 = vmatprep.subr.mxu0 0.0
    %1028 = vmatpush1.xpose.msra.mxu0 0.0
    %1029 = vmatprep.subr.mxu0 0.0
    %1030 = vmatpush1.xpose.msra.mxu0 0.0
    %1031 = vmatprep.subr.mxu0 0.0
    %1032 = vmatpush1.xpose.msra.mxu0 0.0
    %1033 = vmatprep.subr.mxu0 0.0
    %1034 = vmatpush1.xpose.msra.mxu0 0.0
    %1035 = vmatprep.subr.mxu0 0.0
    %1036 = vmatpush1.xpose.msra.mxu0 0.0
    %1037 = vmatprep.subr.mxu0 0.0
    %1038 = vmatpush1.xpose.msra.mxu0 0.0
    %1039 = vmatprep.subr.mxu0 0.0
    %1040 = vmatpush1.xpose.msra.mxu0 0.0
    %1041 = vmatprep.subr.mxu0 0.0
    %1042 = vmatpush1.xpose.msra.mxu0 0.0
    %1043 = vmatprep.subr.mxu0 0.0
    %1044 = vmatpush1.xpose.msra.mxu0 0.0
    %1045 = vmatprep.subr.mxu0 0.0
    %1046 = vmatpush1.xpose.msra.mxu0 0.0
    %1047 = vmatprep.subr.mxu0 0.0
    %1048 = vmatpush1.xpose.msra.mxu0 %v110
    %1049 = vmatprep.subr.mxu0 0.0
    %1050 = vmatpush1.xpose.msra.mxu0 %v109
    %1051 = vmatprep.subr.mxu0 0.0
    %1052 = vmatpush1.xpose.msra.mxu0 %v108
    %1053 = vmatprep.subr.mxu0 0.0
    %1054 = vmatpush2.xpose.msra.mxu0 0.0
    %1055 = vmatprep.subr.mxu0 0.0
    %1056 = vmatpush2.xpose.msra.mxu0 0.0
    %1057 = vmatprep.subr.mxu0 0.0
    %1058 = vmatpush2.xpose.msra.mxu0 0.0
    %1059 = vmatprep.subr.mxu0 0.0
    %1060 = vmatpush2.xpose.msra.mxu0 0.0
    %1061 = vmatprep.subr.mxu0 0.0
    %1062 = vmatpush2.xpose.msra.mxu0 0.0
    %1063 = vmatprep.subr.mxu0 0.0
    %1064 = vmatpush2.xpose.msra.mxu0 0.0
    %1065 = vmatprep.subr.mxu0 0.0
    %1066 = vmatpush2.xpose.msra.mxu0 0.0
    %1067 = vmatprep.subr.mxu0 0.0
    %1068 = vmatpush2.xpose.msra.mxu0 0.0
    %1069 = vmatprep.subr.mxu0 0.0
    %1070 = vmatpush2.xpose.msra.mxu0 0.0
    %1071 = vmatprep.subr.mxu0 0.0
    %1072 = vmatpush2.xpose.msra.mxu0 0.0
    %1073 = vmatprep.subr.mxu0 0.0
    %1074 = vmatpush2.xpose.msra.mxu0 0.0
    %1075 = vmatprep.subr.mxu0 0.0
    %1076 = vmatpush2.xpose.msra.mxu0 0.0
    %1077 = vmatprep.subr.mxu0 0.0
    %1078 = vmatpush2.xpose.msra.mxu0 0.0
    %1079 = vmatprep.subr.mxu0 0.0
    %1080 = vmatpush2.xpose.msra.mxu0 0.0
    %1081 = vmatprep.subr.mxu0 0.0
    %1082 = vmatpush2.xpose.msra.mxu0 0.0
    %1083 = vmatprep.subr.mxu0 0.0
    %1084 = vmatpush2.xpose.msra.mxu0 0.0
    %1085 = vmatprep.mubr.f32.mxu0 0.0
    %1086 = vmatmul.mubr.f32.gmra.mxu0 %v343
    %v1087 = vpop.f32.mrf.mxu0
    %v1088 = vadd.f32 0.0, %v1087
    %v1089 = vpop.f32.mrf.mxu0
    %1090 = vmatprep.mubr.f32.mxu0 0.0
    %1091 = vmatmul.mubr.f32.gmra.mxu0 %v348
    %v1092 = vpop.f32.mrf.mxu0
    %v1093 = vadd.f32 0.0, %v1092
    %v1094 = vpop.f32.mrf.mxu0
    %1095 = vdwg.mxu0
    %1096 = vmatprep.subr.mxu0 0.0
    %1097 = vmatpush1.xpose.msra.mxu0 0.0
    %1098 = vmatprep.subr.mxu0 0.0
    %1099 = vmatpush1.xpose.msra.mxu0 0.0
    %1100 = vmatprep.subr.mxu0 0.0
    %1101 = vmatpush1.xpose.msra.mxu0 0.0
    %1102 = vmatprep.subr.mxu0 0.0
    %1103 = vmatpush1.xpose.msra.mxu0 0.0
    %1104 = vmatprep.subr.mxu0 0.0
    %1105 = vmatpush1.xpose.msra.mxu0 0.0
    %1106 = vmatprep.subr.mxu0 0.0
    %1107 = vmatpush1.xpose.msra.mxu0 0.0
    %1108 = vmatprep.subr.mxu0 0.0
    %1109 = vmatpush1.xpose.msra.mxu0 0.0
    %1110 = vmatprep.subr.mxu0 0.0
    %1111 = vmatpush1.xpose.msra.mxu0 0.0
    %1112 = vmatprep.subr.mxu0 0.0
    %1113 = vmatpush1.xpose.msra.mxu0 0.0
    %1114 = vmatprep.subr.mxu0 0.0
    %1115 = vmatpush1.xpose.msra.mxu0 0.0
    %1116 = vmatprep.subr.mxu0 0.0
    %1117 = vmatpush1.xpose.msra.mxu0 0.0
    %1118 = vmatprep.subr.mxu0 0.0
    %1119 = vmatpush1.xpose.msra.mxu0 0.0
    %1120 = vmatprep.subr.mxu0 0.0
    %1121 = vmatpush1.xpose.msra.mxu0 0.0
    %1122 = vmatprep.subr.mxu0 0.0
    %1123 = vmatpush1.xpose.msra.mxu0 %v113
    %1124 = vmatprep.subr.mxu0 0.0
    %1125 = vmatpush1.xpose.msra.mxu0 %v112
    %1126 = vmatprep.subr.mxu0 0.0
    %1127 = vmatpush1.xpose.msra.mxu0 %v111
    %1128 = vmatprep.subr.mxu0 0.0
    %1129 = vmatpush2.xpose.msra.mxu0 0.0
    %1130 = vmatprep.subr.mxu0 0.0
    %1131 = vmatpush2.xpose.msra.mxu0 0.0
    %1132 = vmatprep.subr.mxu0 0.0
    %1133 = vmatpush2.xpose.msra.mxu0 0.0
    %1134 = vmatprep.subr.mxu0 0.0
    %1135 = vmatpush2.xpose.msra.mxu0 0.0
    %1136 = vmatprep.subr.mxu0 0.0
    %1137 = vmatpush2.xpose.msra.mxu0 0.0
    %1138 = vmatprep.subr.mxu0 0.0
    %1139 = vmatpush2.xpose.msra.mxu0 0.0
    %1140 = vmatprep.subr.mxu0 0.0
    %1141 = vmatpush2.xpose.msra.mxu0 0.0
    %1142 = vmatprep.subr.mxu0 0.0
    %1143 = vmatpush2.xpose.msra.mxu0 0.0
    %1144 = vmatprep.subr.mxu0 0.0
    %1145 = vmatpush2.xpose.msra.mxu0 0.0
    %1146 = vmatprep.subr.mxu0 0.0
    %1147 = vmatpush2.xpose.msra.mxu0 0.0
    %1148 = vmatprep.subr.mxu0 0.0
    %1149 = vmatpush2.xpose.msra.mxu0 0.0
    %1150 = vmatprep.subr.mxu0 0.0
    %1151 = vmatpush2.xpose.msra.mxu0 0.0
    %1152 = vmatprep.subr.mxu0 0.0
    %1153 = vmatpush2.xpose.msra.mxu0 0.0
    %1154 = vmatprep.subr.mxu0 0.0
    %1155 = vmatpush2.xpose.msra.mxu0 0.0
    %1156 = vmatprep.subr.mxu0 0.0
    %1157 = vmatpush2.xpose.msra.mxu0 0.0
    %1158 = vmatprep.subr.mxu0 0.0
    %1159 = vmatpush2.xpose.msra.mxu0 0.0
    %1160 = vmatprep.mubr.f32.mxu0 0.0
    %1161 = vmatmul.mubr.f32.gmra.mxu0 %v353
    %v1162 = vpop.f32.mrf.mxu0
    %v1163 = vadd.f32 0.0, %v1162
    %v1164 = vpop.f32.mrf.mxu0
    %1165 = vmatprep.mubr.f32.mxu0 0.0
    %1166 = vmatmul.mubr.f32.gmra.mxu0 %v358
    %v1167 = vpop.f32.mrf.mxu0
    %v1168 = vadd.f32 0.0, %v1167
    %v1169 = vpop.f32.mrf.mxu0
    %1170 = vdwg.mxu0
    %1171 = vmatprep.subr.mxu0 0.0
    %1172 = vmatpush1.xpose.msra.mxu0 0.0
    %1173 = vmatprep.subr.mxu0 0.0
    %1174 = vmatpush1.xpose.msra.mxu0 0.0
    %1175 = vmatprep.subr.mxu0 0.0
    %1176 = vmatpush1.xpose.msra.mxu0 0.0
    %1177 = vmatprep.subr.mxu0 0.0
    %1178 = vmatpush1.xpose.msra.mxu0 0.0
    %1179 = vmatprep.subr.mxu0 0.0
    %1180 = vmatpush1.xpose.msra.mxu0 0.0
    %1181 = vmatprep.subr.mxu0 0.0
    %1182 = vmatpush1.xpose.msra.mxu0 0.0
    %1183 = vmatprep.subr.mxu0 0.0
    %1184 = vmatpush1.xpose.msra.mxu0 0.0
    %1185 = vmatprep.subr.mxu0 0.0
    %1186 = vmatpush1.xpose.msra.mxu0 0.0
    %1187 = vmatprep.subr.mxu0 0.0
    %1188 = vmatpush1.xpose.msra.mxu0 0.0
    %1189 = vmatprep.subr.mxu0 0.0
    %1190 = vmatpush1.xpose.msra.mxu0 0.0
    %1191 = vmatprep.subr.mxu0 0.0
    %1192 = vmatpush1.xpose.msra.mxu0 0.0
    %1193 = vmatprep.subr.mxu0 0.0
    %1194 = vmatpush1.xpose.msra.mxu0 0.0
    %1195 = vmatprep.subr.mxu0 0.0
    %1196 = vmatpush1.xpose.msra.mxu0 0.0
    %1197 = vmatprep.subr.mxu0 0.0
    %1198 = vmatpush1.xpose.msra.mxu0 %v116
    %1199 = vmatprep.subr.mxu0 0.0
    %1200 = vmatpush1.xpose.msra.mxu0 %v115
    %1201 = vmatprep.subr.mxu0 0.0
    %1202 = vmatpush1.xpose.msra.mxu0 %v114
    %1203 = vmatprep.subr.mxu0 0.0
    %1204 = vmatpush2.xpose.msra.mxu0 0.0
    %1205 = vmatprep.subr.mxu0 0.0
    %1206 = vmatpush2.xpose.msra.mxu0 0.0
    %1207 = vmatprep.subr.mxu0 0.0
    %1208 = vmatpush2.xpose.msra.mxu0 0.0
    %1209 = vmatprep.subr.mxu0 0.0
    %1210 = vmatpush2.xpose.msra.mxu0 0.0
    %1211 = vmatprep.subr.mxu0 0.0
    %1212 = vmatpush2.xpose.msra.mxu0 0.0
    %1213 = vmatprep.subr.mxu0 0.0
    %1214 = vmatpush2.xpose.msra.mxu0 0.0
    %1215 = vmatprep.subr.mxu0 0.0
    %1216 = vmatpush2.xpose.msra.mxu0 0.0
    %1217 = vmatprep.subr.mxu0 0.0
    %1218 = vmatpush2.xpose.msra.mxu0 0.0
    %1219 = vmatprep.subr.mxu0 0.0
    %1220 = vmatpush2.xpose.msra.mxu0 0.0
    %1221 = vmatprep.subr.mxu0 0.0
    %1222 = vmatpush2.xpose.msra.mxu0 0.0
    %1223 = vmatprep.subr.mxu0 0.0
    %1224 = vmatpush2.xpose.msra.mxu0 0.0
    %1225 = vmatprep.subr.mxu0 0.0
    %1226 = vmatpush2.xpose.msra.mxu0 0.0
    %1227 = vmatprep.subr.mxu0 0.0
    %1228 = vmatpush2.xpose.msra.mxu0 0.0
    %1229 = vmatprep.subr.mxu0 0.0
    %1230 = vmatpush2.xpose.msra.mxu0 0.0
    %1231 = vmatprep.subr.mxu0 0.0
    %1232 = vmatpush2.xpose.msra.mxu0 0.0
    %1233 = vmatprep.subr.mxu0 0.0
    %1234 = vmatpush2.xpose.msra.mxu0 0.0
    %1235 = vmatprep.mubr.f32.mxu0 0.0
    %1236 = vmatmul.mubr.f32.gmra.mxu0 %v363
    %v1237 = vpop.f32.mrf.mxu0
    %v1238 = vadd.f32 0.0, %v1237
    %v1239 = vpop.f32.mrf.mxu0
    %1240 = vmatprep.mubr.f32.mxu0 0.0
    %1241 = vmatmul.mubr.f32.gmra.mxu0 %v368
    %v1242 = vpop.f32.mrf.mxu0
    %v1243 = vadd.f32 0.0, %v1242
    %v1244 = vpop.f32.mrf.mxu0
    %1245 = vdwg.mxu0
    %1246 = vmatprep.subr.mxu0 0.0
    %1247 = vmatpush1.xpose.msra.mxu0 0.0
    %1248 = vmatprep.subr.mxu0 0.0
    %1249 = vmatpush1.xpose.msra.mxu0 0.0
    %1250 = vmatprep.subr.mxu0 0.0
    %1251 = vmatpush1.xpose.msra.mxu0 0.0
    %1252 = vmatprep.subr.mxu0 0.0
    %1253 = vmatpush1.xpose.msra.mxu0 0.0
    %1254 = vmatprep.subr.mxu0 0.0
    %1255 = vmatpush1.xpose.msra.mxu0 0.0
    %1256 = vmatprep.subr.mxu0 0.0
    %1257 = vmatpush1.xpose.msra.mxu0 0.0
    %1258 = vmatprep.subr.mxu0 0.0
    %1259 = vmatpush1.xpose.msra.mxu0 0.0
    %1260 = vmatprep.subr.mxu0 0.0
    %1261 = vmatpush1.xpose.msra.mxu0 0.0
    %1262 = vmatprep.subr.mxu0 0.0
    %1263 = vmatpush1.xpose.msra.mxu0 0.0
    %1264 = vmatprep.subr.mxu0 0.0
    %1265 = vmatpush1.xpose.msra.mxu0 0.0
    %1266 = vmatprep.subr.mxu0 0.0
    %1267 = vmatpush1.xpose.msra.mxu0 0.0
    %1268 = vmatprep.subr.mxu0 0.0
    %1269 = vmatpush1.xpose.msra.mxu0 0.0
    %1270 = vmatprep.subr.mxu0 0.0
    %1271 = vmatpush1.xpose.msra.mxu0 0.0
    %1272 = vmatprep.subr.mxu0 0.0
    %1273 = vmatpush1.xpose.msra.mxu0 %v119
    %1274 = vmatprep.subr.mxu0 0.0
    %1275 = vmatpush1.xpose.msra.mxu0 %v118
    %1276 = vmatprep.subr.mxu0 0.0
    %1277 = vmatpush1.xpose.msra.mxu0 %v117
    %1278 = vmatprep.subr.mxu0 0.0
    %1279 = vmatpush2.xpose.msra.mxu0 0.0
    %1280 = vmatprep.subr.mxu0 0.0
    %1281 = vmatpush2.xpose.msra.mxu0 0.0
    %1282 = vmatprep.subr.mxu0 0.0
    %1283 = vmatpush2.xpose.msra.mxu0 0.0
    %1284 = vmatprep.subr.mxu0 0.0
    %1285 = vmatpush2.xpose.msra.mxu0 0.0
    %1286 = vmatprep.subr.mxu0 0.0
    %1287 = vmatpush2.xpose.msra.mxu0 0.0
    %1288 = vmatprep.subr.mxu0 0.0
    %1289 = vmatpush2.xpose.msra.mxu0 0.0
    %1290 = vmatprep.subr.mxu0 0.0
    %1291 = vmatpush2.xpose.msra.mxu0 0.0
    %1292 = vmatprep.subr.mxu0 0.0
    %1293 = vmatpush2.xpose.msra.mxu0 0.0
    %1294 = vmatprep.subr.mxu0 0.0
    %1295 = vmatpush2.xpose.msra.mxu0 0.0
    %1296 = vmatprep.subr.mxu0 0.0
    %1297 = vmatpush2.xpose.msra.mxu0 0.0
    %1298 = vmatprep.subr.mxu0 0.0
    %1299 = vmatpush2.xpose.msra.mxu0 0.0
    %1300 = vmatprep.subr.mxu0 0.0
    %1301 = vmatpush2.xpose.msra.mxu0 0.0
    %1302 = vmatprep.subr.mxu0 0.0
    %1303 = vmatpush2.xpose.msra.mxu0 0.0
    %1304 = vmatprep.subr.mxu0 0.0
    %1305 = vmatpush2.xpose.msra.mxu0 0.0
    %1306 = vmatprep.subr.mxu0 0.0
    %1307 = vmatpush2.xpose.msra.mxu0 0.0
    %1308 = vmatprep.subr.mxu0 0.0
    %1309 = vmatpush2.xpose.msra.mxu0 0.0
    %1310 = vmatprep.mubr.f32.mxu0 0.0
    %1311 = vmatmul.mubr.f32.gmra.mxu0 %v373
    %v1312 = vpop.f32.mrf.mxu0
    %v1313 = vadd.f32 0.0, %v1312
    %v1314 = vpop.f32.mrf.mxu0
    %1315 = vmatprep.mubr.f32.mxu0 0.0
    %1316 = vmatmul.mubr.f32.gmra.mxu0 %v378
    %v1317 = vpop.f32.mrf.mxu0
    %v1318 = vadd.f32 0.0, %v1317
    %v1319 = vpop.f32.mrf.mxu0
    %1320 = vdwg.mxu0
    %1321 = vmatprep.subr.mxu0 0.0
    %1322 = vmatpush1.xpose.msra.mxu0 0.0
    %1323 = vmatprep.subr.mxu0 0.0
    %1324 = vmatpush1.xpose.msra.mxu0 0.0
    %1325 = vmatprep.subr.mxu0 0.0
    %1326 = vmatpush1.xpose.msra.mxu0 0.0
    %1327 = vmatprep.subr.mxu0 0.0
    %1328 = vmatpush1.xpose.msra.mxu0 0.0
    %1329 = vmatprep.subr.mxu0 0.0
    %1330 = vmatpush1.xpose.msra.mxu0 0.0
    %1331 = vmatprep.subr.mxu0 0.0
    %1332 = vmatpush1.xpose.msra.mxu0 0.0
    %1333 = vmatprep.subr.mxu0 0.0
    %1334 = vmatpush1.xpose.msra.mxu0 0.0
    %1335 = vmatprep.subr.mxu0 0.0
    %1336 = vmatpush1.xpose.msra.mxu0 0.0
    %1337 = vmatprep.subr.mxu0 0.0
    %1338 = vmatpush1.xpose.msra.mxu0 0.0
    %1339 = vmatprep.subr.mxu0 0.0
    %1340 = vmatpush1.xpose.msra.mxu0 0.0
    %1341 = vmatprep.subr.mxu0 0.0
    %1342 = vmatpush1.xpose.msra.mxu0 0.0
    %1343 = vmatprep.subr.mxu0 0.0
    %1344 = vmatpush1.xpose.msra.mxu0 0.0
    %1345 = vmatprep.subr.mxu0 0.0
    %1346 = vmatpush1.xpose.msra.mxu0 0.0
    %1347 = vmatprep.subr.mxu0 0.0
    %1348 = vmatpush1.xpose.msra.mxu0 %v122
    %1349 = vmatprep.subr.mxu0 0.0
    %1350 = vmatpush1.xpose.msra.mxu0 %v121
    %1351 = vmatprep.subr.mxu0 0.0
    %1352 = vmatpush1.xpose.msra.mxu0 %v120
    %1353 = vmatprep.subr.mxu0 0.0
    %1354 = vmatpush2.xpose.msra.mxu0 0.0
    %1355 = vmatprep.subr.mxu0 0.0
    %1356 = vmatpush2.xpose.msra.mxu0 0.0
    %1357 = vmatprep.subr.mxu0 0.0
    %1358 = vmatpush2.xpose.msra.mxu0 0.0
    %1359 = vmatprep.subr.mxu0 0.0
    %1360 = vmatpush2.xpose.msra.mxu0 0.0
    %1361 = vmatprep.subr.mxu0 0.0
    %1362 = vmatpush2.xpose.msra.mxu0 0.0
    %1363 = vmatprep.subr.mxu0 0.0
    %1364 = vmatpush2.xpose.msra.mxu0 0.0
    %1365 = vmatprep.subr.mxu0 0.0
    %1366 = vmatpush2.xpose.msra.mxu0 0.0
    %1367 = vmatprep.subr.mxu0 0.0
    %1368 = vmatpush2.xpose.msra.mxu0 0.0
    %1369 = vmatprep.subr.mxu0 0.0
    %1370 = vmatpush2.xpose.msra.mxu0 0.0
    %1371 = vmatprep.subr.mxu0 0.0
    %1372 = vmatpush2.xpose.msra.mxu0 0.0
    %1373 = vmatprep.subr.mxu0 0.0
    %1374 = vmatpush2.xpose.msra.mxu0 0.0
    %1375 = vmatprep.subr.mxu0 0.0
    %1376 = vmatpush2.xpose.msra.mxu0 0.0
    %1377 = vmatprep.subr.mxu0 0.0
    %1378 = vmatpush2.xpose.msra.mxu0 0.0
    %1379 = vmatprep.subr.mxu0 0.0
    %1380 = vmatpush2.xpose.msra.mxu0 0.0
    %1381 = vmatprep.subr.mxu0 0.0
    %1382 = vmatpush2.xpose.msra.mxu0 0.0
    %1383 = vmatprep.subr.mxu0 0.0
    %1384 = vmatpush2.xpose.msra.mxu0 0.0
    %1385 = vmatprep.mubr.f32.mxu0 0.0
    %1386 = vmatmul.mubr.f32.gmra.mxu0 %v383
    %v1387 = vpop.f32.mrf.mxu0
    %v1388 = vadd.f32 0.0, %v1387
    %v1389 = vpop.f32.mrf.mxu0
    %1390 = vmatprep.mubr.f32.mxu0 0.0
    %1391 = vmatmul.mubr.f32.gmra.mxu0 %v388
    %v1392 = vpop.f32.mrf.mxu0
    %v1393 = vadd.f32 0.0, %v1392
    %v1394 = vpop.f32.mrf.mxu0
    %1395 = vdwg.mxu0
    %1396 = vmatprep.subr.mxu0 0.0
    %1397 = vmatpush1.xpose.msra.mxu0 0.0
    %1398 = vmatprep.subr.mxu0 0.0
    %1399 = vmatpush1.xpose.msra.mxu0 0.0
    %1400 = vmatprep.subr.mxu0 0.0
    %1401 = vmatpush1.xpose.msra.mxu0 0.0
    %1402 = vmatprep.subr.mxu0 0.0
    %1403 = vmatpush1.xpose.msra.mxu0 0.0
    %1404 = vmatprep.subr.mxu0 0.0
    %1405 = vmatpush1.xpose.msra.mxu0 0.0
    %1406 = vmatprep.subr.mxu0 0.0
    %1407 = vmatpush1.xpose.msra.mxu0 0.0
    %1408 = vmatprep.subr.mxu0 0.0
    %1409 = vmatpush1.xpose.msra.mxu0 0.0
    %1410 = vmatprep.subr.mxu0 0.0
    %1411 = vmatpush1.xpose.msra.mxu0 0.0
    %1412 = vmatprep.subr.mxu0 0.0
    %1413 = vmatpush1.xpose.msra.mxu0 0.0
    %1414 = vmatprep.subr.mxu0 0.0
    %1415 = vmatpush1.xpose.msra.mxu0 0.0
    %1416 = vmatprep.subr.mxu0 0.0
    %1417 = vmatpush1.xpose.msra.mxu0 0.0
    %1418 = vmatprep.subr.mxu0 0.0
    %1419 = vmatpush1.xpose.msra.mxu0 0.0
    %1420 = vmatprep.subr.mxu0 0.0
    %1421 = vmatpush1.xpose.msra.mxu0 0.0
    %1422 = vmatprep.subr.mxu0 0.0
    %1423 = vmatpush1.xpose.msra.mxu0 %v125
    %1424 = vmatprep.subr.mxu0 0.0
    %1425 = vmatpush1.xpose.msra.mxu0 %v124
    %1426 = vmatprep.subr.mxu0 0.0
    %1427 = vmatpush1.xpose.msra.mxu0 %v123
    %1428 = vmatprep.subr.mxu0 0.0
    %1429 = vmatpush2.xpose.msra.mxu0 0.0
    %1430 = vmatprep.subr.mxu0 0.0
    %1431 = vmatpush2.xpose.msra.mxu0 0.0
    %1432 = vmatprep.subr.mxu0 0.0
    %1433 = vmatpush2.xpose.msra.mxu0 0.0
    %1434 = vmatprep.subr.mxu0 0.0
    %1435 = vmatpush2.xpose.msra.mxu0 0.0
    %1436 = vmatprep.subr.mxu0 0.0
    %1437 = vmatpush2.xpose.msra.mxu0 0.0
    %1438 = vmatprep.subr.mxu0 0.0
    %1439 = vmatpush2.xpose.msra.mxu0 0.0
    %1440 = vmatprep.subr.mxu0 0.0
    %1441 = vmatpush2.xpose.msra.mxu0 0.0
    %1442 = vmatprep.subr.mxu0 0.0
    %1443 = vmatpush2.xpose.msra.mxu0 0.0
    %1444 = vmatprep.subr.mxu0 0.0
    %1445 = vmatpush2.xpose.msra.mxu0 0.0
    %1446 = vmatprep.subr.mxu0 0.0
    %1447 = vmatpush2.xpose.msra.mxu0 0.0
    %1448 = vmatprep.subr.mxu0 0.0
    %1449 = vmatpush2.xpose.msra.mxu0 0.0
    %1450 = vmatprep.subr.mxu0 0.0
    %1451 = vmatpush2.xpose.msra.mxu0 0.0
    %1452 = vmatprep.subr.mxu0 0.0
    %1453 = vmatpush2.xpose.msra.mxu0 0.0
    %1454 = vmatprep.subr.mxu0 0.0
    %1455 = vmatpush2.xpose.msra.mxu0 0.0
    %1456 = vmatprep.subr.mxu0 0.0
    %1457 = vmatpush2.xpose.msra.mxu0 0.0
    %1458 = vmatprep.subr.mxu0 0.0
    %1459 = vmatpush2.xpose.msra.mxu0 0.0
    %1460 = vmatprep.mubr.f32.mxu0 0.0
    %1461 = vmatmul.mubr.f32.gmra.mxu0 %v393
    %v1462 = vpop.f32.mrf.mxu0
    %v1463 = vadd.f32 0.0, %v1462
    %v1464 = vpop.f32.mrf.mxu0
    %1465 = vmatprep.mubr.f32.mxu0 0.0
    %1466 = vmatmul.mubr.f32.gmra.mxu0 %v398
    %v1467 = vpop.f32.mrf.mxu0
    %v1468 = vadd.f32 0.0, %v1467
    %v1469 = vpop.f32.mrf.mxu0
    %1470 = vdwg.mxu0
    %1471 = vmatprep.subr.mxu0 0.0
    %1472 = vmatpush1.xpose.msra.mxu0 0.0
    %1473 = vmatprep.subr.mxu0 0.0
    %1474 = vmatpush1.xpose.msra.mxu0 0.0
    %1475 = vmatprep.subr.mxu0 0.0
    %1476 = vmatpush1.xpose.msra.mxu0 0.0
    %1477 = vmatprep.subr.mxu0 0.0
    %1478 = vmatpush1.xpose.msra.mxu0 0.0
    %1479 = vmatprep.subr.mxu0 0.0
    %1480 = vmatpush1.xpose.msra.mxu0 0.0
    %1481 = vmatprep.subr.mxu0 0.0
    %1482 = vmatpush1.xpose.msra.mxu0 0.0
    %1483 = vmatprep.subr.mxu0 0.0
    %1484 = vmatpush1.xpose.msra.mxu0 0.0
    %1485 = vmatprep.subr.mxu0 0.0
    %1486 = vmatpush1.xpose.msra.mxu0 0.0
    %1487 = vmatprep.subr.mxu0 0.0
    %1488 = vmatpush1.xpose.msra.mxu0 0.0
    %1489 = vmatprep.subr.mxu0 0.0
    %1490 = vmatpush1.xpose.msra.mxu0 0.0
    %1491 = vmatprep.subr.mxu0 0.0
    %1492 = vmatpush1.xpose.msra.mxu0 0.0
    %1493 = vmatprep.subr.mxu0 0.0
    %1494 = vmatpush1.xpose.msra.mxu0 0.0
    %1495 = vmatprep.subr.mxu0 0.0
    %1496 = vmatpush1.xpose.msra.mxu0 0.0
    %1497 = vmatprep.subr.mxu0 0.0
    %1498 = vmatpush1.xpose.msra.mxu0 %v128
    %1499 = vmatprep.subr.mxu0 0.0
    %1500 = vmatpush1.xpose.msra.mxu0 %v127
    %1501 = vmatprep.subr.mxu0 0.0
    %1502 = vmatpush1.xpose.msra.mxu0 %v126
    %1503 = vmatprep.subr.mxu0 0.0
    %1504 = vmatpush2.xpose.msra.mxu0 0.0
    %1505 = vmatprep.subr.mxu0 0.0
    %1506 = vmatpush2.xpose.msra.mxu0 0.0
    %1507 = vmatprep.subr.mxu0 0.0
    %1508 = vmatpush2.xpose.msra.mxu0 0.0
    %1509 = vmatprep.subr.mxu0 0.0
    %1510 = vmatpush2.xpose.msra.mxu0 0.0
    %1511 = vmatprep.subr.mxu0 0.0
    %1512 = vmatpush2.xpose.msra.mxu0 0.0
    %1513 = vmatprep.subr.mxu0 0.0
    %1514 = vmatpush2.xpose.msra.mxu0 0.0
    %1515 = vmatprep.subr.mxu0 0.0
    %1516 = vmatpush2.xpose.msra.mxu0 0.0
    %1517 = vmatprep.subr.mxu0 0.0
    %1518 = vmatpush2.xpose.msra.mxu0 0.0
    %1519 = vmatprep.subr.mxu0 0.0
    %1520 = vmatpush2.xpose.msra.mxu0 0.0
    %1521 = vmatprep.subr.mxu0 0.0
    %1522 = vmatpush2.xpose.msra.mxu0 0.0
    %1523 = vmatprep.subr.mxu0 0.0
    %1524 = vmatpush2.xpose.msra.mxu0 0.0
    %1525 = vmatprep.subr.mxu0 0.0
    %1526 = vmatpush2.xpose.msra.mxu0 0.0
    %1527 = vmatprep.subr.mxu0 0.0
    %1528 = vmatpush2.xpose.msra.mxu0 0.0
    %1529 = vmatprep.subr.mxu0 0.0
    %1530 = vmatpush2.xpose.msra.mxu0 0.0
    %1531 = vmatprep.subr.mxu0 0.0
    %1532 = vmatpush2.xpose.msra.mxu0 0.0
    %1533 = vmatprep.subr.mxu0 0.0
    %1534 = vmatpush2.xpose.msra.mxu0 0.0
    %1535 = vmatprep.mubr.f32.mxu0 0.0
    %1536 = vmatmul.mubr.f32.gmra.mxu0 %v403
    %v1537 = vpop.f32.mrf.mxu0
    %v1538 = vadd.f32 0.0, %v1537
    %v1539 = vpop.f32.mrf.mxu0
    %1540 = vmatprep.mubr.f32.mxu0 0.0
    %1541 = vmatmul.mubr.f32.gmra.mxu0 %v408
    %v1542 = vpop.f32.mrf.mxu0
    %v1543 = vadd.f32 0.0, %v1542
    %v1544 = vpop.f32.mrf.mxu0
    %1545 = vdwg.mxu0
    %1546 = vmatprep.subr.mxu0 0.0
    %1547 = vmatpush1.xpose.msra.mxu0 0.0
    %1548 = vmatprep.subr.mxu0 0.0
    %1549 = vmatpush1.xpose.msra.mxu0 0.0
    %1550 = vmatprep.subr.mxu0 0.0
    %1551 = vmatpush1.xpose.msra.mxu0 0.0
    %1552 = vmatprep.subr.mxu0 0.0
    %1553 = vmatpush1.xpose.msra.mxu0 0.0
    %1554 = vmatprep.subr.mxu0 0.0
    %1555 = vmatpush1.xpose.msra.mxu0 0.0
    %1556 = vmatprep.subr.mxu0 0.0
    %1557 = vmatpush1.xpose.msra.mxu0 0.0
    %1558 = vmatprep.subr.mxu0 0.0
    %1559 = vmatpush1.xpose.msra.mxu0 0.0
    %1560 = vmatprep.subr.mxu0 0.0
    %1561 = vmatpush1.xpose.msra.mxu0 0.0
    %1562 = vmatprep.subr.mxu0 0.0
    %1563 = vmatpush1.xpose.msra.mxu0 0.0
    %1564 = vmatprep.subr.mxu0 0.0
    %1565 = vmatpush1.xpose.msra.mxu0 0.0
    %1566 = vmatprep.subr.mxu0 0.0
    %1567 = vmatpush1.xpose.msra.mxu0 0.0
    %1568 = vmatprep.subr.mxu0 0.0
    %1569 = vmatpush1.xpose.msra.mxu0 0.0
    %1570 = vmatprep.subr.mxu0 0.0
    %1571 = vmatpush1.xpose.msra.mxu0 0.0
    %1572 = vmatprep.subr.mxu0 0.0
    %1573 = vmatpush1.xpose.msra.mxu0 %v131
    %1574 = vmatprep.subr.mxu0 0.0
    %1575 = vmatpush1.xpose.msra.mxu0 %v130
    %1576 = vmatprep.subr.mxu0 0.0
    %1577 = vmatpush1.xpose.msra.mxu0 %v129
    %1578 = vmatprep.subr.mxu0 0.0
    %1579 = vmatpush2.xpose.msra.mxu0 0.0
    %1580 = vmatprep.subr.mxu0 0.0
    %1581 = vmatpush2.xpose.msra.mxu0 0.0
    %1582 = vmatprep.subr.mxu0 0.0
    %1583 = vmatpush2.xpose.msra.mxu0 0.0
    %1584 = vmatprep.subr.mxu0 0.0
    %1585 = vmatpush2.xpose.msra.mxu0 0.0
    %1586 = vmatprep.subr.mxu0 0.0
    %1587 = vmatpush2.xpose.msra.mxu0 0.0
    %1588 = vmatprep.subr.mxu0 0.0
    %1589 = vmatpush2.xpose.msra.mxu0 0.0
    %1590 = vmatprep.subr.mxu0 0.0
    %1591 = vmatpush2.xpose.msra.mxu0 0.0
    %1592 = vmatprep.subr.mxu0 0.0
    %1593 = vmatpush2.xpose.msra.mxu0 0.0
    %1594 = vmatprep.subr.mxu0 0.0
    %1595 = vmatpush2.xpose.msra.mxu0 0.0
    %1596 = vmatprep.subr.mxu0 0.0
    %1597 = vmatpush2.xpose.msra.mxu0 0.0
    %1598 = vmatprep.subr.mxu0 0.0
    %1599 = vmatpush2.xpose.msra.mxu0 0.0
    %1600 = vmatprep.subr.mxu0 0.0
    %1601 = vmatpush2.xpose.msra.mxu0 0.0
    %1602 = vmatprep.subr.mxu0 0.0
    %1603 = vmatpush2.xpose.msra.mxu0 0.0
    %1604 = vmatprep.subr.mxu0 0.0
    %1605 = vmatpush2.xpose.msra.mxu0 0.0
    %1606 = vmatprep.subr.mxu0 0.0
    %1607 = vmatpush2.xpose.msra.mxu0 0.0
    %1608 = vmatprep.subr.mxu0 0.0
    %1609 = vmatpush2.xpose.msra.mxu0 0.0
    %1610 = vmatprep.mubr.f32.mxu0 0.0
    %1611 = vmatmul.mubr.f32.gmra.mxu0 %v413
    %v1612 = vpop.f32.mrf.mxu0
    %v1613 = vadd.f32 0.0, %v1612
    %v1614 = vpop.f32.mrf.mxu0
    %1615 = vmatprep.mubr.f32.mxu0 0.0
    %1616 = vmatmul.mubr.f32.gmra.mxu0 %v418
    %v1617 = vpop.f32.mrf.mxu0
    %v1618 = vadd.f32 0.0, %v1617
    %v1619 = vpop.f32.mrf.mxu0
    %1620 = vdwg.mxu0
    %1622 = vset.pattern.permute.xlu0 0
    %1623 = vperm.xlu0 %1622, %v148
    %v1624 = vpop.permute.xlu0 %1623
    %1627 = vset.pattern.permute.xlu0 0
    %1628 = vperm.xlu0 %1627, %v149
    %v1629 = vpop.permute.xlu0 %1628
    %1632 = vset.pattern.permute.xlu0 0
    %1633 = vperm.xlu0 %1632, %v150
    %v1634 = vpop.permute.xlu0 %1633
    %1637 = vset.pattern.permute.xlu0 0
    %1638 = vperm.xlu0 %1637, %v151
    %v1639 = vpop.permute.xlu0 %1638
    %1642 = vset.pattern.permute.xlu0 0
    %1643 = vperm.xlu0 %1642, %v152
    %v1644 = vpop.permute.xlu0 %1643
    %1647 = vset.pattern.permute.xlu0 0
    %1648 = vperm.xlu0 %1647, %v153
    %v1649 = vpop.permute.xlu0 %1648
    %1652 = vset.pattern.permute.xlu0 0
    %1653 = vperm.xlu0 %1652, %v154
    %v1654 = vpop.permute.xlu0 %1653
    %1657 = vset.pattern.permute.xlu0 0
    %1658 = vperm.xlu0 %1657, %v155
    %v1659 = vpop.permute.xlu0 %1658
    %1662 = vset.pattern.permute.xlu0 0
    %1663 = vperm.xlu0 %1662, %v156
    %v1664 = vpop.permute.xlu0 %1663
    %1667 = vset.pattern.permute.xlu0 0
    %1668 = vperm.xlu0 %1667, %v157
    %v1669 = vpop.permute.xlu0 %1668
    %1672 = vset.pattern.permute.xlu0 0
    %1673 = vperm.xlu0 %1672, %v158
    %v1674 = vpop.permute.xlu0 %1673
    %1677 = vset.pattern.permute.xlu0 0
    %1678 = vperm.xlu0 %1677, %v159
    %v1679 = vpop.permute.xlu0 %1678
    %1682 = vset.pattern.permute.xlu0 0
    %1683 = vperm.xlu0 %1682, %v160
    %v1684 = vpop.permute.xlu0 %1683
    %1687 = vset.pattern.permute.xlu0 0
    %1688 = vperm.xlu0 %1687, %v161
    %v1689 = vpop.permute.xlu0 %1688
    %1692 = vset.pattern.permute.xlu0 0
    %1693 = vperm.xlu0 %1692, %v162
    %v1694 = vpop.permute.xlu0 %1693
    %1697 = vset.pattern.permute.xlu0 0
    %1698 = vperm.xlu0 %1697, %v163
    %v1699 = vpop.permute.xlu0 %1698
    %1702 = vset.pattern.permute.xlu0 0
    %1703 = vperm.xlu0 %1702, %v164
    %v1704 = vpop.permute.xlu0 %1703
    %1707 = vset.pattern.permute.xlu0 0
    %1708 = vperm.xlu0 %1707, %v165
    %v1709 = vpop.permute.xlu0 %1708
    %1712 = vset.pattern.permute.xlu0 0
    %1713 = vperm.xlu0 %1712, %v166
    %v1714 = vpop.permute.xlu0 %1713
    %1717 = vset.pattern.permute.xlu0 0
    %1718 = vperm.xlu0 %1717, %v167
    %v1719 = vpop.permute.xlu0 %1718
    %1722 = vset.pattern.permute.xlu0 0
    %1723 = vperm.xlu0 %1722, %v168
    %v1724 = vpop.permute.xlu0 %1723
    %1727 = vset.pattern.permute.xlu0 0
    %1728 = vperm.xlu0 %1727, %v169
    %v1729 = vpop.permute.xlu0 %1728
    %1732 = vset.pattern.permute.xlu0 0
    %1733 = vperm.xlu0 %1732, %v170
    %v1734 = vpop.permute.xlu0 %1733
    %1737 = vset.pattern.permute.xlu0 0
    %1738 = vperm.xlu0 %1737, %v171
    %v1739 = vpop.permute.xlu0 %1738
    %1742 = vset.pattern.permute.xlu0 0
    %1743 = vperm.xlu0 %1742, %v172
    %v1744 = vpop.permute.xlu0 %1743
    %1747 = vset.pattern.permute.xlu0 0
    %1748 = vperm.xlu0 %1747, %v173
    %v1749 = vpop.permute.xlu0 %1748
    %1752 = vset.pattern.permute.xlu0 0
    %1753 = vperm.xlu0 %1752, %v174
    %v1754 = vpop.permute.xlu0 %1753
    %1757 = vset.pattern.permute.xlu0 0
    %1758 = vperm.xlu0 %1757, %v175
    %v1759 = vpop.permute.xlu0 %1758
    %1762 = vset.pattern.permute.xlu0 0
    %1763 = vperm.xlu0 %1762, %v176
    %v1764 = vpop.permute.xlu0 %1763
    %1767 = vset.pattern.permute.xlu0 0
    %1768 = vperm.xlu0 %1767, %v177
    %v1769 = vpop.permute.xlu0 %1768
    %1772 = vset.pattern.permute.xlu0 0
    %1773 = vperm.xlu0 %1772, %v178
    %v1774 = vpop.permute.xlu0 %1773
    %1777 = vset.pattern.permute.xlu0 0
    %1778 = vperm.xlu0 %1777, %v179
    %v1779 = vpop.permute.xlu0 %1778
    %v1797 = vlaneseq
    %v1798 = vshrl.u32 %v1797, 7
    %v1799 = vsub.s32 0, %v1798
    %v1800 = vrot.slane %v180, %v1799
    %v1801 = vlaneseq
    %v1802 = vshrl.u32 %v1801, 7
    %v1803 = vsub.s32 0, %v1802
    %v1804 = vrot.slane %v181, %v1803
    %v1805 = vlaneseq
    %v1806 = vshrl.u32 %v1805, 7
    %v1807 = vsub.s32 0, %v1806
    %v1808 = vrot.slane %v182, %v1807
    %v1809 = vlaneseq
    %v1810 = vshrl.u32 %v1809, 7
    %v1811 = vsub.s32 0, %v1810
    %v1812 = vrot.slane %v183, %v1811
    %v1813 = vlaneseq
    %v1814 = vshrl.u32 %v1813, 7
    %v1815 = vsub.s32 0, %v1814
    %v1816 = vrot.slane %v184, %v1815
    %v1817 = vlaneseq
    %v1818 = vshrl.u32 %v1817, 7
    %v1819 = vsub.s32 0, %v1818
    %v1820 = vrot.slane %v185, %v1819
    %v1821 = vlaneseq
    %v1822 = vshrl.u32 %v1821, 7
    %v1823 = vsub.s32 0, %v1822
    %v1824 = vrot.slane %v186, %v1823
    %v1825 = vlaneseq
    %v1826 = vshrl.u32 %v1825, 7
    %v1827 = vsub.s32 0, %v1826
    %v1828 = vrot.slane %v187, %v1827
    %v1829 = vlaneseq
    %v1830 = vshrl.u32 %v1829, 7
    %v1831 = vsub.s32 0, %v1830
    %v1832 = vrot.slane %v188, %v1831
    %v1833 = vlaneseq
    %v1834 = vshrl.u32 %v1833, 7
    %v1835 = vsub.s32 0, %v1834
    %v1836 = vrot.slane %v189, %v1835
    %v1837 = vlaneseq
    %v1838 = vshrl.u32 %v1837, 7
    %v1839 = vsub.s32 0, %v1838
    %v1840 = vrot.slane %v190, %v1839
    %v1841 = vlaneseq
    %v1842 = vshrl.u32 %v1841, 7
    %v1843 = vsub.s32 0, %v1842
    %v1844 = vrot.slane %v191, %v1843
    %v1845 = vlaneseq
    %v1846 = vshrl.u32 %v1845, 7
    %v1847 = vsub.s32 0, %v1846
    %v1848 = vrot.slane %v192, %v1847
    %v1849 = vlaneseq
    %v1850 = vshrl.u32 %v1849, 7
    %v1851 = vsub.s32 0, %v1850
    %v1852 = vrot.slane %v193, %v1851
    %v1853 = vlaneseq
    %v1854 = vshrl.u32 %v1853, 7
    %v1855 = vsub.s32 0, %v1854
    %v1856 = vrot.slane %v194, %v1855
    %v1857 = vlaneseq
    %v1858 = vshrl.u32 %v1857, 7
    %v1859 = vsub.s32 0, %v1858
    %v1860 = vrot.slane %v195, %v1859
    %v1877 = vadd.f32 %v1624, %v1800
    %v1878 = vadd.f32 %v1629, %v1800
    %v1879 = vadd.f32 %v1634, %v1804
    %v1880 = vadd.f32 %v1639, %v1804
    %v1881 = vadd.f32 %v1644, %v1808
    %v1882 = vadd.f32 %v1649, %v1808
    %v1883 = vadd.f32 %v1654, %v1812
    %v1884 = vadd.f32 %v1659, %v1812
    %v1885 = vadd.f32 %v1664, %v1816
    %v1886 = vadd.f32 %v1669, %v1816
    %v1887 = vadd.f32 %v1674, %v1820
    %v1888 = vadd.f32 %v1679, %v1820
    %v1889 = vadd.f32 %v1684, %v1824
    %v1890 = vadd.f32 %v1689, %v1824
    %v1891 = vadd.f32 %v1694, %v1828
    %v1892 = vadd.f32 %v1699, %v1828
    %v1893 = vadd.f32 %v1704, %v1832
    %v1894 = vadd.f32 %v1709, %v1832
    %v1895 = vadd.f32 %v1714, %v1836
    %v1896 = vadd.f32 %v1719, %v1836
    %v1897 = vadd.f32 %v1724, %v1840
    %v1898 = vadd.f32 %v1729, %v1840
    %v1899 = vadd.f32 %v1734, %v1844
    %v1900 = vadd.f32 %v1739, %v1844
    %v1901 = vadd.f32 %v1744, %v1848
    %v1902 = vadd.f32 %v1749, %v1848
    %v1903 = vadd.f32 %v1754, %v1852
    %v1904 = vadd.f32 %v1759, %v1852
    %v1905 = vadd.f32 %v1764, %v1856
    %v1906 = vadd.f32 %v1769, %v1856
    %v1907 = vadd.f32 %v1774, %v1860
    %v1908 = vadd.f32 %v1779, %v1860
    %vm1909 = vcmp.gt.f32.partialorder %v1877, 0.0
    %vm1910 = vcmp.gt.f32.partialorder %v1878, 0.0
    %vm1911 = vcmp.gt.f32.partialorder %v1879, 0.0
    %vm1912 = vcmp.gt.f32.partialorder %v1880, 0.0
    %vm1913 = vcmp.gt.f32.partialorder %v1881, 0.0
    %vm1914 = vcmp.gt.f32.partialorder %v1882, 0.0
    %vm1915 = vcmp.gt.f32.partialorder %v1883, 0.0
    %vm1916 = vcmp.gt.f32.partialorder %v1884, 0.0
    %vm1917 = vcmp.gt.f32.partialorder %v1885, 0.0
    %vm1918 = vcmp.gt.f32.partialorder %v1886, 0.0
    %vm1919 = vcmp.gt.f32.partialorder %v1887, 0.0
    %vm1920 = vcmp.gt.f32.partialorder %v1888, 0.0
    %vm1921 = vcmp.gt.f32.partialorder %v1889, 0.0
    %vm1922 = vcmp.gt.f32.partialorder %v1890, 0.0
    %vm1923 = vcmp.gt.f32.partialorder %v1891, 0.0
    %vm1924 = vcmp.gt.f32.partialorder %v1892, 0.0
    %vm1925 = vcmp.gt.f32.partialorder %v1893, 0.0
    %vm1926 = vcmp.gt.f32.partialorder %v1894, 0.0
    %vm1927 = vcmp.gt.f32.partialorder %v1895, 0.0
    %vm1928 = vcmp.gt.f32.partialorder %v1896, 0.0
    %vm1929 = vcmp.gt.f32.partialorder %v1897, 0.0
    %vm1930 = vcmp.gt.f32.partialorder %v1898, 0.0
    %vm1931 = vcmp.gt.f32.partialorder %v1899, 0.0
    %vm1932 = vcmp.gt.f32.partialorder %v1900, 0.0
    %vm1933 = vcmp.gt.f32.partialorder %v1901, 0.0
    %vm1934 = vcmp.gt.f32.partialorder %v1902, 0.0
    %vm1935 = vcmp.gt.f32.partialorder %v1903, 0.0
    %vm1936 = vcmp.gt.f32.partialorder %v1904, 0.0
    %vm1937 = vcmp.gt.f32.partialorder %v1905, 0.0
    %vm1938 = vcmp.gt.f32.partialorder %v1906, 0.0
    %vm1939 = vcmp.gt.f32.partialorder %v1907, 0.0
    %vm1940 = vcmp.gt.f32.partialorder %v1908, 0.0
    %v1941 = vmax.f32 %v488, 0.0
    %v1942 = vmax.f32 %v493, 0.0
    %v1943 = vmax.f32 %v563, 0.0
    %v1944 = vmax.f32 %v568, 0.0
    %v1945 = vmax.f32 %v638, 0.0
    %v1946 = vmax.f32 %v643, 0.0
    %v1947 = vmax.f32 %v713, 0.0
    %v1948 = vmax.f32 %v718, 0.0
    %v1949 = vmax.f32 %v788, 0.0
    %v1950 = vmax.f32 %v793, 0.0
    %v1951 = vmax.f32 %v863, 0.0
    %v1952 = vmax.f32 %v868, 0.0
    %v1953 = vmax.f32 %v938, 0.0
    %v1954 = vmax.f32 %v943, 0.0
    %v1955 = vmax.f32 %v1013, 0.0
    %v1956 = vmax.f32 %v1018, 0.0
    %v1957 = vmax.f32 %v1088, 0.0
    %v1958 = vmax.f32 %v1093, 0.0
    %v1959 = vmax.f32 %v1163, 0.0
    %v1960 = vmax.f32 %v1168, 0.0
    %v1961 = vmax.f32 %v1238, 0.0
    %v1962 = vmax.f32 %v1243, 0.0
    %v1963 = vmax.f32 %v1313, 0.0
    %v1964 = vmax.f32 %v1318, 0.0
    %v1965 = vmax.f32 %v1388, 0.0
    %v1966 = vmax.f32 %v1393, 0.0
    %v1967 = vmax.f32 %v1463, 0.0
    %v1968 = vmax.f32 %v1468, 0.0
    %v1969 = vmax.f32 %v1538, 0.0
    %v1970 = vmax.f32 %v1543, 0.0
    %v1971 = vmax.f32 %v1613, 0.0
    %v1972 = vmax.f32 %v1618, 0.0
    %v1973 = vsel %vm1909, -10000.0, %v1941
    %v1974 = vsel %vm1910, -10000.0, %v1942
    %v1975 = vsel %vm1911, -10000.0, %v1943
    %v1976 = vsel %vm1912, -10000.0, %v1944
    %v1977 = vsel %vm1913, -10000.0, %v1945
    %v1978 = vsel %vm1914, -10000.0, %v1946
    %v1979 = vsel %vm1915, -10000.0, %v1947
    %v1980 = vsel %vm1916, -10000.0, %v1948
    %v1981 = vsel %vm1917, -10000.0, %v1949
    %v1982 = vsel %vm1918, -10000.0, %v1950
    %v1983 = vsel %vm1919, -10000.0, %v1951
    %v1984 = vsel %vm1920, -10000.0, %v1952
    %v1985 = vsel %vm1921, -10000.0, %v1953
    %v1986 = vsel %vm1922, -10000.0, %v1954
    %v1987 = vsel %vm1923, -10000.0, %v1955
    %v1988 = vsel %vm1924, -10000.0, %v1956
    %v1989 = vsel %vm1925, -10000.0, %v1957
    %v1990 = vsel %vm1926, -10000.0, %v1958
    %v1991 = vsel %vm1927, -10000.0, %v1959
    %v1992 = vsel %vm1928, -10000.0, %v1960
    %v1993 = vsel %vm1929, -10000.0, %v1961
    %v1994 = vsel %vm1930, -10000.0, %v1962
    %v1995 = vsel %vm1931, -10000.0, %v1963
    %v1996 = vsel %vm1932, -10000.0, %v1964
    %v1997 = vsel %vm1933, -10000.0, %v1965
    %v1998 = vsel %vm1934, -10000.0, %v1966
    %v1999 = vsel %vm1935, -10000.0, %v1967
    %v2000 = vsel %vm1936, -10000.0, %v1968
    %v2001 = vsel %vm1937, -10000.0, %v1969
    %v2002 = vsel %vm1938, -10000.0, %v1970
    %v2003 = vsel %vm1939, -10000.0, %v1971
    %v2004 = vsel %vm1940, -10000.0, %v1972
    %vm2005 = vcmask 195584
    %v2006 = vsel %vm2005, %v1973, -inf
    %2007 = vmax.xlane.f32.xlu0 %v2006
    %v2008 = vpop.xlane.xlu0 %2007
    %v2009 = vsel %vm2005, %v1974, -inf
    %2010 = vmax.xlane.f32.xlu0 %v2009
    %v2011 = vpop.xlane.xlu0 %2010
    %v2012 = vsel %vm2005, %v1975, -inf
    %2013 = vmax.xlane.f32.xlu0 %v2012
    %v2014 = vpop.xlane.xlu0 %2013
    %v2015 = vsel %vm2005, %v1976, -inf
    %2016 = vmax.xlane.f32.xlu0 %v2015
    %v2017 = vpop.xlane.xlu0 %2016
    %v2018 = vsel %vm2005, %v1977, -inf
    %2019 = vmax.xlane.f32.xlu0 %v2018
    %v2020 = vpop.xlane.xlu0 %2019
    %v2021 = vsel %vm2005, %v1978, -inf
    %2022 = vmax.xlane.f32.xlu0 %v2021
    %v2023 = vpop.xlane.xlu0 %2022
    %v2024 = vsel %vm2005, %v1979, -inf
    %2025 = vmax.xlane.f32.xlu0 %v2024
    %v2026 = vpop.xlane.xlu0 %2025
    %v2027 = vsel %vm2005, %v1980, -inf
    %2028 = vmax.xlane.f32.xlu0 %v2027
    %v2029 = vpop.xlane.xlu0 %2028
    %v2030 = vsel %vm2005, %v1981, -inf
    %2031 = vmax.xlane.f32.xlu0 %v2030
    %v2032 = vpop.xlane.xlu0 %2031
    %v2033 = vsel %vm2005, %v1982, -inf
    %2034 = vmax.xlane.f32.xlu0 %v2033
    %v2035 = vpop.xlane.xlu0 %2034
    %v2036 = vsel %vm2005, %v1983, -inf
    %2037 = vmax.xlane.f32.xlu0 %v2036
    %v2038 = vpop.xlane.xlu0 %2037
    %v2039 = vsel %vm2005, %v1984, -inf
    %2040 = vmax.xlane.f32.xlu0 %v2039
    %v2041 = vpop.xlane.xlu0 %2040
    %v2042 = vsel %vm2005, %v1985, -inf
    %2043 = vmax.xlane.f32.xlu0 %v2042
    %v2044 = vpop.xlane.xlu0 %2043
    %v2045 = vsel %vm2005, %v1986, -inf
    %2046 = vmax.xlane.f32.xlu0 %v2045
    %v2047 = vpop.xlane.xlu0 %2046
    %v2048 = vsel %vm2005, %v1987, -inf
    %2049 = vmax.xlane.f32.xlu0 %v2048
    %v2050 = vpop.xlane.xlu0 %2049
    %v2051 = vsel %vm2005, %v1988, -inf
    %2052 = vmax.xlane.f32.xlu0 %v2051
    %v2053 = vpop.xlane.xlu0 %2052
    %v2054 = vsel %vm2005, %v1989, -inf
    %2055 = vmax.xlane.f32.xlu0 %v2054
    %v2056 = vpop.xlane.xlu0 %2055
    %v2057 = vsel %vm2005, %v1990, -inf
    %2058 = vmax.xlane.f32.xlu0 %v2057
    %v2059 = vpop.xlane.xlu0 %2058
    %v2060 = vsel %vm2005, %v1991, -inf
    %2061 = vmax.xlane.f32.xlu0 %v2060
    %v2062 = vpop.xlane.xlu0 %2061
    %v2063 = vsel %vm2005, %v1992, -inf
    %2064 = vmax.xlane.f32.xlu0 %v2063
    %v2065 = vpop.xlane.xlu0 %2064
    %v2066 = vsel %vm2005, %v1993, -inf
    %2067 = vmax.xlane.f32.xlu0 %v2066
    %v2068 = vpop.xlane.xlu0 %2067
    %v2069 = vsel %vm2005, %v1994, -inf
    %2070 = vmax.xlane.f32.xlu0 %v2069
    %v2071 = vpop.xlane.xlu0 %2070
    %v2072 = vsel %vm2005, %v1995, -inf
    %2073 = vmax.xlane.f32.xlu0 %v2072
    %v2074 = vpop.xlane.xlu0 %2073
    %v2075 = vsel %vm2005, %v1996, -inf
    %2076 = vmax.xlane.f32.xlu0 %v2075
    %v2077 = vpop.xlane.xlu0 %2076
    %v2078 = vsel %vm2005, %v1997, -inf
    %2079 = vmax.xlane.f32.xlu0 %v2078
    %v2080 = vpop.xlane.xlu0 %2079
    %v2081 = vsel %vm2005, %v1998, -inf
    %2082 = vmax.xlane.f32.xlu0 %v2081
    %v2083 = vpop.xlane.xlu0 %2082
    %v2084 = vsel %vm2005, %v1999, -inf
    %2085 = vmax.xlane.f32.xlu0 %v2084
    %v2086 = vpop.xlane.xlu0 %2085
    %v2087 = vsel %vm2005, %v2000, -inf
    %2088 = vmax.xlane.f32.xlu0 %v2087
    %v2089 = vpop.xlane.xlu0 %2088
    %v2090 = vsel %vm2005, %v2001, -inf
    %2091 = vmax.xlane.f32.xlu0 %v2090
    %v2092 = vpop.xlane.xlu0 %2091
    %v2093 = vsel %vm2005, %v2002, -inf
    %2094 = vmax.xlane.f32.xlu0 %v2093
    %v2095 = vpop.xlane.xlu0 %2094
    %v2096 = vsel %vm2005, %v2003, -inf
    %2097 = vmax.xlane.f32.xlu0 %v2096
    %v2098 = vpop.xlane.xlu0 %2097
    %v2099 = vsel %vm2005, %v2004, -inf
    %2100 = vmax.xlane.f32.xlu0 %v2099
    %v2101 = vpop.xlane.xlu0 %2100
    %v2102 = vmax.f32 %v2006, %v2009
    %v2103 = vrot.slane %v2102, 4
    %v2104 = vmax.f32 %v2102, %v2103
    %v2105 = vrot.slane %v2104, 2
    %v2106 = vmax.f32 %v2104, %v2105
    %v2107 = vrot.slane %v2106, 1
    %v2108 = vmax.f32 %v2106, %v2107
    %v2109 = vmax.f32 %v2012, %v2015
    %v2110 = vrot.slane %v2109, 4
    %v2111 = vmax.f32 %v2109, %v2110
    %v2112 = vrot.slane %v2111, 2
    %v2113 = vmax.f32 %v2111, %v2112
    %v2114 = vrot.slane %v2113, 1
    %v2115 = vmax.f32 %v2113, %v2114
    %v2116 = vmax.f32 %v2018, %v2021
    %v2117 = vrot.slane %v2116, 4
    %v2118 = vmax.f32 %v2116, %v2117
    %v2119 = vrot.slane %v2118, 2
    %v2120 = vmax.f32 %v2118, %v2119
    %v2121 = vrot.slane %v2120, 1
    %v2122 = vmax.f32 %v2120, %v2121
    %v2123 = vmax.f32 %v2024, %v2027
    %v2124 = vrot.slane %v2123, 4
    %v2125 = vmax.f32 %v2123, %v2124
    %v2126 = vrot.slane %v2125, 2
    %v2127 = vmax.f32 %v2125, %v2126
    %v2128 = vrot.slane %v2127, 1
    %v2129 = vmax.f32 %v2127, %v2128
    %v2130 = vmax.f32 %v2030, %v2033
    %v2131 = vrot.slane %v2130, 4
    %v2132 = vmax.f32 %v2130, %v2131
    %v2133 = vrot.slane %v2132, 2
    %v2134 = vmax.f32 %v2132, %v2133
    %v2135 = vrot.slane %v2134, 1
    %v2136 = vmax.f32 %v2134, %v2135
    %v2137 = vmax.f32 %v2036, %v2039
    %v2138 = vrot.slane %v2137, 4
    %v2139 = vmax.f32 %v2137, %v2138
    %v2140 = vrot.slane %v2139, 2
    %v2141 = vmax.f32 %v2139, %v2140
    %v2142 = vrot.slane %v2141, 1
    %v2143 = vmax.f32 %v2141, %v2142
    %v2144 = vmax.f32 %v2042, %v2045
    %v2145 = vrot.slane %v2144, 4
    %v2146 = vmax.f32 %v2144, %v2145
    %v2147 = vrot.slane %v2146, 2
    %v2148 = vmax.f32 %v2146, %v2147
    %v2149 = vrot.slane %v2148, 1
    %v2150 = vmax.f32 %v2148, %v2149
    %v2151 = vmax.f32 %v2048, %v2051
    %v2152 = vrot.slane %v2151, 4
    %v2153 = vmax.f32 %v2151, %v2152
    %v2154 = vrot.slane %v2153, 2
    %v2155 = vmax.f32 %v2153, %v2154
    %v2156 = vrot.slane %v2155, 1
    %v2157 = vmax.f32 %v2155, %v2156
    %v2158 = vmax.f32 %v2054, %v2057
    %v2159 = vrot.slane %v2158, 4
    %v2160 = vmax.f32 %v2158, %v2159
    %v2161 = vrot.slane %v2160, 2
    %v2162 = vmax.f32 %v2160, %v2161
    %v2163 = vrot.slane %v2162, 1
    %v2164 = vmax.f32 %v2162, %v2163
    %v2165 = vmax.f32 %v2060, %v2063
    %v2166 = vrot.slane %v2165, 4
    %v2167 = vmax.f32 %v2165, %v2166
    %v2168 = vrot.slane %v2167, 2
    %v2169 = vmax.f32 %v2167, %v2168
    %v2170 = vrot.slane %v2169, 1
    %v2171 = vmax.f32 %v2169, %v2170
    %v2172 = vmax.f32 %v2066, %v2069
    %v2173 = vrot.slane %v2172, 4
    %v2174 = vmax.f32 %v2172, %v2173
    %v2175 = vrot.slane %v2174, 2
    %v2176 = vmax.f32 %v2174, %v2175
    %v2177 = vrot.slane %v2176, 1
    %v2178 = vmax.f32 %v2176, %v2177
    %v2179 = vmax.f32 %v2072, %v2075
    %v2180 = vrot.slane %v2179, 4
    %v2181 = vmax.f32 %v2179, %v2180
    %v2182 = vrot.slane %v2181, 2
    %v2183 = vmax.f32 %v2181, %v2182
    %v2184 = vrot.slane %v2183, 1
    %v2185 = vmax.f32 %v2183, %v2184
    %v2186 = vmax.f32 %v2078, %v2081
    %v2187 = vrot.slane %v2186, 4
    %v2188 = vmax.f32 %v2186, %v2187
    %v2189 = vrot.slane %v2188, 2
    %v2190 = vmax.f32 %v2188, %v2189
    %v2191 = vrot.slane %v2190, 1
    %v2192 = vmax.f32 %v2190, %v2191
    %v2193 = vmax.f32 %v2084, %v2087
    %v2194 = vrot.slane %v2193, 4
    %v2195 = vmax.f32 %v2193, %v2194
    %v2196 = vrot.slane %v2195, 2
    %v2197 = vmax.f32 %v2195, %v2196
    %v2198 = vrot.slane %v2197, 1
    %v2199 = vmax.f32 %v2197, %v2198
    %v2200 = vmax.f32 %v2090, %v2093
    %v2201 = vrot.slane %v2200, 4
    %v2202 = vmax.f32 %v2200, %v2201
    %v2203 = vrot.slane %v2202, 2
    %v2204 = vmax.f32 %v2202, %v2203
    %v2205 = vrot.slane %v2204, 1
    %v2206 = vmax.f32 %v2204, %v2205
    %v2207 = vmax.f32 %v2096, %v2099
    %v2208 = vrot.slane %v2207, 4
    %v2209 = vmax.f32 %v2207, %v2208
    %v2210 = vrot.slane %v2209, 2
    %v2211 = vmax.f32 %v2209, %v2210
    %v2212 = vrot.slane %v2211, 1
    %v2213 = vmax.f32 %v2211, %v2212
    %v2214 = vsub.f32 %v1973, %v2008
    %v2215 = vsub.f32 %v1974, %v2011
    %v2216 = vsub.f32 %v1975, %v2014
    %v2217 = vsub.f32 %v1976, %v2017
    %v2218 = vsub.f32 %v1977, %v2020
    %v2219 = vsub.f32 %v1978, %v2023
    %v2220 = vsub.f32 %v1979, %v2026
    %v2221 = vsub.f32 %v1980, %v2029
    %v2222 = vsub.f32 %v1981, %v2032
    %v2223 = vsub.f32 %v1982, %v2035
    %v2224 = vsub.f32 %v1983, %v2038
    %v2225 = vsub.f32 %v1984, %v2041
    %v2226 = vsub.f32 %v1985, %v2044
    %v2227 = vsub.f32 %v1986, %v2047
    %v2228 = vsub.f32 %v1987, %v2050
    %v2229 = vsub.f32 %v1988, %v2053
    %v2230 = vsub.f32 %v1989, %v2056
    %v2231 = vsub.f32 %v1990, %v2059
    %v2232 = vsub.f32 %v1991, %v2062
    %v2233 = vsub.f32 %v1992, %v2065
    %v2234 = vsub.f32 %v1993, %v2068
    %v2235 = vsub.f32 %v1994, %v2071
    %v2236 = vsub.f32 %v1995, %v2074
    %v2237 = vsub.f32 %v1996, %v2077
    %v2238 = vsub.f32 %v1997, %v2080
    %v2239 = vsub.f32 %v1998, %v2083
    %v2240 = vsub.f32 %v1999, %v2086
    %v2241 = vsub.f32 %v2000, %v2089
    %v2242 = vsub.f32 %v2001, %v2092
    %v2243 = vsub.f32 %v2002, %v2095
    %v2244 = vsub.f32 %v2003, %v2098
    %v2245 = vsub.f32 %v2004, %v2101
    %v2246 = vmul.f32 %v2214, 1.442695
    %v2247 = vpow.pop %v2246
    %v2248 = vmul.f32 %v2215, 1.442695
    %v2249 = vpow.pop %v2248
    %v2250 = vmul.f32 %v2216, 1.442695
    %v2251 = vpow.pop %v2250
    %v2252 = vmul.f32 %v2217, 1.442695
    %v2253 = vpow.pop %v2252
    %v2254 = vmul.f32 %v2218, 1.442695
    %v2255 = vpow.pop %v2254
    %v2256 = vmul.f32 %v2219, 1.442695
    %v2257 = vpow.pop %v2256
    %v2258 = vmul.f32 %v2220, 1.442695
    %v2259 = vpow.pop %v2258
    %v2260 = vmul.f32 %v2221, 1.442695
    %v2261 = vpow.pop %v2260
    %v2262 = vmul.f32 %v2222, 1.442695
    %v2263 = vpow.pop %v2262
    %v2264 = vmul.f32 %v2223, 1.442695
    %v2265 = vpow.pop %v2264
    %v2266 = vmul.f32 %v2224, 1.442695
    %v2267 = vpow.pop %v2266
    %v2268 = vmul.f32 %v2225, 1.442695
    %v2269 = vpow.pop %v2268
    %v2270 = vmul.f32 %v2226, 1.442695
    %v2271 = vpow.pop %v2270
    %v2272 = vmul.f32 %v2227, 1.442695
    %v2273 = vpow.pop %v2272
    %v2274 = vmul.f32 %v2228, 1.442695
    %v2275 = vpow.pop %v2274
    %v2276 = vmul.f32 %v2229, 1.442695
    %v2277 = vpow.pop %v2276
    %v2278 = vmul.f32 %v2230, 1.442695
    %v2279 = vpow.pop %v2278
    %v2280 = vmul.f32 %v2231, 1.442695
    %v2281 = vpow.pop %v2280
    %v2282 = vmul.f32 %v2232, 1.442695
    %v2283 = vpow.pop %v2282
    %v2284 = vmul.f32 %v2233, 1.442695
    %v2285 = vpow.pop %v2284
    %v2286 = vmul.f32 %v2234, 1.442695
    %v2287 = vpow.pop %v2286
    %v2288 = vmul.f32 %v2235, 1.442695
    %v2289 = vpow.pop %v2288
    %v2290 = vmul.f32 %v2236, 1.442695
    %v2291 = vpow.pop %v2290
    %v2292 = vmul.f32 %v2237, 1.442695
    %v2293 = vpow.pop %v2292
    %v2294 = vmul.f32 %v2238, 1.442695
    %v2295 = vpow.pop %v2294
    %v2296 = vmul.f32 %v2239, 1.442695
    %v2297 = vpow.pop %v2296
    %v2298 = vmul.f32 %v2240, 1.442695
    %v2299 = vpow.pop %v2298
    %v2300 = vmul.f32 %v2241, 1.442695
    %v2301 = vpow.pop %v2300
    %v2302 = vmul.f32 %v2242, 1.442695
    %v2303 = vpow.pop %v2302
    %v2304 = vmul.f32 %v2243, 1.442695
    %v2305 = vpow.pop %v2304
    %v2306 = vmul.f32 %v2244, 1.442695
    %v2307 = vpow.pop %v2306
    %v2308 = vmul.f32 %v2245, 1.442695
    %v2309 = vpow.pop %v2308
    %v2310 = vsub.f32 %v1973, %v2108
    %v2311 = vsub.f32 %v1974, %v2108
    %v2312 = vsub.f32 %v1975, %v2115
    %v2313 = vsub.f32 %v1976, %v2115
    %v2314 = vsub.f32 %v1977, %v2122
    %v2315 = vsub.f32 %v1978, %v2122
    %v2316 = vsub.f32 %v1979, %v2129
    %v2317 = vsub.f32 %v1980, %v2129
    %v2318 = vsub.f32 %v1981, %v2136
    %v2319 = vsub.f32 %v1982, %v2136
    %v2320 = vsub.f32 %v1983, %v2143
    %v2321 = vsub.f32 %v1984, %v2143
    %v2322 = vsub.f32 %v1985, %v2150
    %v2323 = vsub.f32 %v1986, %v2150
    %v2324 = vsub.f32 %v1987, %v2157
    %v2325 = vsub.f32 %v1988, %v2157
    %v2326 = vsub.f32 %v1989, %v2164
    %v2327 = vsub.f32 %v1990, %v2164
    %v2328 = vsub.f32 %v1991, %v2171
    %v2329 = vsub.f32 %v1992, %v2171
    %v2330 = vsub.f32 %v1993, %v2178
    %v2331 = vsub.f32 %v1994, %v2178
    %v2332 = vsub.f32 %v1995, %v2185
    %v2333 = vsub.f32 %v1996, %v2185
    %v2334 = vsub.f32 %v1997, %v2192
    %v2335 = vsub.f32 %v1998, %v2192
    %v2336 = vsub.f32 %v1999, %v2199
    %v2337 = vsub.f32 %v2000, %v2199
    %v2338 = vsub.f32 %v2001, %v2206
    %v2339 = vsub.f32 %v2002, %v2206
    %v2340 = vsub.f32 %v2003, %v2213
    %v2341 = vsub.f32 %v2004, %v2213
    %v2342 = vmul.f32 %v2310, 1.442695
    %v2343 = vpow.pop %v2342
    %v2344 = vmul.f32 %v2311, 1.442695
    %v2345 = vpow.pop %v2344
    %v2346 = vmul.f32 %v2312, 1.442695
    %v2347 = vpow.pop %v2346
    %v2348 = vmul.f32 %v2313, 1.442695
    %v2349 = vpow.pop %v2348
    %v2350 = vmul.f32 %v2314, 1.442695
    %v2351 = vpow.pop %v2350
    %v2352 = vmul.f32 %v2315, 1.442695
    %v2353 = vpow.pop %v2352
    %v2354 = vmul.f32 %v2316, 1.442695
    %v2355 = vpow.pop %v2354
    %v2356 = vmul.f32 %v2317, 1.442695
    %v2357 = vpow.pop %v2356
    %v2358 = vmul.f32 %v2318, 1.442695
    %v2359 = vpow.pop %v2358
    %v2360 = vmul.f32 %v2319, 1.442695
    %v2361 = vpow.pop %v2360
    %v2362 = vmul.f32 %v2320, 1.442695
    %v2363 = vpow.pop %v2362
    %v2364 = vmul.f32 %v2321, 1.442695
    %v2365 = vpow.pop %v2364
    %v2366 = vmul.f32 %v2322, 1.442695
    %v2367 = vpow.pop %v2366
    %v2368 = vmul.f32 %v2323, 1.442695
    %v2369 = vpow.pop %v2368
    %v2370 = vmul.f32 %v2324, 1.442695
    %v2371 = vpow.pop %v2370
    %v2372 = vmul.f32 %v2325, 1.442695
    %v2373 = vpow.pop %v2372
    %v2374 = vmul.f32 %v2326, 1.442695
    %v2375 = vpow.pop %v2374
    %v2376 = vmul.f32 %v2327, 1.442695
    %v2377 = vpow.pop %v2376
    %v2378 = vmul.f32 %v2328, 1.442695
    %v2379 = vpow.pop %v2378
    %v2380 = vmul.f32 %v2329, 1.442695
    %v2381 = vpow.pop %v2380
    %v2382 = vmul.f32 %v2330, 1.442695
    %v2383 = vpow.pop %v2382
    %v2384 = vmul.f32 %v2331, 1.442695
    %v2385 = vpow.pop %v2384
    %v2386 = vmul.f32 %v2332, 1.442695
    %v2387 = vpow.pop %v2386
    %v2388 = vmul.f32 %v2333, 1.442695
    %v2389 = vpow.pop %v2388
    %v2390 = vmul.f32 %v2334, 1.442695
    %v2391 = vpow.pop %v2390
    %v2392 = vmul.f32 %v2335, 1.442695
    %v2393 = vpow.pop %v2392
    %v2394 = vmul.f32 %v2336, 1.442695
    %v2395 = vpow.pop %v2394
    %v2396 = vmul.f32 %v2337, 1.442695
    %v2397 = vpow.pop %v2396
    %v2398 = vmul.f32 %v2338, 1.442695
    %v2399 = vpow.pop %v2398
    %v2400 = vmul.f32 %v2339, 1.442695
    %v2401 = vpow.pop %v2400
    %v2402 = vmul.f32 %v2340, 1.442695
    %v2403 = vpow.pop %v2402
    %v2404 = vmul.f32 %v2341, 1.442695
    %v2405 = vpow.pop %v2404
    %v2406 = vsel %vm2005, %v2247, 0.0
    %2407 = vadd.xlane.f32.xlu0 %v2406
    %v2408 = vpop.xlane.xlu0 %2407
    %v2409 = vsel %vm2005, %v2249, 0.0
    %2410 = vadd.xlane.f32.xlu0 %v2409
    %v2411 = vpop.xlane.xlu0 %2410
    %v2412 = vsel %vm2005, %v2251, 0.0
    %2413 = vadd.xlane.f32.xlu0 %v2412
    %v2414 = vpop.xlane.xlu0 %2413
    %v2415 = vsel %vm2005, %v2253, 0.0
    %2416 = vadd.xlane.f32.xlu0 %v2415
    %v2417 = vpop.xlane.xlu0 %2416
    %v2418 = vsel %vm2005, %v2255, 0.0
    %2419 = vadd.xlane.f32.xlu0 %v2418
    %v2420 = vpop.xlane.xlu0 %2419
    %v2421 = vsel %vm2005, %v2257, 0.0
    %2422 = vadd.xlane.f32.xlu0 %v2421
    %v2423 = vpop.xlane.xlu0 %2422
    %v2424 = vsel %vm2005, %v2259, 0.0
    %2425 = vadd.xlane.f32.xlu0 %v2424
    %v2426 = vpop.xlane.xlu0 %2425
    %v2427 = vsel %vm2005, %v2261, 0.0
    %2428 = vadd.xlane.f32.xlu0 %v2427
    %v2429 = vpop.xlane.xlu0 %2428
    %v2430 = vsel %vm2005, %v2263, 0.0
    %2431 = vadd.xlane.f32.xlu0 %v2430
    %v2432 = vpop.xlane.xlu0 %2431
    %v2433 = vsel %vm2005, %v2265, 0.0
    %2434 = vadd.xlane.f32.xlu0 %v2433
    %v2435 = vpop.xlane.xlu0 %2434
    %v2436 = vsel %vm2005, %v2267, 0.0
    %2437 = vadd.xlane.f32.xlu0 %v2436
    %v2438 = vpop.xlane.xlu0 %2437
    %v2439 = vsel %vm2005, %v2269, 0.0
    %2440 = vadd.xlane.f32.xlu0 %v2439
    %v2441 = vpop.xlane.xlu0 %2440
    %v2442 = vsel %vm2005, %v2271, 0.0
    %2443 = vadd.xlane.f32.xlu0 %v2442
    %v2444 = vpop.xlane.xlu0 %2443
    %v2445 = vsel %vm2005, %v2273, 0.0
    %2446 = vadd.xlane.f32.xlu0 %v2445
    %v2447 = vpop.xlane.xlu0 %2446
    %v2448 = vsel %vm2005, %v2275, 0.0
    %2449 = vadd.xlane.f32.xlu0 %v2448
    %v2450 = vpop.xlane.xlu0 %2449
    %v2451 = vsel %vm2005, %v2277, 0.0
    %2452 = vadd.xlane.f32.xlu0 %v2451
    %v2453 = vpop.xlane.xlu0 %2452
    %v2454 = vsel %vm2005, %v2279, 0.0
    %2455 = vadd.xlane.f32.xlu0 %v2454
    %v2456 = vpop.xlane.xlu0 %2455
    %v2457 = vsel %vm2005, %v2281, 0.0
    %2458 = vadd.xlane.f32.xlu0 %v2457
    %v2459 = vpop.xlane.xlu0 %2458
    %v2460 = vsel %vm2005, %v2283, 0.0
    %2461 = vadd.xlane.f32.xlu0 %v2460
    %v2462 = vpop.xlane.xlu0 %2461
    %v2463 = vsel %vm2005, %v2285, 0.0
    %2464 = vadd.xlane.f32.xlu0 %v2463
    %v2465 = vpop.xlane.xlu0 %2464
    %v2466 = vsel %vm2005, %v2287, 0.0
    %2467 = vadd.xlane.f32.xlu0 %v2466
    %v2468 = vpop.xlane.xlu0 %2467
    %v2469 = vsel %vm2005, %v2289, 0.0
    %2470 = vadd.xlane.f32.xlu0 %v2469
    %v2471 = vpop.xlane.xlu0 %2470
    %v2472 = vsel %vm2005, %v2291, 0.0
    %2473 = vadd.xlane.f32.xlu0 %v2472
    %v2474 = vpop.xlane.xlu0 %2473
    %v2475 = vsel %vm2005, %v2293, 0.0
    %2476 = vadd.xlane.f32.xlu0 %v2475
    %v2477 = vpop.xlane.xlu0 %2476
    %v2478 = vsel %vm2005, %v2295, 0.0
    %2479 = vadd.xlane.f32.xlu0 %v2478
    %v2480 = vpop.xlane.xlu0 %2479
    %v2481 = vsel %vm2005, %v2297, 0.0
    %2482 = vadd.xlane.f32.xlu0 %v2481
    %v2483 = vpop.xlane.xlu0 %2482
    %v2484 = vsel %vm2005, %v2299, 0.0
    %2485 = vadd.xlane.f32.xlu0 %v2484
    %v2486 = vpop.xlane.xlu0 %2485
    %v2487 = vsel %vm2005, %v2301, 0.0
    %2488 = vadd.xlane.f32.xlu0 %v2487
    %v2489 = vpop.xlane.xlu0 %2488
    %v2490 = vsel %vm2005, %v2303, 0.0
    %2491 = vadd.xlane.f32.xlu0 %v2490
    %v2492 = vpop.xlane.xlu0 %2491
    %v2493 = vsel %vm2005, %v2305, 0.0
    %2494 = vadd.xlane.f32.xlu0 %v2493
    %v2495 = vpop.xlane.xlu0 %2494
    %v2496 = vsel %vm2005, %v2307, 0.0
    %2497 = vadd.xlane.f32.xlu0 %v2496
    %v2498 = vpop.xlane.xlu0 %2497
    %v2499 = vsel %vm2005, %v2309, 0.0
    %2500 = vadd.xlane.f32.xlu0 %v2499
    %v2501 = vpop.xlane.xlu0 %2500
    %v2503 = vsel %vm2005, %v2247, 0
    %v2506 = vsel %vm2005, %v2249, 0
    %2508 = vmatprep.subr.mxu0 0.0
    %2509 = vmatpush1.msra.mxu0 0.0
    %2510 = vmatprep.subr.mxu0 0.0
    %2511 = vmatpush1.msra.mxu0 0.0
    %2512 = vmatprep.subr.mxu0 0.0
    %2513 = vmatpush1.msra.mxu0 0.0
    %2514 = vmatprep.subr.mxu0 0.0
    %2515 = vmatpush1.msra.mxu0 0.0
    %2516 = vmatprep.subr.mxu0 0.0
    %2517 = vmatpush1.msra.mxu0 0.0
    %2518 = vmatprep.subr.mxu0 0.0
    %2519 = vmatpush1.msra.mxu0 0.0
    %2520 = vmatprep.subr.mxu0 0.0
    %2521 = vmatpush1.msra.mxu0 0.0
    %2522 = vmatprep.subr.mxu0 0.0
    %2523 = vmatpush1.msra.mxu0 0.0
    %2524 = vmatprep.subr.mxu0 0.0
    %2525 = vmatpush1.msra.mxu0 0.0
    %2526 = vmatprep.subr.mxu0 0.0
    %2527 = vmatpush1.msra.mxu0 0.0
    %2528 = vmatprep.subr.mxu0 0.0
    %2529 = vmatpush1.msra.mxu0 0.0
    %2530 = vmatprep.subr.mxu0 0.0
    %2531 = vmatpush1.msra.mxu0 0.0
    %2532 = vmatprep.subr.mxu0 0.0
    %2533 = vmatpush1.msra.mxu0 0.0
    %2534 = vmatprep.subr.mxu0 0.0
    %2535 = vmatpush1.msra.mxu0 %v86
    %2536 = vmatprep.subr.mxu0 0.0
    %2537 = vmatpush1.msra.mxu0 %v85
    %2538 = vmatprep.subr.mxu0 0.0
    %2539 = vmatpush1.msra.mxu0 %v84
    %2540 = vmatprep.subr.mxu0 0.0
    %2541 = vmatpush2.msra.mxu0 0.0
    %2542 = vmatprep.subr.mxu0 0.0
    %2543 = vmatpush2.msra.mxu0 0.0
    %2544 = vmatprep.subr.mxu0 0.0
    %2545 = vmatpush2.msra.mxu0 0.0
    %2546 = vmatprep.subr.mxu0 0.0
    %2547 = vmatpush2.msra.mxu0 0.0
    %2548 = vmatprep.subr.mxu0 0.0
    %2549 = vmatpush2.msra.mxu0 0.0
    %2550 = vmatprep.subr.mxu0 0.0
    %2551 = vmatpush2.msra.mxu0 0.0
    %2552 = vmatprep.subr.mxu0 0.0
    %2553 = vmatpush2.msra.mxu0 0.0
    %2554 = vmatprep.subr.mxu0 0.0
    %2555 = vmatpush2.msra.mxu0 0.0
    %2556 = vmatprep.subr.mxu0 0.0
    %2557 = vmatpush2.msra.mxu0 0.0
    %2558 = vmatprep.subr.mxu0 0.0
    %2559 = vmatpush2.msra.mxu0 0.0
    %2560 = vmatprep.subr.mxu0 0.0
    %2561 = vmatpush2.msra.mxu0 0.0
    %2562 = vmatprep.subr.mxu0 0.0
    %2563 = vmatpush2.msra.mxu0 0.0
    %2564 = vmatprep.subr.mxu0 0.0
    %2565 = vmatpush2.msra.mxu0 0.0
    %2566 = vmatprep.subr.mxu0 0.0
    %2567 = vmatpush2.msra.mxu0 0.0
    %2568 = vmatprep.subr.mxu0 0.0
    %2569 = vmatpush2.msra.mxu0 0.0
    %2570 = vmatprep.subr.mxu0 0.0
    %2571 = vmatpush2.msra.mxu0 0.0
    %2572 = vmatprep.mubr.f32.mxu0 0.0
    %2573 = vmatmul.mubr.f32.gmra.mxu0 %v2503
    %v2574 = vpop.f32.mrf.mxu0
    %v2575 = vadd.f32 0.0, %v2574
    %v2576 = vpop.f32.mrf.mxu0
    %2577 = vmatprep.mubr.f32.mxu0 0.0
    %2578 = vmatmul.mubr.f32.gmra.mxu0 %v2506
    %v2579 = vpop.f32.mrf.mxu0
    %v2580 = vadd.f32 0.0, %v2579
    %v2581 = vpop.f32.mrf.mxu0
    %2582 = vdwg.mxu0
    %v2584 = vsel %vm2005, %v2251, 0
    %v2587 = vsel %vm2005, %v2253, 0
    %2589 = vmatprep.subr.mxu0 0.0
    %2590 = vmatpush1.msra.mxu0 0.0
    %2591 = vmatprep.subr.mxu0 0.0
    %2592 = vmatpush1.msra.mxu0 0.0
    %2593 = vmatprep.subr.mxu0 0.0
    %2594 = vmatpush1.msra.mxu0 0.0
    %2595 = vmatprep.subr.mxu0 0.0
    %2596 = vmatpush1.msra.mxu0 0.0
    %2597 = vmatprep.subr.mxu0 0.0
    %2598 = vmatpush1.msra.mxu0 0.0
    %2599 = vmatprep.subr.mxu0 0.0
    %2600 = vmatpush1.msra.mxu0 0.0
    %2601 = vmatprep.subr.mxu0 0.0
    %2602 = vmatpush1.msra.mxu0 0.0
    %2603 = vmatprep.subr.mxu0 0.0
    %2604 = vmatpush1.msra.mxu0 0.0
    %2605 = vmatprep.subr.mxu0 0.0
    %2606 = vmatpush1.msra.mxu0 0.0
    %2607 = vmatprep.subr.mxu0 0.0
    %2608 = vmatpush1.msra.mxu0 0.0
    %2609 = vmatprep.subr.mxu0 0.0
    %2610 = vmatpush1.msra.mxu0 0.0
    %2611 = vmatprep.subr.mxu0 0.0
    %2612 = vmatpush1.msra.mxu0 0.0
    %2613 = vmatprep.subr.mxu0 0.0
    %2614 = vmatpush1.msra.mxu0 0.0
    %2615 = vmatprep.subr.mxu0 0.0
    %2616 = vmatpush1.msra.mxu0 %v89
    %2617 = vmatprep.subr.mxu0 0.0
    %2618 = vmatpush1.msra.mxu0 %v88
    %2619 = vmatprep.subr.mxu0 0.0
    %2620 = vmatpush1.msra.mxu0 %v87
    %2621 = vmatprep.subr.mxu0 0.0
    %2622 = vmatpush2.msra.mxu0 0.0
    %2623 = vmatprep.subr.mxu0 0.0
    %2624 = vmatpush2.msra.mxu0 0.0
    %2625 = vmatprep.subr.mxu0 0.0
    %2626 = vmatpush2.msra.mxu0 0.0
    %2627 = vmatprep.subr.mxu0 0.0
    %2628 = vmatpush2.msra.mxu0 0.0
    %2629 = vmatprep.subr.mxu0 0.0
    %2630 = vmatpush2.msra.mxu0 0.0
    %2631 = vmatprep.subr.mxu0 0.0
    %2632 = vmatpush2.msra.mxu0 0.0
    %2633 = vmatprep.subr.mxu0 0.0
    %2634 = vmatpush2.msra.mxu0 0.0
    %2635 = vmatprep.subr.mxu0 0.0
    %2636 = vmatpush2.msra.mxu0 0.0
    %2637 = vmatprep.subr.mxu0 0.0
    %2638 = vmatpush2.msra.mxu0 0.0
    %2639 = vmatprep.subr.mxu0 0.0
    %2640 = vmatpush2.msra.mxu0 0.0
    %2641 = vmatprep.subr.mxu0 0.0
    %2642 = vmatpush2.msra.mxu0 0.0
    %2643 = vmatprep.subr.mxu0 0.0
    %2644 = vmatpush2.msra.mxu0 0.0
    %2645 = vmatprep.subr.mxu0 0.0
    %2646 = vmatpush2.msra.mxu0 0.0
    %2647 = vmatprep.subr.mxu0 0.0
    %2648 = vmatpush2.msra.mxu0 0.0
    %2649 = vmatprep.subr.mxu0 0.0
    %2650 = vmatpush2.msra.mxu0 0.0
    %2651 = vmatprep.subr.mxu0 0.0
    %2652 = vmatpush2.msra.mxu0 0.0
    %2653 = vmatprep.mubr.f32.mxu0 0.0
    %2654 = vmatmul.mubr.f32.gmra.mxu0 %v2584
    %v2655 = vpop.f32.mrf.mxu0
    %v2656 = vadd.f32 0.0, %v2655
    %v2657 = vpop.f32.mrf.mxu0
    %2658 = vmatprep.mubr.f32.mxu0 0.0
    %2659 = vmatmul.mubr.f32.gmra.mxu0 %v2587
    %v2660 = vpop.f32.mrf.mxu0
    %v2661 = vadd.f32 0.0, %v2660
    %v2662 = vpop.f32.mrf.mxu0
    %2663 = vdwg.mxu0
    %v2665 = vsel %vm2005, %v2255, 0
    %v2668 = vsel %vm2005, %v2257, 0
    %2670 = vmatprep.subr.mxu0 0.0
    %2671 = vmatpush1.msra.mxu0 0.0
    %2672 = vmatprep.subr.mxu0 0.0
    %2673 = vmatpush1.msra.mxu0 0.0
    %2674 = vmatprep.subr.mxu0 0.0
    %2675 = vmatpush1.msra.mxu0 0.0
    %2676 = vmatprep.subr.mxu0 0.0
    %2677 = vmatpush1.msra.mxu0 0.0
    %2678 = vmatprep.subr.mxu0 0.0
    %2679 = vmatpush1.msra.mxu0 0.0
    %2680 = vmatprep.subr.mxu0 0.0
    %2681 = vmatpush1.msra.mxu0 0.0
    %2682 = vmatprep.subr.mxu0 0.0
    %2683 = vmatpush1.msra.mxu0 0.0
    %2684 = vmatprep.subr.mxu0 0.0
    %2685 = vmatpush1.msra.mxu0 0.0
    %2686 = vmatprep.subr.mxu0 0.0
    %2687 = vmatpush1.msra.mxu0 0.0
    %2688 = vmatprep.subr.mxu0 0.0
    %2689 = vmatpush1.msra.mxu0 0.0
    %2690 = vmatprep.subr.mxu0 0.0
    %2691 = vmatpush1.msra.mxu0 0.0
    %2692 = vmatprep.subr.mxu0 0.0
    %2693 = vmatpush1.msra.mxu0 0.0
    %2694 = vmatprep.subr.mxu0 0.0
    %2695 = vmatpush1.msra.mxu0 0.0
    %2696 = vmatprep.subr.mxu0 0.0
    %2697 = vmatpush1.msra.mxu0 %v92
    %2698 = vmatprep.subr.mxu0 0.0
    %2699 = vmatpush1.msra.mxu0 %v91
    %2700 = vmatprep.subr.mxu0 0.0
    %2701 = vmatpush1.msra.mxu0 %v90
    %2702 = vmatprep.subr.mxu0 0.0
    %2703 = vmatpush2.msra.mxu0 0.0
    %2704 = vmatprep.subr.mxu0 0.0
    %2705 = vmatpush2.msra.mxu0 0.0
    %2706 = vmatprep.subr.mxu0 0.0
    %2707 = vmatpush2.msra.mxu0 0.0
    %2708 = vmatprep.subr.mxu0 0.0
    %2709 = vmatpush2.msra.mxu0 0.0
    %2710 = vmatprep.subr.mxu0 0.0
    %2711 = vmatpush2.msra.mxu0 0.0
    %2712 = vmatprep.subr.mxu0 0.0
    %2713 = vmatpush2.msra.mxu0 0.0
    %2714 = vmatprep.subr.mxu0 0.0
    %2715 = vmatpush2.msra.mxu0 0.0
    %2716 = vmatprep.subr.mxu0 0.0
    %2717 = vmatpush2.msra.mxu0 0.0
    %2718 = vmatprep.subr.mxu0 0.0
    %2719 = vmatpush2.msra.mxu0 0.0
    %2720 = vmatprep.subr.mxu0 0.0
    %2721 = vmatpush2.msra.mxu0 0.0
    %2722 = vmatprep.subr.mxu0 0.0
    %2723 = vmatpush2.msra.mxu0 0.0
    %2724 = vmatprep.subr.mxu0 0.0
    %2725 = vmatpush2.msra.mxu0 0.0
    %2726 = vmatprep.subr.mxu0 0.0
    %2727 = vmatpush2.msra.mxu0 0.0
    %2728 = vmatprep.subr.mxu0 0.0
    %2729 = vmatpush2.msra.mxu0 0.0
    %2730 = vmatprep.subr.mxu0 0.0
    %2731 = vmatpush2.msra.mxu0 0.0
    %2732 = vmatprep.subr.mxu0 0.0
    %2733 = vmatpush2.msra.mxu0 0.0
    %2734 = vmatprep.mubr.f32.mxu0 0.0
    %2735 = vmatmul.mubr.f32.gmra.mxu0 %v2665
    %v2736 = vpop.f32.mrf.mxu0
    %v2737 = vadd.f32 0.0, %v2736
    %v2738 = vpop.f32.mrf.mxu0
    %2739 = vmatprep.mubr.f32.mxu0 0.0
    %2740 = vmatmul.mubr.f32.gmra.mxu0 %v2668
    %v2741 = vpop.f32.mrf.mxu0
    %v2742 = vadd.f32 0.0, %v2741
    %v2743 = vpop.f32.mrf.mxu0
    %2744 = vdwg.mxu0
    %v2746 = vsel %vm2005, %v2259, 0
    %v2749 = vsel %vm2005, %v2261, 0
    %2751 = vmatprep.subr.mxu0 0.0
    %2752 = vmatpush1.msra.mxu0 0.0
    %2753 = vmatprep.subr.mxu0 0.0
    %2754 = vmatpush1.msra.mxu0 0.0
    %2755 = vmatprep.subr.mxu0 0.0
    %2756 = vmatpush1.msra.mxu0 0.0
    %2757 = vmatprep.subr.mxu0 0.0
    %2758 = vmatpush1.msra.mxu0 0.0
    %2759 = vmatprep.subr.mxu0 0.0
    %2760 = vmatpush1.msra.mxu0 0.0
    %2761 = vmatprep.subr.mxu0 0.0
    %2762 = vmatpush1.msra.mxu0 0.0
    %2763 = vmatprep.subr.mxu0 0.0
    %2764 = vmatpush1.msra.mxu0 0.0
    %2765 = vmatprep.subr.mxu0 0.0
    %2766 = vmatpush1.msra.mxu0 0.0
    %2767 = vmatprep.subr.mxu0 0.0
    %2768 = vmatpush1.msra.mxu0 0.0
    %2769 = vmatprep.subr.mxu0 0.0
    %2770 = vmatpush1.msra.mxu0 0.0
    %2771 = vmatprep.subr.mxu0 0.0
    %2772 = vmatpush1.msra.mxu0 0.0
    %2773 = vmatprep.subr.mxu0 0.0
    %2774 = vmatpush1.msra.mxu0 0.0
    %2775 = vmatprep.subr.mxu0 0.0
    %2776 = vmatpush1.msra.mxu0 0.0
    %2777 = vmatprep.subr.mxu0 0.0
    %2778 = vmatpush1.msra.mxu0 %v95
    %2779 = vmatprep.subr.mxu0 0.0
    %2780 = vmatpush1.msra.mxu0 %v94
    %2781 = vmatprep.subr.mxu0 0.0
    %2782 = vmatpush1.msra.mxu0 %v93
    %2783 = vmatprep.subr.mxu0 0.0
    %2784 = vmatpush2.msra.mxu0 0.0
    %2785 = vmatprep.subr.mxu0 0.0
    %2786 = vmatpush2.msra.mxu0 0.0
    %2787 = vmatprep.subr.mxu0 0.0
    %2788 = vmatpush2.msra.mxu0 0.0
    %2789 = vmatprep.subr.mxu0 0.0
    %2790 = vmatpush2.msra.mxu0 0.0
    %2791 = vmatprep.subr.mxu0 0.0
    %2792 = vmatpush2.msra.mxu0 0.0
    %2793 = vmatprep.subr.mxu0 0.0
    %2794 = vmatpush2.msra.mxu0 0.0
    %2795 = vmatprep.subr.mxu0 0.0
    %2796 = vmatpush2.msra.mxu0 0.0
    %2797 = vmatprep.subr.mxu0 0.0
    %2798 = vmatpush2.msra.mxu0 0.0
    %2799 = vmatprep.subr.mxu0 0.0
    %2800 = vmatpush2.msra.mxu0 0.0
    %2801 = vmatprep.subr.mxu0 0.0
    %2802 = vmatpush2.msra.mxu0 0.0
    %2803 = vmatprep.subr.mxu0 0.0
    %2804 = vmatpush2.msra.mxu0 0.0
    %2805 = vmatprep.subr.mxu0 0.0
    %2806 = vmatpush2.msra.mxu0 0.0
    %2807 = vmatprep.subr.mxu0 0.0
    %2808 = vmatpush2.msra.mxu0 0.0
    %2809 = vmatprep.subr.mxu0 0.0
    %2810 = vmatpush2.msra.mxu0 0.0
    %2811 = vmatprep.subr.mxu0 0.0
    %2812 = vmatpush2.msra.mxu0 0.0
    %2813 = vmatprep.subr.mxu0 0.0
    %2814 = vmatpush2.msra.mxu0 0.0
    %2815 = vmatprep.mubr.f32.mxu0 0.0
    %2816 = vmatmul.mubr.f32.gmra.mxu0 %v2746
    %v2817 = vpop.f32.mrf.mxu0
    %v2818 = vadd.f32 0.0, %v2817
    %v2819 = vpop.f32.mrf.mxu0
    %2820 = vmatprep.mubr.f32.mxu0 0.0
    %2821 = vmatmul.mubr.f32.gmra.mxu0 %v2749
    %v2822 = vpop.f32.mrf.mxu0
    %v2823 = vadd.f32 0.0, %v2822
    %v2824 = vpop.f32.mrf.mxu0
    %2825 = vdwg.mxu0
    %v2827 = vsel %vm2005, %v2263, 0
    %v2830 = vsel %vm2005, %v2265, 0
    %2832 = vmatprep.subr.mxu0 0.0
    %2833 = vmatpush1.msra.mxu0 0.0
    %2834 = vmatprep.subr.mxu0 0.0
    %2835 = vmatpush1.msra.mxu0 0.0
    %2836 = vmatprep.subr.mxu0 0.0
    %2837 = vmatpush1.msra.mxu0 0.0
    %2838 = vmatprep.subr.mxu0 0.0
    %2839 = vmatpush1.msra.mxu0 0.0
    %2840 = vmatprep.subr.mxu0 0.0
    %2841 = vmatpush1.msra.mxu0 0.0
    %2842 = vmatprep.subr.mxu0 0.0
    %2843 = vmatpush1.msra.mxu0 0.0
    %2844 = vmatprep.subr.mxu0 0.0
    %2845 = vmatpush1.msra.mxu0 0.0
    %2846 = vmatprep.subr.mxu0 0.0
    %2847 = vmatpush1.msra.mxu0 0.0
    %2848 = vmatprep.subr.mxu0 0.0
    %2849 = vmatpush1.msra.mxu0 0.0
    %2850 = vmatprep.subr.mxu0 0.0
    %2851 = vmatpush1.msra.mxu0 0.0
    %2852 = vmatprep.subr.mxu0 0.0
    %2853 = vmatpush1.msra.mxu0 0.0
    %2854 = vmatprep.subr.mxu0 0.0
    %2855 = vmatpush1.msra.mxu0 0.0
    %2856 = vmatprep.subr.mxu0 0.0
    %2857 = vmatpush1.msra.mxu0 0.0
    %2858 = vmatprep.subr.mxu0 0.0
    %2859 = vmatpush1.msra.mxu0 %v98
    %2860 = vmatprep.subr.mxu0 0.0
    %2861 = vmatpush1.msra.mxu0 %v97
    %2862 = vmatprep.subr.mxu0 0.0
    %2863 = vmatpush1.msra.mxu0 %v96
    %2864 = vmatprep.subr.mxu0 0.0
    %2865 = vmatpush2.msra.mxu0 0.0
    %2866 = vmatprep.subr.mxu0 0.0
    %2867 = vmatpush2.msra.mxu0 0.0
    %2868 = vmatprep.subr.mxu0 0.0
    %2869 = vmatpush2.msra.mxu0 0.0
    %2870 = vmatprep.subr.mxu0 0.0
    %2871 = vmatpush2.msra.mxu0 0.0
    %2872 = vmatprep.subr.mxu0 0.0
    %2873 = vmatpush2.msra.mxu0 0.0
    %2874 = vmatprep.subr.mxu0 0.0
    %2875 = vmatpush2.msra.mxu0 0.0
    %2876 = vmatprep.subr.mxu0 0.0
    %2877 = vmatpush2.msra.mxu0 0.0
    %2878 = vmatprep.subr.mxu0 0.0
    %2879 = vmatpush2.msra.mxu0 0.0
    %2880 = vmatprep.subr.mxu0 0.0
    %2881 = vmatpush2.msra.mxu0 0.0
    %2882 = vmatprep.subr.mxu0 0.0
    %2883 = vmatpush2.msra.mxu0 0.0
    %2884 = vmatprep.subr.mxu0 0.0
    %2885 = vmatpush2.msra.mxu0 0.0
    %2886 = vmatprep.subr.mxu0 0.0
    %2887 = vmatpush2.msra.mxu0 0.0
    %2888 = vmatprep.subr.mxu0 0.0
    %2889 = vmatpush2.msra.mxu0 0.0
    %2890 = vmatprep.subr.mxu0 0.0
    %2891 = vmatpush2.msra.mxu0 0.0
    %2892 = vmatprep.subr.mxu0 0.0
    %2893 = vmatpush2.msra.mxu0 0.0
    %2894 = vmatprep.subr.mxu0 0.0
    %2895 = vmatpush2.msra.mxu0 0.0
    %2896 = vmatprep.mubr.f32.mxu0 0.0
    %2897 = vmatmul.mubr.f32.gmra.mxu0 %v2827
    %v2898 = vpop.f32.mrf.mxu0
    %v2899 = vadd.f32 0.0, %v2898
    %v2900 = vpop.f32.mrf.mxu0
    %2901 = vmatprep.mubr.f32.mxu0 0.0
    %2902 = vmatmul.mubr.f32.gmra.mxu0 %v2830
    %v2903 = vpop.f32.mrf.mxu0
    %v2904 = vadd.f32 0.0, %v2903
    %v2905 = vpop.f32.mrf.mxu0
    %2906 = vdwg.mxu0
    %v2908 = vsel %vm2005, %v2267, 0
    %v2911 = vsel %vm2005, %v2269, 0
    %2913 = vmatprep.subr.mxu0 0.0
    %2914 = vmatpush1.msra.mxu0 0.0
    %2915 = vmatprep.subr.mxu0 0.0
    %2916 = vmatpush1.msra.mxu0 0.0
    %2917 = vmatprep.subr.mxu0 0.0
    %2918 = vmatpush1.msra.mxu0 0.0
    %2919 = vmatprep.subr.mxu0 0.0
    %2920 = vmatpush1.msra.mxu0 0.0
    %2921 = vmatprep.subr.mxu0 0.0
    %2922 = vmatpush1.msra.mxu0 0.0
    %2923 = vmatprep.subr.mxu0 0.0
    %2924 = vmatpush1.msra.mxu0 0.0
    %2925 = vmatprep.subr.mxu0 0.0
    %2926 = vmatpush1.msra.mxu0 0.0
    %2927 = vmatprep.subr.mxu0 0.0
    %2928 = vmatpush1.msra.mxu0 0.0
    %2929 = vmatprep.subr.mxu0 0.0
    %2930 = vmatpush1.msra.mxu0 0.0
    %2931 = vmatprep.subr.mxu0 0.0
    %2932 = vmatpush1.msra.mxu0 0.0
    %2933 = vmatprep.subr.mxu0 0.0
    %2934 = vmatpush1.msra.mxu0 0.0
    %2935 = vmatprep.subr.mxu0 0.0
    %2936 = vmatpush1.msra.mxu0 0.0
    %2937 = vmatprep.subr.mxu0 0.0
    %2938 = vmatpush1.msra.mxu0 0.0
    %2939 = vmatprep.subr.mxu0 0.0
    %2940 = vmatpush1.msra.mxu0 %v101
    %2941 = vmatprep.subr.mxu0 0.0
    %2942 = vmatpush1.msra.mxu0 %v100
    %2943 = vmatprep.subr.mxu0 0.0
    %2944 = vmatpush1.msra.mxu0 %v99
    %2945 = vmatprep.subr.mxu0 0.0
    %2946 = vmatpush2.msra.mxu0 0.0
    %2947 = vmatprep.subr.mxu0 0.0
    %2948 = vmatpush2.msra.mxu0 0.0
    %2949 = vmatprep.subr.mxu0 0.0
    %2950 = vmatpush2.msra.mxu0 0.0
    %2951 = vmatprep.subr.mxu0 0.0
    %2952 = vmatpush2.msra.mxu0 0.0
    %2953 = vmatprep.subr.mxu0 0.0
    %2954 = vmatpush2.msra.mxu0 0.0
    %2955 = vmatprep.subr.mxu0 0.0
    %2956 = vmatpush2.msra.mxu0 0.0
    %2957 = vmatprep.subr.mxu0 0.0
    %2958 = vmatpush2.msra.mxu0 0.0
    %2959 = vmatprep.subr.mxu0 0.0
    %2960 = vmatpush2.msra.mxu0 0.0
    %2961 = vmatprep.subr.mxu0 0.0
    %2962 = vmatpush2.msra.mxu0 0.0
    %2963 = vmatprep.subr.mxu0 0.0
    %2964 = vmatpush2.msra.mxu0 0.0
    %2965 = vmatprep.subr.mxu0 0.0
    %2966 = vmatpush2.msra.mxu0 0.0
    %2967 = vmatprep.subr.mxu0 0.0
    %2968 = vmatpush2.msra.mxu0 0.0
    %2969 = vmatprep.subr.mxu0 0.0
    %2970 = vmatpush2.msra.mxu0 0.0
    %2971 = vmatprep.subr.mxu0 0.0
    %2972 = vmatpush2.msra.mxu0 0.0
    %2973 = vmatprep.subr.mxu0 0.0
    %2974 = vmatpush2.msra.mxu0 0.0
    %2975 = vmatprep.subr.mxu0 0.0
    %2976 = vmatpush2.msra.mxu0 0.0
    %2977 = vmatprep.mubr.f32.mxu0 0.0
    %2978 = vmatmul.mubr.f32.gmra.mxu0 %v2908
    %v2979 = vpop.f32.mrf.mxu0
    %v2980 = vadd.f32 0.0, %v2979
    %v2981 = vpop.f32.mrf.mxu0
    %2982 = vmatprep.mubr.f32.mxu0 0.0
    %2983 = vmatmul.mubr.f32.gmra.mxu0 %v2911
    %v2984 = vpop.f32.mrf.mxu0
    %v2985 = vadd.f32 0.0, %v2984
    %v2986 = vpop.f32.mrf.mxu0
    %2987 = vdwg.mxu0
    %v2989 = vsel %vm2005, %v2271, 0
    %v2992 = vsel %vm2005, %v2273, 0
    %2994 = vmatprep.subr.mxu0 0.0
    %2995 = vmatpush1.msra.mxu0 0.0
    %2996 = vmatprep.subr.mxu0 0.0
    %2997 = vmatpush1.msra.mxu0 0.0
    %2998 = vmatprep.subr.mxu0 0.0
    %2999 = vmatpush1.msra.mxu0 0.0
    %3000 = vmatprep.subr.mxu0 0.0
    %3001 = vmatpush1.msra.mxu0 0.0
    %3002 = vmatprep.subr.mxu0 0.0
    %3003 = vmatpush1.msra.mxu0 0.0
    %3004 = vmatprep.subr.mxu0 0.0
    %3005 = vmatpush1.msra.mxu0 0.0
    %3006 = vmatprep.subr.mxu0 0.0
    %3007 = vmatpush1.msra.mxu0 0.0
    %3008 = vmatprep.subr.mxu0 0.0
    %3009 = vmatpush1.msra.mxu0 0.0
    %3010 = vmatprep.subr.mxu0 0.0
    %3011 = vmatpush1.msra.mxu0 0.0
    %3012 = vmatprep.subr.mxu0 0.0
    %3013 = vmatpush1.msra.mxu0 0.0
    %3014 = vmatprep.subr.mxu0 0.0
    %3015 = vmatpush1.msra.mxu0 0.0
    %3016 = vmatprep.subr.mxu0 0.0
    %3017 = vmatpush1.msra.mxu0 0.0
    %3018 = vmatprep.subr.mxu0 0.0
    %3019 = vmatpush1.msra.mxu0 0.0
    %3020 = vmatprep.subr.mxu0 0.0
    %3021 = vmatpush1.msra.mxu0 %v104
    %3022 = vmatprep.subr.mxu0 0.0
    %3023 = vmatpush1.msra.mxu0 %v103
    %3024 = vmatprep.subr.mxu0 0.0
    %3025 = vmatpush1.msra.mxu0 %v102
    %3026 = vmatprep.subr.mxu0 0.0
    %3027 = vmatpush2.msra.mxu0 0.0
    %3028 = vmatprep.subr.mxu0 0.0
    %3029 = vmatpush2.msra.mxu0 0.0
    %3030 = vmatprep.subr.mxu0 0.0
    %3031 = vmatpush2.msra.mxu0 0.0
    %3032 = vmatprep.subr.mxu0 0.0
    %3033 = vmatpush2.msra.mxu0 0.0
    %3034 = vmatprep.subr.mxu0 0.0
    %3035 = vmatpush2.msra.mxu0 0.0
    %3036 = vmatprep.subr.mxu0 0.0
    %3037 = vmatpush2.msra.mxu0 0.0
    %3038 = vmatprep.subr.mxu0 0.0
    %3039 = vmatpush2.msra.mxu0 0.0
    %3040 = vmatprep.subr.mxu0 0.0
    %3041 = vmatpush2.msra.mxu0 0.0
    %3042 = vmatprep.subr.mxu0 0.0
    %3043 = vmatpush2.msra.mxu0 0.0
    %3044 = vmatprep.subr.mxu0 0.0
    %3045 = vmatpush2.msra.mxu0 0.0
    %3046 = vmatprep.subr.mxu0 0.0
    %3047 = vmatpush2.msra.mxu0 0.0
    %3048 = vmatprep.subr.mxu0 0.0
    %3049 = vmatpush2.msra.mxu0 0.0
    %3050 = vmatprep.subr.mxu0 0.0
    %3051 = vmatpush2.msra.mxu0 0.0
    %3052 = vmatprep.subr.mxu0 0.0
    %3053 = vmatpush2.msra.mxu0 0.0
    %3054 = vmatprep.subr.mxu0 0.0
    %3055 = vmatpush2.msra.mxu0 0.0
    %3056 = vmatprep.subr.mxu0 0.0
    %3057 = vmatpush2.msra.mxu0 0.0
    %3058 = vmatprep.mubr.f32.mxu0 0.0
    %3059 = vmatmul.mubr.f32.gmra.mxu0 %v2989
    %v3060 = vpop.f32.mrf.mxu0
    %v3061 = vadd.f32 0.0, %v3060
    %v3062 = vpop.f32.mrf.mxu0
    %3063 = vmatprep.mubr.f32.mxu0 0.0
    %3064 = vmatmul.mubr.f32.gmra.mxu0 %v2992
    %v3065 = vpop.f32.mrf.mxu0
    %v3066 = vadd.f32 0.0, %v3065
    %v3067 = vpop.f32.mrf.mxu0
    %3068 = vdwg.mxu0
    %v3070 = vsel %vm2005, %v2275, 0
    %v3073 = vsel %vm2005, %v2277, 0
    %3075 = vmatprep.subr.mxu0 0.0
    %3076 = vmatpush1.msra.mxu0 0.0
    %3077 = vmatprep.subr.mxu0 0.0
    %3078 = vmatpush1.msra.mxu0 0.0
    %3079 = vmatprep.subr.mxu0 0.0
    %3080 = vmatpush1.msra.mxu0 0.0
    %3081 = vmatprep.subr.mxu0 0.0
    %3082 = vmatpush1.msra.mxu0 0.0
    %3083 = vmatprep.subr.mxu0 0.0
    %3084 = vmatpush1.msra.mxu0 0.0
    %3085 = vmatprep.subr.mxu0 0.0
    %3086 = vmatpush1.msra.mxu0 0.0
    %3087 = vmatprep.subr.mxu0 0.0
    %3088 = vmatpush1.msra.mxu0 0.0
    %3089 = vmatprep.subr.mxu0 0.0
    %3090 = vmatpush1.msra.mxu0 0.0
    %3091 = vmatprep.subr.mxu0 0.0
    %3092 = vmatpush1.msra.mxu0 0.0
    %3093 = vmatprep.subr.mxu0 0.0
    %3094 = vmatpush1.msra.mxu0 0.0
    %3095 = vmatprep.subr.mxu0 0.0
    %3096 = vmatpush1.msra.mxu0 0.0
    %3097 = vmatprep.subr.mxu0 0.0
    %3098 = vmatpush1.msra.mxu0 0.0
    %3099 = vmatprep.subr.mxu0 0.0
    %3100 = vmatpush1.msra.mxu0 0.0
    %3101 = vmatprep.subr.mxu0 0.0
    %3102 = vmatpush1.msra.mxu0 %v107
    %3103 = vmatprep.subr.mxu0 0.0
    %3104 = vmatpush1.msra.mxu0 %v106
    %3105 = vmatprep.subr.mxu0 0.0
    %3106 = vmatpush1.msra.mxu0 %v105
    %3107 = vmatprep.subr.mxu0 0.0
    %3108 = vmatpush2.msra.mxu0 0.0
    %3109 = vmatprep.subr.mxu0 0.0
    %3110 = vmatpush2.msra.mxu0 0.0
    %3111 = vmatprep.subr.mxu0 0.0
    %3112 = vmatpush2.msra.mxu0 0.0
    %3113 = vmatprep.subr.mxu0 0.0
    %3114 = vmatpush2.msra.mxu0 0.0
    %3115 = vmatprep.subr.mxu0 0.0
    %3116 = vmatpush2.msra.mxu0 0.0
    %3117 = vmatprep.subr.mxu0 0.0
    %3118 = vmatpush2.msra.mxu0 0.0
    %3119 = vmatprep.subr.mxu0 0.0
    %3120 = vmatpush2.msra.mxu0 0.0
    %3121 = vmatprep.subr.mxu0 0.0
    %3122 = vmatpush2.msra.mxu0 0.0
    %3123 = vmatprep.subr.mxu0 0.0
    %3124 = vmatpush2.msra.mxu0 0.0
    %3125 = vmatprep.subr.mxu0 0.0
    %3126 = vmatpush2.msra.mxu0 0.0
    %3127 = vmatprep.subr.mxu0 0.0
    %3128 = vmatpush2.msra.mxu0 0.0
    %3129 = vmatprep.subr.mxu0 0.0
    %3130 = vmatpush2.msra.mxu0 0.0
    %3131 = vmatprep.subr.mxu0 0.0
    %3132 = vmatpush2.msra.mxu0 0.0
    %3133 = vmatprep.subr.mxu0 0.0
    %3134 = vmatpush2.msra.mxu0 0.0
    %3135 = vmatprep.subr.mxu0 0.0
    %3136 = vmatpush2.msra.mxu0 0.0
    %3137 = vmatprep.subr.mxu0 0.0
    %3138 = vmatpush2.msra.mxu0 0.0
    %3139 = vmatprep.mubr.f32.mxu0 0.0
    %3140 = vmatmul.mubr.f32.gmra.mxu0 %v3070
    %v3141 = vpop.f32.mrf.mxu0
    %v3142 = vadd.f32 0.0, %v3141
    %v3143 = vpop.f32.mrf.mxu0
    %3144 = vmatprep.mubr.f32.mxu0 0.0
    %3145 = vmatmul.mubr.f32.gmra.mxu0 %v3073
    %v3146 = vpop.f32.mrf.mxu0
    %v3147 = vadd.f32 0.0, %v3146
    %v3148 = vpop.f32.mrf.mxu0
    %3149 = vdwg.mxu0
    %v3151 = vsel %vm2005, %v2279, 0
    %v3154 = vsel %vm2005, %v2281, 0
    %3156 = vmatprep.subr.mxu0 0.0
    %3157 = vmatpush1.msra.mxu0 0.0
    %3158 = vmatprep.subr.mxu0 0.0
    %3159 = vmatpush1.msra.mxu0 0.0
    %3160 = vmatprep.subr.mxu0 0.0
    %3161 = vmatpush1.msra.mxu0 0.0
    %3162 = vmatprep.subr.mxu0 0.0
    %3163 = vmatpush1.msra.mxu0 0.0
    %3164 = vmatprep.subr.mxu0 0.0
    %3165 = vmatpush1.msra.mxu0 0.0
    %3166 = vmatprep.subr.mxu0 0.0
    %3167 = vmatpush1.msra.mxu0 0.0
    %3168 = vmatprep.subr.mxu0 0.0
    %3169 = vmatpush1.msra.mxu0 0.0
    %3170 = vmatprep.subr.mxu0 0.0
    %3171 = vmatpush1.msra.mxu0 0.0
    %3172 = vmatprep.subr.mxu0 0.0
    %3173 = vmatpush1.msra.mxu0 0.0
    %3174 = vmatprep.subr.mxu0 0.0
    %3175 = vmatpush1.msra.mxu0 0.0
    %3176 = vmatprep.subr.mxu0 0.0
    %3177 = vmatpush1.msra.mxu0 0.0
    %3178 = vmatprep.subr.mxu0 0.0
    %3179 = vmatpush1.msra.mxu0 0.0
    %3180 = vmatprep.subr.mxu0 0.0
    %3181 = vmatpush1.msra.mxu0 0.0
    %3182 = vmatprep.subr.mxu0 0.0
    %3183 = vmatpush1.msra.mxu0 %v110
    %3184 = vmatprep.subr.mxu0 0.0
    %3185 = vmatpush1.msra.mxu0 %v109
    %3186 = vmatprep.subr.mxu0 0.0
    %3187 = vmatpush1.msra.mxu0 %v108
    %3188 = vmatprep.subr.mxu0 0.0
    %3189 = vmatpush2.msra.mxu0 0.0
    %3190 = vmatprep.subr.mxu0 0.0
    %3191 = vmatpush2.msra.mxu0 0.0
    %3192 = vmatprep.subr.mxu0 0.0
    %3193 = vmatpush2.msra.mxu0 0.0
    %3194 = vmatprep.subr.mxu0 0.0
    %3195 = vmatpush2.msra.mxu0 0.0
    %3196 = vmatprep.subr.mxu0 0.0
    %3197 = vmatpush2.msra.mxu0 0.0
    %3198 = vmatprep.subr.mxu0 0.0
    %3199 = vmatpush2.msra.mxu0 0.0
    %3200 = vmatprep.subr.mxu0 0.0
    %3201 = vmatpush2.msra.mxu0 0.0
    %3202 = vmatprep.subr.mxu0 0.0
    %3203 = vmatpush2.msra.mxu0 0.0
    %3204 = vmatprep.subr.mxu0 0.0
    %3205 = vmatpush2.msra.mxu0 0.0
    %3206 = vmatprep.subr.mxu0 0.0
    %3207 = vmatpush2.msra.mxu0 0.0
    %3208 = vmatprep.subr.mxu0 0.0
    %3209 = vmatpush2.msra.mxu0 0.0
    %3210 = vmatprep.subr.mxu0 0.0
    %3211 = vmatpush2.msra.mxu0 0.0
    %3212 = vmatprep.subr.mxu0 0.0
    %3213 = vmatpush2.msra.mxu0 0.0
    %3214 = vmatprep.subr.mxu0 0.0
    %3215 = vmatpush2.msra.mxu0 0.0
    %3216 = vmatprep.subr.mxu0 0.0
    %3217 = vmatpush2.msra.mxu0 0.0
    %3218 = vmatprep.subr.mxu0 0.0
    %3219 = vmatpush2.msra.mxu0 0.0
    %3220 = vmatprep.mubr.f32.mxu0 0.0
    %3221 = vmatmul.mubr.f32.gmra.mxu0 %v3151
    %v3222 = vpop.f32.mrf.mxu0
    %v3223 = vadd.f32 0.0, %v3222
    %v3224 = vpop.f32.mrf.mxu0
    %3225 = vmatprep.mubr.f32.mxu0 0.0
    %3226 = vmatmul.mubr.f32.gmra.mxu0 %v3154
    %v3227 = vpop.f32.mrf.mxu0
    %v3228 = vadd.f32 0.0, %v3227
    %v3229 = vpop.f32.mrf.mxu0
    %3230 = vdwg.mxu0
    %v3232 = vsel %vm2005, %v2283, 0
    %v3235 = vsel %vm2005, %v2285, 0
    %3237 = vmatprep.subr.mxu0 0.0
    %3238 = vmatpush1.msra.mxu0 0.0
    %3239 = vmatprep.subr.mxu0 0.0
    %3240 = vmatpush1.msra.mxu0 0.0
    %3241 = vmatprep.subr.mxu0 0.0
    %3242 = vmatpush1.msra.mxu0 0.0
    %3243 = vmatprep.subr.mxu0 0.0
    %3244 = vmatpush1.msra.mxu0 0.0
    %3245 = vmatprep.subr.mxu0 0.0
    %3246 = vmatpush1.msra.mxu0 0.0
    %3247 = vmatprep.subr.mxu0 0.0
    %3248 = vmatpush1.msra.mxu0 0.0
    %3249 = vmatprep.subr.mxu0 0.0
    %3250 = vmatpush1.msra.mxu0 0.0
    %3251 = vmatprep.subr.mxu0 0.0
    %3252 = vmatpush1.msra.mxu0 0.0
    %3253 = vmatprep.subr.mxu0 0.0
    %3254 = vmatpush1.msra.mxu0 0.0
    %3255 = vmatprep.subr.mxu0 0.0
    %3256 = vmatpush1.msra.mxu0 0.0
    %3257 = vmatprep.subr.mxu0 0.0
    %3258 = vmatpush1.msra.mxu0 0.0
    %3259 = vmatprep.subr.mxu0 0.0
    %3260 = vmatpush1.msra.mxu0 0.0
    %3261 = vmatprep.subr.mxu0 0.0
    %3262 = vmatpush1.msra.mxu0 0.0
    %3263 = vmatprep.subr.mxu0 0.0
    %3264 = vmatpush1.msra.mxu0 %v113
    %3265 = vmatprep.subr.mxu0 0.0
    %3266 = vmatpush1.msra.mxu0 %v112
    %3267 = vmatprep.subr.mxu0 0.0
    %3268 = vmatpush1.msra.mxu0 %v111
    %3269 = vmatprep.subr.mxu0 0.0
    %3270 = vmatpush2.msra.mxu0 0.0
    %3271 = vmatprep.subr.mxu0 0.0
    %3272 = vmatpush2.msra.mxu0 0.0
    %3273 = vmatprep.subr.mxu0 0.0
    %3274 = vmatpush2.msra.mxu0 0.0
    %3275 = vmatprep.subr.mxu0 0.0
    %3276 = vmatpush2.msra.mxu0 0.0
    %3277 = vmatprep.subr.mxu0 0.0
    %3278 = vmatpush2.msra.mxu0 0.0
    %3279 = vmatprep.subr.mxu0 0.0
    %3280 = vmatpush2.msra.mxu0 0.0
    %3281 = vmatprep.subr.mxu0 0.0
    %3282 = vmatpush2.msra.mxu0 0.0
    %3283 = vmatprep.subr.mxu0 0.0
    %3284 = vmatpush2.msra.mxu0 0.0
    %3285 = vmatprep.subr.mxu0 0.0
    %3286 = vmatpush2.msra.mxu0 0.0
    %3287 = vmatprep.subr.mxu0 0.0
    %3288 = vmatpush2.msra.mxu0 0.0
    %3289 = vmatprep.subr.mxu0 0.0
    %3290 = vmatpush2.msra.mxu0 0.0
    %3291 = vmatprep.subr.mxu0 0.0
    %3292 = vmatpush2.msra.mxu0 0.0
    %3293 = vmatprep.subr.mxu0 0.0
    %3294 = vmatpush2.msra.mxu0 0.0
    %3295 = vmatprep.subr.mxu0 0.0
    %3296 = vmatpush2.msra.mxu0 0.0
    %3297 = vmatprep.subr.mxu0 0.0
    %3298 = vmatpush2.msra.mxu0 0.0
    %3299 = vmatprep.subr.mxu0 0.0
    %3300 = vmatpush2.msra.mxu0 0.0
    %3301 = vmatprep.mubr.f32.mxu0 0.0
    %3302 = vmatmul.mubr.f32.gmra.mxu0 %v3232
    %v3303 = vpop.f32.mrf.mxu0
    %v3304 = vadd.f32 0.0, %v3303
    %v3305 = vpop.f32.mrf.mxu0
    %3306 = vmatprep.mubr.f32.mxu0 0.0
    %3307 = vmatmul.mubr.f32.gmra.mxu0 %v3235
    %v3308 = vpop.f32.mrf.mxu0
    %v3309 = vadd.f32 0.0, %v3308
    %v3310 = vpop.f32.mrf.mxu0
    %3311 = vdwg.mxu0
    %v3313 = vsel %vm2005, %v2287, 0
    %v3316 = vsel %vm2005, %v2289, 0
    %3318 = vmatprep.subr.mxu0 0.0
    %3319 = vmatpush1.msra.mxu0 0.0
    %3320 = vmatprep.subr.mxu0 0.0
    %3321 = vmatpush1.msra.mxu0 0.0
    %3322 = vmatprep.subr.mxu0 0.0
    %3323 = vmatpush1.msra.mxu0 0.0
    %3324 = vmatprep.subr.mxu0 0.0
    %3325 = vmatpush1.msra.mxu0 0.0
    %3326 = vmatprep.subr.mxu0 0.0
    %3327 = vmatpush1.msra.mxu0 0.0
    %3328 = vmatprep.subr.mxu0 0.0
    %3329 = vmatpush1.msra.mxu0 0.0
    %3330 = vmatprep.subr.mxu0 0.0
    %3331 = vmatpush1.msra.mxu0 0.0
    %3332 = vmatprep.subr.mxu0 0.0
    %3333 = vmatpush1.msra.mxu0 0.0
    %3334 = vmatprep.subr.mxu0 0.0
    %3335 = vmatpush1.msra.mxu0 0.0
    %3336 = vmatprep.subr.mxu0 0.0
    %3337 = vmatpush1.msra.mxu0 0.0
    %3338 = vmatprep.subr.mxu0 0.0
    %3339 = vmatpush1.msra.mxu0 0.0
    %3340 = vmatprep.subr.mxu0 0.0
    %3341 = vmatpush1.msra.mxu0 0.0
    %3342 = vmatprep.subr.mxu0 0.0
    %3343 = vmatpush1.msra.mxu0 0.0
    %3344 = vmatprep.subr.mxu0 0.0
    %3345 = vmatpush1.msra.mxu0 %v116
    %3346 = vmatprep.subr.mxu0 0.0
    %3347 = vmatpush1.msra.mxu0 %v115
    %3348 = vmatprep.subr.mxu0 0.0
    %3349 = vmatpush1.msra.mxu0 %v114
    %3350 = vmatprep.subr.mxu0 0.0
    %3351 = vmatpush2.msra.mxu0 0.0
    %3352 = vmatprep.subr.mxu0 0.0
    %3353 = vmatpush2.msra.mxu0 0.0
    %3354 = vmatprep.subr.mxu0 0.0
    %3355 = vmatpush2.msra.mxu0 0.0
    %3356 = vmatprep.subr.mxu0 0.0
    %3357 = vmatpush2.msra.mxu0 0.0
    %3358 = vmatprep.subr.mxu0 0.0
    %3359 = vmatpush2.msra.mxu0 0.0
    %3360 = vmatprep.subr.mxu0 0.0
    %3361 = vmatpush2.msra.mxu0 0.0
    %3362 = vmatprep.subr.mxu0 0.0
    %3363 = vmatpush2.msra.mxu0 0.0
    %3364 = vmatprep.subr.mxu0 0.0
    %3365 = vmatpush2.msra.mxu0 0.0
    %3366 = vmatprep.subr.mxu0 0.0
    %3367 = vmatpush2.msra.mxu0 0.0
    %3368 = vmatprep.subr.mxu0 0.0
    %3369 = vmatpush2.msra.mxu0 0.0
    %3370 = vmatprep.subr.mxu0 0.0
    %3371 = vmatpush2.msra.mxu0 0.0
    %3372 = vmatprep.subr.mxu0 0.0
    %3373 = vmatpush2.msra.mxu0 0.0
    %3374 = vmatprep.subr.mxu0 0.0
    %3375 = vmatpush2.msra.mxu0 0.0
    %3376 = vmatprep.subr.mxu0 0.0
    %3377 = vmatpush2.msra.mxu0 0.0
    %3378 = vmatprep.subr.mxu0 0.0
    %3379 = vmatpush2.msra.mxu0 0.0
    %3380 = vmatprep.subr.mxu0 0.0
    %3381 = vmatpush2.msra.mxu0 0.0
    %3382 = vmatprep.mubr.f32.mxu0 0.0
    %3383 = vmatmul.mubr.f32.gmra.mxu0 %v3313
    %v3384 = vpop.f32.mrf.mxu0
    %v3385 = vadd.f32 0.0, %v3384
    %v3386 = vpop.f32.mrf.mxu0
    %3387 = vmatprep.mubr.f32.mxu0 0.0
    %3388 = vmatmul.mubr.f32.gmra.mxu0 %v3316
    %v3389 = vpop.f32.mrf.mxu0
    %v3390 = vadd.f32 0.0, %v3389
    %v3391 = vpop.f32.mrf.mxu0
    %3392 = vdwg.mxu0
    %v3394 = vsel %vm2005, %v2291, 0
    %v3397 = vsel %vm2005, %v2293, 0
    %3399 = vmatprep.subr.mxu0 0.0
    %3400 = vmatpush1.msra.mxu0 0.0
    %3401 = vmatprep.subr.mxu0 0.0
    %3402 = vmatpush1.msra.mxu0 0.0
    %3403 = vmatprep.subr.mxu0 0.0
    %3404 = vmatpush1.msra.mxu0 0.0
    %3405 = vmatprep.subr.mxu0 0.0
    %3406 = vmatpush1.msra.mxu0 0.0
    %3407 = vmatprep.subr.mxu0 0.0
    %3408 = vmatpush1.msra.mxu0 0.0
    %3409 = vmatprep.subr.mxu0 0.0
    %3410 = vmatpush1.msra.mxu0 0.0
    %3411 = vmatprep.subr.mxu0 0.0
    %3412 = vmatpush1.msra.mxu0 0.0
    %3413 = vmatprep.subr.mxu0 0.0
    %3414 = vmatpush1.msra.mxu0 0.0
    %3415 = vmatprep.subr.mxu0 0.0
    %3416 = vmatpush1.msra.mxu0 0.0
    %3417 = vmatprep.subr.mxu0 0.0
    %3418 = vmatpush1.msra.mxu0 0.0
    %3419 = vmatprep.subr.mxu0 0.0
    %3420 = vmatpush1.msra.mxu0 0.0
    %3421 = vmatprep.subr.mxu0 0.0
    %3422 = vmatpush1.msra.mxu0 0.0
    %3423 = vmatprep.subr.mxu0 0.0
    %3424 = vmatpush1.msra.mxu0 0.0
    %3425 = vmatprep.subr.mxu0 0.0
    %3426 = vmatpush1.msra.mxu0 %v119
    %3427 = vmatprep.subr.mxu0 0.0
    %3428 = vmatpush1.msra.mxu0 %v118
    %3429 = vmatprep.subr.mxu0 0.0
    %3430 = vmatpush1.msra.mxu0 %v117
    %3431 = vmatprep.subr.mxu0 0.0
    %3432 = vmatpush2.msra.mxu0 0.0
    %3433 = vmatprep.subr.mxu0 0.0
    %3434 = vmatpush2.msra.mxu0 0.0
    %3435 = vmatprep.subr.mxu0 0.0
    %3436 = vmatpush2.msra.mxu0 0.0
    %3437 = vmatprep.subr.mxu0 0.0
    %3438 = vmatpush2.msra.mxu0 0.0
    %3439 = vmatprep.subr.mxu0 0.0
    %3440 = vmatpush2.msra.mxu0 0.0
    %3441 = vmatprep.subr.mxu0 0.0
    %3442 = vmatpush2.msra.mxu0 0.0
    %3443 = vmatprep.subr.mxu0 0.0
    %3444 = vmatpush2.msra.mxu0 0.0
    %3445 = vmatprep.subr.mxu0 0.0
    %3446 = vmatpush2.msra.mxu0 0.0
    %3447 = vmatprep.subr.mxu0 0.0
    %3448 = vmatpush2.msra.mxu0 0.0
    %3449 = vmatprep.subr.mxu0 0.0
    %3450 = vmatpush2.msra.mxu0 0.0
    %3451 = vmatprep.subr.mxu0 0.0
    %3452 = vmatpush2.msra.mxu0 0.0
    %3453 = vmatprep.subr.mxu0 0.0
    %3454 = vmatpush2.msra.mxu0 0.0
    %3455 = vmatprep.subr.mxu0 0.0
    %3456 = vmatpush2.msra.mxu0 0.0
    %3457 = vmatprep.subr.mxu0 0.0
    %3458 = vmatpush2.msra.mxu0 0.0
    %3459 = vmatprep.subr.mxu0 0.0
    %3460 = vmatpush2.msra.mxu0 0.0
    %3461 = vmatprep.subr.mxu0 0.0
    %3462 = vmatpush2.msra.mxu0 0.0
    %3463 = vmatprep.mubr.f32.mxu0 0.0
    %3464 = vmatmul.mubr.f32.gmra.mxu0 %v3394
    %v3465 = vpop.f32.mrf.mxu0
    %v3466 = vadd.f32 0.0, %v3465
    %v3467 = vpop.f32.mrf.mxu0
    %3468 = vmatprep.mubr.f32.mxu0 0.0
    %3469 = vmatmul.mubr.f32.gmra.mxu0 %v3397
    %v3470 = vpop.f32.mrf.mxu0
    %v3471 = vadd.f32 0.0, %v3470
    %v3472 = vpop.f32.mrf.mxu0
    %3473 = vdwg.mxu0
    %v3475 = vsel %vm2005, %v2295, 0
    %v3478 = vsel %vm2005, %v2297, 0
    %3480 = vmatprep.subr.mxu0 0.0
    %3481 = vmatpush1.msra.mxu0 0.0
    %3482 = vmatprep.subr.mxu0 0.0
    %3483 = vmatpush1.msra.mxu0 0.0
    %3484 = vmatprep.subr.mxu0 0.0
    %3485 = vmatpush1.msra.mxu0 0.0
    %3486 = vmatprep.subr.mxu0 0.0
    %3487 = vmatpush1.msra.mxu0 0.0
    %3488 = vmatprep.subr.mxu0 0.0
    %3489 = vmatpush1.msra.mxu0 0.0
    %3490 = vmatprep.subr.mxu0 0.0
    %3491 = vmatpush1.msra.mxu0 0.0
    %3492 = vmatprep.subr.mxu0 0.0
    %3493 = vmatpush1.msra.mxu0 0.0
    %3494 = vmatprep.subr.mxu0 0.0
    %3495 = vmatpush1.msra.mxu0 0.0
    %3496 = vmatprep.subr.mxu0 0.0
    %3497 = vmatpush1.msra.mxu0 0.0
    %3498 = vmatprep.subr.mxu0 0.0
    %3499 = vmatpush1.msra.mxu0 0.0
    %3500 = vmatprep.subr.mxu0 0.0
    %3501 = vmatpush1.msra.mxu0 0.0
    %3502 = vmatprep.subr.mxu0 0.0
    %3503 = vmatpush1.msra.mxu0 0.0
    %3504 = vmatprep.subr.mxu0 0.0
    %3505 = vmatpush1.msra.mxu0 0.0
    %3506 = vmatprep.subr.mxu0 0.0
    %3507 = vmatpush1.msra.mxu0 %v122
    %3508 = vmatprep.subr.mxu0 0.0
    %3509 = vmatpush1.msra.mxu0 %v121
    %3510 = vmatprep.subr.mxu0 0.0
    %3511 = vmatpush1.msra.mxu0 %v120
    %3512 = vmatprep.subr.mxu0 0.0
    %3513 = vmatpush2.msra.mxu0 0.0
    %3514 = vmatprep.subr.mxu0 0.0
    %3515 = vmatpush2.msra.mxu0 0.0
    %3516 = vmatprep.subr.mxu0 0.0
    %3517 = vmatpush2.msra.mxu0 0.0
    %3518 = vmatprep.subr.mxu0 0.0
    %3519 = vmatpush2.msra.mxu0 0.0
    %3520 = vmatprep.subr.mxu0 0.0
    %3521 = vmatpush2.msra.mxu0 0.0
    %3522 = vmatprep.subr.mxu0 0.0
    %3523 = vmatpush2.msra.mxu0 0.0
    %3524 = vmatprep.subr.mxu0 0.0
    %3525 = vmatpush2.msra.mxu0 0.0
    %3526 = vmatprep.subr.mxu0 0.0
    %3527 = vmatpush2.msra.mxu0 0.0
    %3528 = vmatprep.subr.mxu0 0.0
    %3529 = vmatpush2.msra.mxu0 0.0
    %3530 = vmatprep.subr.mxu0 0.0
    %3531 = vmatpush2.msra.mxu0 0.0
    %3532 = vmatprep.subr.mxu0 0.0
    %3533 = vmatpush2.msra.mxu0 0.0
    %3534 = vmatprep.subr.mxu0 0.0
    %3535 = vmatpush2.msra.mxu0 0.0
    %3536 = vmatprep.subr.mxu0 0.0
    %3537 = vmatpush2.msra.mxu0 0.0
    %3538 = vmatprep.subr.mxu0 0.0
    %3539 = vmatpush2.msra.mxu0 0.0
    %3540 = vmatprep.subr.mxu0 0.0
    %3541 = vmatpush2.msra.mxu0 0.0
    %3542 = vmatprep.subr.mxu0 0.0
    %3543 = vmatpush2.msra.mxu0 0.0
    %3544 = vmatprep.mubr.f32.mxu0 0.0
    %3545 = vmatmul.mubr.f32.gmra.mxu0 %v3475
    %v3546 = vpop.f32.mrf.mxu0
    %v3547 = vadd.f32 0.0, %v3546
    %v3548 = vpop.f32.mrf.mxu0
    %3549 = vmatprep.mubr.f32.mxu0 0.0
    %3550 = vmatmul.mubr.f32.gmra.mxu0 %v3478
    %v3551 = vpop.f32.mrf.mxu0
    %v3552 = vadd.f32 0.0, %v3551
    %v3553 = vpop.f32.mrf.mxu0
    %3554 = vdwg.mxu0
    %v3556 = vsel %vm2005, %v2299, 0
    %v3559 = vsel %vm2005, %v2301, 0
    %3561 = vmatprep.subr.mxu0 0.0
    %3562 = vmatpush1.msra.mxu0 0.0
    %3563 = vmatprep.subr.mxu0 0.0
    %3564 = vmatpush1.msra.mxu0 0.0
    %3565 = vmatprep.subr.mxu0 0.0
    %3566 = vmatpush1.msra.mxu0 0.0
    %3567 = vmatprep.subr.mxu0 0.0
    %3568 = vmatpush1.msra.mxu0 0.0
    %3569 = vmatprep.subr.mxu0 0.0
    %3570 = vmatpush1.msra.mxu0 0.0
    %3571 = vmatprep.subr.mxu0 0.0
    %3572 = vmatpush1.msra.mxu0 0.0
    %3573 = vmatprep.subr.mxu0 0.0
    %3574 = vmatpush1.msra.mxu0 0.0
    %3575 = vmatprep.subr.mxu0 0.0
    %3576 = vmatpush1.msra.mxu0 0.0
    %3577 = vmatprep.subr.mxu0 0.0
    %3578 = vmatpush1.msra.mxu0 0.0
    %3579 = vmatprep.subr.mxu0 0.0
    %3580 = vmatpush1.msra.mxu0 0.0
    %3581 = vmatprep.subr.mxu0 0.0
    %3582 = vmatpush1.msra.mxu0 0.0
    %3583 = vmatprep.subr.mxu0 0.0
    %3584 = vmatpush1.msra.mxu0 0.0
    %3585 = vmatprep.subr.mxu0 0.0
    %3586 = vmatpush1.msra.mxu0 0.0
    %3587 = vmatprep.subr.mxu0 0.0
    %3588 = vmatpush1.msra.mxu0 %v125
    %3589 = vmatprep.subr.mxu0 0.0
    %3590 = vmatpush1.msra.mxu0 %v124
    %3591 = vmatprep.subr.mxu0 0.0
    %3592 = vmatpush1.msra.mxu0 %v123
    %3593 = vmatprep.subr.mxu0 0.0
    %3594 = vmatpush2.msra.mxu0 0.0
    %3595 = vmatprep.subr.mxu0 0.0
    %3596 = vmatpush2.msra.mxu0 0.0
    %3597 = vmatprep.subr.mxu0 0.0
    %3598 = vmatpush2.msra.mxu0 0.0
    %3599 = vmatprep.subr.mxu0 0.0
    %3600 = vmatpush2.msra.mxu0 0.0
    %3601 = vmatprep.subr.mxu0 0.0
    %3602 = vmatpush2.msra.mxu0 0.0
    %3603 = vmatprep.subr.mxu0 0.0
    %3604 = vmatpush2.msra.mxu0 0.0
    %3605 = vmatprep.subr.mxu0 0.0
    %3606 = vmatpush2.msra.mxu0 0.0
    %3607 = vmatprep.subr.mxu0 0.0
    %3608 = vmatpush2.msra.mxu0 0.0
    %3609 = vmatprep.subr.mxu0 0.0
    %3610 = vmatpush2.msra.mxu0 0.0
    %3611 = vmatprep.subr.mxu0 0.0
    %3612 = vmatpush2.msra.mxu0 0.0
    %3613 = vmatprep.subr.mxu0 0.0
    %3614 = vmatpush2.msra.mxu0 0.0
    %3615 = vmatprep.subr.mxu0 0.0
    %3616 = vmatpush2.msra.mxu0 0.0
    %3617 = vmatprep.subr.mxu0 0.0
    %3618 = vmatpush2.msra.mxu0 0.0
    %3619 = vmatprep.subr.mxu0 0.0
    %3620 = vmatpush2.msra.mxu0 0.0
    %3621 = vmatprep.subr.mxu0 0.0
    %3622 = vmatpush2.msra.mxu0 0.0
    %3623 = vmatprep.subr.mxu0 0.0
    %3624 = vmatpush2.msra.mxu0 0.0
    %3625 = vmatprep.mubr.f32.mxu0 0.0
    %3626 = vmatmul.mubr.f32.gmra.mxu0 %v3556
    %v3627 = vpop.f32.mrf.mxu0
    %v3628 = vadd.f32 0.0, %v3627
    %v3629 = vpop.f32.mrf.mxu0
    %3630 = vmatprep.mubr.f32.mxu0 0.0
    %3631 = vmatmul.mubr.f32.gmra.mxu0 %v3559
    %v3632 = vpop.f32.mrf.mxu0
    %v3633 = vadd.f32 0.0, %v3632
    %v3634 = vpop.f32.mrf.mxu0
    %3635 = vdwg.mxu0
    %v3637 = vsel %vm2005, %v2303, 0
    %v3640 = vsel %vm2005, %v2305, 0
    %3642 = vmatprep.subr.mxu0 0.0
    %3643 = vmatpush1.msra.mxu0 0.0
    %3644 = vmatprep.subr.mxu0 0.0
    %3645 = vmatpush1.msra.mxu0 0.0
    %3646 = vmatprep.subr.mxu0 0.0
    %3647 = vmatpush1.msra.mxu0 0.0
    %3648 = vmatprep.subr.mxu0 0.0
    %3649 = vmatpush1.msra.mxu0 0.0
    %3650 = vmatprep.subr.mxu0 0.0
    %3651 = vmatpush1.msra.mxu0 0.0
    %3652 = vmatprep.subr.mxu0 0.0
    %3653 = vmatpush1.msra.mxu0 0.0
    %3654 = vmatprep.subr.mxu0 0.0
    %3655 = vmatpush1.msra.mxu0 0.0
    %3656 = vmatprep.subr.mxu0 0.0
    %3657 = vmatpush1.msra.mxu0 0.0
    %3658 = vmatprep.subr.mxu0 0.0
    %3659 = vmatpush1.msra.mxu0 0.0
    %3660 = vmatprep.subr.mxu0 0.0
    %3661 = vmatpush1.msra.mxu0 0.0
    %3662 = vmatprep.subr.mxu0 0.0
    %3663 = vmatpush1.msra.mxu0 0.0
    %3664 = vmatprep.subr.mxu0 0.0
    %3665 = vmatpush1.msra.mxu0 0.0
    %3666 = vmatprep.subr.mxu0 0.0
    %3667 = vmatpush1.msra.mxu0 0.0
    %3668 = vmatprep.subr.mxu0 0.0
    %3669 = vmatpush1.msra.mxu0 %v128
    %3670 = vmatprep.subr.mxu0 0.0
    %3671 = vmatpush1.msra.mxu0 %v127
    %3672 = vmatprep.subr.mxu0 0.0
    %3673 = vmatpush1.msra.mxu0 %v126
    %3674 = vmatprep.subr.mxu0 0.0
    %3675 = vmatpush2.msra.mxu0 0.0
    %3676 = vmatprep.subr.mxu0 0.0
    %3677 = vmatpush2.msra.mxu0 0.0
    %3678 = vmatprep.subr.mxu0 0.0
    %3679 = vmatpush2.msra.mxu0 0.0
    %3680 = vmatprep.subr.mxu0 0.0
    %3681 = vmatpush2.msra.mxu0 0.0
    %3682 = vmatprep.subr.mxu0 0.0
    %3683 = vmatpush2.msra.mxu0 0.0
    %3684 = vmatprep.subr.mxu0 0.0
    %3685 = vmatpush2.msra.mxu0 0.0
    %3686 = vmatprep.subr.mxu0 0.0
    %3687 = vmatpush2.msra.mxu0 0.0
    %3688 = vmatprep.subr.mxu0 0.0
    %3689 = vmatpush2.msra.mxu0 0.0
    %3690 = vmatprep.subr.mxu0 0.0
    %3691 = vmatpush2.msra.mxu0 0.0
    %3692 = vmatprep.subr.mxu0 0.0
    %3693 = vmatpush2.msra.mxu0 0.0
    %3694 = vmatprep.subr.mxu0 0.0
    %3695 = vmatpush2.msra.mxu0 0.0
    %3696 = vmatprep.subr.mxu0 0.0
    %3697 = vmatpush2.msra.mxu0 0.0
    %3698 = vmatprep.subr.mxu0 0.0
    %3699 = vmatpush2.msra.mxu0 0.0
    %3700 = vmatprep.subr.mxu0 0.0
    %3701 = vmatpush2.msra.mxu0 0.0
    %3702 = vmatprep.subr.mxu0 0.0
    %3703 = vmatpush2.msra.mxu0 0.0
    %3704 = vmatprep.subr.mxu0 0.0
    %3705 = vmatpush2.msra.mxu0 0.0
    %3706 = vmatprep.mubr.f32.mxu0 0.0
    %3707 = vmatmul.mubr.f32.gmra.mxu0 %v3637
    %v3708 = vpop.f32.mrf.mxu0
    %v3709 = vadd.f32 0.0, %v3708
    %v3710 = vpop.f32.mrf.mxu0
    %3711 = vmatprep.mubr.f32.mxu0 0.0
    %3712 = vmatmul.mubr.f32.gmra.mxu0 %v3640
    %v3713 = vpop.f32.mrf.mxu0
    %v3714 = vadd.f32 0.0, %v3713
    %v3715 = vpop.f32.mrf.mxu0
    %3716 = vdwg.mxu0
    %v3718 = vsel %vm2005, %v2307, 0
    %v3721 = vsel %vm2005, %v2309, 0
    %3723 = vmatprep.subr.mxu0 0.0
    %3724 = vmatpush1.msra.mxu0 0.0
    %3725 = vmatprep.subr.mxu0 0.0
    %3726 = vmatpush1.msra.mxu0 0.0
    %3727 = vmatprep.subr.mxu0 0.0
    %3728 = vmatpush1.msra.mxu0 0.0
    %3729 = vmatprep.subr.mxu0 0.0
    %3730 = vmatpush1.msra.mxu0 0.0
    %3731 = vmatprep.subr.mxu0 0.0
    %3732 = vmatpush1.msra.mxu0 0.0
    %3733 = vmatprep.subr.mxu0 0.0
    %3734 = vmatpush1.msra.mxu0 0.0
    %3735 = vmatprep.subr.mxu0 0.0
    %3736 = vmatpush1.msra.mxu0 0.0
    %3737 = vmatprep.subr.mxu0 0.0
    %3738 = vmatpush1.msra.mxu0 0.0
    %3739 = vmatprep.subr.mxu0 0.0
    %3740 = vmatpush1.msra.mxu0 0.0
    %3741 = vmatprep.subr.mxu0 0.0
    %3742 = vmatpush1.msra.mxu0 0.0
    %3743 = vmatprep.subr.mxu0 0.0
    %3744 = vmatpush1.msra.mxu0 0.0
    %3745 = vmatprep.subr.mxu0 0.0
    %3746 = vmatpush1.msra.mxu0 0.0
    %3747 = vmatprep.subr.mxu0 0.0
    %3748 = vmatpush1.msra.mxu0 0.0
    %3749 = vmatprep.subr.mxu0 0.0
    %3750 = vmatpush1.msra.mxu0 %v131
    %3751 = vmatprep.subr.mxu0 0.0
    %3752 = vmatpush1.msra.mxu0 %v130
    %3753 = vmatprep.subr.mxu0 0.0
    %3754 = vmatpush1.msra.mxu0 %v129
    %3755 = vmatprep.subr.mxu0 0.0
    %3756 = vmatpush2.msra.mxu0 0.0
    %3757 = vmatprep.subr.mxu0 0.0
    %3758 = vmatpush2.msra.mxu0 0.0
    %3759 = vmatprep.subr.mxu0 0.0
    %3760 = vmatpush2.msra.mxu0 0.0
    %3761 = vmatprep.subr.mxu0 0.0
    %3762 = vmatpush2.msra.mxu0 0.0
    %3763 = vmatprep.subr.mxu0 0.0
    %3764 = vmatpush2.msra.mxu0 0.0
    %3765 = vmatprep.subr.mxu0 0.0
    %3766 = vmatpush2.msra.mxu0 0.0
    %3767 = vmatprep.subr.mxu0 0.0
    %3768 = vmatpush2.msra.mxu0 0.0
    %3769 = vmatprep.subr.mxu0 0.0
    %3770 = vmatpush2.msra.mxu0 0.0
    %3771 = vmatprep.subr.mxu0 0.0
    %3772 = vmatpush2.msra.mxu0 0.0
    %3773 = vmatprep.subr.mxu0 0.0
    %3774 = vmatpush2.msra.mxu0 0.0
    %3775 = vmatprep.subr.mxu0 0.0
    %3776 = vmatpush2.msra.mxu0 0.0
    %3777 = vmatprep.subr.mxu0 0.0
    %3778 = vmatpush2.msra.mxu0 0.0
    %3779 = vmatprep.subr.mxu0 0.0
    %3780 = vmatpush2.msra.mxu0 0.0
    %3781 = vmatprep.subr.mxu0 0.0
    %3782 = vmatpush2.msra.mxu0 0.0
    %3783 = vmatprep.subr.mxu0 0.0
    %3784 = vmatpush2.msra.mxu0 0.0
    %3785 = vmatprep.subr.mxu0 0.0
    %3786 = vmatpush2.msra.mxu0 0.0
    %3787 = vmatprep.mubr.f32.mxu0 0.0
    %3788 = vmatmul.mubr.f32.gmra.mxu0 %v3718
    %v3789 = vpop.f32.mrf.mxu0
    %v3790 = vadd.f32 0.0, %v3789
    %v3791 = vpop.f32.mrf.mxu0
    %3792 = vmatprep.mubr.f32.mxu0 0.0
    %3793 = vmatmul.mubr.f32.gmra.mxu0 %v3721
    %v3794 = vpop.f32.mrf.mxu0
    %v3795 = vadd.f32 0.0, %v3794
    %v3796 = vpop.f32.mrf.mxu0
    %3797 = vdwg.mxu0
    %v3798 = vrcp.pop %v2408
    %v3799 = vrcp.pop %v2411
    %v3800 = vrcp.pop %v2414
    %v3801 = vrcp.pop %v2417
    %v3802 = vrcp.pop %v2420
    %v3803 = vrcp.pop %v2423
    %v3804 = vrcp.pop %v2426
    %v3805 = vrcp.pop %v2429
    %v3806 = vrcp.pop %v2432
    %v3807 = vrcp.pop %v2435
    %v3808 = vrcp.pop %v2438
    %v3809 = vrcp.pop %v2441
    %v3810 = vrcp.pop %v2444
    %v3811 = vrcp.pop %v2447
    %v3812 = vrcp.pop %v2450
    %v3813 = vrcp.pop %v2453
    %v3814 = vrcp.pop %v2456
    %v3815 = vrcp.pop %v2459
    %v3816 = vrcp.pop %v2462
    %v3817 = vrcp.pop %v2465
    %v3818 = vrcp.pop %v2468
    %v3819 = vrcp.pop %v2471
    %v3820 = vrcp.pop %v2474
    %v3821 = vrcp.pop %v2477
    %v3822 = vrcp.pop %v2480
    %v3823 = vrcp.pop %v2483
    %v3824 = vrcp.pop %v2486
    %v3825 = vrcp.pop %v2489
    %v3826 = vrcp.pop %v2492
    %v3827 = vrcp.pop %v2495
    %v3828 = vrcp.pop %v2498
    %v3829 = vrcp.pop %v2501
    %v3830 = vmul.f32 %v2408, %v3798
    %v3831 = vmul.f32 %v2411, %v3799
    %v3832 = vmul.f32 %v2414, %v3800
    %v3833 = vmul.f32 %v2417, %v3801
    %v3834 = vmul.f32 %v2420, %v3802
    %v3835 = vmul.f32 %v2423, %v3803
    %v3836 = vmul.f32 %v2426, %v3804
    %v3837 = vmul.f32 %v2429, %v3805
    %v3838 = vmul.f32 %v2432, %v3806
    %v3839 = vmul.f32 %v2435, %v3807
    %v3840 = vmul.f32 %v2438, %v3808
    %v3841 = vmul.f32 %v2441, %v3809
    %v3842 = vmul.f32 %v2444, %v3810
    %v3843 = vmul.f32 %v2447, %v3811
    %v3844 = vmul.f32 %v2450, %v3812
    %v3845 = vmul.f32 %v2453, %v3813
    %v3846 = vmul.f32 %v2456, %v3814
    %v3847 = vmul.f32 %v2459, %v3815
    %v3848 = vmul.f32 %v2462, %v3816
    %v3849 = vmul.f32 %v2465, %v3817
    %v3850 = vmul.f32 %v2468, %v3818
    %v3851 = vmul.f32 %v2471, %v3819
    %v3852 = vmul.f32 %v2474, %v3820
    %v3853 = vmul.f32 %v2477, %v3821
    %v3854 = vmul.f32 %v2480, %v3822
    %v3855 = vmul.f32 %v2483, %v3823
    %v3856 = vmul.f32 %v2486, %v3824
    %v3857 = vmul.f32 %v2489, %v3825
    %v3858 = vmul.f32 %v2492, %v3826
    %v3859 = vmul.f32 %v2495, %v3827
    %v3860 = vmul.f32 %v2498, %v3828
    %v3861 = vmul.f32 %v2501, %v3829
    %v3862 = vsub.f32 2.0, %v3830
    %v3863 = vsub.f32 2.0, %v3831
    %v3864 = vsub.f32 2.0, %v3832
    %v3865 = vsub.f32 2.0, %v3833
    %v3866 = vsub.f32 2.0, %v3834
    %v3867 = vsub.f32 2.0, %v3835
    %v3868 = vsub.f32 2.0, %v3836
    %v3869 = vsub.f32 2.0, %v3837
    %v3870 = vsub.f32 2.0, %v3838
    %v3871 = vsub.f32 2.0, %v3839
    %v3872 = vsub.f32 2.0, %v3840
    %v3873 = vsub.f32 2.0, %v3841
    %v3874 = vsub.f32 2.0, %v3842
    %v3875 = vsub.f32 2.0, %v3843
    %v3876 = vsub.f32 2.0, %v3844
    %v3877 = vsub.f32 2.0, %v3845
    %v3878 = vsub.f32 2.0, %v3846
    %v3879 = vsub.f32 2.0, %v3847
    %v3880 = vsub.f32 2.0, %v3848
    %v3881 = vsub.f32 2.0, %v3849
    %v3882 = vsub.f32 2.0, %v3850
    %v3883 = vsub.f32 2.0, %v3851
    %v3884 = vsub.f32 2.0, %v3852
    %v3885 = vsub.f32 2.0, %v3853
    %v3886 = vsub.f32 2.0, %v3854
    %v3887 = vsub.f32 2.0, %v3855
    %v3888 = vsub.f32 2.0, %v3856
    %v3889 = vsub.f32 2.0, %v3857
    %v3890 = vsub.f32 2.0, %v3858
    %v3891 = vsub.f32 2.0, %v3859
    %v3892 = vsub.f32 2.0, %v3860
    %v3893 = vsub.f32 2.0, %v3861
    %v3894 = vmul.f32 %v3798, %v3862
    %v3895 = vmul.f32 %v3799, %v3863
    %v3896 = vmul.f32 %v3800, %v3864
    %v3897 = vmul.f32 %v3801, %v3865
    %v3898 = vmul.f32 %v3802, %v3866
    %v3899 = vmul.f32 %v3803, %v3867
    %v3900 = vmul.f32 %v3804, %v3868
    %v3901 = vmul.f32 %v3805, %v3869
    %v3902 = vmul.f32 %v3806, %v3870
    %v3903 = vmul.f32 %v3807, %v3871
    %v3904 = vmul.f32 %v3808, %v3872
    %v3905 = vmul.f32 %v3809, %v3873
    %v3906 = vmul.f32 %v3810, %v3874
    %v3907 = vmul.f32 %v3811, %v3875
    %v3908 = vmul.f32 %v3812, %v3876
    %v3909 = vmul.f32 %v3813, %v3877
    %v3910 = vmul.f32 %v3814, %v3878
    %v3911 = vmul.f32 %v3815, %v3879
    %v3912 = vmul.f32 %v3816, %v3880
    %v3913 = vmul.f32 %v3817, %v3881
    %v3914 = vmul.f32 %v3818, %v3882
    %v3915 = vmul.f32 %v3819, %v3883
    %v3916 = vmul.f32 %v3820, %v3884
    %v3917 = vmul.f32 %v3821, %v3885
    %v3918 = vmul.f32 %v3822, %v3886
    %v3919 = vmul.f32 %v3823, %v3887
    %v3920 = vmul.f32 %v3824, %v3888
    %v3921 = vmul.f32 %v3825, %v3889
    %v3922 = vmul.f32 %v3826, %v3890
    %v3923 = vmul.f32 %v3827, %v3891
    %v3924 = vmul.f32 %v3828, %v3892
    %v3925 = vmul.f32 %v3829, %v3893
    %v3926 = vmul.f32 %v2575, %v3894
    %v3927 = vmul.f32 %v2580, %v3895
    %v3928 = vmul.f32 %v2656, %v3896
    %v3929 = vmul.f32 %v2661, %v3897
    %v3930 = vmul.f32 %v2737, %v3898
    %v3931 = vmul.f32 %v2742, %v3899
    %v3932 = vmul.f32 %v2818, %v3900
    %v3933 = vmul.f32 %v2823, %v3901
    %v3934 = vmul.f32 %v2899, %v3902
    %v3935 = vmul.f32 %v2904, %v3903
    %v3936 = vmul.f32 %v2980, %v3904
    %v3937 = vmul.f32 %v2985, %v3905
    %v3938 = vmul.f32 %v3061, %v3906
    %v3939 = vmul.f32 %v3066, %v3907
    %v3940 = vmul.f32 %v3142, %v3908
    %v3941 = vmul.f32 %v3147, %v3909
    %v3942 = vmul.f32 %v3223, %v3910
    %v3943 = vmul.f32 %v3228, %v3911
    %v3944 = vmul.f32 %v3304, %v3912
    %v3945 = vmul.f32 %v3309, %v3913
    %v3946 = vmul.f32 %v3385, %v3914
    %v3947 = vmul.f32 %v3390, %v3915
    %v3948 = vmul.f32 %v3466, %v3916
    %v3949 = vmul.f32 %v3471, %v3917
    %v3950 = vmul.f32 %v3547, %v3918
    %v3951 = vmul.f32 %v3552, %v3919
    %v3952 = vmul.f32 %v3628, %v3920
    %v3953 = vmul.f32 %v3633, %v3921
    %v3954 = vmul.f32 %v3709, %v3922
    %v3955 = vmul.f32 %v3714, %v3923
    %v3956 = vmul.f32 %v3790, %v3924
    %v3957 = vmul.f32 %v3795, %v3925
    %3958 = vst [vmem:[#allocation7] sm:$0xff] %v3926
    %3959 = vst [vmem:[#allocation7 + $0x8] sm:$0xff] %v3927
    %3960 = vst [vmem:[#allocation7 + $0x10] sm:$0xff] %v3928
    %3961 = vst [vmem:[#allocation7 + $0x18] sm:$0xff] %v3929
    %3962 = vst [vmem:[#allocation7 + $0x20] sm:$0xff] %v3930
    %3963 = vst [vmem:[#allocation7 + $0x28] sm:$0xff] %v3931
    %3964 = vst [vmem:[#allocation7 + $0x30] sm:$0xff] %v3932
    %3965 = vst [vmem:[#allocation7 + $0x38] sm:$0xff] %v3933
    %3966 = vst [vmem:[#allocation7 + $0x40] sm:$0xff] %v3934
    %3967 = vst [vmem:[#allocation7 + $0x48] sm:$0xff] %v3935
    %3968 = vst [vmem:[#allocation7 + $0x50] sm:$0xff] %v3936
    %3969 = vst [vmem:[#allocation7 + $0x58] sm:$0xff] %v3937
    %3970 = vst [vmem:[#allocation7 + $0x60] sm:$0xff] %v3938
    %3971 = vst [vmem:[#allocation7 + $0x68] sm:$0xff] %v3939
    %3972 = vst [vmem:[#allocation7 + $0x70] sm:$0xff] %v3940
    %3973 = vst [vmem:[#allocation7 + $0x78] sm:$0xff] %v3941
    %3974 = vst [vmem:[#allocation7 + $0x80] sm:$0xff] %v3942
    %3975 = vst [vmem:[#allocation7 + $0x88] sm:$0xff] %v3943
    %3976 = vst [vmem:[#allocation7 + $0x90] sm:$0xff] %v3944
    %3977 = vst [vmem:[#allocation7 + $0x98] sm:$0xff] %v3945
    %3978 = vst [vmem:[#allocation7 + $0xa0] sm:$0xff] %v3946
    %3979 = vst [vmem:[#allocation7 + $0xa8] sm:$0xff] %v3947
    %3980 = vst [vmem:[#allocation7 + $0xb0] sm:$0xff] %v3948
    %3981 = vst [vmem:[#allocation7 + $0xb8] sm:$0xff] %v3949
    %3982 = vst [vmem:[#allocation7 + $0xc0] sm:$0xff] %v3950
    %3983 = vst [vmem:[#allocation7 + $0xc8] sm:$0xff] %v3951
    %3984 = vst [vmem:[#allocation7 + $0xd0] sm:$0xff] %v3952
    %3985 = vst [vmem:[#allocation7 + $0xd8] sm:$0xff] %v3953
    %3986 = vst [vmem:[#allocation7 + $0xe0] sm:$0xff] %v3954
    %3987 = vst [vmem:[#allocation7 + $0xe8] sm:$0xff] %v3955
    %3988 = vst [vmem:[#allocation7 + $0xf0] sm:$0xff] %v3956
    %3989 = vst [vmem:[#allocation7 + $0xf8] sm:$0xff] %v3957
    %v3990 = vsel %vm2005, %v2343, 0.0
    %v3991 = vsel %vm2005, %v2345, 0.0
    %v3992 = vadd.f32 %v3990, %v3991
    %v3993 = vrot.slane %v3992, 4
    %v3994 = vadd.f32 %v3992, %v3993
    %v3995 = vrot.slane %v3994, 2
    %v3996 = vadd.f32 %v3994, %v3995
    %v3997 = vrot.slane %v3996, 1
    %v3998 = vadd.f32 %v3996, %v3997
    %v3999 = vsel %vm2005, %v2347, 0.0
    %v4000 = vsel %vm2005, %v2349, 0.0
    %v4001 = vadd.f32 %v3999, %v4000
    %v4002 = vrot.slane %v4001, 4
    %v4003 = vadd.f32 %v4001, %v4002
    %v4004 = vrot.slane %v4003, 2
    %v4005 = vadd.f32 %v4003, %v4004
    %v4006 = vrot.slane %v4005, 1
    %v4007 = vadd.f32 %v4005, %v4006
    %v4008 = vsel %vm2005, %v2351, 0.0
    %v4009 = vsel %vm2005, %v2353, 0.0
    %v4010 = vadd.f32 %v4008, %v4009
    %v4011 = vrot.slane %v4010, 4
    %v4012 = vadd.f32 %v4010, %v4011
    %v4013 = vrot.slane %v4012, 2
    %v4014 = vadd.f32 %v4012, %v4013
    %v4015 = vrot.slane %v4014, 1
    %v4016 = vadd.f32 %v4014, %v4015
    %v4017 = vsel %vm2005, %v2355, 0.0
    %v4018 = vsel %vm2005, %v2357, 0.0
    %v4019 = vadd.f32 %v4017, %v4018
    %v4020 = vrot.slane %v4019, 4
    %v4021 = vadd.f32 %v4019, %v4020
    %v4022 = vrot.slane %v4021, 2
    %v4023 = vadd.f32 %v4021, %v4022
    %v4024 = vrot.slane %v4023, 1
    %v4025 = vadd.f32 %v4023, %v4024
    %v4026 = vsel %vm2005, %v2359, 0.0
    %v4027 = vsel %vm2005, %v2361, 0.0
    %v4028 = vadd.f32 %v4026, %v4027
    %v4029 = vrot.slane %v4028, 4
    %v4030 = vadd.f32 %v4028, %v4029
    %v4031 = vrot.slane %v4030, 2
    %v4032 = vadd.f32 %v4030, %v4031
    %v4033 = vrot.slane %v4032, 1
    %v4034 = vadd.f32 %v4032, %v4033
    %v4035 = vsel %vm2005, %v2363, 0.0
    %v4036 = vsel %vm2005, %v2365, 0.0
    %v4037 = vadd.f32 %v4035, %v4036
    %v4038 = vrot.slane %v4037, 4
    %v4039 = vadd.f32 %v4037, %v4038
    %v4040 = vrot.slane %v4039, 2
    %v4041 = vadd.f32 %v4039, %v4040
    %v4042 = vrot.slane %v4041, 1
    %v4043 = vadd.f32 %v4041, %v4042
    %v4044 = vsel %vm2005, %v2367, 0.0
    %v4045 = vsel %vm2005, %v2369, 0.0
    %v4046 = vadd.f32 %v4044, %v4045
    %v4047 = vrot.slane %v4046, 4
    %v4048 = vadd.f32 %v4046, %v4047
    %v4049 = vrot.slane %v4048, 2
    %v4050 = vadd.f32 %v4048, %v4049
    %v4051 = vrot.slane %v4050, 1
    %v4052 = vadd.f32 %v4050, %v4051
    %v4053 = vsel %vm2005, %v2371, 0.0
    %v4054 = vsel %vm2005, %v2373, 0.0
    %v4055 = vadd.f32 %v4053, %v4054
    %v4056 = vrot.slane %v4055, 4
    %v4057 = vadd.f32 %v4055, %v4056
    %v4058 = vrot.slane %v4057, 2
    %v4059 = vadd.f32 %v4057, %v4058
    %v4060 = vrot.slane %v4059, 1
    %v4061 = vadd.f32 %v4059, %v4060
    %v4062 = vsel %vm2005, %v2375, 0.0
    %v4063 = vsel %vm2005, %v2377, 0.0
    %v4064 = vadd.f32 %v4062, %v4063
    %v4065 = vrot.slane %v4064, 4
    %v4066 = vadd.f32 %v4064, %v4065
    %v4067 = vrot.slane %v4066, 2
    %v4068 = vadd.f32 %v4066, %v4067
    %v4069 = vrot.slane %v4068, 1
    %v4070 = vadd.f32 %v4068, %v4069
    %v4071 = vsel %vm2005, %v2379, 0.0
    %v4072 = vsel %vm2005, %v2381, 0.0
    %v4073 = vadd.f32 %v4071, %v4072
    %v4074 = vrot.slane %v4073, 4
    %v4075 = vadd.f32 %v4073, %v4074
    %v4076 = vrot.slane %v4075, 2
    %v4077 = vadd.f32 %v4075, %v4076
    %v4078 = vrot.slane %v4077, 1
    %v4079 = vadd.f32 %v4077, %v4078
    %v4080 = vsel %vm2005, %v2383, 0.0
    %v4081 = vsel %vm2005, %v2385, 0.0
    %v4082 = vadd.f32 %v4080, %v4081
    %v4083 = vrot.slane %v4082, 4
    %v4084 = vadd.f32 %v4082, %v4083
    %v4085 = vrot.slane %v4084, 2
    %v4086 = vadd.f32 %v4084, %v4085
    %v4087 = vrot.slane %v4086, 1
    %v4088 = vadd.f32 %v4086, %v4087
    %v4089 = vsel %vm2005, %v2387, 0.0
    %v4090 = vsel %vm2005, %v2389, 0.0
    %v4091 = vadd.f32 %v4089, %v4090
    %v4092 = vrot.slane %v4091, 4
    %v4093 = vadd.f32 %v4091, %v4092
    %v4094 = vrot.slane %v4093, 2
    %v4095 = vadd.f32 %v4093, %v4094
    %v4096 = vrot.slane %v4095, 1
    %v4097 = vadd.f32 %v4095, %v4096
    %v4098 = vsel %vm2005, %v2391, 0.0
    %v4099 = vsel %vm2005, %v2393, 0.0
    %v4100 = vadd.f32 %v4098, %v4099
    %v4101 = vrot.slane %v4100, 4
    %v4102 = vadd.f32 %v4100, %v4101
    %v4103 = vrot.slane %v4102, 2
    %v4104 = vadd.f32 %v4102, %v4103
    %v4105 = vrot.slane %v4104, 1
    %v4106 = vadd.f32 %v4104, %v4105
    %v4107 = vsel %vm2005, %v2395, 0.0
    %v4108 = vsel %vm2005, %v2397, 0.0
    %v4109 = vadd.f32 %v4107, %v4108
    %v4110 = vrot.slane %v4109, 4
    %v4111 = vadd.f32 %v4109, %v4110
    %v4112 = vrot.slane %v4111, 2
    %v4113 = vadd.f32 %v4111, %v4112
    %v4114 = vrot.slane %v4113, 1
    %v4115 = vadd.f32 %v4113, %v4114
    %v4116 = vsel %vm2005, %v2399, 0.0
    %v4117 = vsel %vm2005, %v2401, 0.0
    %v4118 = vadd.f32 %v4116, %v4117
    %v4119 = vrot.slane %v4118, 4
    %v4120 = vadd.f32 %v4118, %v4119
    %v4121 = vrot.slane %v4120, 2
    %v4122 = vadd.f32 %v4120, %v4121
    %v4123 = vrot.slane %v4122, 1
    %v4124 = vadd.f32 %v4122, %v4123
    %v4125 = vsel %vm2005, %v2403, 0.0
    %v4126 = vsel %vm2005, %v2405, 0.0
    %v4127 = vadd.f32 %v4125, %v4126
    %v4128 = vrot.slane %v4127, 4
    %v4129 = vadd.f32 %v4127, %v4128
    %v4130 = vrot.slane %v4129, 2
    %v4131 = vadd.f32 %v4129, %v4130
    %v4132 = vrot.slane %v4131, 1
    %v4133 = vadd.f32 %v4131, %v4132
    %v4134 = vrcp.pop %v3998
    %v4135 = vrcp.pop %v4007
    %v4136 = vrcp.pop %v4016
    %v4137 = vrcp.pop %v4025
    %v4138 = vrcp.pop %v4034
    %v4139 = vrcp.pop %v4043
    %v4140 = vrcp.pop %v4052
    %v4141 = vrcp.pop %v4061
    %v4142 = vrcp.pop %v4070
    %v4143 = vrcp.pop %v4079
    %v4144 = vrcp.pop %v4088
    %v4145 = vrcp.pop %v4097
    %v4146 = vrcp.pop %v4106
    %v4147 = vrcp.pop %v4115
    %v4148 = vrcp.pop %v4124
    %v4149 = vrcp.pop %v4133
    %v4150 = vmul.f32 %v3998, %v4134
    %v4151 = vmul.f32 %v4007, %v4135
    %v4152 = vmul.f32 %v4016, %v4136
    %v4153 = vmul.f32 %v4025, %v4137
    %v4154 = vmul.f32 %v4034, %v4138
    %v4155 = vmul.f32 %v4043, %v4139
    %v4156 = vmul.f32 %v4052, %v4140
    %v4157 = vmul.f32 %v4061, %v4141
    %v4158 = vmul.f32 %v4070, %v4142
    %v4159 = vmul.f32 %v4079, %v4143
    %v4160 = vmul.f32 %v4088, %v4144
    %v4161 = vmul.f32 %v4097, %v4145
    %v4162 = vmul.f32 %v4106, %v4146
    %v4163 = vmul.f32 %v4115, %v4147
    %v4164 = vmul.f32 %v4124, %v4148
    %v4165 = vmul.f32 %v4133, %v4149
    %v4166 = vsub.f32 2.0, %v4150
    %v4167 = vsub.f32 2.0, %v4151
    %v4168 = vsub.f32 2.0, %v4152
    %v4169 = vsub.f32 2.0, %v4153
    %v4170 = vsub.f32 2.0, %v4154
    %v4171 = vsub.f32 2.0, %v4155
    %v4172 = vsub.f32 2.0, %v4156
    %v4173 = vsub.f32 2.0, %v4157
    %v4174 = vsub.f32 2.0, %v4158
    %v4175 = vsub.f32 2.0, %v4159
    %v4176 = vsub.f32 2.0, %v4160
    %v4177 = vsub.f32 2.0, %v4161
    %v4178 = vsub.f32 2.0, %v4162
    %v4179 = vsub.f32 2.0, %v4163
    %v4180 = vsub.f32 2.0, %v4164
    %v4181 = vsub.f32 2.0, %v4165
    %v4182 = vmul.f32 %v4134, %v4166
    %v4183 = vmul.f32 %v4135, %v4167
    %v4184 = vmul.f32 %v4136, %v4168
    %v4185 = vmul.f32 %v4137, %v4169
    %v4186 = vmul.f32 %v4138, %v4170
    %v4187 = vmul.f32 %v4139, %v4171
    %v4188 = vmul.f32 %v4140, %v4172
    %v4189 = vmul.f32 %v4141, %v4173
    %v4190 = vmul.f32 %v4142, %v4174
    %v4191 = vmul.f32 %v4143, %v4175
    %v4192 = vmul.f32 %v4144, %v4176
    %v4193 = vmul.f32 %v4145, %v4177
    %v4194 = vmul.f32 %v4146, %v4178
    %v4195 = vmul.f32 %v4147, %v4179
    %v4196 = vmul.f32 %v4148, %v4180
    %v4197 = vmul.f32 %v4149, %v4181
    %v4198 = vmul.f32 %v2343, %v4182
    %v4199 = vmul.f32 %v2345, %v4182
    %v4200 = vmul.f32 %v2347, %v4183
    %v4201 = vmul.f32 %v2349, %v4183
    %v4202 = vmul.f32 %v2351, %v4184
    %v4203 = vmul.f32 %v2353, %v4184
    %v4204 = vmul.f32 %v2355, %v4185
    %v4205 = vmul.f32 %v2357, %v4185
    %v4206 = vmul.f32 %v2359, %v4186
    %v4207 = vmul.f32 %v2361, %v4186
    %v4208 = vmul.f32 %v2363, %v4187
    %v4209 = vmul.f32 %v2365, %v4187
    %v4210 = vmul.f32 %v2367, %v4188
    %v4211 = vmul.f32 %v2369, %v4188
    %v4212 = vmul.f32 %v2371, %v4189
    %v4213 = vmul.f32 %v2373, %v4189
    %v4214 = vmul.f32 %v2375, %v4190
    %v4215 = vmul.f32 %v2377, %v4190
    %v4216 = vmul.f32 %v2379, %v4191
    %v4217 = vmul.f32 %v2381, %v4191
    %v4218 = vmul.f32 %v2383, %v4192
    %v4219 = vmul.f32 %v2385, %v4192
    %v4220 = vmul.f32 %v2387, %v4193
    %v4221 = vmul.f32 %v2389, %v4193
    %v4222 = vmul.f32 %v2391, %v4194
    %v4223 = vmul.f32 %v2393, %v4194
    %v4224 = vmul.f32 %v2395, %v4195
    %v4225 = vmul.f32 %v2397, %v4195
    %v4226 = vmul.f32 %v2399, %v4196
    %v4227 = vmul.f32 %v2401, %v4196
    %v4228 = vmul.f32 %v2403, %v4197
    %v4229 = vmul.f32 %v2405, %v4197
    %4230 = vxpose.xlu0.b32.start [1/16] %v4198, 128
    %4231 = vxpose.xlu0.b32.cont [2/16] %v4199, 128
    %4232 = vxpose.xlu0.b32.cont [3/16] 0.0, 128
    %4233 = vxpose.xlu0.b32.cont [4/16] 0.0, 128
    %4234 = vxpose.xlu0.b32.cont [5/16] 0.0, 128
    %4235 = vxpose.xlu0.b32.cont [6/16] 0.0, 128
    %4236 = vxpose.xlu0.b32.cont [7/16] 0.0, 128
    %4237 = vxpose.xlu0.b32.cont [8/16] 0.0, 128
    %4238 = vxpose.xlu0.b32.cont [9/16] 0.0, 128
    %4239 = vxpose.xlu0.b32.cont [10/16] 0.0, 128
    %4240 = vxpose.xlu0.b32.cont [11/16] 0.0, 128
    %4241 = vxpose.xlu0.b32.cont [12/16] 0.0, 128
    %4242 = vxpose.xlu0.b32.cont [13/16] 0.0, 128
    %4243 = vxpose.xlu0.b32.cont [14/16] 0.0, 128
    %4244 = vxpose.xlu0.b32.cont [15/16] 0.0, 128
    %4245 = vxpose.xlu0.b32.end [16/16] 0.0, 128
    %v4246 = vpop.trf.xlu0
    %v4247 = vpop.trf.xlu0
    %v4248 = vpop.trf.xlu0
    %v4249 = vpop.trf.xlu0
    %v4250 = vpop.trf.xlu0
    %v4251 = vpop.trf.xlu0
    %v4252 = vpop.trf.xlu0
    %v4253 = vpop.trf.xlu0
    %v4254 = vpop.trf.xlu0
    %v4255 = vpop.trf.xlu0
    %v4256 = vpop.trf.xlu0
    %v4257 = vpop.trf.xlu0
    %v4258 = vpop.trf.xlu0
    %v4259 = vpop.trf.xlu0
    %v4260 = vpop.trf.xlu0
    %v4261 = vpop.trf.xlu0
    %4262 = vxpose.xlu0.b32.start [1/16] %v4200, 128
    %4263 = vxpose.xlu0.b32.cont [2/16] %v4201, 128
    %4264 = vxpose.xlu0.b32.cont [3/16] 0.0, 128
    %4265 = vxpose.xlu0.b32.cont [4/16] 0.0, 128
    %4266 = vxpose.xlu0.b32.cont [5/16] 0.0, 128
    %4267 = vxpose.xlu0.b32.cont [6/16] 0.0, 128
    %4268 = vxpose.xlu0.b32.cont [7/16] 0.0, 128
    %4269 = vxpose.xlu0.b32.cont [8/16] 0.0, 128
    %4270 = vxpose.xlu0.b32.cont [9/16] 0.0, 128
    %4271 = vxpose.xlu0.b32.cont [10/16] 0.0, 128
    %4272 = vxpose.xlu0.b32.cont [11/16] 0.0, 128
    %4273 = vxpose.xlu0.b32.cont [12/16] 0.0, 128
    %4274 = vxpose.xlu0.b32.cont [13/16] 0.0, 128
    %4275 = vxpose.xlu0.b32.cont [14/16] 0.0, 128
    %4276 = vxpose.xlu0.b32.cont [15/16] 0.0, 128
    %4277 = vxpose.xlu0.b32.end [16/16] 0.0, 128
    %v4278 = vpop.trf.xlu0
    %v4279 = vpop.trf.xlu0
    %v4280 = vpop.trf.xlu0
    %v4281 = vpop.trf.xlu0
    %v4282 = vpop.trf.xlu0
    %v4283 = vpop.trf.xlu0
    %v4284 = vpop.trf.xlu0
    %v4285 = vpop.trf.xlu0
    %v4286 = vpop.trf.xlu0
    %v4287 = vpop.trf.xlu0
    %v4288 = vpop.trf.xlu0
    %v4289 = vpop.trf.xlu0
    %v4290 = vpop.trf.xlu0
    %v4291 = vpop.trf.xlu0
    %v4292 = vpop.trf.xlu0
    %v4293 = vpop.trf.xlu0
    %4294 = vxpose.xlu0.b32.start [1/16] %v4202, 128
    %4295 = vxpose.xlu0.b32.cont [2/16] %v4203, 128
    %4296 = vxpose.xlu0.b32.cont [3/16] 0.0, 128
    %4297 = vxpose.xlu0.b32.cont [4/16] 0.0, 128
    %4298 = vxpose.xlu0.b32.cont [5/16] 0.0, 128
    %4299 = vxpose.xlu0.b32.cont [6/16] 0.0, 128
    %4300 = vxpose.xlu0.b32.cont [7/16] 0.0, 128
    %4301 = vxpose.xlu0.b32.cont [8/16] 0.0, 128
    %4302 = vxpose.xlu0.b32.cont [9/16] 0.0, 128
    %4303 = vxpose.xlu0.b32.cont [10/16] 0.0, 128
    %4304 = vxpose.xlu0.b32.cont [11/16] 0.0, 128
    %4305 = vxpose.xlu0.b32.cont [12/16] 0.0, 128
    %4306 = vxpose.xlu0.b32.cont [13/16] 0.0, 128
    %4307 = vxpose.xlu0.b32.cont [14/16] 0.0, 128
    %4308 = vxpose.xlu0.b32.cont [15/16] 0.0, 128
    %4309 = vxpose.xlu0.b32.end [16/16] 0.0, 128
    %v4310 = vpop.trf.xlu0
    %v4311 = vpop.trf.xlu0
    %v4312 = vpop.trf.xlu0
    %v4313 = vpop.trf.xlu0
    %v4314 = vpop.trf.xlu0
    %v4315 = vpop.trf.xlu0
    %v4316 = vpop.trf.xlu0
    %v4317 = vpop.trf.xlu0
    %v4318 = vpop.trf.xlu0
    %v4319 = vpop.trf.xlu0
    %v4320 = vpop.trf.xlu0
    %v4321 = vpop.trf.xlu0
    %v4322 = vpop.trf.xlu0
    %v4323 = vpop.trf.xlu0
    %v4324 = vpop.trf.xlu0
    %v4325 = vpop.trf.xlu0
    %4326 = vxpose.xlu0.b32.start [1/16] %v4204, 128
    %4327 = vxpose.xlu0.b32.cont [2/16] %v4205, 128
    %4328 = vxpose.xlu0.b32.cont [3/16] 0.0, 128
    %4329 = vxpose.xlu0.b32.cont [4/16] 0.0, 128
    %4330 = vxpose.xlu0.b32.cont [5/16] 0.0, 128
    %4331 = vxpose.xlu0.b32.cont [6/16] 0.0, 128
    %4332 = vxpose.xlu0.b32.cont [7/16] 0.0, 128
    %4333 = vxpose.xlu0.b32.cont [8/16] 0.0, 128
    %4334 = vxpose.xlu0.b32.cont [9/16] 0.0, 128
    %4335 = vxpose.xlu0.b32.cont [10/16] 0.0, 128
    %4336 = vxpose.xlu0.b32.cont [11/16] 0.0, 128
    %4337 = vxpose.xlu0.b32.cont [12/16] 0.0, 128
    %4338 = vxpose.xlu0.b32.cont [13/16] 0.0, 128
    %4339 = vxpose.xlu0.b32.cont [14/16] 0.0, 128
    %4340 = vxpose.xlu0.b32.cont [15/16] 0.0, 128
    %4341 = vxpose.xlu0.b32.end [16/16] 0.0, 128
    %v4342 = vpop.trf.xlu0
    %v4343 = vpop.trf.xlu0
    %v4344 = vpop.trf.xlu0
    %v4345 = vpop.trf.xlu0
    %v4346 = vpop.trf.xlu0
    %v4347 = vpop.trf.xlu0
    %v4348 = vpop.trf.xlu0
    %v4349 = vpop.trf.xlu0
    %v4350 = vpop.trf.xlu0
    %v4351 = vpop.trf.xlu0
    %v4352 = vpop.trf.xlu0
    %v4353 = vpop.trf.xlu0
    %v4354 = vpop.trf.xlu0
    %v4355 = vpop.trf.xlu0
    %v4356 = vpop.trf.xlu0
    %v4357 = vpop.trf.xlu0
    %4358 = vxpose.xlu0.b32.start [1/16] %v4206, 128
    %4359 = vxpose.xlu0.b32.cont [2/16] %v4207, 128
    %4360 = vxpose.xlu0.b32.cont [3/16] 0.0, 128
    %4361 = vxpose.xlu0.b32.cont [4/16] 0.0, 128
    %4362 = vxpose.xlu0.b32.cont [5/16] 0.0, 128
    %4363 = vxpose.xlu0.b32.cont [6/16] 0.0, 128
    %4364 = vxpose.xlu0.b32.cont [7/16] 0.0, 128
    %4365 = vxpose.xlu0.b32.cont [8/16] 0.0, 128
    %4366 = vxpose.xlu0.b32.cont [9/16] 0.0, 128
    %4367 = vxpose.xlu0.b32.cont [10/16] 0.0, 128
    %4368 = vxpose.xlu0.b32.cont [11/16] 0.0, 128
    %4369 = vxpose.xlu0.b32.cont [12/16] 0.0, 128
    %4370 = vxpose.xlu0.b32.cont [13/16] 0.0, 128
    %4371 = vxpose.xlu0.b32.cont [14/16] 0.0, 128
    %4372 = vxpose.xlu0.b32.cont [15/16] 0.0, 128
    %4373 = vxpose.xlu0.b32.end [16/16] 0.0, 128
    %v4374 = vpop.trf.xlu0
    %v4375 = vpop.trf.xlu0
    %v4376 = vpop.trf.xlu0
    %v4377 = vpop.trf.xlu0
    %v4378 = vpop.trf.xlu0
    %v4379 = vpop.trf.xlu0
    %v4380 = vpop.trf.xlu0
    %v4381 = vpop.trf.xlu0
    %v4382 = vpop.trf.xlu0
    %v4383 = vpop.trf.xlu0
    %v4384 = vpop.trf.xlu0
    %v4385 = vpop.trf.xlu0
    %v4386 = vpop.trf.xlu0
    %v4387 = vpop.trf.xlu0
    %v4388 = vpop.trf.xlu0
    %v4389 = vpop.trf.xlu0
    %4390 = vxpose.xlu0.b32.start [1/16] %v4208, 128
    %4391 = vxpose.xlu0.b32.cont [2/16] %v4209, 128
    %4392 = vxpose.xlu0.b32.cont [3/16] 0.0, 128
    %4393 = vxpose.xlu0.b32.cont [4/16] 0.0, 128
    %4394 = vxpose.xlu0.b32.cont [5/16] 0.0, 128
    %4395 = vxpose.xlu0.b32.cont [6/16] 0.0, 128
    %4396 = vxpose.xlu0.b32.cont [7/16] 0.0, 128
    %4397 = vxpose.xlu0.b32.cont [8/16] 0.0, 128
    %4398 = vxpose.xlu0.b32.cont [9/16] 0.0, 128
    %4399 = vxpose.xlu0.b32.cont [10/16] 0.0, 128
    %4400 = vxpose.xlu0.b32.cont [11/16] 0.0, 128
    %4401 = vxpose.xlu0.b32.cont [12/16] 0.0, 128
    %4402 = vxpose.xlu0.b32.cont [13/16] 0.0, 128
    %4403 = vxpose.xlu0.b32.cont [14/16] 0.0, 128
    %4404 = vxpose.xlu0.b32.cont [15/16] 0.0, 128
    %4405 = vxpose.xlu0.b32.end [16/16] 0.0, 128
    %v4406 = vpop.trf.xlu0
    %v4407 = vpop.trf.xlu0
    %v4408 = vpop.trf.xlu0
    %v4409 = vpop.trf.xlu0
    %v4410 = vpop.trf.xlu0
    %v4411 = vpop.trf.xlu0
    %v4412 = vpop.trf.xlu0
    %v4413 = vpop.trf.xlu0
    %v4414 = vpop.trf.xlu0
    %v4415 = vpop.trf.xlu0
    %v4416 = vpop.trf.xlu0
    %v4417 = vpop.trf.xlu0
    %v4418 = vpop.trf.xlu0
    %v4419 = vpop.trf.xlu0
    %v4420 = vpop.trf.xlu0
    %v4421 = vpop.trf.xlu0
    %4422 = vxpose.xlu0.b32.start [1/16] %v4210, 128
    %4423 = vxpose.xlu0.b32.cont [2/16] %v4211, 128
    %4424 = vxpose.xlu0.b32.cont [3/16] 0.0, 128
    %4425 = vxpose.xlu0.b32.cont [4/16] 0.0, 128
    %4426 = vxpose.xlu0.b32.cont [5/16] 0.0, 128
    %4427 = vxpose.xlu0.b32.cont [6/16] 0.0, 128
    %4428 = vxpose.xlu0.b32.cont [7/16] 0.0, 128
    %4429 = vxpose.xlu0.b32.cont [8/16] 0.0, 128
    %4430 = vxpose.xlu0.b32.cont [9/16] 0.0, 128
    %4431 = vxpose.xlu0.b32.cont [10/16] 0.0, 128
    %4432 = vxpose.xlu0.b32.cont [11/16] 0.0, 128
    %4433 = vxpose.xlu0.b32.cont [12/16] 0.0, 128
    %4434 = vxpose.xlu0.b32.cont [13/16] 0.0, 128
    %4435 = vxpose.xlu0.b32.cont [14/16] 0.0, 128
    %4436 = vxpose.xlu0.b32.cont [15/16] 0.0, 128
    %4437 = vxpose.xlu0.b32.end [16/16] 0.0, 128
    %v4438 = vpop.trf.xlu0
    %v4439 = vpop.trf.xlu0
    %v4440 = vpop.trf.xlu0
    %v4441 = vpop.trf.xlu0
    %v4442 = vpop.trf.xlu0
    %v4443 = vpop.trf.xlu0
    %v4444 = vpop.trf.xlu0
    %v4445 = vpop.trf.xlu0
    %v4446 = vpop.trf.xlu0
    %v4447 = vpop.trf.xlu0
    %v4448 = vpop.trf.xlu0
    %v4449 = vpop.trf.xlu0
    %v4450 = vpop.trf.xlu0
    %v4451 = vpop.trf.xlu0
    %v4452 = vpop.trf.xlu0
    %v4453 = vpop.trf.xlu0
    %4454 = vxpose.xlu0.b32.start [1/16] %v4212, 128
    %4455 = vxpose.xlu0.b32.cont [2/16] %v4213, 128
    %4456 = vxpose.xlu0.b32.cont [3/16] 0.0, 128
    %4457 = vxpose.xlu0.b32.cont [4/16] 0.0, 128
    %4458 = vxpose.xlu0.b32.cont [5/16] 0.0, 128
    %4459 = vxpose.xlu0.b32.cont [6/16] 0.0, 128
    %4460 = vxpose.xlu0.b32.cont [7/16] 0.0, 128
    %4461 = vxpose.xlu0.b32.cont [8/16] 0.0, 128
    %4462 = vxpose.xlu0.b32.cont [9/16] 0.0, 128
    %4463 = vxpose.xlu0.b32.cont [10/16] 0.0, 128
    %4464 = vxpose.xlu0.b32.cont [11/16] 0.0, 128
    %4465 = vxpose.xlu0.b32.cont [12/16] 0.0, 128
    %4466 = vxpose.xlu0.b32.cont [13/16] 0.0, 128
    %4467 = vxpose.xlu0.b32.cont [14/16] 0.0, 128
    %4468 = vxpose.xlu0.b32.cont [15/16] 0.0, 128
    %4469 = vxpose.xlu0.b32.end [16/16] 0.0, 128
    %v4470 = vpop.trf.xlu0
    %v4471 = vpop.trf.xlu0
    %v4472 = vpop.trf.xlu0
    %v4473 = vpop.trf.xlu0
    %v4474 = vpop.trf.xlu0
    %v4475 = vpop.trf.xlu0
    %v4476 = vpop.trf.xlu0
    %v4477 = vpop.trf.xlu0
    %v4478 = vpop.trf.xlu0
    %v4479 = vpop.trf.xlu0
    %v4480 = vpop.trf.xlu0
    %v4481 = vpop.trf.xlu0
    %v4482 = vpop.trf.xlu0
    %v4483 = vpop.trf.xlu0
    %v4484 = vpop.trf.xlu0
    %v4485 = vpop.trf.xlu0
    %4486 = vxpose.xlu0.b32.start [1/16] %v4214, 128
    %4487 = vxpose.xlu0.b32.cont [2/16] %v4215, 128
    %4488 = vxpose.xlu0.b32.cont [3/16] 0.0, 128
    %4489 = vxpose.xlu0.b32.cont [4/16] 0.0, 128
    %4490 = vxpose.xlu0.b32.cont [5/16] 0.0, 128
    %4491 = vxpose.xlu0.b32.cont [6/16] 0.0, 128
    %4492 = vxpose.xlu0.b32.cont [7/16] 0.0, 128
    %4493 = vxpose.xlu0.b32.cont [8/16] 0.0, 128
    %4494 = vxpose.xlu0.b32.cont [9/16] 0.0, 128
    %4495 = vxpose.xlu0.b32.cont [10/16] 0.0, 128
    %4496 = vxpose.xlu0.b32.cont [11/16] 0.0, 128
    %4497 = vxpose.xlu0.b32.cont [12/16] 0.0, 128
    %4498 = vxpose.xlu0.b32.cont [13/16] 0.0, 128
    %4499 = vxpose.xlu0.b32.cont [14/16] 0.0, 128
    %4500 = vxpose.xlu0.b32.cont [15/16] 0.0, 128
    %4501 = vxpose.xlu0.b32.end [16/16] 0.0, 128
    %v4502 = vpop.trf.xlu0
    %v4503 = vpop.trf.xlu0
    %v4504 = vpop.trf.xlu0
    %v4505 = vpop.trf.xlu0
    %v4506 = vpop.trf.xlu0
    %v4507 = vpop.trf.xlu0
    %v4508 = vpop.trf.xlu0
    %v4509 = vpop.trf.xlu0
    %v4510 = vpop.trf.xlu0
    %v4511 = vpop.trf.xlu0
    %v4512 = vpop.trf.xlu0
    %v4513 = vpop.trf.xlu0
    %v4514 = vpop.trf.xlu0
    %v4515 = vpop.trf.xlu0
    %v4516 = vpop.trf.xlu0
    %v4517 = vpop.trf.xlu0
    %4518 = vxpose.xlu0.b32.start [1/16] %v4216, 128
    %4519 = vxpose.xlu0.b32.cont [2/16] %v4217, 128
    %4520 = vxpose.xlu0.b32.cont [3/16] 0.0, 128
    %4521 = vxpose.xlu0.b32.cont [4/16] 0.0, 128
    %4522 = vxpose.xlu0.b32.cont [5/16] 0.0, 128
    %4523 = vxpose.xlu0.b32.cont [6/16] 0.0, 128
    %4524 = vxpose.xlu0.b32.cont [7/16] 0.0, 128
    %4525 = vxpose.xlu0.b32.cont [8/16] 0.0, 128
    %4526 = vxpose.xlu0.b32.cont [9/16] 0.0, 128
    %4527 = vxpose.xlu0.b32.cont [10/16] 0.0, 128
    %4528 = vxpose.xlu0.b32.cont [11/16] 0.0, 128
    %4529 = vxpose.xlu0.b32.cont [12/16] 0.0, 128
    %4530 = vxpose.xlu0.b32.cont [13/16] 0.0, 128
    %4531 = vxpose.xlu0.b32.cont [14/16] 0.0, 128
    %4532 = vxpose.xlu0.b32.cont [15/16] 0.0, 128
    %4533 = vxpose.xlu0.b32.end [16/16] 0.0, 128
    %v4534 = vpop.trf.xlu0
    %v4535 = vpop.trf.xlu0
    %v4536 = vpop.trf.xlu0
    %v4537 = vpop.trf.xlu0
    %v4538 = vpop.trf.xlu0
    %v4539 = vpop.trf.xlu0
    %v4540 = vpop.trf.xlu0
    %v4541 = vpop.trf.xlu0
    %v4542 = vpop.trf.xlu0
    %v4543 = vpop.trf.xlu0
    %v4544 = vpop.trf.xlu0
    %v4545 = vpop.trf.xlu0
    %v4546 = vpop.trf.xlu0
    %v4547 = vpop.trf.xlu0
    %v4548 = vpop.trf.xlu0
    %v4549 = vpop.trf.xlu0
    %4550 = vxpose.xlu0.b32.start [1/16] %v4218, 128
    %4551 = vxpose.xlu0.b32.cont [2/16] %v4219, 128
    %4552 = vxpose.xlu0.b32.cont [3/16] 0.0, 128
    %4553 = vxpose.xlu0.b32.cont [4/16] 0.0, 128
    %4554 = vxpose.xlu0.b32.cont [5/16] 0.0, 128
    %4555 = vxpose.xlu0.b32.cont [6/16] 0.0, 128
    %4556 = vxpose.xlu0.b32.cont [7/16] 0.0, 128
    %4557 = vxpose.xlu0.b32.cont [8/16] 0.0, 128
    %4558 = vxpose.xlu0.b32.cont [9/16] 0.0, 128
    %4559 = vxpose.xlu0.b32.cont [10/16] 0.0, 128
    %4560 = vxpose.xlu0.b32.cont [11/16] 0.0, 128
    %4561 = vxpose.xlu0.b32.cont [12/16] 0.0, 128
    %4562 = vxpose.xlu0.b32.cont [13/16] 0.0, 128
    %4563 = vxpose.xlu0.b32.cont [14/16] 0.0, 128
    %4564 = vxpose.xlu0.b32.cont [15/16] 0.0, 128
    %4565 = vxpose.xlu0.b32.end [16/16] 0.0, 128
    %v4566 = vpop.trf.xlu0
    %v4567 = vpop.trf.xlu0
    %v4568 = vpop.trf.xlu0
    %v4569 = vpop.trf.xlu0
    %v4570 = vpop.trf.xlu0
    %v4571 = vpop.trf.xlu0
    %v4572 = vpop.trf.xlu0
    %v4573 = vpop.trf.xlu0
    %v4574 = vpop.trf.xlu0
    %v4575 = vpop.trf.xlu0
    %v4576 = vpop.trf.xlu0
    %v4577 = vpop.trf.xlu0
    %v4578 = vpop.trf.xlu0
    %v4579 = vpop.trf.xlu0
    %v4580 = vpop.trf.xlu0
    %v4581 = vpop.trf.xlu0
    %4582 = vxpose.xlu0.b32.start [1/16] %v4220, 128
    %4583 = vxpose.xlu0.b32.cont [2/16] %v4221, 128
    %4584 = vxpose.xlu0.b32.cont [3/16] 0.0, 128
    %4585 = vxpose.xlu0.b32.cont [4/16] 0.0, 128
    %4586 = vxpose.xlu0.b32.cont [5/16] 0.0, 128
    %4587 = vxpose.xlu0.b32.cont [6/16] 0.0, 128
    %4588 = vxpose.xlu0.b32.cont [7/16] 0.0, 128
    %4589 = vxpose.xlu0.b32.cont [8/16] 0.0, 128
    %4590 = vxpose.xlu0.b32.cont [9/16] 0.0, 128
    %4591 = vxpose.xlu0.b32.cont [10/16] 0.0, 128
    %4592 = vxpose.xlu0.b32.cont [11/16] 0.0, 128
    %4593 = vxpose.xlu0.b32.cont [12/16] 0.0, 128
    %4594 = vxpose.xlu0.b32.cont [13/16] 0.0, 128
    %4595 = vxpose.xlu0.b32.cont [14/16] 0.0, 128
    %4596 = vxpose.xlu0.b32.cont [15/16] 0.0, 128
    %4597 = vxpose.xlu0.b32.end [16/16] 0.0, 128
    %v4598 = vpop.trf.xlu0
    %v4599 = vpop.trf.xlu0
    %v4600 = vpop.trf.xlu0
    %v4601 = vpop.trf.xlu0
    %v4602 = vpop.trf.xlu0
    %v4603 = vpop.trf.xlu0
    %v4604 = vpop.trf.xlu0
    %v4605 = vpop.trf.xlu0
    %v4606 = vpop.trf.xlu0
    %v4607 = vpop.trf.xlu0
    %v4608 = vpop.trf.xlu0
    %v4609 = vpop.trf.xlu0
    %v4610 = vpop.trf.xlu0
    %v4611 = vpop.trf.xlu0
    %v4612 = vpop.trf.xlu0
    %v4613 = vpop.trf.xlu0
    %4614 = vxpose.xlu0.b32.start [1/16] %v4222, 128
    %4615 = vxpose.xlu0.b32.cont [2/16] %v4223, 128
    %4616 = vxpose.xlu0.b32.cont [3/16] 0.0, 128
    %4617 = vxpose.xlu0.b32.cont [4/16] 0.0, 128
    %4618 = vxpose.xlu0.b32.cont [5/16] 0.0, 128
    %4619 = vxpose.xlu0.b32.cont [6/16] 0.0, 128
    %4620 = vxpose.xlu0.b32.cont [7/16] 0.0, 128
    %4621 = vxpose.xlu0.b32.cont [8/16] 0.0, 128
    %4622 = vxpose.xlu0.b32.cont [9/16] 0.0, 128
    %4623 = vxpose.xlu0.b32.cont [10/16] 0.0, 128
    %4624 = vxpose.xlu0.b32.cont [11/16] 0.0, 128
    %4625 = vxpose.xlu0.b32.cont [12/16] 0.0, 128
    %4626 = vxpose.xlu0.b32.cont [13/16] 0.0, 128
    %4627 = vxpose.xlu0.b32.cont [14/16] 0.0, 128
    %4628 = vxpose.xlu0.b32.cont [15/16] 0.0, 128
    %4629 = vxpose.xlu0.b32.end [16/16] 0.0, 128
    %v4630 = vpop.trf.xlu0
    %v4631 = vpop.trf.xlu0
    %v4632 = vpop.trf.xlu0
    %v4633 = vpop.trf.xlu0
    %v4634 = vpop.trf.xlu0
    %v4635 = vpop.trf.xlu0
    %v4636 = vpop.trf.xlu0
    %v4637 = vpop.trf.xlu0
    %v4638 = vpop.trf.xlu0
    %v4639 = vpop.trf.xlu0
    %v4640 = vpop.trf.xlu0
    %v4641 = vpop.trf.xlu0
    %v4642 = vpop.trf.xlu0
    %v4643 = vpop.trf.xlu0
    %v4644 = vpop.trf.xlu0
    %v4645 = vpop.trf.xlu0
    %4646 = vxpose.xlu0.b32.start [1/16] %v4224, 128
    %4647 = vxpose.xlu0.b32.cont [2/16] %v4225, 128
    %4648 = vxpose.xlu0.b32.cont [3/16] 0.0, 128
    %4649 = vxpose.xlu0.b32.cont [4/16] 0.0, 128
    %4650 = vxpose.xlu0.b32.cont [5/16] 0.0, 128
    %4651 = vxpose.xlu0.b32.cont [6/16] 0.0, 128
    %4652 = vxpose.xlu0.b32.cont [7/16] 0.0, 128
    %4653 = vxpose.xlu0.b32.cont [8/16] 0.0, 128
    %4654 = vxpose.xlu0.b32.cont [9/16] 0.0, 128
    %4655 = vxpose.xlu0.b32.cont [10/16] 0.0, 128
    %4656 = vxpose.xlu0.b32.cont [11/16] 0.0, 128
    %4657 = vxpose.xlu0.b32.cont [12/16] 0.0, 128
    %4658 = vxpose.xlu0.b32.cont [13/16] 0.0, 128
    %4659 = vxpose.xlu0.b32.cont [14/16] 0.0, 128
    %4660 = vxpose.xlu0.b32.cont [15/16] 0.0, 128
    %4661 = vxpose.xlu0.b32.end [16/16] 0.0, 128
    %v4662 = vpop.trf.xlu0
    %v4663 = vpop.trf.xlu0
    %v4664 = vpop.trf.xlu0
    %v4665 = vpop.trf.xlu0
    %v4666 = vpop.trf.xlu0
    %v4667 = vpop.trf.xlu0
    %v4668 = vpop.trf.xlu0
    %v4669 = vpop.trf.xlu0
    %v4670 = vpop.trf.xlu0
    %v4671 = vpop.trf.xlu0
    %v4672 = vpop.trf.xlu0
    %v4673 = vpop.trf.xlu0
    %v4674 = vpop.trf.xlu0
    %v4675 = vpop.trf.xlu0
    %v4676 = vpop.trf.xlu0
    %v4677 = vpop.trf.xlu0
    %4678 = vxpose.xlu0.b32.start [1/16] %v4226, 128
    %4679 = vxpose.xlu0.b32.cont [2/16] %v4227, 128
    %4680 = vxpose.xlu0.b32.cont [3/16] 0.0, 128
    %4681 = vxpose.xlu0.b32.cont [4/16] 0.0, 128
    %4682 = vxpose.xlu0.b32.cont [5/16] 0.0, 128
    %4683 = vxpose.xlu0.b32.cont [6/16] 0.0, 128
    %4684 = vxpose.xlu0.b32.cont [7/16] 0.0, 128
    %4685 = vxpose.xlu0.b32.cont [8/16] 0.0, 128
    %4686 = vxpose.xlu0.b32.cont [9/16] 0.0, 128
    %4687 = vxpose.xlu0.b32.cont [10/16] 0.0, 128
    %4688 = vxpose.xlu0.b32.cont [11/16] 0.0, 128
    %4689 = vxpose.xlu0.b32.cont [12/16] 0.0, 128
    %4690 = vxpose.xlu0.b32.cont [13/16] 0.0, 128
    %4691 = vxpose.xlu0.b32.cont [14/16] 0.0, 128
    %4692 = vxpose.xlu0.b32.cont [15/16] 0.0, 128
    %4693 = vxpose.xlu0.b32.end [16/16] 0.0, 128
    %v4694 = vpop.trf.xlu0
    %v4695 = vpop.trf.xlu0
    %v4696 = vpop.trf.xlu0
    %v4697 = vpop.trf.xlu0
    %v4698 = vpop.trf.xlu0
    %v4699 = vpop.trf.xlu0
    %v4700 = vpop.trf.xlu0
    %v4701 = vpop.trf.xlu0
    %v4702 = vpop.trf.xlu0
    %v4703 = vpop.trf.xlu0
    %v4704 = vpop.trf.xlu0
    %v4705 = vpop.trf.xlu0
    %v4706 = vpop.trf.xlu0
    %v4707 = vpop.trf.xlu0
    %v4708 = vpop.trf.xlu0
    %v4709 = vpop.trf.xlu0
    %4710 = vxpose.xlu0.b32.start [1/16] %v4228, 128
    %4711 = vxpose.xlu0.b32.cont [2/16] %v4229, 128
    %4712 = vxpose.xlu0.b32.cont [3/16] 0.0, 128
    %4713 = vxpose.xlu0.b32.cont [4/16] 0.0, 128
    %4714 = vxpose.xlu0.b32.cont [5/16] 0.0, 128
    %4715 = vxpose.xlu0.b32.cont [6/16] 0.0, 128
    %4716 = vxpose.xlu0.b32.cont [7/16] 0.0, 128
    %4717 = vxpose.xlu0.b32.cont [8/16] 0.0, 128
    %4718 = vxpose.xlu0.b32.cont [9/16] 0.0, 128
    %4719 = vxpose.xlu0.b32.cont [10/16] 0.0, 128
    %4720 = vxpose.xlu0.b32.cont [11/16] 0.0, 128
    %4721 = vxpose.xlu0.b32.cont [12/16] 0.0, 128
    %4722 = vxpose.xlu0.b32.cont [13/16] 0.0, 128
    %4723 = vxpose.xlu0.b32.cont [14/16] 0.0, 128
    %4724 = vxpose.xlu0.b32.cont [15/16] 0.0, 128
    %4725 = vxpose.xlu0.b32.end [16/16] 0.0, 128
    %v4726 = vpop.trf.xlu0
    %v4727 = vpop.trf.xlu0
    %v4728 = vpop.trf.xlu0
    %v4729 = vpop.trf.xlu0
    %v4730 = vpop.trf.xlu0
    %v4731 = vpop.trf.xlu0
    %v4732 = vpop.trf.xlu0
    %v4733 = vpop.trf.xlu0
    %v4734 = vpop.trf.xlu0
    %v4735 = vpop.trf.xlu0
    %v4736 = vpop.trf.xlu0
    %v4737 = vpop.trf.xlu0
    %v4738 = vpop.trf.xlu0
    %v4739 = vpop.trf.xlu0
    %v4740 = vpop.trf.xlu0
    %v4741 = vpop.trf.xlu0
    %vm4742 = vcmask 130048
    %v4744 = vsel %vm4742, %v4246, 0
    %v4747 = vsel %vm4742, %v4247, 0
    %v4750 = vsel %vm4742, %v4248, 0
    %4752 = vmatprep.subr.mxu0 0.0
    %4753 = vmatpush1.msra.mxu0 0.0
    %4754 = vmatprep.subr.mxu0 0.0
    %4755 = vmatpush1.msra.mxu0 0.0
    %4756 = vmatprep.subr.mxu0 0.0
    %4757 = vmatpush1.msra.mxu0 0.0
    %4758 = vmatprep.subr.mxu0 0.0
    %4759 = vmatpush1.msra.mxu0 0.0
    %4760 = vmatprep.subr.mxu0 0.0
    %4761 = vmatpush1.msra.mxu0 0.0
    %4762 = vmatprep.subr.mxu0 0.0
    %4763 = vmatpush1.msra.mxu0 0.0
    %4764 = vmatprep.subr.mxu0 0.0
    %4765 = vmatpush1.msra.mxu0 0.0
    %4766 = vmatprep.subr.mxu0 0.0
    %4767 = vmatpush1.msra.mxu0 0.0
    %4768 = vmatprep.subr.mxu0 0.0
    %4769 = vmatpush1.msra.mxu0 0.0
    %4770 = vmatprep.subr.mxu0 0.0
    %4771 = vmatpush1.msra.mxu0 0.0
    %4772 = vmatprep.subr.mxu0 0.0
    %4773 = vmatpush1.msra.mxu0 0.0
    %4774 = vmatprep.subr.mxu0 0.0
    %4775 = vmatpush1.msra.mxu0 0.0
    %4776 = vmatprep.subr.mxu0 0.0
    %4777 = vmatpush1.msra.mxu0 0.0
    %4778 = vmatprep.subr.mxu0 0.0
    %4779 = vmatpush1.msra.mxu0 0.0
    %4780 = vmatprep.subr.mxu0 0.0
    %4781 = vmatpush1.msra.mxu0 %v53
    %4782 = vmatprep.subr.mxu0 0.0
    %4783 = vmatpush1.msra.mxu0 %v52
    %4784 = vmatprep.subr.mxu0 0.0
    %4785 = vmatpush2.msra.mxu0 0.0
    %4786 = vmatprep.subr.mxu0 0.0
    %4787 = vmatpush2.msra.mxu0 0.0
    %4788 = vmatprep.subr.mxu0 0.0
    %4789 = vmatpush2.msra.mxu0 0.0
    %4790 = vmatprep.subr.mxu0 0.0
    %4791 = vmatpush2.msra.mxu0 0.0
    %4792 = vmatprep.subr.mxu0 0.0
    %4793 = vmatpush2.msra.mxu0 0.0
    %4794 = vmatprep.subr.mxu0 0.0
    %4795 = vmatpush2.msra.mxu0 0.0
    %4796 = vmatprep.subr.mxu0 0.0
    %4797 = vmatpush2.msra.mxu0 0.0
    %4798 = vmatprep.subr.mxu0 0.0
    %4799 = vmatpush2.msra.mxu0 0.0
    %4800 = vmatprep.subr.mxu0 0.0
    %4801 = vmatpush2.msra.mxu0 0.0
    %4802 = vmatprep.subr.mxu0 0.0
    %4803 = vmatpush2.msra.mxu0 0.0
    %4804 = vmatprep.subr.mxu0 0.0
    %4805 = vmatpush2.msra.mxu0 0.0
    %4806 = vmatprep.subr.mxu0 0.0
    %4807 = vmatpush2.msra.mxu0 0.0
    %4808 = vmatprep.subr.mxu0 0.0
    %4809 = vmatpush2.msra.mxu0 0.0
    %4810 = vmatprep.subr.mxu0 0.0
    %4811 = vmatpush2.msra.mxu0 0.0
    %4812 = vmatprep.subr.mxu0 0.0
    %4813 = vmatpush2.msra.mxu0 0.0
    %4814 = vmatprep.subr.mxu0 0.0
    %4815 = vmatpush2.msra.mxu0 0.0
    %4816 = vmatprep.mubr.f32.mxu0 0.0
    %4817 = vmatmul.mubr.f32.gmra.mxu0 %v4744
    %v4818 = vpop.f32.mrf.mxu0
    %v4819 = vadd.f32 0.0, %v4818
    %v4820 = vpop.f32.mrf.mxu0
    %4821 = vmatprep.mubr.f32.mxu0 0.0
    %4822 = vmatmul.mubr.f32.gmra.mxu0 %v4747
    %v4823 = vpop.f32.mrf.mxu0
    %v4824 = vadd.f32 0.0, %v4823
    %v4825 = vpop.f32.mrf.mxu0
    %4826 = vmatprep.mubr.f32.mxu0 0.0
    %4827 = vmatmul.mubr.f32.gmra.mxu0 %v4750
    %v4828 = vpop.f32.mrf.mxu0
    %v4829 = vadd.f32 0.0, %v4828
    %v4830 = vpop.f32.mrf.mxu0
    %4831 = vdwg.mxu0
    %v4833 = vsel %vm4742, %v4278, 0
    %v4836 = vsel %vm4742, %v4279, 0
    %v4839 = vsel %vm4742, %v4280, 0
    %4841 = vmatprep.subr.mxu0 0.0
    %4842 = vmatpush1.msra.mxu0 0.0
    %4843 = vmatprep.subr.mxu0 0.0
    %4844 = vmatpush1.msra.mxu0 0.0
    %4845 = vmatprep.subr.mxu0 0.0
    %4846 = vmatpush1.msra.mxu0 0.0
    %4847 = vmatprep.subr.mxu0 0.0
    %4848 = vmatpush1.msra.mxu0 0.0
    %4849 = vmatprep.subr.mxu0 0.0
    %4850 = vmatpush1.msra.mxu0 0.0
    %4851 = vmatprep.subr.mxu0 0.0
    %4852 = vmatpush1.msra.mxu0 0.0
    %4853 = vmatprep.subr.mxu0 0.0
    %4854 = vmatpush1.msra.mxu0 0.0
    %4855 = vmatprep.subr.mxu0 0.0
    %4856 = vmatpush1.msra.mxu0 0.0
    %4857 = vmatprep.subr.mxu0 0.0
    %4858 = vmatpush1.msra.mxu0 0.0
    %4859 = vmatprep.subr.mxu0 0.0
    %4860 = vmatpush1.msra.mxu0 0.0
    %4861 = vmatprep.subr.mxu0 0.0
    %4862 = vmatpush1.msra.mxu0 0.0
    %4863 = vmatprep.subr.mxu0 0.0
    %4864 = vmatpush1.msra.mxu0 0.0
    %4865 = vmatprep.subr.mxu0 0.0
    %4866 = vmatpush1.msra.mxu0 0.0
    %4867 = vmatprep.subr.mxu0 0.0
    %4868 = vmatpush1.msra.mxu0 0.0
    %4869 = vmatprep.subr.mxu0 0.0
    %4870 = vmatpush1.msra.mxu0 %v55
    %4871 = vmatprep.subr.mxu0 0.0
    %4872 = vmatpush1.msra.mxu0 %v54
    %4873 = vmatprep.subr.mxu0 0.0
    %4874 = vmatpush2.msra.mxu0 0.0
    %4875 = vmatprep.subr.mxu0 0.0
    %4876 = vmatpush2.msra.mxu0 0.0
    %4877 = vmatprep.subr.mxu0 0.0
    %4878 = vmatpush2.msra.mxu0 0.0
    %4879 = vmatprep.subr.mxu0 0.0
    %4880 = vmatpush2.msra.mxu0 0.0
    %4881 = vmatprep.subr.mxu0 0.0
    %4882 = vmatpush2.msra.mxu0 0.0
    %4883 = vmatprep.subr.mxu0 0.0
    %4884 = vmatpush2.msra.mxu0 0.0
    %4885 = vmatprep.subr.mxu0 0.0
    %4886 = vmatpush2.msra.mxu0 0.0
    %4887 = vmatprep.subr.mxu0 0.0
    %4888 = vmatpush2.msra.mxu0 0.0
    %4889 = vmatprep.subr.mxu0 0.0
    %4890 = vmatpush2.msra.mxu0 0.0
    %4891 = vmatprep.subr.mxu0 0.0
    %4892 = vmatpush2.msra.mxu0 0.0
    %4893 = vmatprep.subr.mxu0 0.0
    %4894 = vmatpush2.msra.mxu0 0.0
    %4895 = vmatprep.subr.mxu0 0.0
    %4896 = vmatpush2.msra.mxu0 0.0
    %4897 = vmatprep.subr.mxu0 0.0
    %4898 = vmatpush2.msra.mxu0 0.0
    %4899 = vmatprep.subr.mxu0 0.0
    %4900 = vmatpush2.msra.mxu0 0.0
    %4901 = vmatprep.subr.mxu0 0.0
    %4902 = vmatpush2.msra.mxu0 0.0
    %4903 = vmatprep.subr.mxu0 0.0
    %4904 = vmatpush2.msra.mxu0 0.0
    %4905 = vmatprep.mubr.f32.mxu0 0.0
    %4906 = vmatmul.mubr.f32.gmra.mxu0 %v4833
    %v4907 = vpop.f32.mrf.mxu0
    %v4908 = vadd.f32 0.0, %v4907
    %v4909 = vpop.f32.mrf.mxu0
    %4910 = vmatprep.mubr.f32.mxu0 0.0
    %4911 = vmatmul.mubr.f32.gmra.mxu0 %v4836
    %v4912 = vpop.f32.mrf.mxu0
    %v4913 = vadd.f32 0.0, %v4912
    %v4914 = vpop.f32.mrf.mxu0
    %4915 = vmatprep.mubr.f32.mxu0 0.0
    %4916 = vmatmul.mubr.f32.gmra.mxu0 %v4839
    %v4917 = vpop.f32.mrf.mxu0
    %v4918 = vadd.f32 0.0, %v4917
    %v4919 = vpop.f32.mrf.mxu0
    %4920 = vdwg.mxu0
    %v4922 = vsel %vm4742, %v4310, 0
    %v4925 = vsel %vm4742, %v4311, 0
    %v4928 = vsel %vm4742, %v4312, 0
    %4930 = vmatprep.subr.mxu0 0.0
    %4931 = vmatpush1.msra.mxu0 0.0
    %4932 = vmatprep.subr.mxu0 0.0
    %4933 = vmatpush1.msra.mxu0 0.0
    %4934 = vmatprep.subr.mxu0 0.0
    %4935 = vmatpush1.msra.mxu0 0.0
    %4936 = vmatprep.subr.mxu0 0.0
    %4937 = vmatpush1.msra.mxu0 0.0
    %4938 = vmatprep.subr.mxu0 0.0
    %4939 = vmatpush1.msra.mxu0 0.0
    %4940 = vmatprep.subr.mxu0 0.0
    %4941 = vmatpush1.msra.mxu0 0.0
    %4942 = vmatprep.subr.mxu0 0.0
    %4943 = vmatpush1.msra.mxu0 0.0
    %4944 = vmatprep.subr.mxu0 0.0
    %4945 = vmatpush1.msra.mxu0 0.0
    %4946 = vmatprep.subr.mxu0 0.0
    %4947 = vmatpush1.msra.mxu0 0.0
    %4948 = vmatprep.subr.mxu0 0.0
    %4949 = vmatpush1.msra.mxu0 0.0
    %4950 = vmatprep.subr.mxu0 0.0
    %4951 = vmatpush1.msra.mxu0 0.0
    %4952 = vmatprep.subr.mxu0 0.0
    %4953 = vmatpush1.msra.mxu0 0.0
    %4954 = vmatprep.subr.mxu0 0.0
    %4955 = vmatpush1.msra.mxu0 0.0
    %4956 = vmatprep.subr.mxu0 0.0
    %4957 = vmatpush1.msra.mxu0 0.0
    %4958 = vmatprep.subr.mxu0 0.0
    %4959 = vmatpush1.msra.mxu0 %v57
    %4960 = vmatprep.subr.mxu0 0.0
    %4961 = vmatpush1.msra.mxu0 %v56
    %4962 = vmatprep.subr.mxu0 0.0
    %4963 = vmatpush2.msra.mxu0 0.0
    %4964 = vmatprep.subr.mxu0 0.0
    %4965 = vmatpush2.msra.mxu0 0.0
    %4966 = vmatprep.subr.mxu0 0.0
    %4967 = vmatpush2.msra.mxu0 0.0
    %4968 = vmatprep.subr.mxu0 0.0
    %4969 = vmatpush2.msra.mxu0 0.0
    %4970 = vmatprep.subr.mxu0 0.0
    %4971 = vmatpush2.msra.mxu0 0.0
    %4972 = vmatprep.subr.mxu0 0.0
    %4973 = vmatpush2.msra.mxu0 0.0
    %4974 = vmatprep.subr.mxu0 0.0
    %4975 = vmatpush2.msra.mxu0 0.0
    %4976 = vmatprep.subr.mxu0 0.0
    %4977 = vmatpush2.msra.mxu0 0.0
    %4978 = vmatprep.subr.mxu0 0.0
    %4979 = vmatpush2.msra.mxu0 0.0
    %4980 = vmatprep.subr.mxu0 0.0
    %4981 = vmatpush2.msra.mxu0 0.0
    %4982 = vmatprep.subr.mxu0 0.0
    %4983 = vmatpush2.msra.mxu0 0.0
    %4984 = vmatprep.subr.mxu0 0.0
    %4985 = vmatpush2.msra.mxu0 0.0
    %4986 = vmatprep.subr.mxu0 0.0
    %4987 = vmatpush2.msra.mxu0 0.0
    %4988 = vmatprep.subr.mxu0 0.0
    %4989 = vmatpush2.msra.mxu0 0.0
    %4990 = vmatprep.subr.mxu0 0.0
    %4991 = vmatpush2.msra.mxu0 0.0
    %4992 = vmatprep.subr.mxu0 0.0
    %4993 = vmatpush2.msra.mxu0 0.0
    %4994 = vmatprep.mubr.f32.mxu0 0.0
    %4995 = vmatmul.mubr.f32.gmra.mxu0 %v4922
    %v4996 = vpop.f32.mrf.mxu0
    %v4997 = vadd.f32 0.0, %v4996
    %v4998 = vpop.f32.mrf.mxu0
    %4999 = vmatprep.mubr.f32.mxu0 0.0
    %5000 = vmatmul.mubr.f32.gmra.mxu0 %v4925
    %v5001 = vpop.f32.mrf.mxu0
    %v5002 = vadd.f32 0.0, %v5001
    %v5003 = vpop.f32.mrf.mxu0
    %5004 = vmatprep.mubr.f32.mxu0 0.0
    %5005 = vmatmul.mubr.f32.gmra.mxu0 %v4928
    %v5006 = vpop.f32.mrf.mxu0
    %v5007 = vadd.f32 0.0, %v5006
    %v5008 = vpop.f32.mrf.mxu0
    %5009 = vdwg.mxu0
    %v5011 = vsel %vm4742, %v4342, 0
    %v5014 = vsel %vm4742, %v4343, 0
    %v5017 = vsel %vm4742, %v4344, 0
    %5019 = vmatprep.subr.mxu0 0.0
    %5020 = vmatpush1.msra.mxu0 0.0
    %5021 = vmatprep.subr.mxu0 0.0
    %5022 = vmatpush1.msra.mxu0 0.0
    %5023 = vmatprep.subr.mxu0 0.0
    %5024 = vmatpush1.msra.mxu0 0.0
    %5025 = vmatprep.subr.mxu0 0.0
    %5026 = vmatpush1.msra.mxu0 0.0
    %5027 = vmatprep.subr.mxu0 0.0
    %5028 = vmatpush1.msra.mxu0 0.0
    %5029 = vmatprep.subr.mxu0 0.0
    %5030 = vmatpush1.msra.mxu0 0.0
    %5031 = vmatprep.subr.mxu0 0.0
    %5032 = vmatpush1.msra.mxu0 0.0
    %5033 = vmatprep.subr.mxu0 0.0
    %5034 = vmatpush1.msra.mxu0 0.0
    %5035 = vmatprep.subr.mxu0 0.0
    %5036 = vmatpush1.msra.mxu0 0.0
    %5037 = vmatprep.subr.mxu0 0.0
    %5038 = vmatpush1.msra.mxu0 0.0
    %5039 = vmatprep.subr.mxu0 0.0
    %5040 = vmatpush1.msra.mxu0 0.0
    %5041 = vmatprep.subr.mxu0 0.0
    %5042 = vmatpush1.msra.mxu0 0.0
    %5043 = vmatprep.subr.mxu0 0.0
    %5044 = vmatpush1.msra.mxu0 0.0
    %5045 = vmatprep.subr.mxu0 0.0
    %5046 = vmatpush1.msra.mxu0 0.0
    %5047 = vmatprep.subr.mxu0 0.0
    %5048 = vmatpush1.msra.mxu0 %v59
    %5049 = vmatprep.subr.mxu0 0.0
    %5050 = vmatpush1.msra.mxu0 %v58
    %5051 = vmatprep.subr.mxu0 0.0
    %5052 = vmatpush2.msra.mxu0 0.0
    %5053 = vmatprep.subr.mxu0 0.0
    %5054 = vmatpush2.msra.mxu0 0.0
    %5055 = vmatprep.subr.mxu0 0.0
    %5056 = vmatpush2.msra.mxu0 0.0
    %5057 = vmatprep.subr.mxu0 0.0
    %5058 = vmatpush2.msra.mxu0 0.0
    %5059 = vmatprep.subr.mxu0 0.0
    %5060 = vmatpush2.msra.mxu0 0.0
    %5061 = vmatprep.subr.mxu0 0.0
    %5062 = vmatpush2.msra.mxu0 0.0
    %5063 = vmatprep.subr.mxu0 0.0
    %5064 = vmatpush2.msra.mxu0 0.0
    %5065 = vmatprep.subr.mxu0 0.0
    %5066 = vmatpush2.msra.mxu0 0.0
    %5067 = vmatprep.subr.mxu0 0.0
    %5068 = vmatpush2.msra.mxu0 0.0
    %5069 = vmatprep.subr.mxu0 0.0
    %5070 = vmatpush2.msra.mxu0 0.0
    %5071 = vmatprep.subr.mxu0 0.0
    %5072 = vmatpush2.msra.mxu0 0.0
    %5073 = vmatprep.subr.mxu0 0.0
    %5074 = vmatpush2.msra.mxu0 0.0
    %5075 = vmatprep.subr.mxu0 0.0
    %5076 = vmatpush2.msra.mxu0 0.0
    %5077 = vmatprep.subr.mxu0 0.0
    %5078 = vmatpush2.msra.mxu0 0.0
    %5079 = vmatprep.subr.mxu0 0.0
    %5080 = vmatpush2.msra.mxu0 0.0
    %5081 = vmatprep.subr.mxu0 0.0
    %5082 = vmatpush2.msra.mxu0 0.0
    %5083 = vmatprep.mubr.f32.mxu0 0.0
    %5084 = vmatmul.mubr.f32.gmra.mxu0 %v5011
    %v5085 = vpop.f32.mrf.mxu0
    %v5086 = vadd.f32 0.0, %v5085
    %v5087 = vpop.f32.mrf.mxu0
    %5088 = vmatprep.mubr.f32.mxu0 0.0
    %5089 = vmatmul.mubr.f32.gmra.mxu0 %v5014
    %v5090 = vpop.f32.mrf.mxu0
    %v5091 = vadd.f32 0.0, %v5090
    %v5092 = vpop.f32.mrf.mxu0
    %5093 = vmatprep.mubr.f32.mxu0 0.0
    %5094 = vmatmul.mubr.f32.gmra.mxu0 %v5017
    %v5095 = vpop.f32.mrf.mxu0
    %v5096 = vadd.f32 0.0, %v5095
    %v5097 = vpop.f32.mrf.mxu0
    %5098 = vdwg.mxu0
    %v5100 = vsel %vm4742, %v4374, 0
    %v5103 = vsel %vm4742, %v4375, 0
    %v5106 = vsel %vm4742, %v4376, 0
    %5108 = vmatprep.subr.mxu0 0.0
    %5109 = vmatpush1.msra.mxu0 0.0
    %5110 = vmatprep.subr.mxu0 0.0
    %5111 = vmatpush1.msra.mxu0 0.0
    %5112 = vmatprep.subr.mxu0 0.0
    %5113 = vmatpush1.msra.mxu0 0.0
    %5114 = vmatprep.subr.mxu0 0.0
    %5115 = vmatpush1.msra.mxu0 0.0
    %5116 = vmatprep.subr.mxu0 0.0
    %5117 = vmatpush1.msra.mxu0 0.0
    %5118 = vmatprep.subr.mxu0 0.0
    %5119 = vmatpush1.msra.mxu0 0.0
    %5120 = vmatprep.subr.mxu0 0.0
    %5121 = vmatpush1.msra.mxu0 0.0
    %5122 = vmatprep.subr.mxu0 0.0
    %5123 = vmatpush1.msra.mxu0 0.0
    %5124 = vmatprep.subr.mxu0 0.0
    %5125 = vmatpush1.msra.mxu0 0.0
    %5126 = vmatprep.subr.mxu0 0.0
    %5127 = vmatpush1.msra.mxu0 0.0
    %5128 = vmatprep.subr.mxu0 0.0
    %5129 = vmatpush1.msra.mxu0 0.0
    %5130 = vmatprep.subr.mxu0 0.0
    %5131 = vmatpush1.msra.mxu0 0.0
    %5132 = vmatprep.subr.mxu0 0.0
    %5133 = vmatpush1.msra.mxu0 0.0
    %5134 = vmatprep.subr.mxu0 0.0
    %5135 = vmatpush1.msra.mxu0 0.0
    %5136 = vmatprep.subr.mxu0 0.0
    %5137 = vmatpush1.msra.mxu0 %v61
    %5138 = vmatprep.subr.mxu0 0.0
    %5139 = vmatpush1.msra.mxu0 %v60
    %5140 = vmatprep.subr.mxu0 0.0
    %5141 = vmatpush2.msra.mxu0 0.0
    %5142 = vmatprep.subr.mxu0 0.0
    %5143 = vmatpush2.msra.mxu0 0.0
    %5144 = vmatprep.subr.mxu0 0.0
    %5145 = vmatpush2.msra.mxu0 0.0
    %5146 = vmatprep.subr.mxu0 0.0
    %5147 = vmatpush2.msra.mxu0 0.0
    %5148 = vmatprep.subr.mxu0 0.0
    %5149 = vmatpush2.msra.mxu0 0.0
    %5150 = vmatprep.subr.mxu0 0.0
    %5151 = vmatpush2.msra.mxu0 0.0
    %5152 = vmatprep.subr.mxu0 0.0
    %5153 = vmatpush2.msra.mxu0 0.0
    %5154 = vmatprep.subr.mxu0 0.0
    %5155 = vmatpush2.msra.mxu0 0.0
    %5156 = vmatprep.subr.mxu0 0.0
    %5157 = vmatpush2.msra.mxu0 0.0
    %5158 = vmatprep.subr.mxu0 0.0
    %5159 = vmatpush2.msra.mxu0 0.0
    %5160 = vmatprep.subr.mxu0 0.0
    %5161 = vmatpush2.msra.mxu0 0.0
    %5162 = vmatprep.subr.mxu0 0.0
    %5163 = vmatpush2.msra.mxu0 0.0
    %5164 = vmatprep.subr.mxu0 0.0
    %5165 = vmatpush2.msra.mxu0 0.0
    %5166 = vmatprep.subr.mxu0 0.0
    %5167 = vmatpush2.msra.mxu0 0.0
    %5168 = vmatprep.subr.mxu0 0.0
    %5169 = vmatpush2.msra.mxu0 0.0
    %5170 = vmatprep.subr.mxu0 0.0
    %5171 = vmatpush2.msra.mxu0 0.0
    %5172 = vmatprep.mubr.f32.mxu0 0.0
    %5173 = vmatmul.mubr.f32.gmra.mxu0 %v5100
    %v5174 = vpop.f32.mrf.mxu0
    %v5175 = vadd.f32 0.0, %v5174
    %v5176 = vpop.f32.mrf.mxu0
    %5177 = vmatprep.mubr.f32.mxu0 0.0
    %5178 = vmatmul.mubr.f32.gmra.mxu0 %v5103
    %v5179 = vpop.f32.mrf.mxu0
    %v5180 = vadd.f32 0.0, %v5179
    %v5181 = vpop.f32.mrf.mxu0
    %5182 = vmatprep.mubr.f32.mxu0 0.0
    %5183 = vmatmul.mubr.f32.gmra.mxu0 %v5106
    %v5184 = vpop.f32.mrf.mxu0
    %v5185 = vadd.f32 0.0, %v5184
    %v5186 = vpop.f32.mrf.mxu0
    %5187 = vdwg.mxu0
    %v5189 = vsel %vm4742, %v4406, 0
    %v5192 = vsel %vm4742, %v4407, 0
    %v5195 = vsel %vm4742, %v4408, 0
    %5197 = vmatprep.subr.mxu0 0.0
    %5198 = vmatpush1.msra.mxu0 0.0
    %5199 = vmatprep.subr.mxu0 0.0
    %5200 = vmatpush1.msra.mxu0 0.0
    %5201 = vmatprep.subr.mxu0 0.0
    %5202 = vmatpush1.msra.mxu0 0.0
    %5203 = vmatprep.subr.mxu0 0.0
    %5204 = vmatpush1.msra.mxu0 0.0
    %5205 = vmatprep.subr.mxu0 0.0
    %5206 = vmatpush1.msra.mxu0 0.0
    %5207 = vmatprep.subr.mxu0 0.0
    %5208 = vmatpush1.msra.mxu0 0.0
    %5209 = vmatprep.subr.mxu0 0.0
    %5210 = vmatpush1.msra.mxu0 0.0
    %5211 = vmatprep.subr.mxu0 0.0
    %5212 = vmatpush1.msra.mxu0 0.0
    %5213 = vmatprep.subr.mxu0 0.0
    %5214 = vmatpush1.msra.mxu0 0.0
    %5215 = vmatprep.subr.mxu0 0.0
    %5216 = vmatpush1.msra.mxu0 0.0
    %5217 = vmatprep.subr.mxu0 0.0
    %5218 = vmatpush1.msra.mxu0 0.0
    %5219 = vmatprep.subr.mxu0 0.0
    %5220 = vmatpush1.msra.mxu0 0.0
    %5221 = vmatprep.subr.mxu0 0.0
    %5222 = vmatpush1.msra.mxu0 0.0
    %5223 = vmatprep.subr.mxu0 0.0
    %5224 = vmatpush1.msra.mxu0 0.0
    %5225 = vmatprep.subr.mxu0 0.0
    %5226 = vmatpush1.msra.mxu0 %v63
    %5227 = vmatprep.subr.mxu0 0.0
    %5228 = vmatpush1.msra.mxu0 %v62
    %5229 = vmatprep.subr.mxu0 0.0
    %5230 = vmatpush2.msra.mxu0 0.0
    %5231 = vmatprep.subr.mxu0 0.0
    %5232 = vmatpush2.msra.mxu0 0.0
    %5233 = vmatprep.subr.mxu0 0.0
    %5234 = vmatpush2.msra.mxu0 0.0
    %5235 = vmatprep.subr.mxu0 0.0
    %5236 = vmatpush2.msra.mxu0 0.0
    %5237 = vmatprep.subr.mxu0 0.0
    %5238 = vmatpush2.msra.mxu0 0.0
    %5239 = vmatprep.subr.mxu0 0.0
    %5240 = vmatpush2.msra.mxu0 0.0
    %5241 = vmatprep.subr.mxu0 0.0
    %5242 = vmatpush2.msra.mxu0 0.0
    %5243 = vmatprep.subr.mxu0 0.0
    %5244 = vmatpush2.msra.mxu0 0.0
    %5245 = vmatprep.subr.mxu0 0.0
    %5246 = vmatpush2.msra.mxu0 0.0
    %5247 = vmatprep.subr.mxu0 0.0
    %5248 = vmatpush2.msra.mxu0 0.0
    %5249 = vmatprep.subr.mxu0 0.0
    %5250 = vmatpush2.msra.mxu0 0.0
    %5251 = vmatprep.subr.mxu0 0.0
    %5252 = vmatpush2.msra.mxu0 0.0
    %5253 = vmatprep.subr.mxu0 0.0
    %5254 = vmatpush2.msra.mxu0 0.0
    %5255 = vmatprep.subr.mxu0 0.0
    %5256 = vmatpush2.msra.mxu0 0.0
    %5257 = vmatprep.subr.mxu0 0.0
    %5258 = vmatpush2.msra.mxu0 0.0
    %5259 = vmatprep.subr.mxu0 0.0
    %5260 = vmatpush2.msra.mxu0 0.0
    %5261 = vmatprep.mubr.f32.mxu0 0.0
    %5262 = vmatmul.mubr.f32.gmra.mxu0 %v5189
    %v5263 = vpop.f32.mrf.mxu0
    %v5264 = vadd.f32 0.0, %v5263
    %v5265 = vpop.f32.mrf.mxu0
    %5266 = vmatprep.mubr.f32.mxu0 0.0
    %5267 = vmatmul.mubr.f32.gmra.mxu0 %v5192
    %v5268 = vpop.f32.mrf.mxu0
    %v5269 = vadd.f32 0.0, %v5268
    %v5270 = vpop.f32.mrf.mxu0
    %5271 = vmatprep.mubr.f32.mxu0 0.0
    %5272 = vmatmul.mubr.f32.gmra.mxu0 %v5195
    %v5273 = vpop.f32.mrf.mxu0
    %v5274 = vadd.f32 0.0, %v5273
    %v5275 = vpop.f32.mrf.mxu0
    %5276 = vdwg.mxu0
    %v5278 = vsel %vm4742, %v4438, 0
    %v5281 = vsel %vm4742, %v4439, 0
    %v5284 = vsel %vm4742, %v4440, 0
    %5286 = vmatprep.subr.mxu0 0.0
    %5287 = vmatpush1.msra.mxu0 0.0
    %5288 = vmatprep.subr.mxu0 0.0
    %5289 = vmatpush1.msra.mxu0 0.0
    %5290 = vmatprep.subr.mxu0 0.0
    %5291 = vmatpush1.msra.mxu0 0.0
    %5292 = vmatprep.subr.mxu0 0.0
    %5293 = vmatpush1.msra.mxu0 0.0
    %5294 = vmatprep.subr.mxu0 0.0
    %5295 = vmatpush1.msra.mxu0 0.0
    %5296 = vmatprep.subr.mxu0 0.0
    %5297 = vmatpush1.msra.mxu0 0.0
    %5298 = vmatprep.subr.mxu0 0.0
    %5299 = vmatpush1.msra.mxu0 0.0
    %5300 = vmatprep.subr.mxu0 0.0
    %5301 = vmatpush1.msra.mxu0 0.0
    %5302 = vmatprep.subr.mxu0 0.0
    %5303 = vmatpush1.msra.mxu0 0.0
    %5304 = vmatprep.subr.mxu0 0.0
    %5305 = vmatpush1.msra.mxu0 0.0
    %5306 = vmatprep.subr.mxu0 0.0
    %5307 = vmatpush1.msra.mxu0 0.0
    %5308 = vmatprep.subr.mxu0 0.0
    %5309 = vmatpush1.msra.mxu0 0.0
    %5310 = vmatprep.subr.mxu0 0.0
    %5311 = vmatpush1.msra.mxu0 0.0
    %5312 = vmatprep.subr.mxu0 0.0
    %5313 = vmatpush1.msra.mxu0 0.0
    %5314 = vmatprep.subr.mxu0 0.0
    %5315 = vmatpush1.msra.mxu0 %v65
    %5316 = vmatprep.subr.mxu0 0.0
    %5317 = vmatpush1.msra.mxu0 %v64
    %5318 = vmatprep.subr.mxu0 0.0
    %5319 = vmatpush2.msra.mxu0 0.0
    %5320 = vmatprep.subr.mxu0 0.0
    %5321 = vmatpush2.msra.mxu0 0.0
    %5322 = vmatprep.subr.mxu0 0.0
    %5323 = vmatpush2.msra.mxu0 0.0
    %5324 = vmatprep.subr.mxu0 0.0
    %5325 = vmatpush2.msra.mxu0 0.0
    %5326 = vmatprep.subr.mxu0 0.0
    %5327 = vmatpush2.msra.mxu0 0.0
    %5328 = vmatprep.subr.mxu0 0.0
    %5329 = vmatpush2.msra.mxu0 0.0
    %5330 = vmatprep.subr.mxu0 0.0
    %5331 = vmatpush2.msra.mxu0 0.0
    %5332 = vmatprep.subr.mxu0 0.0
    %5333 = vmatpush2.msra.mxu0 0.0
    %5334 = vmatprep.subr.mxu0 0.0
    %5335 = vmatpush2.msra.mxu0 0.0
    %5336 = vmatprep.subr.mxu0 0.0
    %5337 = vmatpush2.msra.mxu0 0.0
    %5338 = vmatprep.subr.mxu0 0.0
    %5339 = vmatpush2.msra.mxu0 0.0
    %5340 = vmatprep.subr.mxu0 0.0
    %5341 = vmatpush2.msra.mxu0 0.0
    %5342 = vmatprep.subr.mxu0 0.0
    %5343 = vmatpush2.msra.mxu0 0.0
    %5344 = vmatprep.subr.mxu0 0.0
    %5345 = vmatpush2.msra.mxu0 0.0
    %5346 = vmatprep.subr.mxu0 0.0
    %5347 = vmatpush2.msra.mxu0 0.0
    %5348 = vmatprep.subr.mxu0 0.0
    %5349 = vmatpush2.msra.mxu0 0.0
    %5350 = vmatprep.mubr.f32.mxu0 0.0
    %5351 = vmatmul.mubr.f32.gmra.mxu0 %v5278
    %v5352 = vpop.f32.mrf.mxu0
    %v5353 = vadd.f32 0.0, %v5352
    %v5354 = vpop.f32.mrf.mxu0
    %5355 = vmatprep.mubr.f32.mxu0 0.0
    %5356 = vmatmul.mubr.f32.gmra.mxu0 %v5281
    %v5357 = vpop.f32.mrf.mxu0
    %v5358 = vadd.f32 0.0, %v5357
    %v5359 = vpop.f32.mrf.mxu0
    %5360 = vmatprep.mubr.f32.mxu0 0.0
    %5361 = vmatmul.mubr.f32.gmra.mxu0 %v5284
    %v5362 = vpop.f32.mrf.mxu0
    %v5363 = vadd.f32 0.0, %v5362
    %v5364 = vpop.f32.mrf.mxu0
    %5365 = vdwg.mxu0
    %v5367 = vsel %vm4742, %v4470, 0
    %v5370 = vsel %vm4742, %v4471, 0
    %v5373 = vsel %vm4742, %v4472, 0
    %5375 = vmatprep.subr.mxu0 0.0
    %5376 = vmatpush1.msra.mxu0 0.0
    %5377 = vmatprep.subr.mxu0 0.0
    %5378 = vmatpush1.msra.mxu0 0.0
    %5379 = vmatprep.subr.mxu0 0.0
    %5380 = vmatpush1.msra.mxu0 0.0
    %5381 = vmatprep.subr.mxu0 0.0
    %5382 = vmatpush1.msra.mxu0 0.0
    %5383 = vmatprep.subr.mxu0 0.0
    %5384 = vmatpush1.msra.mxu0 0.0
    %5385 = vmatprep.subr.mxu0 0.0
    %5386 = vmatpush1.msra.mxu0 0.0
    %5387 = vmatprep.subr.mxu0 0.0
    %5388 = vmatpush1.msra.mxu0 0.0
    %5389 = vmatprep.subr.mxu0 0.0
    %5390 = vmatpush1.msra.mxu0 0.0
    %5391 = vmatprep.subr.mxu0 0.0
    %5392 = vmatpush1.msra.mxu0 0.0
    %5393 = vmatprep.subr.mxu0 0.0
    %5394 = vmatpush1.msra.mxu0 0.0
    %5395 = vmatprep.subr.mxu0 0.0
    %5396 = vmatpush1.msra.mxu0 0.0
    %5397 = vmatprep.subr.mxu0 0.0
    %5398 = vmatpush1.msra.mxu0 0.0
    %5399 = vmatprep.subr.mxu0 0.0
    %5400 = vmatpush1.msra.mxu0 0.0
    %5401 = vmatprep.subr.mxu0 0.0
    %5402 = vmatpush1.msra.mxu0 0.0
    %5403 = vmatprep.subr.mxu0 0.0
    %5404 = vmatpush1.msra.mxu0 %v67
    %5405 = vmatprep.subr.mxu0 0.0
    %5406 = vmatpush1.msra.mxu0 %v66
    %5407 = vmatprep.subr.mxu0 0.0
    %5408 = vmatpush2.msra.mxu0 0.0
    %5409 = vmatprep.subr.mxu0 0.0
    %5410 = vmatpush2.msra.mxu0 0.0
    %5411 = vmatprep.subr.mxu0 0.0
    %5412 = vmatpush2.msra.mxu0 0.0
    %5413 = vmatprep.subr.mxu0 0.0
    %5414 = vmatpush2.msra.mxu0 0.0
    %5415 = vmatprep.subr.mxu0 0.0
    %5416 = vmatpush2.msra.mxu0 0.0
    %5417 = vmatprep.subr.mxu0 0.0
    %5418 = vmatpush2.msra.mxu0 0.0
    %5419 = vmatprep.subr.mxu0 0.0
    %5420 = vmatpush2.msra.mxu0 0.0
    %5421 = vmatprep.subr.mxu0 0.0
    %5422 = vmatpush2.msra.mxu0 0.0
    %5423 = vmatprep.subr.mxu0 0.0
    %5424 = vmatpush2.msra.mxu0 0.0
    %5425 = vmatprep.subr.mxu0 0.0
    %5426 = vmatpush2.msra.mxu0 0.0
    %5427 = vmatprep.subr.mxu0 0.0
    %5428 = vmatpush2.msra.mxu0 0.0
    %5429 = vmatprep.subr.mxu0 0.0
    %5430 = vmatpush2.msra.mxu0 0.0
    %5431 = vmatprep.subr.mxu0 0.0
    %5432 = vmatpush2.msra.mxu0 0.0
    %5433 = vmatprep.subr.mxu0 0.0
    %5434 = vmatpush2.msra.mxu0 0.0
    %5435 = vmatprep.subr.mxu0 0.0
    %5436 = vmatpush2.msra.mxu0 0.0
    %5437 = vmatprep.subr.mxu0 0.0
    %5438 = vmatpush2.msra.mxu0 0.0
    %5439 = vmatprep.mubr.f32.mxu0 0.0
    %5440 = vmatmul.mubr.f32.gmra.mxu0 %v5367
    %v5441 = vpop.f32.mrf.mxu0
    %v5442 = vadd.f32 0.0, %v5441
    %v5443 = vpop.f32.mrf.mxu0
    %5444 = vmatprep.mubr.f32.mxu0 0.0
    %5445 = vmatmul.mubr.f32.gmra.mxu0 %v5370
    %v5446 = vpop.f32.mrf.mxu0
    %v5447 = vadd.f32 0.0, %v5446
    %v5448 = vpop.f32.mrf.mxu0
    %5449 = vmatprep.mubr.f32.mxu0 0.0
    %5450 = vmatmul.mubr.f32.gmra.mxu0 %v5373
    %v5451 = vpop.f32.mrf.mxu0
    %v5452 = vadd.f32 0.0, %v5451
    %v5453 = vpop.f32.mrf.mxu0
    %5454 = vdwg.mxu0
    %v5456 = vsel %vm4742, %v4502, 0
    %v5459 = vsel %vm4742, %v4503, 0
    %v5462 = vsel %vm4742, %v4504, 0
    %5464 = vmatprep.subr.mxu0 0.0
    %5465 = vmatpush1.msra.mxu0 0.0
    %5466 = vmatprep.subr.mxu0 0.0
    %5467 = vmatpush1.msra.mxu0 0.0
    %5468 = vmatprep.subr.mxu0 0.0
    %5469 = vmatpush1.msra.mxu0 0.0
    %5470 = vmatprep.subr.mxu0 0.0
    %5471 = vmatpush1.msra.mxu0 0.0
    %5472 = vmatprep.subr.mxu0 0.0
    %5473 = vmatpush1.msra.mxu0 0.0
    %5474 = vmatprep.subr.mxu0 0.0
    %5475 = vmatpush1.msra.mxu0 0.0
    %5476 = vmatprep.subr.mxu0 0.0
    %5477 = vmatpush1.msra.mxu0 0.0
    %5478 = vmatprep.subr.mxu0 0.0
    %5479 = vmatpush1.msra.mxu0 0.0
    %5480 = vmatprep.subr.mxu0 0.0
    %5481 = vmatpush1.msra.mxu0 0.0
    %5482 = vmatprep.subr.mxu0 0.0
    %5483 = vmatpush1.msra.mxu0 0.0
    %5484 = vmatprep.subr.mxu0 0.0
    %5485 = vmatpush1.msra.mxu0 0.0
    %5486 = vmatprep.subr.mxu0 0.0
    %5487 = vmatpush1.msra.mxu0 0.0
    %5488 = vmatprep.subr.mxu0 0.0
    %5489 = vmatpush1.msra.mxu0 0.0
    %5490 = vmatprep.subr.mxu0 0.0
    %5491 = vmatpush1.msra.mxu0 0.0
    %5492 = vmatprep.subr.mxu0 0.0
    %5493 = vmatpush1.msra.mxu0 %v69
    %5494 = vmatprep.subr.mxu0 0.0
    %5495 = vmatpush1.msra.mxu0 %v68
    %5496 = vmatprep.subr.mxu0 0.0
    %5497 = vmatpush2.msra.mxu0 0.0
    %5498 = vmatprep.subr.mxu0 0.0
    %5499 = vmatpush2.msra.mxu0 0.0
    %5500 = vmatprep.subr.mxu0 0.0
    %5501 = vmatpush2.msra.mxu0 0.0
    %5502 = vmatprep.subr.mxu0 0.0
    %5503 = vmatpush2.msra.mxu0 0.0
    %5504 = vmatprep.subr.mxu0 0.0
    %5505 = vmatpush2.msra.mxu0 0.0
    %5506 = vmatprep.subr.mxu0 0.0
    %5507 = vmatpush2.msra.mxu0 0.0
    %5508 = vmatprep.subr.mxu0 0.0
    %5509 = vmatpush2.msra.mxu0 0.0
    %5510 = vmatprep.subr.mxu0 0.0
    %5511 = vmatpush2.msra.mxu0 0.0
    %5512 = vmatprep.subr.mxu0 0.0
    %5513 = vmatpush2.msra.mxu0 0.0
    %5514 = vmatprep.subr.mxu0 0.0
    %5515 = vmatpush2.msra.mxu0 0.0
    %5516 = vmatprep.subr.mxu0 0.0
    %5517 = vmatpush2.msra.mxu0 0.0
    %5518 = vmatprep.subr.mxu0 0.0
    %5519 = vmatpush2.msra.mxu0 0.0
    %5520 = vmatprep.subr.mxu0 0.0
    %5521 = vmatpush2.msra.mxu0 0.0
    %5522 = vmatprep.subr.mxu0 0.0
    %5523 = vmatpush2.msra.mxu0 0.0
    %5524 = vmatprep.subr.mxu0 0.0
    %5525 = vmatpush2.msra.mxu0 0.0
    %5526 = vmatprep.subr.mxu0 0.0
    %5527 = vmatpush2.msra.mxu0 0.0
    %5528 = vmatprep.mubr.f32.mxu0 0.0
    %5529 = vmatmul.mubr.f32.gmra.mxu0 %v5456
    %v5530 = vpop.f32.mrf.mxu0
    %v5531 = vadd.f32 0.0, %v5530
    %v5532 = vpop.f32.mrf.mxu0
    %5533 = vmatprep.mubr.f32.mxu0 0.0
    %5534 = vmatmul.mubr.f32.gmra.mxu0 %v5459
    %v5535 = vpop.f32.mrf.mxu0
    %v5536 = vadd.f32 0.0, %v5535
    %v5537 = vpop.f32.mrf.mxu0
    %5538 = vmatprep.mubr.f32.mxu0 0.0
    %5539 = vmatmul.mubr.f32.gmra.mxu0 %v5462
    %v5540 = vpop.f32.mrf.mxu0
    %v5541 = vadd.f32 0.0, %v5540
    %v5542 = vpop.f32.mrf.mxu0
    %5543 = vdwg.mxu0
    %v5545 = vsel %vm4742, %v4534, 0
    %v5548 = vsel %vm4742, %v4535, 0
    %v5551 = vsel %vm4742, %v4536, 0
    %5553 = vmatprep.subr.mxu0 0.0
    %5554 = vmatpush1.msra.mxu0 0.0
    %5555 = vmatprep.subr.mxu0 0.0
    %5556 = vmatpush1.msra.mxu0 0.0
    %5557 = vmatprep.subr.mxu0 0.0
    %5558 = vmatpush1.msra.mxu0 0.0
    %5559 = vmatprep.subr.mxu0 0.0
    %5560 = vmatpush1.msra.mxu0 0.0
    %5561 = vmatprep.subr.mxu0 0.0
    %5562 = vmatpush1.msra.mxu0 0.0
    %5563 = vmatprep.subr.mxu0 0.0
    %5564 = vmatpush1.msra.mxu0 0.0
    %5565 = vmatprep.subr.mxu0 0.0
    %5566 = vmatpush1.msra.mxu0 0.0
    %5567 = vmatprep.subr.mxu0 0.0
    %5568 = vmatpush1.msra.mxu0 0.0
    %5569 = vmatprep.subr.mxu0 0.0
    %5570 = vmatpush1.msra.mxu0 0.0
    %5571 = vmatprep.subr.mxu0 0.0
    %5572 = vmatpush1.msra.mxu0 0.0
    %5573 = vmatprep.subr.mxu0 0.0
    %5574 = vmatpush1.msra.mxu0 0.0
    %5575 = vmatprep.subr.mxu0 0.0
    %5576 = vmatpush1.msra.mxu0 0.0
    %5577 = vmatprep.subr.mxu0 0.0
    %5578 = vmatpush1.msra.mxu0 0.0
    %5579 = vmatprep.subr.mxu0 0.0
    %5580 = vmatpush1.msra.mxu0 0.0
    %5581 = vmatprep.subr.mxu0 0.0
    %5582 = vmatpush1.msra.mxu0 %v71
    %5583 = vmatprep.subr.mxu0 0.0
    %5584 = vmatpush1.msra.mxu0 %v70
    %5585 = vmatprep.subr.mxu0 0.0
    %5586 = vmatpush2.msra.mxu0 0.0
    %5587 = vmatprep.subr.mxu0 0.0
    %5588 = vmatpush2.msra.mxu0 0.0
    %5589 = vmatprep.subr.mxu0 0.0
    %5590 = vmatpush2.msra.mxu0 0.0
    %5591 = vmatprep.subr.mxu0 0.0
    %5592 = vmatpush2.msra.mxu0 0.0
    %5593 = vmatprep.subr.mxu0 0.0
    %5594 = vmatpush2.msra.mxu0 0.0
    %5595 = vmatprep.subr.mxu0 0.0
    %5596 = vmatpush2.msra.mxu0 0.0
    %5597 = vmatprep.subr.mxu0 0.0
    %5598 = vmatpush2.msra.mxu0 0.0
    %5599 = vmatprep.subr.mxu0 0.0
    %5600 = vmatpush2.msra.mxu0 0.0
    %5601 = vmatprep.subr.mxu0 0.0
    %5602 = vmatpush2.msra.mxu0 0.0
    %5603 = vmatprep.subr.mxu0 0.0
    %5604 = vmatpush2.msra.mxu0 0.0
    %5605 = vmatprep.subr.mxu0 0.0
    %5606 = vmatpush2.msra.mxu0 0.0
    %5607 = vmatprep.subr.mxu0 0.0
    %5608 = vmatpush2.msra.mxu0 0.0
    %5609 = vmatprep.subr.mxu0 0.0
    %5610 = vmatpush2.msra.mxu0 0.0
    %5611 = vmatprep.subr.mxu0 0.0
    %5612 = vmatpush2.msra.mxu0 0.0
    %5613 = vmatprep.subr.mxu0 0.0
    %5614 = vmatpush2.msra.mxu0 0.0
    %5615 = vmatprep.subr.mxu0 0.0
    %5616 = vmatpush2.msra.mxu0 0.0
    %5617 = vmatprep.mubr.f32.mxu0 0.0
    %5618 = vmatmul.mubr.f32.gmra.mxu0 %v5545
    %v5619 = vpop.f32.mrf.mxu0
    %v5620 = vadd.f32 0.0, %v5619
    %v5621 = vpop.f32.mrf.mxu0
    %5622 = vmatprep.mubr.f32.mxu0 0.0
    %5623 = vmatmul.mubr.f32.gmra.mxu0 %v5548
    %v5624 = vpop.f32.mrf.mxu0
    %v5625 = vadd.f32 0.0, %v5624
    %v5626 = vpop.f32.mrf.mxu0
    %5627 = vmatprep.mubr.f32.mxu0 0.0
    %5628 = vmatmul.mubr.f32.gmra.mxu0 %v5551
    %v5629 = vpop.f32.mrf.mxu0
    %v5630 = vadd.f32 0.0, %v5629
    %v5631 = vpop.f32.mrf.mxu0
    %5632 = vdwg.mxu0
    %v5634 = vsel %vm4742, %v4566, 0
    %v5637 = vsel %vm4742, %v4567, 0
    %v5640 = vsel %vm4742, %v4568, 0
    %5642 = vmatprep.subr.mxu0 0.0
    %5643 = vmatpush1.msra.mxu0 0.0
    %5644 = vmatprep.subr.mxu0 0.0
    %5645 = vmatpush1.msra.mxu0 0.0
    %5646 = vmatprep.subr.mxu0 0.0
    %5647 = vmatpush1.msra.mxu0 0.0
    %5648 = vmatprep.subr.mxu0 0.0
    %5649 = vmatpush1.msra.mxu0 0.0
    %5650 = vmatprep.subr.mxu0 0.0
    %5651 = vmatpush1.msra.mxu0 0.0
    %5652 = vmatprep.subr.mxu0 0.0
    %5653 = vmatpush1.msra.mxu0 0.0
    %5654 = vmatprep.subr.mxu0 0.0
    %5655 = vmatpush1.msra.mxu0 0.0
    %5656 = vmatprep.subr.mxu0 0.0
    %5657 = vmatpush1.msra.mxu0 0.0
    %5658 = vmatprep.subr.mxu0 0.0
    %5659 = vmatpush1.msra.mxu0 0.0
    %5660 = vmatprep.subr.mxu0 0.0
    %5661 = vmatpush1.msra.mxu0 0.0
    %5662 = vmatprep.subr.mxu0 0.0
    %5663 = vmatpush1.msra.mxu0 0.0
    %5664 = vmatprep.subr.mxu0 0.0
    %5665 = vmatpush1.msra.mxu0 0.0
    %5666 = vmatprep.subr.mxu0 0.0
    %5667 = vmatpush1.msra.mxu0 0.0
    %5668 = vmatprep.subr.mxu0 0.0
    %5669 = vmatpush1.msra.mxu0 0.0
    %5670 = vmatprep.subr.mxu0 0.0
    %5671 = vmatpush1.msra.mxu0 %v73
    %5672 = vmatprep.subr.mxu0 0.0
    %5673 = vmatpush1.msra.mxu0 %v72
    %5674 = vmatprep.subr.mxu0 0.0
    %5675 = vmatpush2.msra.mxu0 0.0
    %5676 = vmatprep.subr.mxu0 0.0
    %5677 = vmatpush2.msra.mxu0 0.0
    %5678 = vmatprep.subr.mxu0 0.0
    %5679 = vmatpush2.msra.mxu0 0.0
    %5680 = vmatprep.subr.mxu0 0.0
    %5681 = vmatpush2.msra.mxu0 0.0
    %5682 = vmatprep.subr.mxu0 0.0
    %5683 = vmatpush2.msra.mxu0 0.0
    %5684 = vmatprep.subr.mxu0 0.0
    %5685 = vmatpush2.msra.mxu0 0.0
    %5686 = vmatprep.subr.mxu0 0.0
    %5687 = vmatpush2.msra.mxu0 0.0
    %5688 = vmatprep.subr.mxu0 0.0
    %5689 = vmatpush2.msra.mxu0 0.0
    %5690 = vmatprep.subr.mxu0 0.0
    %5691 = vmatpush2.msra.mxu0 0.0
    %5692 = vmatprep.subr.mxu0 0.0
    %5693 = vmatpush2.msra.mxu0 0.0
    %5694 = vmatprep.subr.mxu0 0.0
    %5695 = vmatpush2.msra.mxu0 0.0
    %5696 = vmatprep.subr.mxu0 0.0
    %5697 = vmatpush2.msra.mxu0 0.0
    %5698 = vmatprep.subr.mxu0 0.0
    %5699 = vmatpush2.msra.mxu0 0.0
    %5700 = vmatprep.subr.mxu0 0.0
    %5701 = vmatpush2.msra.mxu0 0.0
    %5702 = vmatprep.subr.mxu0 0.0
    %5703 = vmatpush2.msra.mxu0 0.0
    %5704 = vmatprep.subr.mxu0 0.0
    %5705 = vmatpush2.msra.mxu0 0.0
    %5706 = vmatprep.mubr.f32.mxu0 0.0
    %5707 = vmatmul.mubr.f32.gmra.mxu0 %v5634
    %v5708 = vpop.f32.mrf.mxu0
    %v5709 = vadd.f32 0.0, %v5708
    %v5710 = vpop.f32.mrf.mxu0
    %5711 = vmatprep.mubr.f32.mxu0 0.0
    %5712 = vmatmul.mubr.f32.gmra.mxu0 %v5637
    %v5713 = vpop.f32.mrf.mxu0
    %v5714 = vadd.f32 0.0, %v5713
    %v5715 = vpop.f32.mrf.mxu0
    %5716 = vmatprep.mubr.f32.mxu0 0.0
    %5717 = vmatmul.mubr.f32.gmra.mxu0 %v5640
    %v5718 = vpop.f32.mrf.mxu0
    %v5719 = vadd.f32 0.0, %v5718
    %v5720 = vpop.f32.mrf.mxu0
    %5721 = vdwg.mxu0
    %v5723 = vsel %vm4742, %v4598, 0
    %v5726 = vsel %vm4742, %v4599, 0
    %v5729 = vsel %vm4742, %v4600, 0
    %5731 = vmatprep.subr.mxu0 0.0
    %5732 = vmatpush1.msra.mxu0 0.0
    %5733 = vmatprep.subr.mxu0 0.0
    %5734 = vmatpush1.msra.mxu0 0.0
    %5735 = vmatprep.subr.mxu0 0.0
    %5736 = vmatpush1.msra.mxu0 0.0
    %5737 = vmatprep.subr.mxu0 0.0
    %5738 = vmatpush1.msra.mxu0 0.0
    %5739 = vmatprep.subr.mxu0 0.0
    %5740 = vmatpush1.msra.mxu0 0.0
    %5741 = vmatprep.subr.mxu0 0.0
    %5742 = vmatpush1.msra.mxu0 0.0
    %5743 = vmatprep.subr.mxu0 0.0
    %5744 = vmatpush1.msra.mxu0 0.0
    %5745 = vmatprep.subr.mxu0 0.0
    %5746 = vmatpush1.msra.mxu0 0.0
    %5747 = vmatprep.subr.mxu0 0.0
    %5748 = vmatpush1.msra.mxu0 0.0
    %5749 = vmatprep.subr.mxu0 0.0
    %5750 = vmatpush1.msra.mxu0 0.0
    %5751 = vmatprep.subr.mxu0 0.0
    %5752 = vmatpush1.msra.mxu0 0.0
    %5753 = vmatprep.subr.mxu0 0.0
    %5754 = vmatpush1.msra.mxu0 0.0
    %5755 = vmatprep.subr.mxu0 0.0
    %5756 = vmatpush1.msra.mxu0 0.0
    %5757 = vmatprep.subr.mxu0 0.0
    %5758 = vmatpush1.msra.mxu0 0.0
    %5759 = vmatprep.subr.mxu0 0.0
    %5760 = vmatpush1.msra.mxu0 %v75
    %5761 = vmatprep.subr.mxu0 0.0
    %5762 = vmatpush1.msra.mxu0 %v74
    %5763 = vmatprep.subr.mxu0 0.0
    %5764 = vmatpush2.msra.mxu0 0.0
    %5765 = vmatprep.subr.mxu0 0.0
    %5766 = vmatpush2.msra.mxu0 0.0
    %5767 = vmatprep.subr.mxu0 0.0
    %5768 = vmatpush2.msra.mxu0 0.0
    %5769 = vmatprep.subr.mxu0 0.0
    %5770 = vmatpush2.msra.mxu0 0.0
    %5771 = vmatprep.subr.mxu0 0.0
    %5772 = vmatpush2.msra.mxu0 0.0
    %5773 = vmatprep.subr.mxu0 0.0
    %5774 = vmatpush2.msra.mxu0 0.0
    %5775 = vmatprep.subr.mxu0 0.0
    %5776 = vmatpush2.msra.mxu0 0.0
    %5777 = vmatprep.subr.mxu0 0.0
    %5778 = vmatpush2.msra.mxu0 0.0
    %5779 = vmatprep.subr.mxu0 0.0
    %5780 = vmatpush2.msra.mxu0 0.0
    %5781 = vmatprep.subr.mxu0 0.0
    %5782 = vmatpush2.msra.mxu0 0.0
    %5783 = vmatprep.subr.mxu0 0.0
    %5784 = vmatpush2.msra.mxu0 0.0
    %5785 = vmatprep.subr.mxu0 0.0
    %5786 = vmatpush2.msra.mxu0 0.0
    %5787 = vmatprep.subr.mxu0 0.0
    %5788 = vmatpush2.msra.mxu0 0.0
    %5789 = vmatprep.subr.mxu0 0.0
    %5790 = vmatpush2.msra.mxu0 0.0
    %5791 = vmatprep.subr.mxu0 0.0
    %5792 = vmatpush2.msra.mxu0 0.0
    %5793 = vmatprep.subr.mxu0 0.0
    %5794 = vmatpush2.msra.mxu0 0.0
    %5795 = vmatprep.mubr.f32.mxu0 0.0
    %5796 = vmatmul.mubr.f32.gmra.mxu0 %v5723
    %v5797 = vpop.f32.mrf.mxu0
    %v5798 = vadd.f32 0.0, %v5797
    %v5799 = vpop.f32.mrf.mxu0
    %5800 = vmatprep.mubr.f32.mxu0 0.0
    %5801 = vmatmul.mubr.f32.gmra.mxu0 %v5726
    %v5802 = vpop.f32.mrf.mxu0
    %v5803 = vadd.f32 0.0, %v5802
    %v5804 = vpop.f32.mrf.mxu0
    %5805 = vmatprep.mubr.f32.mxu0 0.0
    %5806 = vmatmul.mubr.f32.gmra.mxu0 %v5729
    %v5807 = vpop.f32.mrf.mxu0
    %v5808 = vadd.f32 0.0, %v5807
    %v5809 = vpop.f32.mrf.mxu0
    %5810 = vdwg.mxu0
    %v5812 = vsel %vm4742, %v4630, 0
    %v5815 = vsel %vm4742, %v4631, 0
    %v5818 = vsel %vm4742, %v4632, 0
    %5820 = vmatprep.subr.mxu0 0.0
    %5821 = vmatpush1.msra.mxu0 0.0
    %5822 = vmatprep.subr.mxu0 0.0
    %5823 = vmatpush1.msra.mxu0 0.0
    %5824 = vmatprep.subr.mxu0 0.0
    %5825 = vmatpush1.msra.mxu0 0.0
    %5826 = vmatprep.subr.mxu0 0.0
    %5827 = vmatpush1.msra.mxu0 0.0
    %5828 = vmatprep.subr.mxu0 0.0
    %5829 = vmatpush1.msra.mxu0 0.0
    %5830 = vmatprep.subr.mxu0 0.0
    %5831 = vmatpush1.msra.mxu0 0.0
    %5832 = vmatprep.subr.mxu0 0.0
    %5833 = vmatpush1.msra.mxu0 0.0
    %5834 = vmatprep.subr.mxu0 0.0
    %5835 = vmatpush1.msra.mxu0 0.0
    %5836 = vmatprep.subr.mxu0 0.0
    %5837 = vmatpush1.msra.mxu0 0.0
    %5838 = vmatprep.subr.mxu0 0.0
    %5839 = vmatpush1.msra.mxu0 0.0
    %5840 = vmatprep.subr.mxu0 0.0
    %5841 = vmatpush1.msra.mxu0 0.0
    %5842 = vmatprep.subr.mxu0 0.0
    %5843 = vmatpush1.msra.mxu0 0.0
    %5844 = vmatprep.subr.mxu0 0.0
    %5845 = vmatpush1.msra.mxu0 0.0
    %5846 = vmatprep.subr.mxu0 0.0
    %5847 = vmatpush1.msra.mxu0 0.0
    %5848 = vmatprep.subr.mxu0 0.0
    %5849 = vmatpush1.msra.mxu0 %v77
    %5850 = vmatprep.subr.mxu0 0.0
    %5851 = vmatpush1.msra.mxu0 %v76
    %5852 = vmatprep.subr.mxu0 0.0
    %5853 = vmatpush2.msra.mxu0 0.0
    %5854 = vmatprep.subr.mxu0 0.0
    %5855 = vmatpush2.msra.mxu0 0.0
    %5856 = vmatprep.subr.mxu0 0.0
    %5857 = vmatpush2.msra.mxu0 0.0
    %5858 = vmatprep.subr.mxu0 0.0
    %5859 = vmatpush2.msra.mxu0 0.0
    %5860 = vmatprep.subr.mxu0 0.0
    %5861 = vmatpush2.msra.mxu0 0.0
    %5862 = vmatprep.subr.mxu0 0.0
    %5863 = vmatpush2.msra.mxu0 0.0
    %5864 = vmatprep.subr.mxu0 0.0
    %5865 = vmatpush2.msra.mxu0 0.0
    %5866 = vmatprep.subr.mxu0 0.0
    %5867 = vmatpush2.msra.mxu0 0.0
    %5868 = vmatprep.subr.mxu0 0.0
    %5869 = vmatpush2.msra.mxu0 0.0
    %5870 = vmatprep.subr.mxu0 0.0
    %5871 = vmatpush2.msra.mxu0 0.0
    %5872 = vmatprep.subr.mxu0 0.0
    %5873 = vmatpush2.msra.mxu0 0.0
    %5874 = vmatprep.subr.mxu0 0.0
    %5875 = vmatpush2.msra.mxu0 0.0
    %5876 = vmatprep.subr.mxu0 0.0
    %5877 = vmatpush2.msra.mxu0 0.0
    %5878 = vmatprep.subr.mxu0 0.0
    %5879 = vmatpush2.msra.mxu0 0.0
    %5880 = vmatprep.subr.mxu0 0.0
    %5881 = vmatpush2.msra.mxu0 0.0
    %5882 = vmatprep.subr.mxu0 0.0
    %5883 = vmatpush2.msra.mxu0 0.0
    %5884 = vmatprep.mubr.f32.mxu0 0.0
    %5885 = vmatmul.mubr.f32.gmra.mxu0 %v5812
    %v5886 = vpop.f32.mrf.mxu0
    %v5887 = vadd.f32 0.0, %v5886
    %v5888 = vpop.f32.mrf.mxu0
    %5889 = vmatprep.mubr.f32.mxu0 0.0
    %5890 = vmatmul.mubr.f32.gmra.mxu0 %v5815
    %v5891 = vpop.f32.mrf.mxu0
    %v5892 = vadd.f32 0.0, %v5891
    %v5893 = vpop.f32.mrf.mxu0
    %5894 = vmatprep.mubr.f32.mxu0 0.0
    %5895 = vmatmul.mubr.f32.gmra.mxu0 %v5818
    %v5896 = vpop.f32.mrf.mxu0
    %v5897 = vadd.f32 0.0, %v5896
    %v5898 = vpop.f32.mrf.mxu0
    %5899 = vdwg.mxu0
    %v5901 = vsel %vm4742, %v4662, 0
    %v5904 = vsel %vm4742, %v4663, 0
    %v5907 = vsel %vm4742, %v4664, 0
    %5909 = vmatprep.subr.mxu0 0.0
    %5910 = vmatpush1.msra.mxu0 0.0
    %5911 = vmatprep.subr.mxu0 0.0
    %5912 = vmatpush1.msra.mxu0 0.0
    %5913 = vmatprep.subr.mxu0 0.0
    %5914 = vmatpush1.msra.mxu0 0.0
    %5915 = vmatprep.subr.mxu0 0.0
    %5916 = vmatpush1.msra.mxu0 0.0
    %5917 = vmatprep.subr.mxu0 0.0
    %5918 = vmatpush1.msra.mxu0 0.0
    %5919 = vmatprep.subr.mxu0 0.0
    %5920 = vmatpush1.msra.mxu0 0.0
    %5921 = vmatprep.subr.mxu0 0.0
    %5922 = vmatpush1.msra.mxu0 0.0
    %5923 = vmatprep.subr.mxu0 0.0
    %5924 = vmatpush1.msra.mxu0 0.0
    %5925 = vmatprep.subr.mxu0 0.0
    %5926 = vmatpush1.msra.mxu0 0.0
    %5927 = vmatprep.subr.mxu0 0.0
    %5928 = vmatpush1.msra.mxu0 0.0
    %5929 = vmatprep.subr.mxu0 0.0
    %5930 = vmatpush1.msra.mxu0 0.0
    %5931 = vmatprep.subr.mxu0 0.0
    %5932 = vmatpush1.msra.mxu0 0.0
    %5933 = vmatprep.subr.mxu0 0.0
    %5934 = vmatpush1.msra.mxu0 0.0
    %5935 = vmatprep.subr.mxu0 0.0
    %5936 = vmatpush1.msra.mxu0 0.0
    %5937 = vmatprep.subr.mxu0 0.0
    %5938 = vmatpush1.msra.mxu0 %v79
    %5939 = vmatprep.subr.mxu0 0.0
    %5940 = vmatpush1.msra.mxu0 %v78
    %5941 = vmatprep.subr.mxu0 0.0
    %5942 = vmatpush2.msra.mxu0 0.0
    %5943 = vmatprep.subr.mxu0 0.0
    %5944 = vmatpush2.msra.mxu0 0.0
    %5945 = vmatprep.subr.mxu0 0.0
    %5946 = vmatpush2.msra.mxu0 0.0
    %5947 = vmatprep.subr.mxu0 0.0
    %5948 = vmatpush2.msra.mxu0 0.0
    %5949 = vmatprep.subr.mxu0 0.0
    %5950 = vmatpush2.msra.mxu0 0.0
    %5951 = vmatprep.subr.mxu0 0.0
    %5952 = vmatpush2.msra.mxu0 0.0
    %5953 = vmatprep.subr.mxu0 0.0
    %5954 = vmatpush2.msra.mxu0 0.0
    %5955 = vmatprep.subr.mxu0 0.0
    %5956 = vmatpush2.msra.mxu0 0.0
    %5957 = vmatprep.subr.mxu0 0.0
    %5958 = vmatpush2.msra.mxu0 0.0
    %5959 = vmatprep.subr.mxu0 0.0
    %5960 = vmatpush2.msra.mxu0 0.0
    %5961 = vmatprep.subr.mxu0 0.0
    %5962 = vmatpush2.msra.mxu0 0.0
    %5963 = vmatprep.subr.mxu0 0.0
    %5964 = vmatpush2.msra.mxu0 0.0
    %5965 = vmatprep.subr.mxu0 0.0
    %5966 = vmatpush2.msra.mxu0 0.0
    %5967 = vmatprep.subr.mxu0 0.0
    %5968 = vmatpush2.msra.mxu0 0.0
    %5969 = vmatprep.subr.mxu0 0.0
    %5970 = vmatpush2.msra.mxu0 0.0
    %5971 = vmatprep.subr.mxu0 0.0
    %5972 = vmatpush2.msra.mxu0 0.0
    %5973 = vmatprep.mubr.f32.mxu0 0.0
    %5974 = vmatmul.mubr.f32.gmra.mxu0 %v5901
    %v5975 = vpop.f32.mrf.mxu0
    %v5976 = vadd.f32 0.0, %v5975
    %v5977 = vpop.f32.mrf.mxu0
    %5978 = vmatprep.mubr.f32.mxu0 0.0
    %5979 = vmatmul.mubr.f32.gmra.mxu0 %v5904
    %v5980 = vpop.f32.mrf.mxu0
    %v5981 = vadd.f32 0.0, %v5980
    %v5982 = vpop.f32.mrf.mxu0
    %5983 = vmatprep.mubr.f32.mxu0 0.0
    %5984 = vmatmul.mubr.f32.gmra.mxu0 %v5907
    %v5985 = vpop.f32.mrf.mxu0
    %v5986 = vadd.f32 0.0, %v5985
    %v5987 = vpop.f32.mrf.mxu0
    %5988 = vdwg.mxu0
    %v5990 = vsel %vm4742, %v4694, 0
    %v5993 = vsel %vm4742, %v4695, 0
    %v5996 = vsel %vm4742, %v4696, 0
    %5998 = vmatprep.subr.mxu0 0.0
    %5999 = vmatpush1.msra.mxu0 0.0
    %6000 = vmatprep.subr.mxu0 0.0
    %6001 = vmatpush1.msra.mxu0 0.0
    %6002 = vmatprep.subr.mxu0 0.0
    %6003 = vmatpush1.msra.mxu0 0.0
    %6004 = vmatprep.subr.mxu0 0.0
    %6005 = vmatpush1.msra.mxu0 0.0
    %6006 = vmatprep.subr.mxu0 0.0
    %6007 = vmatpush1.msra.mxu0 0.0
    %6008 = vmatprep.subr.mxu0 0.0
    %6009 = vmatpush1.msra.mxu0 0.0
    %6010 = vmatprep.subr.mxu0 0.0
    %6011 = vmatpush1.msra.mxu0 0.0
    %6012 = vmatprep.subr.mxu0 0.0
    %6013 = vmatpush1.msra.mxu0 0.0
    %6014 = vmatprep.subr.mxu0 0.0
    %6015 = vmatpush1.msra.mxu0 0.0
    %6016 = vmatprep.subr.mxu0 0.0
    %6017 = vmatpush1.msra.mxu0 0.0
    %6018 = vmatprep.subr.mxu0 0.0
    %6019 = vmatpush1.msra.mxu0 0.0
    %6020 = vmatprep.subr.mxu0 0.0
    %6021 = vmatpush1.msra.mxu0 0.0
    %6022 = vmatprep.subr.mxu0 0.0
    %6023 = vmatpush1.msra.mxu0 0.0
    %6024 = vmatprep.subr.mxu0 0.0
    %6025 = vmatpush1.msra.mxu0 0.0
    %6026 = vmatprep.subr.mxu0 0.0
    %6027 = vmatpush1.msra.mxu0 %v81
    %6028 = vmatprep.subr.mxu0 0.0
    %6029 = vmatpush1.msra.mxu0 %v80
    %6030 = vmatprep.subr.mxu0 0.0
    %6031 = vmatpush2.msra.mxu0 0.0
    %6032 = vmatprep.subr.mxu0 0.0
    %6033 = vmatpush2.msra.mxu0 0.0
    %6034 = vmatprep.subr.mxu0 0.0
    %6035 = vmatpush2.msra.mxu0 0.0
    %6036 = vmatprep.subr.mxu0 0.0
    %6037 = vmatpush2.msra.mxu0 0.0
    %6038 = vmatprep.subr.mxu0 0.0
    %6039 = vmatpush2.msra.mxu0 0.0
    %6040 = vmatprep.subr.mxu0 0.0
    %6041 = vmatpush2.msra.mxu0 0.0
    %6042 = vmatprep.subr.mxu0 0.0
    %6043 = vmatpush2.msra.mxu0 0.0
    %6044 = vmatprep.subr.mxu0 0.0
    %6045 = vmatpush2.msra.mxu0 0.0
    %6046 = vmatprep.subr.mxu0 0.0
    %6047 = vmatpush2.msra.mxu0 0.0
    %6048 = vmatprep.subr.mxu0 0.0
    %6049 = vmatpush2.msra.mxu0 0.0
    %6050 = vmatprep.subr.mxu0 0.0
    %6051 = vmatpush2.msra.mxu0 0.0
    %6052 = vmatprep.subr.mxu0 0.0
    %6053 = vmatpush2.msra.mxu0 0.0
    %6054 = vmatprep.subr.mxu0 0.0
    %6055 = vmatpush2.msra.mxu0 0.0
    %6056 = vmatprep.subr.mxu0 0.0
    %6057 = vmatpush2.msra.mxu0 0.0
    %6058 = vmatprep.subr.mxu0 0.0
    %6059 = vmatpush2.msra.mxu0 0.0
    %6060 = vmatprep.subr.mxu0 0.0
    %6061 = vmatpush2.msra.mxu0 0.0
    %6062 = vmatprep.mubr.f32.mxu0 0.0
    %6063 = vmatmul.mubr.f32.gmra.mxu0 %v5990
    %v6064 = vpop.f32.mrf.mxu0
    %v6065 = vadd.f32 0.0, %v6064
    %v6066 = vpop.f32.mrf.mxu0
    %6067 = vmatprep.mubr.f32.mxu0 0.0
    %6068 = vmatmul.mubr.f32.gmra.mxu0 %v5993
    %v6069 = vpop.f32.mrf.mxu0
    %v6070 = vadd.f32 0.0, %v6069
    %v6071 = vpop.f32.mrf.mxu0
    %6072 = vmatprep.mubr.f32.mxu0 0.0
    %6073 = vmatmul.mubr.f32.gmra.mxu0 %v5996
    %v6074 = vpop.f32.mrf.mxu0
    %v6075 = vadd.f32 0.0, %v6074
    %v6076 = vpop.f32.mrf.mxu0
    %6077 = vdwg.mxu0
    %v6079 = vsel %vm4742, %v4726, 0
    %v6082 = vsel %vm4742, %v4727, 0
    %v6085 = vsel %vm4742, %v4728, 0
    %6087 = vmatprep.subr.mxu0 0.0
    %6088 = vmatpush1.msra.mxu0 0.0
    %6089 = vmatprep.subr.mxu0 0.0
    %6090 = vmatpush1.msra.mxu0 0.0
    %6091 = vmatprep.subr.mxu0 0.0
    %6092 = vmatpush1.msra.mxu0 0.0
    %6093 = vmatprep.subr.mxu0 0.0
    %6094 = vmatpush1.msra.mxu0 0.0
    %6095 = vmatprep.subr.mxu0 0.0
    %6096 = vmatpush1.msra.mxu0 0.0
    %6097 = vmatprep.subr.mxu0 0.0
    %6098 = vmatpush1.msra.mxu0 0.0
    %6099 = vmatprep.subr.mxu0 0.0
    %6100 = vmatpush1.msra.mxu0 0.0
    %6101 = vmatprep.subr.mxu0 0.0
    %6102 = vmatpush1.msra.mxu0 0.0
    %6103 = vmatprep.subr.mxu0 0.0
    %6104 = vmatpush1.msra.mxu0 0.0
    %6105 = vmatprep.subr.mxu0 0.0
    %6106 = vmatpush1.msra.mxu0 0.0
    %6107 = vmatprep.subr.mxu0 0.0
    %6108 = vmatpush1.msra.mxu0 0.0
    %6109 = vmatprep.subr.mxu0 0.0
    %6110 = vmatpush1.msra.mxu0 0.0
    %6111 = vmatprep.subr.mxu0 0.0
    %6112 = vmatpush1.msra.mxu0 0.0
    %6113 = vmatprep.subr.mxu0 0.0
    %6114 = vmatpush1.msra.mxu0 0.0
    %6115 = vmatprep.subr.mxu0 0.0
    %6116 = vmatpush1.msra.mxu0 %v83
    %6117 = vmatprep.subr.mxu0 0.0
    %6118 = vmatpush1.msra.mxu0 %v82
    %6119 = vmatprep.subr.mxu0 0.0
    %6120 = vmatpush2.msra.mxu0 0.0
    %6121 = vmatprep.subr.mxu0 0.0
    %6122 = vmatpush2.msra.mxu0 0.0
    %6123 = vmatprep.subr.mxu0 0.0
    %6124 = vmatpush2.msra.mxu0 0.0
    %6125 = vmatprep.subr.mxu0 0.0
    %6126 = vmatpush2.msra.mxu0 0.0
    %6127 = vmatprep.subr.mxu0 0.0
    %6128 = vmatpush2.msra.mxu0 0.0
    %6129 = vmatprep.subr.mxu0 0.0
    %6130 = vmatpush2.msra.mxu0 0.0
    %6131 = vmatprep.subr.mxu0 0.0
    %6132 = vmatpush2.msra.mxu0 0.0
    %6133 = vmatprep.subr.mxu0 0.0
    %6134 = vmatpush2.msra.mxu0 0.0
    %6135 = vmatprep.subr.mxu0 0.0
    %6136 = vmatpush2.msra.mxu0 0.0
    %6137 = vmatprep.subr.mxu0 0.0
    %6138 = vmatpush2.msra.mxu0 0.0
    %6139 = vmatprep.subr.mxu0 0.0
    %6140 = vmatpush2.msra.mxu0 0.0
    %6141 = vmatprep.subr.mxu0 0.0
    %6142 = vmatpush2.msra.mxu0 0.0
    %6143 = vmatprep.subr.mxu0 0.0
    %6144 = vmatpush2.msra.mxu0 0.0
    %6145 = vmatprep.subr.mxu0 0.0
    %6146 = vmatpush2.msra.mxu0 0.0
    %6147 = vmatprep.subr.mxu0 0.0
    %6148 = vmatpush2.msra.mxu0 0.0
    %6149 = vmatprep.subr.mxu0 0.0
    %6150 = vmatpush2.msra.mxu0 0.0
    %6151 = vmatprep.mubr.f32.mxu0 0.0
    %6152 = vmatmul.mubr.f32.gmra.mxu0 %v6079
    %v6153 = vpop.f32.mrf.mxu0
    %v6154 = vadd.f32 0.0, %v6153
    %v6155 = vpop.f32.mrf.mxu0
    %6156 = vmatprep.mubr.f32.mxu0 0.0
    %6157 = vmatmul.mubr.f32.gmra.mxu0 %v6082
    %v6158 = vpop.f32.mrf.mxu0
    %v6159 = vadd.f32 0.0, %v6158
    %v6160 = vpop.f32.mrf.mxu0
    %6161 = vmatprep.mubr.f32.mxu0 0.0
    %6162 = vmatmul.mubr.f32.gmra.mxu0 %v6085
    %v6163 = vpop.f32.mrf.mxu0
    %v6164 = vadd.f32 0.0, %v6163
    %v6165 = vpop.f32.mrf.mxu0
    %6166 = vdwg.mxu0
    %6167 = vst [vmem:[#allocation8] sm:$0xff] %v4819
    %6168 = vst [vmem:[#allocation8 + $0x8] sm:$0xff] %v4824
    %6169 = vst [vmem:[#allocation8 + $0x10] sm:$0xff] %v4829
    %6170 = vst [vmem:[#allocation8 + $0x18] sm:$0xff] %v4908
    %6171 = vst [vmem:[#allocation8 + $0x20] sm:$0xff] %v4913
    %6172 = vst [vmem:[#allocation8 + $0x28] sm:$0xff] %v4918
    %6173 = vst [vmem:[#allocation8 + $0x30] sm:$0xff] %v4997
    %6174 = vst [vmem:[#allocation8 + $0x38] sm:$0xff] %v5002
    %6175 = vst [vmem:[#allocation8 + $0x40] sm:$0xff] %v5007
    %6176 = vst [vmem:[#allocation8 + $0x48] sm:$0xff] %v5086
    %6177 = vst [vmem:[#allocation8 + $0x50] sm:$0xff] %v5091
    %6178 = vst [vmem:[#allocation8 + $0x58] sm:$0xff] %v5096
    %6179 = vst [vmem:[#allocation8 + $0x60] sm:$0xff] %v5175
    %6180 = vst [vmem:[#allocation8 + $0x68] sm:$0xff] %v5180
    %6181 = vst [vmem:[#allocation8 + $0x70] sm:$0xff] %v5185
    %6182 = vst [vmem:[#allocation8 + $0x78] sm:$0xff] %v5264
    %6183 = vst [vmem:[#allocation8 + $0x80] sm:$0xff] %v5269
    %6184 = vst [vmem:[#allocation8 + $0x88] sm:$0xff] %v5274
    %6185 = vst [vmem:[#allocation8 + $0x90] sm:$0xff] %v5353
    %6186 = vst [vmem:[#allocation8 + $0x98] sm:$0xff] %v5358
    %6187 = vst [vmem:[#allocation8 + $0xa0] sm:$0xff] %v5363
    %6188 = vst [vmem:[#allocation8 + $0xa8] sm:$0xff] %v5442
    %6189 = vst [vmem:[#allocation8 + $0xb0] sm:$0xff] %v5447
    %6190 = vst [vmem:[#allocation8 + $0xb8] sm:$0xff] %v5452
    %6191 = vst [vmem:[#allocation8 + $0xc0] sm:$0xff] %v5531
    %6192 = vst [vmem:[#allocation8 + $0xc8] sm:$0xff] %v5536
    %6193 = vst [vmem:[#allocation8 + $0xd0] sm:$0xff] %v5541
    %6194 = vst [vmem:[#allocation8 + $0xd8] sm:$0xff] %v5620
    %6195 = vst [vmem:[#allocation8 + $0xe0] sm:$0xff] %v5625
    %6196 = vst [vmem:[#allocation8 + $0xe8] sm:$0xff] %v5630
    %6197 = vst [vmem:[#allocation8 + $0xf0] sm:$0xff] %v5709
    %6198 = vst [vmem:[#allocation8 + $0xf8] sm:$0xff] %v5714
    %6199 = vst [vmem:[#allocation8 + $0x100] sm:$0xff] %v5719
    %6200 = vst [vmem:[#allocation8 + $0x108] sm:$0xff] %v5798
    %6201 = vst [vmem:[#allocation8 + $0x110] sm:$0xff] %v5803
    %6202 = vst [vmem:[#allocation8 + $0x118] sm:$0xff] %v5808
    %6203 = vst [vmem:[#allocation8 + $0x120] sm:$0xff] %v5887
    %6204 = vst [vmem:[#allocation8 + $0x128] sm:$0xff] %v5892
    %6205 = vst [vmem:[#allocation8 + $0x130] sm:$0xff] %v5897
    %6206 = vst [vmem:[#allocation8 + $0x138] sm:$0xff] %v5976
    %6207 = vst [vmem:[#allocation8 + $0x140] sm:$0xff] %v5981
    %6208 = vst [vmem:[#allocation8 + $0x148] sm:$0xff] %v5986
    %6209 = vst [vmem:[#allocation8 + $0x150] sm:$0xff] %v6065
    %6210 = vst [vmem:[#allocation8 + $0x158] sm:$0xff] %v6070
    %6211 = vst [vmem:[#allocation8 + $0x160] sm:$0xff] %v6075
    %6212 = vst [vmem:[#allocation8 + $0x168] sm:$0xff] %v6154
    %6213 = vst [vmem:[#allocation8 + $0x170] sm:$0xff] %v6159
    %6214 = vst [vmem:[#allocation8 + $0x178] sm:$0xff] %v6164
    // Predicated region
    $region30: #{tpu_custom_call.1} parent=1 // pred_check
      _
    $region31: #{tpu_custom_call.1} parent=1 // pred_check_branch
      %6216 = sbr.rel (0) target = $region33
    $region32: #{tpu_custom_call.1} parent=1 // pred_region
      %s6218 = ssub.s32 4096, 4096
      %6219 = vsyncadd [#allocation4], %s6218
      %s6220 = sshll.u32 [#allocation7], 4
      %s6221 = int_to_ptr.vmem [resolvable:$true] %s6220
      %6226 = dma.vmem_to_hbm [thread:$0]  %s6221, 4096, %s5, [#allocation4], 128, 128, 8
    $region33: #{tpu_custom_call.1} parent=1 // pred_fallthru
      _
    // Predicated region
    $region34: #{tpu_custom_call.1} parent=1 // pred_check
      _
    $region35: #{tpu_custom_call.1} parent=1 // pred_check_branch
      %6228 = sbr.rel (0) target = $region37
    $region36: #{tpu_custom_call.1} parent=1 // pred_region
      %s6230 = ssub.s32 6144, 6144
      %6231 = vsyncadd [#allocation9], %s6230
      %s6232 = sshll.u32 [#allocation8], 4
      %s6233 = int_to_ptr.vmem [resolvable:$true] %s6232
      %6238 = dma.vmem_to_hbm [thread:$0]  %s6233, 6144, %s6, [#allocation9], 128, 128, 8
    $region37: #{tpu_custom_call.1} parent=1 // pred_fallthru
      _
    // Predicated region
    $region38: #{tpu_custom_call.1} parent=1 // pred_check
      _
    $region39: #{tpu_custom_call.1} parent=1 // pred_check_branch
      %6240 = sbr.rel (0) target = $region41
    $region40: #{tpu_custom_call.1} parent=1 // pred_region
      %6241 = dma.done [#allocation4], 4096
    $region41: #{tpu_custom_call.1} parent=1 // pred_fallthru
      _
    // Predicated region
    $region42: #{tpu_custom_call.1} parent=1 // pred_check
      _
    $region43: #{tpu_custom_call.1} parent=1 // pred_check_branch
      %6243 = sbr.rel (0) target = $region45
    $region44: #{tpu_custom_call.1} parent=1 // pred_region
      %6244 = dma.done [#allocation9], 6144
    $region45: #{tpu_custom_call.1} parent=1 // pred_fallthru
      _
    %6245 = vsyncpa [#allocation3], 1
    %6246 = vsyncpa [#allocation6], 1
    %6247 = vsyncpa [#allocation4], 1
    %6248 = vsyncpa [#allocation9], 1

</llo_original>
